<compile_context>
chip_gen: v5e
topology: v5e:2x2
jax: 0.10.0
libtpu: 0.0.40
codegen_flags: <defaults>
</compile_context>

<pallas_src>
import functools

import jax
import jax.numpy as jnp
from jax import lax
from jax.experimental import pallas as pl
from jax.experimental.pallas import tpu as pltpu


_FEATS = 64     # feature maps (= padded channel count of every layer)
_LAYERS = 15
_IN_CH = 5      # noise map + 4 pixel-unshuffled sub-images
_OUT_CH = 4
_HL = 16        # left pad (= bf16 sublane tile) -> aligned per-layer stores


def _geom(Hh, Wh):
    """Flat padded-activation geometry (all Python ints)."""
    hl = _HL
    hr = (-(Wh + hl)) % 16
    hr = hr if hr > 0 else 16
    Wp = Wh + hl + hr                   # padded width, multiple of 16
    Hp = Hh + 2                         # 1-row halo top/bottom
    MP = Hh * Wp                        # matmul M (all rows incl. pad columns)
    flat = ((Hp * Wp + hl + 1 + 15) // 16) * 16   # room for tap over-reach
    return hl, hr, Wp, Hp, MP, flat


# -----------------------------------------------------------------------------
# Fused DnCNN kernel: grid = (batch, layer); one conv3x3(+bias)(+ReLU) per step.
# -----------------------------------------------------------------------------
def _dncnn_kernel(x_ref, w_ref, b_ref, o_ref, buf0, buf1, *,
                  Hh, Wh, Wp, hl, flat, n_layers):
    # x_ref : (1, flat, 5)   bf16 input, already placed in flat padded layout
    # w_ref : (1, 9, F, F)   bf16 weights of THIS layer, tap index = kh*3 + kw
    # b_ref : (1, 1, F)      f32 folded-BN bias of THIS layer
    # o_ref : (1, MP, 4)     f32 last-conv output (pad columns dropped in JAX)
    # buf0/1: (flat, F)      bf16 ping-pong activation slabs
    MP = Hh * Wp
    l = pl.program_id(1)

    # ---- per-image init (first layer only; megacore-safe: gated on l) ------
    @pl.when(l == 0)
    def _init():
        # buf0 is the layer-0 input: channels >= 5 must be zero everywhere
        # (VMEM scratch is uninitialised and 0 * NaN != 0), so clear the slab
        # once, then drop in the 5 real channels (their halo entries are
        # already zero in x_ref).
        buf0[...] = jnp.zeros_like(buf0)
        buf0[:, 0:_IN_CH] = x_ref[0]
        # buf1: per-layer stores rewrite everything except these two strips
        # (top halo row + left pad of first data row; bottom halo row + tail),
        # so only they need zero-filling.
        head = Wp + hl
        tail_start = (Hh + 1) * Wp + hl
        buf1[0:head, :] = jnp.zeros((head, buf1.shape[-1]), buf1.dtype)
        buf1[tail_start:flat, :] = jnp.zeros((flat - tail_start, buf1.shape[-1]),
                                             buf1.dtype)

    # ---- one conv3x3 + bias (+ ReLU) layer ----------------------------------
    def layer(src, dst):
        # 9 MXU matmuls, one per (kh, kw) tap.  Each operand is a zero-copy
        # pl.ds window into the flat padded activation (offsets are static;
        # kw=1 taps are 16-sublane aligned).  No concat/reshape copies.
        acc = None
        for kh in range(3):
            for kw in range(3):
                off = kh * Wp + hl - 1 + kw
                part = jnp.dot(src[pl.ds(off, MP), :],
                               w_ref[0, kh * 3 + kw],
                               preferred_element_type=jnp.float32)
                acc = part if acc is None else acc + part
        y = acc + b_ref[0]              # (MP, F) f32; BN scale folded in W

        @pl.when(l < n_layers - 1)
        def _store_act():
            # Zero the pad columns of every row so this single aligned store
            # also re-zeroes the destination halo columns, then ReLU -> bf16.
            col = lax.broadcasted_iota(jnp.int32, (MP, 1), 0) % Wp
            act = jnp.where(col < Wh, jnp.maximum(y, 0.0), 0.0)
            dst[pl.ds(Wp + hl, MP), :] = act.astype(dst.dtype)

        @pl.when(l == n_layers - 1)
        def _store_out():
            o_ref[0, :, :] = y[:, 0:_OUT_CH]

    # ping-pong: even layers read buf0 / write buf1, odd layers the reverse.
    parity = l % 2

    @pl.when(parity == 0)
    def _even():
        layer(buf0, buf1)

    @pl.when(parity == 1)
    def _odd():
        layer(buf1, buf0)


def dncnn_pallas(x_flat, w_stack, bias_stack, *, Hh, Wh, Wp, hl, flat):
    N = x_flat.shape[0]
    L, _, F, _ = w_stack.shape
    MP = Hh * Wp
    kern = functools.partial(_dncnn_kernel, Hh=Hh, Wh=Wh, Wp=Wp, hl=hl,
                             flat=flat, n_layers=L)
    return pl.pallas_call(
        kern,
        out_shape=jax.ShapeDtypeStruct((N, MP, _OUT_CH), jnp.float32),
        grid=(N, L),
        in_specs=[
            pl.BlockSpec((1, flat, _IN_CH), lambda n, l: (n, 0, 0)),   # input
            pl.BlockSpec((1, 9, F, F), lambda n, l: (l, 0, 0, 0)),     # weights
            pl.BlockSpec((1, 1, F), lambda n, l: (l, 0, 0)),           # bias
        ],
        out_specs=pl.BlockSpec((1, MP, _OUT_CH), lambda n, l: (n, 0, 0)),
        scratch_shapes=[
            pltpu.VMEM((flat, F), jnp.bfloat16),
            pltpu.VMEM((flat, F), jnp.bfloat16),
        ],
        compiler_params=pltpu.CompilerParams(
            dimension_semantics=("parallel", "arbitrary")),
    )(x_flat, w_stack, bias_stack)


# -----------------------------------------------------------------------------
# Parameter init (deterministic, synthetic — mirrors the module's layer shapes).
# BN running stats are folded (eval mode); the BN scale is folded into the conv
# weights, so the in-kernel epilogue is bias-add (+ ReLU) only.
# -----------------------------------------------------------------------------
def init_params(key):
    eps = 1e-5
    L, F = _LAYERS, _FEATS
    cins = [_IN_CH] + [F] * (L - 1)
    couts = [F] * (L - 1) + [_OUT_CH]
    keys = jax.random.split(key, L * 5)

    ws, biases = [], []
    for i in range(L):
        cin, cout = cins[i], couts[i]
        kw_, kg, kb, km, kv = keys[5 * i:5 * i + 5]
        std = (2.0 / (9.0 * cin)) ** 0.5
        w = std * jax.random.normal(kw_, (3, 3, cin, cout), jnp.float32)  # HWIO
        if 0 < i < L - 1:   # layers with BatchNorm
            gamma = 1.0 + 0.1 * jax.random.normal(kg, (cout,), jnp.float32)
            beta = 0.1 * jax.random.normal(kb, (cout,), jnp.float32)
            mean = 0.1 * jax.random.normal(km, (cout,), jnp.float32)
            var = 1.0 + 0.1 * jnp.abs(jax.random.normal(kv, (cout,), jnp.float32))
            scale = gamma / jnp.sqrt(var + eps)
            bias = beta - mean * scale
        else:
            scale = jnp.ones((cout,), jnp.float32)
            bias = jnp.zeros((cout,), jnp.float32)

        w = w * scale[None, None, None, :]                  # fold BN scale
        w_pad = jnp.zeros((3, 3, F, F), jnp.float32).at[:, :, :cin, :cout].set(w)
        b_pad = jnp.zeros((F,), jnp.float32).at[:cout].set(bias)
        ws.append(w_pad)
        biases.append(b_pad)

    w_stack = jnp.stack(ws).reshape(L, 9, F, F).astype(jnp.bfloat16)  # tap=kh*3+kw
    bias_stack = jnp.stack(biases).reshape(L, 1, F)                   # f32
    return w_stack, bias_stack


# -----------------------------------------------------------------------------
# FFDNet forward (PyTorch semantics: NCHW in / NCHW out).
# NOTE: sub-pixel order (0,0),(0,1),(1,0),(1,1) and noise-map-first channel
#       ordering are convention-sensitive when loading real checkpoints.
# -----------------------------------------------------------------------------
def ffdnet_forward(params, x_nchw, noise_sigma):
    w_stack, bias_stack = params
    N, C, H, W = x_nchw.shape       # C == 1 (downsampled_channels = 4*C+1 = 5)
    assert C == 1 and H % 2 == 0 and W % 2 == 0
    Hh, Wh = H // 2, W // 2
    hl, hr, Wp, Hp, MP, flat = _geom(Hh, Wh)

    # --- pixel-unshuffle (x2) + noise map, built directly in NHWC -----------
    x = x_nchw[:, 0]
    subs = [x[:, 0::2, 0::2], x[:, 0::2, 1::2], x[:, 1::2, 0::2], x[:, 1::2, 1::2]]
    noise = jnp.broadcast_to(noise_sigma.reshape(N, 1, 1), (N, Hh, Wh))
    x5 = jnp.stack([noise] + subs, axis=-1)                      # (N, Hh, Wh, 5)

    # --- place into the kernel's flat padded layout (only 5 channels DMA'd) --
    xp = jnp.pad(x5, ((0, 0), (1, 1), (hl, hr), (0, 0)))         # (N, Hp, Wp, 5)
    x_flat = xp.reshape(N, Hp * Wp, _IN_CH)
    x_flat = jnp.pad(x_flat, ((0, 0), (0, flat - Hp * Wp), (0, 0)))
    x_flat = x_flat.astype(jnp.bfloat16)

    # --- fused 15-layer DnCNN: one pallas_call, activations stay in VMEM -----
    out = dncnn_pallas(x_flat, w_stack, bias_stack,
                       Hh=Hh, Wh=Wh, Wp=Wp, hl=hl, flat=flat)    # (N, MP, 4)

    # --- drop pad columns, pixel-shuffle x2 back to full resolution ----------
    out4 = out.reshape(N, Hh, Wp, _OUT_CH)[:, :, :Wh, :]          # (N, Hh, Wh, 4)
    t = out4.reshape(N, Hh, Wh, 2, 2)                             # (..., dr, dc)
    y = jnp.transpose(t, (0, 1, 3, 2, 4)).reshape(N, H, W)
    return y[:, None, :, :]                                       # (N, 1, H, W)


if __name__ == "__main__":
    key = jax.random.PRNGKey(0)
    kx, ks, kp = jax.random.split(key, 3)

    # grayscale input (FFDNet with 5 downsampled channels implies C=1)
    x = jax.random.normal(kx, (2, 1, 16, 16), jnp.float32)
    noise_sigma = jax.random.uniform(ks, (2,), jnp.float32, minval=0.0, maxval=0.2)

    params = init_params(kp)
    y_pred = jax.jit(ffdnet_forward)(params, x, noise_sigma)
    y_pred = jax.block_until_ready(y_pred)

    assert y_pred.shape == (2, 1, 16, 16)
    assert y_pred.dtype == jnp.float32
    print("KERNEL_OK")
</pallas_src>

<mosaic_0001>
module attributes {stable_mosaic.version = 11 : i64} {
  func.func @_dncnn_kernel(%arg0: i32, %arg1: i32, %arg2: memref<1x352x5xbf16, #tpu.memory_space<vmem>>, %arg3: memref<1x9x64x64xbf16, #tpu.memory_space<vmem>>, %arg4: memref<1x1x64xf32, #tpu.memory_space<vmem>>, %arg5: memref<1x256x4xf32, #tpu.memory_space<vmem>>, %arg6: memref<352x64xbf16, #tpu.memory_space<vmem>>, %arg7: memref<352x64xbf16, #tpu.memory_space<vmem>>) attributes {dimension_semantics = [#tpu.dimension_semantics<parallel>, #tpu.dimension_semantics<arbitrary>], iteration_bounds = array<i64: 2, 15>, scalar_prefetch = 0 : i64, scratch_operands = 2 : i64, tpu.core_type = #tpu.core_type<tc>, window_params = [{transform_indices = @transform_0, window_bounds = array<i64: 1, 352, 5>}, {transform_indices = @transform_1, window_bounds = array<i64: 1, 9, 64, 64>}, {transform_indices = @transform_2, window_bounds = array<i64: 1, 1, 64>}, {transform_indices = @transform_3, window_bounds = array<i64: 1, 256, 4>}]} {
    %c0_i32 = arith.constant 0 : i32
    %0 = arith.cmpi eq, %arg1, %c0_i32 : i32
    %1 = arith.extui %0 : i1 to i32
    %c0_i32_0 = arith.constant 0 : i32
    %2 = arith.cmpi ne, %1, %c0_i32_0 : i32
    scf.if %2 {
      %cst = arith.constant 0.000000e+00 : bf16
      %19 = vector.broadcast %cst : bf16 to vector<352x64xbf16>
      %c0 = arith.constant 0 : index
      %c0_9 = arith.constant 0 : index
      %20 = vector.load %arg6[%c0, %c0_9] : memref<352x64xbf16, #tpu.memory_space<vmem>>, vector<352x64xbf16>
      tpu.vector_store %arg6[%c0, %c0_9], %19 {strides = array<i32>} : memref<352x64xbf16, #tpu.memory_space<vmem>>, vector<352x64xbf16>,
      %c0_10 = arith.constant 0 : index
      %c0_11 = arith.constant 0 : index
      %c0_12 = arith.constant 0 : index
      %21 = vector.load %arg2[%c0_10, %c0_11, %c0_12] : memref<1x352x5xbf16, #tpu.memory_space<vmem>>, vector<1x352x5xbf16>
      %22 = vector.shape_cast %21 : vector<1x352x5xbf16> to vector<352x5xbf16>
      %c0_13 = arith.constant 0 : index
      %c0_14 = arith.constant 0 : index
      %23 = vector.load %arg6[%c0_13, %c0_14] : memref<352x64xbf16, #tpu.memory_space<vmem>>, vector<352x5xbf16>
      tpu.vector_store %arg6[%c0_13, %c0_14], %22 {strides = array<i32>} : memref<352x64xbf16, #tpu.memory_space<vmem>>, vector<352x5xbf16>,
      %cst_15 = arith.constant 0.000000e+00 : bf16
      %24 = vector.broadcast %cst_15 : bf16 to vector<48x64xbf16>
      %c0_16 = arith.constant 0 : index
      %c0_17 = arith.constant 0 : index
      %25 = vector.load %arg7[%c0_16, %c0_17] : memref<352x64xbf16, #tpu.memory_space<vmem>>, vector<48x64xbf16>
      tpu.vector_store %arg7[%c0_16, %c0_17], %24 {strides = array<i32>} : memref<352x64xbf16, #tpu.memory_space<vmem>>, vector<48x64xbf16>,
      %cst_18 = arith.constant 0.000000e+00 : bf16
      %26 = vector.broadcast %cst_18 : bf16 to vector<48x64xbf16>
      %c304 = arith.constant 304 : index
      %c0_19 = arith.constant 0 : index
      %27 = vector.load %arg7[%c304, %c0_19] : memref<352x64xbf16, #tpu.memory_space<vmem>>, vector<48x64xbf16>
      tpu.vector_store %arg7[%c304, %c0_19], %26 {strides = array<i32>} : memref<352x64xbf16, #tpu.memory_space<vmem>>, vector<48x64xbf16>,
    } else {
    }
    %c2_i32 = arith.constant 2 : i32
    %c0_i32_1 = arith.constant 0 : i32
    %3 = arith.cmpi eq, %c2_i32, %c0_i32_1 : i32
    %c1_i32 = arith.constant 1 : i32
    %4 = arith.select %3, %c1_i32, %c2_i32 : i32
    %5 = arith.remsi %arg1, %4 : i32
    %c0_i32_2 = arith.constant 0 : i32
    %6 = arith.cmpi ne, %5, %c0_i32_2 : i32
    %c0_i32_3 = arith.constant 0 : i32
    %7 = arith.cmpi slt, %5, %c0_i32_3 : i32
    %c0_i32_4 = arith.constant 0 : i32
    %8 = arith.cmpi slt, %4, %c0_i32_4 : i32
    %9 = arith.xori %7, %8 : i1
    %10 = arith.andi %9, %6 : i1
    %11 = arith.addi %5, %4 : i32
    %12 = arith.select %10, %11, %5 : i32
    %c0_i32_5 = arith.constant 0 : i32
    %13 = arith.cmpi eq, %12, %c0_i32_5 : i32
    %14 = arith.extui %13 : i1 to i32
    %c0_i32_6 = arith.constant 0 : i32
    %15 = arith.cmpi ne, %14, %c0_i32_6 : i32
    scf.if %15 {
      %c15 = arith.constant 15 : index
      %c0 = arith.constant 0 : index
      %19 = vector.load %arg6[%c15, %c0] : memref<352x64xbf16, #tpu.memory_space<vmem>>, vector<256x64xbf16>
      %c0_9 = arith.constant 0 : index
      %c0_10 = arith.constant 0 : index
      %c0_11 = arith.constant 0 : index
      %c0_12 = arith.constant 0 : index
      %20 = vector.load %arg3[%c0_9, %c0_10, %c0_11, %c0_12] : memref<1x9x64x64xbf16, #tpu.memory_space<vmem>>, vector<1x1x64x64xbf16>
      %21 = vector.shape_cast %20 : vector<1x1x64x64xbf16> to vector<64x64xbf16>
      %cst = arith.constant dense<0.000000e+00> : vector<256x64xf32>
      %22 = tpu.matmul %19, %21, %cst {dimension_numbers = #tpu.dot_dimension_numbers<[1], [0], [0], [1], [0, 0, 1, 1], [], []>} : vector<256x64xbf16>, vector<64x64xbf16>, vector<256x64xf32> -> vector<256x64xf32>
      %c16 = arith.constant 16 : index
      %c0_13 = arith.constant 0 : index
      %23 = vector.load %arg6[%c16, %c0_13] : memref<352x64xbf16, #tpu.memory_space<vmem>>, vector<256x64xbf16>
      %c0_14 = arith.constant 0 : index
      %c1 = arith.constant 1 : index
      %c0_15 = arith.constant 0 : index
      %c0_16 = arith.constant 0 : index
      %24 = vector.load %arg3[%c0_14, %c1, %c0_15, %c0_16] : memref<1x9x64x64xbf16, #tpu.memory_space<vmem>>, vector<1x1x64x64xbf16>
      %25 = vector.shape_cast %24 : vector<1x1x64x64xbf16> to vector<64x64xbf16>
      %cst_17 = arith.constant dense<0.000000e+00> : vector<256x64xf32>
      %26 = tpu.matmul %23, %25, %cst_17 {dimension_numbers = #tpu.dot_dimension_numbers<[1], [0], [0], [1], [0, 0, 1, 1], [], []>} : vector<256x64xbf16>, vector<64x64xbf16>, vector<256x64xf32> -> vector<256x64xf32>
      %27 = arith.addf %22, %26 : vector<256x64xf32>
      %c17 = arith.constant 17 : index
      %c0_18 = arith.constant 0 : index
      %28 = vector.load %arg6[%c17, %c0_18] : memref<352x64xbf16, #tpu.memory_space<vmem>>, vector<256x64xbf16>
      %c0_19 = arith.constant 0 : index
      %c2 = arith.constant 2 : index
      %c0_20 = arith.constant 0 : index
      %c0_21 = arith.constant 0 : index
      %29 = vector.load %arg3[%c0_19, %c2, %c0_20, %c0_21] : memref<1x9x64x64xbf16, #tpu.memory_space<vmem>>, vector<1x1x64x64xbf16>
      %30 = vector.shape_cast %29 : vector<1x1x64x64xbf16> to vector<64x64xbf16>
      %cst_22 = arith.constant dense<0.000000e+00> : vector<256x64xf32>
      %31 = tpu.matmul %28, %30, %cst_22 {dimension_numbers = #tpu.dot_dimension_numbers<[1], [0], [0], [1], [0, 0, 1, 1], [], []>} : vector<256x64xbf16>, vector<64x64xbf16>, vector<256x64xf32> -> vector<256x64xf32>
      %32 = arith.addf %27, %31 : vector<256x64xf32>
      %c47 = arith.constant 47 : index
      %c0_23 = arith.constant 0 : index
      %33 = vector.load %arg6[%c47, %c0_23] : memref<352x64xbf16, #tpu.memory_space<vmem>>, vector<256x64xbf16>
      %c0_24 = arith.constant 0 : index
      %c3 = arith.constant 3 : index
      %c0_25 = arith.constant 0 : index
      %c0_26 = arith.constant 0 : index
      %34 = vector.load %arg3[%c0_24, %c3, %c0_25, %c0_26] : memref<1x9x64x64xbf16, #tpu.memory_space<vmem>>, vector<1x1x64x64xbf16>
      %35 = vector.shape_cast %34 : vector<1x1x64x64xbf16> to vector<64x64xbf16>
      %cst_27 = arith.constant dense<0.000000e+00> : vector<256x64xf32>
      %36 = tpu.matmul %33, %35, %cst_27 {dimension_numbers = #tpu.dot_dimension_numbers<[1], [0], [0], [1], [0, 0, 1, 1], [], []>} : vector<256x64xbf16>, vector<64x64xbf16>, vector<256x64xf32> -> vector<256x64xf32>
      %37 = arith.addf %32, %36 : vector<256x64xf32>
      %c48 = arith.constant 48 : index
      %c0_28 = arith.constant 0 : index
      %38 = vector.load %arg6[%c48, %c0_28] : memref<352x64xbf16, #tpu.memory_space<vmem>>, vector<256x64xbf16>
      %c0_29 = arith.constant 0 : index
      %c4 = arith.constant 4 : index
      %c0_30 = arith.constant 0 : index
      %c0_31 = arith.constant 0 : index
      %39 = vector.load %arg3[%c0_29, %c4, %c0_30, %c0_31] : memref<1x9x64x64xbf16, #tpu.memory_space<vmem>>, vector<1x1x64x64xbf16>
      %40 = vector.shape_cast %39 : vector<1x1x64x64xbf16> to vector<64x64xbf16>
      %cst_32 = arith.constant dense<0.000000e+00> : vector<256x64xf32>
      %41 = tpu.matmul %38, %40, %cst_32 {dimension_numbers = #tpu.dot_dimension_numbers<[1], [0], [0], [1], [0, 0, 1, 1], [], []>} : vector<256x64xbf16>, vector<64x64xbf16>, vector<256x64xf32> -> vector<256x64xf32>
      %42 = arith.addf %37, %41 : vector<256x64xf32>
      %c49 = arith.constant 49 : index
      %c0_33 = arith.constant 0 : index
      %43 = vector.load %arg6[%c49, %c0_33] : memref<352x64xbf16, #tpu.memory_space<vmem>>, vector<256x64xbf16>
      %c0_34 = arith.constant 0 : index
      %c5 = arith.constant 5 : index
      %c0_35 = arith.constant 0 : index
      %c0_36 = arith.constant 0 : index
      %44 = vector.load %arg3[%c0_34, %c5, %c0_35, %c0_36] : memref<1x9x64x64xbf16, #tpu.memory_space<vmem>>, vector<1x1x64x64xbf16>
      %45 = vector.shape_cast %44 : vector<1x1x64x64xbf16> to vector<64x64xbf16>
      %cst_37 = arith.constant dense<0.000000e+00> : vector<256x64xf32>
      %46 = tpu.matmul %43, %45, %cst_37 {dimension_numbers = #tpu.dot_dimension_numbers<[1], [0], [0], [1], [0, 0, 1, 1], [], []>} : vector<256x64xbf16>, vector<64x64xbf16>, vector<256x64xf32> -> vector<256x64xf32>
      %47 = arith.addf %42, %46 : vector<256x64xf32>
      %c79 = arith.constant 79 : index
      %c0_38 = arith.constant 0 : index
      %48 = vector.load %arg6[%c79, %c0_38] : memref<352x64xbf16, #tpu.memory_space<vmem>>, vector<256x64xbf16>
      %c0_39 = arith.constant 0 : index
      %c6 = arith.constant 6 : index
      %c0_40 = arith.constant 0 : index
      %c0_41 = arith.constant 0 : index
      %49 = vector.load %arg3[%c0_39, %c6, %c0_40, %c0_41] : memref<1x9x64x64xbf16, #tpu.memory_space<vmem>>, vector<1x1x64x64xbf16>
      %50 = vector.shape_cast %49 : vector<1x1x64x64xbf16> to vector<64x64xbf16>
      %cst_42 = arith.constant dense<0.000000e+00> : vector<256x64xf32>
      %51 = tpu.matmul %48, %50, %cst_42 {dimension_numbers = #tpu.dot_dimension_numbers<[1], [0], [0], [1], [0, 0, 1, 1], [], []>} : vector<256x64xbf16>, vector<64x64xbf16>, vector<256x64xf32> -> vector<256x64xf32>
      %52 = arith.addf %47, %51 : vector<256x64xf32>
      %c80 = arith.constant 80 : index
      %c0_43 = arith.constant 0 : index
      %53 = vector.load %arg6[%c80, %c0_43] : memref<352x64xbf16, #tpu.memory_space<vmem>>, vector<256x64xbf16>
      %c0_44 = arith.constant 0 : index
      %c7 = arith.constant 7 : index
      %c0_45 = arith.constant 0 : index
      %c0_46 = arith.constant 0 : index
      %54 = vector.load %arg3[%c0_44, %c7, %c0_45, %c0_46] : memref<1x9x64x64xbf16, #tpu.memory_space<vmem>>, vector<1x1x64x64xbf16>
      %55 = vector.shape_cast %54 : vector<1x1x64x64xbf16> to vector<64x64xbf16>
      %cst_47 = arith.constant dense<0.000000e+00> : vector<256x64xf32>
      %56 = tpu.matmul %53, %55, %cst_47 {dimension_numbers = #tpu.dot_dimension_numbers<[1], [0], [0], [1], [0, 0, 1, 1], [], []>} : vector<256x64xbf16>, vector<64x64xbf16>, vector<256x64xf32> -> vector<256x64xf32>
      %57 = arith.addf %52, %56 : vector<256x64xf32>
      %c81 = arith.constant 81 : index
      %c0_48 = arith.constant 0 : index
      %58 = vector.load %arg6[%c81, %c0_48] : memref<352x64xbf16, #tpu.memory_space<vmem>>, vector<256x64xbf16>
      %c0_49 = arith.constant 0 : index
      %c8 = arith.constant 8 : index
      %c0_50 = arith.constant 0 : index
      %c0_51 = arith.constant 0 : index
      %59 = vector.load %arg3[%c0_49, %c8, %c0_50, %c0_51] : memref<1x9x64x64xbf16, #tpu.memory_space<vmem>>, vector<1x1x64x64xbf16>
      %60 = vector.shape_cast %59 : vector<1x1x64x64xbf16> to vector<64x64xbf16>
      %cst_52 = arith.constant dense<0.000000e+00> : vector<256x64xf32>
      %61 = tpu.matmul %58, %60, %cst_52 {dimension_numbers = #tpu.dot_dimension_numbers<[1], [0], [0], [1], [0, 0, 1, 1], [], []>} : vector<256x64xbf16>, vector<64x64xbf16>, vector<256x64xf32> -> vector<256x64xf32>
      %62 = arith.addf %57, %61 : vector<256x64xf32>
      %c0_53 = arith.constant 0 : index
      %c0_54 = arith.constant 0 : index
      %c0_55 = arith.constant 0 : index
      %63 = vector.load %arg4[%c0_53, %c0_54, %c0_55] : memref<1x1x64xf32, #tpu.memory_space<vmem>>, vector<1x1x64xf32>
      %64 = vector.shape_cast %63 : vector<1x1x64xf32> to vector<1x64xf32>
      %65 = vector.broadcast %64 : vector<1x64xf32> to vector<256x64xf32>
      %66 = arith.addf %62, %65 : vector<256x64xf32>
      %c14_i32 = arith.constant 14 : i32
      %67 = arith.cmpi slt, %arg1, %c14_i32 : i32
      %68 = arith.extui %67 : i1 to i32
      %c0_i32_56 = arith.constant 0 : i32
      %69 = arith.cmpi ne, %68, %c0_i32_56 : i32
      scf.if %69 {
        %73 = tpu.iota {dimensions = array<i32: 0>} : vector<256x1xi32>
        %c32_i32 = arith.constant 32 : i32
        %c0_i32_59 = arith.constant 0 : i32
        %74 = arith.cmpi eq, %c32_i32, %c0_i32_59 : i32
        %c1_i32_60 = arith.constant 1 : i32
        %75 = arith.select %74, %c1_i32_60, %c32_i32 : i32
        %76 = vector.broadcast %75 : i32 to vector<256x1xi32>
        %77 = arith.remsi %73, %76 : vector<256x1xi32>
        %c0_i32_61 = arith.constant 0 : i32
        %78 = vector.broadcast %c0_i32_61 : i32 to vector<256x1xi32>
        %79 = arith.cmpi ne, %77, %78 : vector<256x1xi32>
        %c0_i32_62 = arith.constant 0 : i32
        %80 = vector.broadcast %c0_i32_62 : i32 to vector<256x1xi32>
        %81 = arith.cmpi slt, %77, %80 : vector<256x1xi32>
        %c0_i32_63 = arith.constant 0 : i32
        %82 = arith.cmpi slt, %75, %c0_i32_63 : i32
        %83 = vector.broadcast %82 : i1 to vector<256x1xi1>
        %84 = vector.broadcast %83 : vector<256x1xi1> to vector<256x1xi1>
        %85 = arith.xori %81, %84 : vector<256x1xi1>
        %86 = arith.andi %85, %79 : vector<256x1xi1>
        %87 = vector.broadcast %75 : i32 to vector<256x1xi32>
        %88 = arith.addi %77, %87 : vector<256x1xi32>
        %89 = arith.select %86, %88, %77 : vector<256x1xi1>, vector<256x1xi32>
        %c8_i32 = arith.constant 8 : i32
        %90 = vector.broadcast %c8_i32 : i32 to vector<256x1xi32>
        %91 = arith.cmpi slt, %89, %90 : vector<256x1xi32>
        %cst_64 = arith.constant 0.000000e+00 : f32
        %92 = vector.broadcast %cst_64 : f32 to vector<256x64xf32>
        %93 = arith.maximumf %66, %92 : vector<256x64xf32>
        %cst_65 = arith.constant 0.000000e+00 : f32
        %94 = vector.shape_cast %91 : vector<256x1xi1> to vector<256x1xi1>
        %95 = vector.broadcast %94 : vector<256x1xi1> to vector<256x64xi1>
        %96 = vector.broadcast %cst_65 : f32 to vector<256x64xf32>
        %97 = arith.select %95, %93, %96 : vector<256x64xi1>, vector<256x64xf32>
        %98 = arith.truncf %97 : vector<256x64xf32> to vector<256x64xbf16>
        %c48_66 = arith.constant 48 : index
        %c0_67 = arith.constant 0 : index
        %99 = vector.load %arg7[%c48_66, %c0_67] : memref<352x64xbf16, #tpu.memory_space<vmem>>, vector<256x64xbf16>
        tpu.vector_store %arg7[%c48_66, %c0_67], %98 {strides = array<i32>} : memref<352x64xbf16, #tpu.memory_space<vmem>>, vector<256x64xbf16>,
      } else {
      }
      %c14_i32_57 = arith.constant 14 : i32
      %70 = arith.cmpi eq, %arg1, %c14_i32_57 : i32
      %71 = arith.extui %70 : i1 to i32
      %c0_i32_58 = arith.constant 0 : i32
      %72 = arith.cmpi ne, %71, %c0_i32_58 : i32
      scf.if %72 {
        %73 = vector.extract_strided_slice %66 {offsets = [0, 0], sizes = [256, 4], strides = [1, 1]} : vector<256x64xf32> to vector<256x4xf32>
        %c0_59 = arith.constant 0 : index
        %c0_60 = arith.constant 0 : index
        %c0_61 = arith.constant 0 : index
        %74 = vector.load %arg5[%c0_59, %c0_60, %c0_61] : memref<1x256x4xf32, #tpu.memory_space<vmem>>, vector<1x256x4xf32>
        %75 = vector.shape_cast %74 : vector<1x256x4xf32> to vector<256x4xf32>
        %76 = vector.shape_cast %73 : vector<256x4xf32> to vector<1x256x4xf32>
        tpu.vector_store %arg5[%c0_59, %c0_60, %c0_61], %76 {strides = array<i32>} : memref<1x256x4xf32, #tpu.memory_space<vmem>>, vector<1x256x4xf32>,
      } else {
      }
    } else {
    }
    %c1_i32_7 = arith.constant 1 : i32
    %16 = arith.cmpi eq, %12, %c1_i32_7 : i32
    %17 = arith.extui %16 : i1 to i32
    %c0_i32_8 = arith.constant 0 : i32
    %18 = arith.cmpi ne, %17, %c0_i32_8 : i32
    scf.if %18 {
      %c15 = arith.constant 15 : index
      %c0 = arith.constant 0 : index
      %19 = vector.load %arg7[%c15, %c0] : memref<352x64xbf16, #tpu.memory_space<vmem>>, vector<256x64xbf16>
      %c0_9 = arith.constant 0 : index
      %c0_10 = arith.constant 0 : index
      %c0_11 = arith.constant 0 : index
      %c0_12 = arith.constant 0 : index
      %20 = vector.load %arg3[%c0_9, %c0_10, %c0_11, %c0_12] : memref<1x9x64x64xbf16, #tpu.memory_space<vmem>>, vector<1x1x64x64xbf16>
      %21 = vector.shape_cast %20 : vector<1x1x64x64xbf16> to vector<64x64xbf16>
      %cst = arith.constant dense<0.000000e+00> : vector<256x64xf32>
      %22 = tpu.matmul %19, %21, %cst {dimension_numbers = #tpu.dot_dimension_numbers<[1], [0], [0], [1], [0, 0, 1, 1], [], []>} : vector<256x64xbf16>, vector<64x64xbf16>, vector<256x64xf32> -> vector<256x64xf32>
      %c16 = arith.constant 16 : index
      %c0_13 = arith.constant 0 : index
      %23 = vector.load %arg7[%c16, %c0_13] : memref<352x64xbf16, #tpu.memory_space<vmem>>, vector<256x64xbf16>
      %c0_14 = arith.constant 0 : index
      %c1 = arith.constant 1 : index
      %c0_15 = arith.constant 0 : index
      %c0_16 = arith.constant 0 : index
      %24 = vector.load %arg3[%c0_14, %c1, %c0_15, %c0_16] : memref<1x9x64x64xbf16, #tpu.memory_space<vmem>>, vector<1x1x64x64xbf16>
      %25 = vector.shape_cast %24 : vector<1x1x64x64xbf16> to vector<64x64xbf16>
      %cst_17 = arith.constant dense<0.000000e+00> : vector<256x64xf32>
      %26 = tpu.matmul %23, %25, %cst_17 {dimension_numbers = #tpu.dot_dimension_numbers<[1], [0], [0], [1], [0, 0, 1, 1], [], []>} : vector<256x64xbf16>, vector<64x64xbf16>, vector<256x64xf32> -> vector<256x64xf32>
      %27 = arith.addf %22, %26 : vector<256x64xf32>
      %c17 = arith.constant 17 : index
      %c0_18 = arith.constant 0 : index
      %28 = vector.load %arg7[%c17, %c0_18] : memref<352x64xbf16, #tpu.memory_space<vmem>>, vector<256x64xbf16>
      %c0_19 = arith.constant 0 : index
      %c2 = arith.constant 2 : index
      %c0_20 = arith.constant 0 : index
      %c0_21 = arith.constant 0 : index
      %29 = vector.load %arg3[%c0_19, %c2, %c0_20, %c0_21] : memref<1x9x64x64xbf16, #tpu.memory_space<vmem>>, vector<1x1x64x64xbf16>
      %30 = vector.shape_cast %29 : vector<1x1x64x64xbf16> to vector<64x64xbf16>
      %cst_22 = arith.constant dense<0.000000e+00> : vector<256x64xf32>
      %31 = tpu.matmul %28, %30, %cst_22 {dimension_numbers = #tpu.dot_dimension_numbers<[1], [0], [0], [1], [0, 0, 1, 1], [], []>} : vector<256x64xbf16>, vector<64x64xbf16>, vector<256x64xf32> -> vector<256x64xf32>
      %32 = arith.addf %27, %31 : vector<256x64xf32>
      %c47 = arith.constant 47 : index
      %c0_23 = arith.constant 0 : index
      %33 = vector.load %arg7[%c47, %c0_23] : memref<352x64xbf16, #tpu.memory_space<vmem>>, vector<256x64xbf16>
      %c0_24 = arith.constant 0 : index
      %c3 = arith.constant 3 : index
      %c0_25 = arith.constant 0 : index
      %c0_26 = arith.constant 0 : index
      %34 = vector.load %arg3[%c0_24, %c3, %c0_25, %c0_26] : memref<1x9x64x64xbf16, #tpu.memory_space<vmem>>, vector<1x1x64x64xbf16>
      %35 = vector.shape_cast %34 : vector<1x1x64x64xbf16> to vector<64x64xbf16>
      %cst_27 = arith.constant dense<0.000000e+00> : vector<256x64xf32>
      %36 = tpu.matmul %33, %35, %cst_27 {dimension_numbers = #tpu.dot_dimension_numbers<[1], [0], [0], [1], [0, 0, 1, 1], [], []>} : vector<256x64xbf16>, vector<64x64xbf16>, vector<256x64xf32> -> vector<256x64xf32>
      %37 = arith.addf %32, %36 : vector<256x64xf32>
      %c48 = arith.constant 48 : index
      %c0_28 = arith.constant 0 : index
      %38 = vector.load %arg7[%c48, %c0_28] : memref<352x64xbf16, #tpu.memory_space<vmem>>, vector<256x64xbf16>
      %c0_29 = arith.constant 0 : index
      %c4 = arith.constant 4 : index
      %c0_30 = arith.constant 0 : index
      %c0_31 = arith.constant 0 : index
      %39 = vector.load %arg3[%c0_29, %c4, %c0_30, %c0_31] : memref<1x9x64x64xbf16, #tpu.memory_space<vmem>>, vector<1x1x64x64xbf16>
      %40 = vector.shape_cast %39 : vector<1x1x64x64xbf16> to vector<64x64xbf16>
      %cst_32 = arith.constant dense<0.000000e+00> : vector<256x64xf32>
      %41 = tpu.matmul %38, %40, %cst_32 {dimension_numbers = #tpu.dot_dimension_numbers<[1], [0], [0], [1], [0, 0, 1, 1], [], []>} : vector<256x64xbf16>, vector<64x64xbf16>, vector<256x64xf32> -> vector<256x64xf32>
      %42 = arith.addf %37, %41 : vector<256x64xf32>
      %c49 = arith.constant 49 : index
      %c0_33 = arith.constant 0 : index
      %43 = vector.load %arg7[%c49, %c0_33] : memref<352x64xbf16, #tpu.memory_space<vmem>>, vector<256x64xbf16>
      %c0_34 = arith.constant 0 : index
      %c5 = arith.constant 5 : index
      %c0_35 = arith.constant 0 : index
      %c0_36 = arith.constant 0 : index
      %44 = vector.load %arg3[%c0_34, %c5, %c0_35, %c0_36] : memref<1x9x64x64xbf16, #tpu.memory_space<vmem>>, vector<1x1x64x64xbf16>
      %45 = vector.shape_cast %44 : vector<1x1x64x64xbf16> to vector<64x64xbf16>
      %cst_37 = arith.constant dense<0.000000e+00> : vector<256x64xf32>
      %46 = tpu.matmul %43, %45, %cst_37 {dimension_numbers = #tpu.dot_dimension_numbers<[1], [0], [0], [1], [0, 0, 1, 1], [], []>} : vector<256x64xbf16>, vector<64x64xbf16>, vector<256x64xf32> -> vector<256x64xf32>
      %47 = arith.addf %42, %46 : vector<256x64xf32>
      %c79 = arith.constant 79 : index
      %c0_38 = arith.constant 0 : index
      %48 = vector.load %arg7[%c79, %c0_38] : memref<352x64xbf16, #tpu.memory_space<vmem>>, vector<256x64xbf16>
      %c0_39 = arith.constant 0 : index
      %c6 = arith.constant 6 : index
      %c0_40 = arith.constant 0 : index
      %c0_41 = arith.constant 0 : index
      %49 = vector.load %arg3[%c0_39, %c6, %c0_40, %c0_41] : memref<1x9x64x64xbf16, #tpu.memory_space<vmem>>, vector<1x1x64x64xbf16>
      %50 = vector.shape_cast %49 : vector<1x1x64x64xbf16> to vector<64x64xbf16>
      %cst_42 = arith.constant dense<0.000000e+00> : vector<256x64xf32>
      %51 = tpu.matmul %48, %50, %cst_42 {dimension_numbers = #tpu.dot_dimension_numbers<[1], [0], [0], [1], [0, 0, 1, 1], [], []>} : vector<256x64xbf16>, vector<64x64xbf16>, vector<256x64xf32> -> vector<256x64xf32>
      %52 = arith.addf %47, %51 : vector<256x64xf32>
      %c80 = arith.constant 80 : index
      %c0_43 = arith.constant 0 : index
      %53 = vector.load %arg7[%c80, %c0_43] : memref<352x64xbf16, #tpu.memory_space<vmem>>, vector<256x64xbf16>
      %c0_44 = arith.constant 0 : index
      %c7 = arith.constant 7 : index
      %c0_45 = arith.constant 0 : index
      %c0_46 = arith.constant 0 : index
      %54 = vector.load %arg3[%c0_44, %c7, %c0_45, %c0_46] : memref<1x9x64x64xbf16, #tpu.memory_space<vmem>>, vector<1x1x64x64xbf16>
      %55 = vector.shape_cast %54 : vector<1x1x64x64xbf16> to vector<64x64xbf16>
      %cst_47 = arith.constant dense<0.000000e+00> : vector<256x64xf32>
      %56 = tpu.matmul %53, %55, %cst_47 {dimension_numbers = #tpu.dot_dimension_numbers<[1], [0], [0], [1], [0, 0, 1, 1], [], []>} : vector<256x64xbf16>, vector<64x64xbf16>, vector<256x64xf32> -> vector<256x64xf32>
      %57 = arith.addf %52, %56 : vector<256x64xf32>
      %c81 = arith.constant 81 : index
      %c0_48 = arith.constant 0 : index
      %58 = vector.load %arg7[%c81, %c0_48] : memref<352x64xbf16, #tpu.memory_space<vmem>>, vector<256x64xbf16>
      %c0_49 = arith.constant 0 : index
      %c8 = arith.constant 8 : index
      %c0_50 = arith.constant 0 : index
      %c0_51 = arith.constant 0 : index
      %59 = vector.load %arg3[%c0_49, %c8, %c0_50, %c0_51] : memref<1x9x64x64xbf16, #tpu.memory_space<vmem>>, vector<1x1x64x64xbf16>
      %60 = vector.shape_cast %59 : vector<1x1x64x64xbf16> to vector<64x64xbf16>
      %cst_52 = arith.constant dense<0.000000e+00> : vector<256x64xf32>
      %61 = tpu.matmul %58, %60, %cst_52 {dimension_numbers = #tpu.dot_dimension_numbers<[1], [0], [0], [1], [0, 0, 1, 1], [], []>} : vector<256x64xbf16>, vector<64x64xbf16>, vector<256x64xf32> -> vector<256x64xf32>
      %62 = arith.addf %57, %61 : vector<256x64xf32>
      %c0_53 = arith.constant 0 : index
      %c0_54 = arith.constant 0 : index
      %c0_55 = arith.constant 0 : index
      %63 = vector.load %arg4[%c0_53, %c0_54, %c0_55] : memref<1x1x64xf32, #tpu.memory_space<vmem>>, vector<1x1x64xf32>
      %64 = vector.shape_cast %63 : vector<1x1x64xf32> to vector<1x64xf32>
      %65 = vector.broadcast %64 : vector<1x64xf32> to vector<256x64xf32>
      %66 = arith.addf %62, %65 : vector<256x64xf32>
      %c14_i32 = arith.constant 14 : i32
      %67 = arith.cmpi slt, %arg1, %c14_i32 : i32
      %68 = arith.extui %67 : i1 to i32
      %c0_i32_56 = arith.constant 0 : i32
      %69 = arith.cmpi ne, %68, %c0_i32_56 : i32
      scf.if %69 {
        %73 = tpu.iota {dimensions = array<i32: 0>} : vector<256x1xi32>
        %c32_i32 = arith.constant 32 : i32
        %c0_i32_59 = arith.constant 0 : i32
        %74 = arith.cmpi eq, %c32_i32, %c0_i32_59 : i32
        %c1_i32_60 = arith.constant 1 : i32
        %75 = arith.select %74, %c1_i32_60, %c32_i32 : i32
        %76 = vector.broadcast %75 : i32 to vector<256x1xi32>
        %77 = arith.remsi %73, %76 : vector<256x1xi32>
        %c0_i32_61 = arith.constant 0 : i32
        %78 = vector.broadcast %c0_i32_61 : i32 to vector<256x1xi32>
        %79 = arith.cmpi ne, %77, %78 : vector<256x1xi32>
        %c0_i32_62 = arith.constant 0 : i32
        %80 = vector.broadcast %c0_i32_62 : i32 to vector<256x1xi32>
        %81 = arith.cmpi slt, %77, %80 : vector<256x1xi32>
        %c0_i32_63 = arith.constant 0 : i32
        %82 = arith.cmpi slt, %75, %c0_i32_63 : i32
        %83 = vector.broadcast %82 : i1 to vector<256x1xi1>
        %84 = vector.broadcast %83 : vector<256x1xi1> to vector<256x1xi1>
        %85 = arith.xori %81, %84 : vector<256x1xi1>
        %86 = arith.andi %85, %79 : vector<256x1xi1>
        %87 = vector.broadcast %75 : i32 to vector<256x1xi32>
        %88 = arith.addi %77, %87 : vector<256x1xi32>
        %89 = arith.select %86, %88, %77 : vector<256x1xi1>, vector<256x1xi32>
        %c8_i32 = arith.constant 8 : i32
        %90 = vector.broadcast %c8_i32 : i32 to vector<256x1xi32>
        %91 = arith.cmpi slt, %89, %90 : vector<256x1xi32>
        %cst_64 = arith.constant 0.000000e+00 : f32
        %92 = vector.broadcast %cst_64 : f32 to vector<256x64xf32>
        %93 = arith.maximumf %66, %92 : vector<256x64xf32>
        %cst_65 = arith.constant 0.000000e+00 : f32
        %94 = vector.shape_cast %91 : vector<256x1xi1> to vector<256x1xi1>
        %95 = vector.broadcast %94 : vector<256x1xi1> to vector<256x64xi1>
        %96 = vector.broadcast %cst_65 : f32 to vector<256x64xf32>
        %97 = arith.select %95, %93, %96 : vector<256x64xi1>, vector<256x64xf32>
        %98 = arith.truncf %97 : vector<256x64xf32> to vector<256x64xbf16>
        %c48_66 = arith.constant 48 : index
        %c0_67 = arith.constant 0 : index
        %99 = vector.load %arg6[%c48_66, %c0_67] : memref<352x64xbf16, #tpu.memory_space<vmem>>, vector<256x64xbf16>
        tpu.vector_store %arg6[%c48_66, %c0_67], %98 {strides = array<i32>} : memref<352x64xbf16, #tpu.memory_space<vmem>>, vector<256x64xbf16>,
      } else {
      }
      %c14_i32_57 = arith.constant 14 : i32
      %70 = arith.cmpi eq, %arg1, %c14_i32_57 : i32
      %71 = arith.extui %70 : i1 to i32
      %c0_i32_58 = arith.constant 0 : i32
      %72 = arith.cmpi ne, %71, %c0_i32_58 : i32
      scf.if %72 {
        %73 = vector.extract_strided_slice %66 {offsets = [0, 0], sizes = [256, 4], strides = [1, 1]} : vector<256x64xf32> to vector<256x4xf32>
        %c0_59 = arith.constant 0 : index
        %c0_60 = arith.constant 0 : index
        %c0_61 = arith.constant 0 : index
        %74 = vector.load %arg5[%c0_59, %c0_60, %c0_61] : memref<1x256x4xf32, #tpu.memory_space<vmem>>, vector<1x256x4xf32>
        %75 = vector.shape_cast %74 : vector<1x256x4xf32> to vector<256x4xf32>
        %76 = vector.shape_cast %73 : vector<256x4xf32> to vector<1x256x4xf32>
        tpu.vector_store %arg5[%c0_59, %c0_60, %c0_61], %76 {strides = array<i32>} : memref<1x256x4xf32, #tpu.memory_space<vmem>>, vector<1x256x4xf32>,
      } else {
      }
    } else {
    }
    return
  }
  func.func @transform_0(%arg0: i32, %arg1: i32) -> (i32, i32, i32) {
    %c0_i32 = arith.constant 0 : i32
    %c0_i32_0 = arith.constant 0 : i32
    %c0_i32_1 = arith.constant 0 : i32
    return %arg0, %c0_i32, %c0_i32_0 : i32, i32, i32
  }
  func.func @transform_1(%arg0: i32, %arg1: i32) -> (i32, i32, i32, i32) {
    %c0_i32 = arith.constant 0 : i32
    %c0_i32_0 = arith.constant 0 : i32
    %c0_i32_1 = arith.constant 0 : i32
    %c0_i32_2 = arith.constant 0 : i32
    return %arg1, %c0_i32, %c0_i32_0, %c0_i32_1 : i32, i32, i32, i32
  }
  func.func @transform_2(%arg0: i32, %arg1: i32) -> (i32, i32, i32) {
    %c0_i32 = arith.constant 0 : i32
    %c0_i32_0 = arith.constant 0 : i32
    %c0_i32_1 = arith.constant 0 : i32
    return %arg1, %c0_i32, %c0_i32_0 : i32, i32, i32
  }
  func.func @transform_3(%arg0: i32, %arg1: i32) -> (i32, i32, i32) {
    %c0_i32 = arith.constant 0 : i32
    %c0_i32_0 = arith.constant 0 : i32
    %c0_i32_1 = arith.constant 0 : i32
    return %arg0, %c0_i32, %c0_i32_0 : i32, i32, i32
  }
}

</mosaic_0001>

<llo_original>
// kernel: ffdnet_forward.1
$region0: #{ffdnet_forward.1}
  #allocation0 [shape = 'u32[]', space=smem, size = 0x4, offset = 0x4, fixed_abs, tag = 'smem constant byte address 0x4 - core index']
  #allocation1 [shape = 'u32[72,128]{1,0:T(1,128)}', space=vmem, size = 0x9000, scoped, tag = 'internal scratch']
  #allocation2 [shape = 'bf16[352,64]{1,0:T(8,128)(2,1)}', space=vmem, size = 0x16000, scoped, tag = 'scratch operand']
  #allocation3 [shape = 'bf16[352,64]{1,0:T(8,128)(2,1)}', space=vmem, size = 0x16000, scoped, tag = 'scratch operand']
  %s0 = inlined_call_operand.vmem [shape: bf16[2,352,5], index: 0, kind: input, shape index: {}]
  %s1 = inlined_call_operand.hbm [shape: bf16[15,9,64,64], index: 1, kind: input, shape index: {}]
  %s2 = inlined_call_operand.hbm [shape: f32[15,1,64], index: 2, kind: input, shape index: {}]
  %s3 = inlined_call_operand.vmem [shape: f32[2,256,4], index: 3, kind: output, shape index: {}]
  %s4 = sld [smem:[#allocation0]]
  $region81: #{ffdnet_forward.1} parent=0
    _
  %s6 = ssub.s32 1, %s4
  %s7 = scalar_select 0, %s6, %s4
  $region1: #{ffdnet_forward.1} parent=0
    #allocation4 [shape = 'u8[294912]{0}', space=vmem, size = 0x48000, scoped, tag = 'input window, operand 1']
    #allocation5 [shape = 's32[2]{0}', space=sflag, size = 0x8, scoped, tag = 'scoped memory for ffdnet_forward.1']
    #allocation6 [shape = 'u8[1024]{0}', space=vmem, size = 0x400, scoped, tag = 'input window, operand 2']
    #allocation7 [shape = 's32[2]{0}', space=sflag, size = 0x8, scoped, tag = 'scoped memory for ffdnet_forward.1']
    %8 = vsyncpa [#allocation5], 0
    %s9 = scalar_lea.sflag [#allocation5], 1
    %10 = vsyncpa %s9, 0
    %11 = vsyncpa [#allocation7], 0
    %s12 = scalar_lea.sflag [#allocation7], 1
    %13 = vsyncpa %s12, 0
    loop: start=0, step=1, limit=32
    $region2: #{ffdnet_forward.1} parent=1 // loop_pre_header
      _
    $region3: #{ffdnet_forward.1} parent=1 // loop_header
      %s15 = sphi 0, %s19
      %p16 = scmp.ge.s32.totalorder %s15, 32
      %s22 = sphi 0, %s34
      %s23 = sphi 0, %s30
      %s24 = sphi 0, %s22
      %s25 = sphi 0, %s23
      %s26 = sphi 0, %s24
      %s27 = sphi 0, %s25
      %s37 = sphi 0, %s39
      %s40 = sphi 0, %s37
      %s41 = sphi 0, %s40
      %s57 = sphi 0, %s41
      %s63 = sphi 0, %s65
      %s66 = sphi 0, %s63
      %s67 = sphi 0, %s66
      %s83 = sphi 0, %s67
      %s89 = sphi 0, %s91
      %s92 = sphi 0, %s89
      %s93 = sphi 0, %s92
      %s109 = sphi 0, %s93
      %s115 = sphi 0, %s117
      %s118 = sphi 0, %s115
      %s119 = sphi 0, %s118
      %s135 = sphi 0, %s119
    $region4: #{ffdnet_forward.1} parent=1 // loop_header_branch
      %18 = sbr.rel (%p16) target = $region8
    $region5: #{ffdnet_forward.1} parent=1 // loop_body
      %s20 = ssub.s32 %s15, 1
      %s21 = ssub.s32 %s15, 2
      %s28 = sadd.s32 1, %s23
      %p29 = scmp.ge.s32.totalorder %s28, 15
      %s30 = scalar_select %p29, 0, %s28
      %s31 = sadd.s32 1, %s22
      %s32 = scalar_select %p29, %s31, %s22
      %p33 = scmp.ge.s32.totalorder %s32, 2
      %s34 = scalar_select %p33, 0, %s32
      %s35 = ssub.s32 %s22, %s34
      %p36 = scmp.eq.s32.totalorder %s35, 0
      %s38 = sadd.s32 %s37, 1
      %s39 = scalar_select %p36, %s37, %s38
      %p42 = pneg %p36
      %p43 = scmp.eq.s32.totalorder %s15, 29
      %p44 = por %p42, %p43
      %p45 = scmp.ne.s32.totalorder %s37, %s40
      %p46 = scmp.eq.s32.totalorder %s15, 0
      %p47 = por %p45, %p46
      %p48 = scmp.ne.s32.totalorder %s37, %s40
      %p49 = scmp.eq.s32.totalorder %s20, 29
      %p50 = por %p48, %p49
      %p51 = scmp.ne.s32.totalorder %s40, %s41
      %p52 = scmp.eq.s32.totalorder %s20, 0
      %p53 = por %p51, %p52
      %p54 = scmp.ne.s32.totalorder %s40, %s41
      %p55 = scmp.eq.s32.totalorder %s21, 29
      %p56 = por %p54, %p55
      %p58 = scmp.ne.s32.totalorder %s41, %s57
      %p59 = scmp.eq.s32.totalorder %s21, 0
      %p60 = por %p58, %p59
      %s61 = ssub.s32 %s23, %s30
      %p62 = scmp.eq.s32.totalorder %s61, 0
      %s64 = sadd.s32 %s63, 1
      %s65 = scalar_select %p62, %s63, %s64
      %p68 = pneg %p62
      %p69 = scmp.eq.s32.totalorder %s15, 29
      %p70 = por %p68, %p69
      %p71 = scmp.ne.s32.totalorder %s63, %s66
      %p72 = scmp.eq.s32.totalorder %s15, 0
      %p73 = por %p71, %p72
      %p74 = scmp.ne.s32.totalorder %s63, %s66
      %p75 = scmp.eq.s32.totalorder %s20, 29
      %p76 = por %p74, %p75
      %p77 = scmp.ne.s32.totalorder %s66, %s67
      %p78 = scmp.eq.s32.totalorder %s20, 0
      %p79 = por %p77, %p78
      %p80 = scmp.ne.s32.totalorder %s66, %s67
      %p81 = scmp.eq.s32.totalorder %s21, 29
      %p82 = por %p80, %p81
      %p84 = scmp.ne.s32.totalorder %s67, %s83
      %p85 = scmp.eq.s32.totalorder %s21, 0
      %p86 = por %p84, %p85
      %s87 = ssub.s32 %s23, %s30
      %p88 = scmp.eq.s32.totalorder %s87, 0
      %s90 = sadd.s32 %s89, 1
      %s91 = scalar_select %p88, %s89, %s90
      %p94 = pneg %p88
      %p95 = scmp.eq.s32.totalorder %s15, 29
      %p96 = por %p94, %p95
      %p97 = scmp.ne.s32.totalorder %s89, %s92
      %p98 = scmp.eq.s32.totalorder %s15, 0
      %p99 = por %p97, %p98
      %p100 = scmp.ne.s32.totalorder %s89, %s92
      %p101 = scmp.eq.s32.totalorder %s20, 29
      %p102 = por %p100, %p101
      %p103 = scmp.ne.s32.totalorder %s92, %s93
      %p104 = scmp.eq.s32.totalorder %s20, 0
      %p105 = por %p103, %p104
      %p106 = scmp.ne.s32.totalorder %s92, %s93
      %p107 = scmp.eq.s32.totalorder %s21, 29
      %p108 = por %p106, %p107
      %p110 = scmp.ne.s32.totalorder %s93, %s109
      %p111 = scmp.eq.s32.totalorder %s21, 0
      %p112 = por %p110, %p111
      %s113 = ssub.s32 %s22, %s34
      %p114 = scmp.eq.s32.totalorder %s113, 0
      %s116 = sadd.s32 %s115, 1
      %s117 = scalar_select %p114, %s115, %s116
      %p120 = pneg %p114
      %p121 = scmp.eq.s32.totalorder %s15, 29
      %p122 = por %p120, %p121
      %p123 = scmp.ne.s32.totalorder %s115, %s118
      %p124 = scmp.eq.s32.totalorder %s15, 0
      %p125 = por %p123, %p124
      %p126 = scmp.ne.s32.totalorder %s115, %s118
      %p127 = scmp.eq.s32.totalorder %s20, 29
      %p128 = por %p126, %p127
      %p129 = scmp.ne.s32.totalorder %s118, %s119
      %p130 = scmp.eq.s32.totalorder %s20, 0
      %p131 = por %p129, %p130
      %p132 = scmp.ne.s32.totalorder %s118, %s119
      %p133 = scmp.eq.s32.totalorder %s21, 29
      %p134 = por %p132, %p133
      %p136 = scmp.ne.s32.totalorder %s119, %s135
      %p137 = scmp.eq.s32.totalorder %s21, 0
      %p138 = por %p136, %p137
      %p139 = scmp.le.s32.totalorder 1, %s15
      %p140 = scmp.lt.s32.totalorder %s15, 31
      %p141 = pnand %p139, %p140
      %p142 = pneg %p141
      // Predicated region
      $region9: #{ffdnet_forward.1} parent=5 // pred_check
        _
      $region10: #{ffdnet_forward.1} parent=5 // pred_check_branch
        %144 = sbr.rel (%p141) target = $region12
      $region11: #{ffdnet_forward.1} parent=5 // pred_region
        %s145 = ssub.s32 %s15, 1
      $region12: #{ffdnet_forward.1} parent=5 // pred_fallthru
        _
      %p146 = scmp.lt.s32.totalorder %s15, 30
      // Predicated region
      $region13: #{ffdnet_forward.1} parent=5 // pred_check
        %p147 = pneg %p146
      $region14: #{ffdnet_forward.1} parent=5 // pred_check_branch
        %149 = sbr.rel (%p147) target = $region16
      $region15: #{ffdnet_forward.1} parent=5 // pred_region
        // Predicated region
        $region17: #{ffdnet_forward.1} parent=15 // pred_check
          %p150 = pneg %p47
        $region18: #{ffdnet_forward.1} parent=15 // pred_check_branch
          %152 = sbr.rel (%p150) target = $region20
        $region19: #{ffdnet_forward.1} parent=15 // pred_region
          %p153 = scmp.lt.s32.totalorder %s22, 1
          %s154 = scalar_select %p153, %s22, 1
          %s155 = smul.addr %s154, 44
          %s156 = smul.addr %s155, 4
          %s157 = scalar_lea.vmem %s0, %s156
        $region20: #{ffdnet_forward.1} parent=15 // pred_fallthru
          _
        // Predicated region
        $region21: #{ffdnet_forward.1} parent=15 // pred_check
          %p158 = pneg %p73
        $region22: #{ffdnet_forward.1} parent=15 // pred_check_branch
          %160 = sbr.rel (%p158) target = $region24
        $region23: #{ffdnet_forward.1} parent=15 // pred_region
          %s161 = sand.u32 %s63, 1
          %s162 = scalar_lea.sflag [#allocation5], %s161
          %s163 = sand.u32 %s63, 1
          %s164 = smul.addr %s163, 288
          %s165 = scalar_lea.vmem [#allocation4], %s164
          %167 = vsyncadd %s162, 0
          %s168 = smul.addr %s23, 72
          %s169 = smul.addr %s168, 4
          %s170 = scalar_lea.hbm %s1, %s169
          %s171 = sshll.u32 %s170, 4
          %s172 = int_to_ptr.hbm [resolvable:$true] %s171
          %s173 = sshll.u32 %s165, 4
          %s174 = int_to_ptr.vmem [resolvable:$true] %s173
          %179 = dma.hbm_to_vmem [thread:$0]  %s172, 4608, %s174, %s162, 64, 64, 4
        $region24: #{ffdnet_forward.1} parent=15 // pred_fallthru
          _
        // Predicated region
        $region25: #{ffdnet_forward.1} parent=15 // pred_check
          %p180 = pneg %p99
        $region26: #{ffdnet_forward.1} parent=15 // pred_check_branch
          %182 = sbr.rel (%p180) target = $region28
        $region27: #{ffdnet_forward.1} parent=15 // pred_region
          %s183 = sand.u32 %s89, 1
          %s184 = scalar_lea.sflag [#allocation7], %s183
          %s185 = sand.u32 %s89, 1
          %s186 = scalar_lea.vmem [#allocation6], %s185
          %188 = vsyncadd %s184, 0
          %s189 = scalar_lea.hbm %s2, %s23
          %s191 = sshll.u32 %s189, 4
          %s192 = int_to_ptr.hbm [resolvable:$true] %s191
          %s193 = sshll.u32 %s186, 4
          %s194 = int_to_ptr.vmem [resolvable:$true] %s193
          %196 = dma.hbm_to_vmem [thread:$0]  %s192, 16, %s194, %s184
        $region28: #{ffdnet_forward.1} parent=15 // pred_fallthru
          _
      $region16: #{ffdnet_forward.1} parent=5 // pred_fallthru
        _
      %p197 = scmp.le.s32.totalorder 1, %s15
      %p198 = scmp.lt.s32.totalorder %s15, 31
      %p199 = pnand %p197, %p198
      %p200 = pneg %p199
      // Predicated region
      $region29: #{ffdnet_forward.1} parent=5 // pred_check
        _
      $region30: #{ffdnet_forward.1} parent=5 // pred_check_branch
        %202 = sbr.rel (%p199) target = $region32
      $region31: #{ffdnet_forward.1} parent=5 // pred_region
        %s203 = ssub.s32 %s15, 1
        %s204 = sand.u32 %s66, 1
        %s205 = scalar_lea.sflag [#allocation5], %s204
        %s206 = sand.u32 %s66, 1
        %s207 = smul.addr %s206, 288
        %s208 = scalar_lea.vmem [#allocation4], %s207
        // Predicated region
        $region33: #{ffdnet_forward.1} parent=31 // pred_check
          %p209 = pneg %p79
        $region34: #{ffdnet_forward.1} parent=31 // pred_check_branch
          %211 = sbr.rel (%p209) target = $region36
        $region35: #{ffdnet_forward.1} parent=31 // pred_region
          %213 = dma.done %s205, 4608
        $region36: #{ffdnet_forward.1} parent=31 // pred_fallthru
          _
        %s214 = sand.u32 %s92, 1
        %s215 = scalar_lea.sflag [#allocation7], %s214
        %s216 = sand.u32 %s92, 1
        %s217 = scalar_lea.vmem [#allocation6], %s216
        // Predicated region
        $region37: #{ffdnet_forward.1} parent=31 // pred_check
          %p218 = pneg %p105
        $region38: #{ffdnet_forward.1} parent=31 // pred_check_branch
          %220 = sbr.rel (%p218) target = $region40
        $region39: #{ffdnet_forward.1} parent=31 // pred_region
          %222 = dma.done %s215, 16
        $region40: #{ffdnet_forward.1} parent=31 // pred_fallthru
          _
        %p223 = scmp.lt.s32.totalorder %s24, 1
        %s224 = scalar_select %p223, %s24, 1
        %s225 = smul.addr %s224, 44
        %s226 = smul.addr %s225, 4
        %s227 = scalar_lea.vmem %s0, %s226
        %p228 = pneg %p53
        %p229 = pneg %p50
        %s230 = sand.u32 %s66, 1
        %s231 = scalar_lea.sflag [#allocation5], %s230
        %s232 = sand.u32 %s66, 1
        %s233 = smul.addr %s232, 288
        %s234 = scalar_lea.vmem [#allocation4], %s233
        %p235 = pneg %p79
        %p236 = pneg %p76
        %s237 = sand.u32 %s92, 1
        %s238 = scalar_lea.sflag [#allocation7], %s237
        %s239 = sand.u32 %s92, 1
        %s240 = scalar_lea.vmem [#allocation6], %s239
        %p241 = pneg %p105
        %p242 = pneg %p102
        %p243 = pneg %p131
        %p244 = pneg %p128
        %p245 = scmp.lt.s32.totalorder %s24, 1
        %s246 = scalar_select %p245, %s24, 1
        %s247 = smul.addr %s246, 32
        %s248 = smul.addr %s247, 8
        %s249 = scalar_lea.vmem %s3, %s248
        %p250 = scmp.lt.s32.totalorder %s24, 1
        %s251 = scalar_select %p250, %s24, 1
        %s252 = smul.addr %s251, 44
        %s253 = smul.addr %s252, 4
        %s254 = scalar_lea.vmem %s0, %s253
        %p255 = scmp.lt.s32.totalorder %s24, 1
        %s256 = scalar_select %p255, %s24, 1
        %s257 = smul.addr %s256, 32
        %s258 = smul.addr %s257, 8
        %s259 = scalar_lea.vmem %s3, %s258
        %p261 = scmp.eq.s32.totalorder %s25, 0
        // Predicated region
        $region41: #{ffdnet_forward.1} parent=31 // pred_check
          %p262 = pneg %p261
        $region42: #{ffdnet_forward.1} parent=31 // pred_check_branch
          %264 = sbr.rel (%p262) target = $region44
        $region43: #{ffdnet_forward.1} parent=31 // pred_region
          %vm265 = vcmask 519168
          %266 = vst.msk [vmem:[#allocation2] sm:$0xf] %vm265, 0
          %267 = vst.msk [vmem:[#allocation2 + $0x4] sm:$0xf] %vm265, 0
          %268 = vst.msk [vmem:[#allocation2 + $0x8] sm:$0xf] %vm265, 0
          %269 = vst.msk [vmem:[#allocation2 + $0xc] sm:$0xf] %vm265, 0
          %270 = vst.msk [vmem:[#allocation2 + $0x10] sm:$0xf] %vm265, 0
          %271 = vst.msk [vmem:[#allocation2 + $0x14] sm:$0xf] %vm265, 0
          %272 = vst.msk [vmem:[#allocation2 + $0x18] sm:$0xf] %vm265, 0
          %273 = vst.msk [vmem:[#allocation2 + $0x1c] sm:$0xf] %vm265, 0
          %274 = vst.msk [vmem:[#allocation2 + $0x20] sm:$0xf] %vm265, 0
          %275 = vst.msk [vmem:[#allocation2 + $0x24] sm:$0xf] %vm265, 0
          %276 = vst.msk [vmem:[#allocation2 + $0x28] sm:$0xf] %vm265, 0
          %277 = vst.msk [vmem:[#allocation2 + $0x2c] sm:$0xf] %vm265, 0
          %278 = vst.msk [vmem:[#allocation2 + $0x30] sm:$0xf] %vm265, 0
          %279 = vst.msk [vmem:[#allocation2 + $0x34] sm:$0xf] %vm265, 0
          %280 = vst.msk [vmem:[#allocation2 + $0x38] sm:$0xf] %vm265, 0
          %281 = vst.msk [vmem:[#allocation2 + $0x3c] sm:$0xf] %vm265, 0
          %282 = vst.msk [vmem:[#allocation2 + $0x40] sm:$0xf] %vm265, 0
          %283 = vst.msk [vmem:[#allocation2 + $0x44] sm:$0xf] %vm265, 0
          %284 = vst.msk [vmem:[#allocation2 + $0x48] sm:$0xf] %vm265, 0
          %285 = vst.msk [vmem:[#allocation2 + $0x4c] sm:$0xf] %vm265, 0
          %286 = vst.msk [vmem:[#allocation2 + $0x50] sm:$0xf] %vm265, 0
          %287 = vst.msk [vmem:[#allocation2 + $0x54] sm:$0xf] %vm265, 0
          %288 = vst.msk [vmem:[#allocation2 + $0x58] sm:$0xf] %vm265, 0
          %289 = vst.msk [vmem:[#allocation2 + $0x5c] sm:$0xf] %vm265, 0
          %290 = vst.msk [vmem:[#allocation2 + $0x60] sm:$0xf] %vm265, 0
          %291 = vst.msk [vmem:[#allocation2 + $0x64] sm:$0xf] %vm265, 0
          %292 = vst.msk [vmem:[#allocation2 + $0x68] sm:$0xf] %vm265, 0
          %293 = vst.msk [vmem:[#allocation2 + $0x6c] sm:$0xf] %vm265, 0
          %294 = vst.msk [vmem:[#allocation2 + $0x70] sm:$0xf] %vm265, 0
          %295 = vst.msk [vmem:[#allocation2 + $0x74] sm:$0xf] %vm265, 0
          %296 = vst.msk [vmem:[#allocation2 + $0x78] sm:$0xf] %vm265, 0
          %297 = vst.msk [vmem:[#allocation2 + $0x7c] sm:$0xf] %vm265, 0
          %298 = vst.msk [vmem:[#allocation2 + $0x80] sm:$0xf] %vm265, 0
          %299 = vst.msk [vmem:[#allocation2 + $0x84] sm:$0xf] %vm265, 0
          %300 = vst.msk [vmem:[#allocation2 + $0x88] sm:$0xf] %vm265, 0
          %301 = vst.msk [vmem:[#allocation2 + $0x8c] sm:$0xf] %vm265, 0
          %302 = vst.msk [vmem:[#allocation2 + $0x90] sm:$0xf] %vm265, 0
          %303 = vst.msk [vmem:[#allocation2 + $0x94] sm:$0xf] %vm265, 0
          %304 = vst.msk [vmem:[#allocation2 + $0x98] sm:$0xf] %vm265, 0
          %305 = vst.msk [vmem:[#allocation2 + $0x9c] sm:$0xf] %vm265, 0
          %306 = vst.msk [vmem:[#allocation2 + $0xa0] sm:$0xf] %vm265, 0
          %307 = vst.msk [vmem:[#allocation2 + $0xa4] sm:$0xf] %vm265, 0
          %308 = vst.msk [vmem:[#allocation2 + $0xa8] sm:$0xf] %vm265, 0
          %309 = vst.msk [vmem:[#allocation2 + $0xac] sm:$0xf] %vm265, 0
          %v310 = vld [vmem:[%s254] sm:$0xf]
          %v311 = vld [vmem:[%s254 + $0x4] sm:$0xf]
          %v312 = vld [vmem:[%s254 + $0x8] sm:$0xf]
          %v313 = vld [vmem:[%s254 + $0xc] sm:$0xf]
          %v314 = vld [vmem:[%s254 + $0x10] sm:$0xf]
          %v315 = vld [vmem:[%s254 + $0x14] sm:$0xf]
          %v316 = vld [vmem:[%s254 + $0x18] sm:$0xf]
          %v317 = vld [vmem:[%s254 + $0x1c] sm:$0xf]
          %v318 = vld [vmem:[%s254 + $0x20] sm:$0xf]
          %v319 = vld [vmem:[%s254 + $0x24] sm:$0xf]
          %v320 = vld [vmem:[%s254 + $0x28] sm:$0xf]
          %v321 = vld [vmem:[%s254 + $0x2c] sm:$0xf]
          %v322 = vld [vmem:[%s254 + $0x30] sm:$0xf]
          %v323 = vld [vmem:[%s254 + $0x34] sm:$0xf]
          %v324 = vld [vmem:[%s254 + $0x38] sm:$0xf]
          %v325 = vld [vmem:[%s254 + $0x3c] sm:$0xf]
          %v326 = vld [vmem:[%s254 + $0x40] sm:$0xf]
          %v327 = vld [vmem:[%s254 + $0x44] sm:$0xf]
          %v328 = vld [vmem:[%s254 + $0x48] sm:$0xf]
          %v329 = vld [vmem:[%s254 + $0x4c] sm:$0xf]
          %v330 = vld [vmem:[%s254 + $0x50] sm:$0xf]
          %v331 = vld [vmem:[%s254 + $0x54] sm:$0xf]
          %v332 = vld [vmem:[%s254 + $0x58] sm:$0xf]
          %v333 = vld [vmem:[%s254 + $0x5c] sm:$0xf]
          %v334 = vld [vmem:[%s254 + $0x60] sm:$0xf]
          %v335 = vld [vmem:[%s254 + $0x64] sm:$0xf]
          %v336 = vld [vmem:[%s254 + $0x68] sm:$0xf]
          %v337 = vld [vmem:[%s254 + $0x6c] sm:$0xf]
          %v338 = vld [vmem:[%s254 + $0x70] sm:$0xf]
          %v339 = vld [vmem:[%s254 + $0x74] sm:$0xf]
          %v340 = vld [vmem:[%s254 + $0x78] sm:$0xf]
          %v341 = vld [vmem:[%s254 + $0x7c] sm:$0xf]
          %v342 = vld [vmem:[%s254 + $0x80] sm:$0xf]
          %v343 = vld [vmem:[%s254 + $0x84] sm:$0xf]
          %v344 = vld [vmem:[%s254 + $0x88] sm:$0xf]
          %v345 = vld [vmem:[%s254 + $0x8c] sm:$0xf]
          %v346 = vld [vmem:[%s254 + $0x90] sm:$0xf]
          %v347 = vld [vmem:[%s254 + $0x94] sm:$0xf]
          %v348 = vld [vmem:[%s254 + $0x98] sm:$0xf]
          %v349 = vld [vmem:[%s254 + $0x9c] sm:$0xf]
          %v350 = vld [vmem:[%s254 + $0xa0] sm:$0xf]
          %v351 = vld [vmem:[%s254 + $0xa4] sm:$0xf]
          %v352 = vld [vmem:[%s254 + $0xa8] sm:$0xf]
          %v353 = vld [vmem:[%s254 + $0xac] sm:$0xf]
          %vm354 = vcmask 35840
          %355 = vst.msk [vmem:[#allocation2] sm:$0xf] %vm354, %v310
          %356 = vst.msk [vmem:[#allocation2 + $0x4] sm:$0xf] %vm354, %v311
          %357 = vst.msk [vmem:[#allocation2 + $0x8] sm:$0xf] %vm354, %v312
          %358 = vst.msk [vmem:[#allocation2 + $0xc] sm:$0xf] %vm354, %v313
          %359 = vst.msk [vmem:[#allocation2 + $0x10] sm:$0xf] %vm354, %v314
          %360 = vst.msk [vmem:[#allocation2 + $0x14] sm:$0xf] %vm354, %v315
          %361 = vst.msk [vmem:[#allocation2 + $0x18] sm:$0xf] %vm354, %v316
          %362 = vst.msk [vmem:[#allocation2 + $0x1c] sm:$0xf] %vm354, %v317
          %363 = vst.msk [vmem:[#allocation2 + $0x20] sm:$0xf] %vm354, %v318
          %364 = vst.msk [vmem:[#allocation2 + $0x24] sm:$0xf] %vm354, %v319
          %365 = vst.msk [vmem:[#allocation2 + $0x28] sm:$0xf] %vm354, %v320
          %366 = vst.msk [vmem:[#allocation2 + $0x2c] sm:$0xf] %vm354, %v321
          %367 = vst.msk [vmem:[#allocation2 + $0x30] sm:$0xf] %vm354, %v322
          %368 = vst.msk [vmem:[#allocation2 + $0x34] sm:$0xf] %vm354, %v323
          %369 = vst.msk [vmem:[#allocation2 + $0x38] sm:$0xf] %vm354, %v324
          %370 = vst.msk [vmem:[#allocation2 + $0x3c] sm:$0xf] %vm354, %v325
          %371 = vst.msk [vmem:[#allocation2 + $0x40] sm:$0xf] %vm354, %v326
          %372 = vst.msk [vmem:[#allocation2 + $0x44] sm:$0xf] %vm354, %v327
          %373 = vst.msk [vmem:[#allocation2 + $0x48] sm:$0xf] %vm354, %v328
          %374 = vst.msk [vmem:[#allocation2 + $0x4c] sm:$0xf] %vm354, %v329
          %375 = vst.msk [vmem:[#allocation2 + $0x50] sm:$0xf] %vm354, %v330
          %376 = vst.msk [vmem:[#allocation2 + $0x54] sm:$0xf] %vm354, %v331
          %377 = vst.msk [vmem:[#allocation2 + $0x58] sm:$0xf] %vm354, %v332
          %378 = vst.msk [vmem:[#allocation2 + $0x5c] sm:$0xf] %vm354, %v333
          %379 = vst.msk [vmem:[#allocation2 + $0x60] sm:$0xf] %vm354, %v334
          %380 = vst.msk [vmem:[#allocation2 + $0x64] sm:$0xf] %vm354, %v335
          %381 = vst.msk [vmem:[#allocation2 + $0x68] sm:$0xf] %vm354, %v336
          %382 = vst.msk [vmem:[#allocation2 + $0x6c] sm:$0xf] %vm354, %v337
          %383 = vst.msk [vmem:[#allocation2 + $0x70] sm:$0xf] %vm354, %v338
          %384 = vst.msk [vmem:[#allocation2 + $0x74] sm:$0xf] %vm354, %v339
          %385 = vst.msk [vmem:[#allocation2 + $0x78] sm:$0xf] %vm354, %v340
          %386 = vst.msk [vmem:[#allocation2 + $0x7c] sm:$0xf] %vm354, %v341
          %387 = vst.msk [vmem:[#allocation2 + $0x80] sm:$0xf] %vm354, %v342
          %388 = vst.msk [vmem:[#allocation2 + $0x84] sm:$0xf] %vm354, %v343
          %389 = vst.msk [vmem:[#allocation2 + $0x88] sm:$0xf] %vm354, %v344
          %390 = vst.msk [vmem:[#allocation2 + $0x8c] sm:$0xf] %vm354, %v345
          %391 = vst.msk [vmem:[#allocation2 + $0x90] sm:$0xf] %vm354, %v346
          %392 = vst.msk [vmem:[#allocation2 + $0x94] sm:$0xf] %vm354, %v347
          %393 = vst.msk [vmem:[#allocation2 + $0x98] sm:$0xf] %vm354, %v348
          %394 = vst.msk [vmem:[#allocation2 + $0x9c] sm:$0xf] %vm354, %v349
          %395 = vst.msk [vmem:[#allocation2 + $0xa0] sm:$0xf] %vm354, %v350
          %396 = vst.msk [vmem:[#allocation2 + $0xa4] sm:$0xf] %vm354, %v351
          %397 = vst.msk [vmem:[#allocation2 + $0xa8] sm:$0xf] %vm354, %v352
          %398 = vst.msk [vmem:[#allocation2 + $0xac] sm:$0xf] %vm354, %v353
          %399 = vst.msk [vmem:[#allocation3] sm:$0xf] %vm265, 0
          %400 = vst.msk [vmem:[#allocation3 + $0x4] sm:$0xf] %vm265, 0
          %401 = vst.msk [vmem:[#allocation3 + $0x8] sm:$0xf] %vm265, 0
          %402 = vst.msk [vmem:[#allocation3 + $0xc] sm:$0xf] %vm265, 0
          %403 = vst.msk [vmem:[#allocation3 + $0x10] sm:$0xf] %vm265, 0
          %404 = vst.msk [vmem:[#allocation3 + $0x14] sm:$0xf] %vm265, 0
          %405 = vst.msk [vmem:[#allocation3 + $0x98] sm:$0xf] %vm265, 0
          %406 = vst.msk [vmem:[#allocation3 + $0x9c] sm:$0xf] %vm265, 0
          %407 = vst.msk [vmem:[#allocation3 + $0xa0] sm:$0xf] %vm265, 0
          %408 = vst.msk [vmem:[#allocation3 + $0xa4] sm:$0xf] %vm265, 0
          %409 = vst.msk [vmem:[#allocation3 + $0xa8] sm:$0xf] %vm265, 0
          %410 = vst.msk [vmem:[#allocation3 + $0xac] sm:$0xf] %vm265, 0
        $region44: #{ffdnet_forward.1} parent=31 // pred_fallthru
          _
        %p411 = scmp.lt.s32.totalorder %s25, 0
        %s412 = ssub.s32 0, %s25
        %s413 = scalar_select %p411, %s412, %s25
        %s414 = sand.u32 %s413, 1
        %s415 = ssub.s32 0, %s414
        %s416 = scalar_select %p411, %s415, %s414
        %p417 = scmp.ne.s32.totalorder %s416, 0
        %p418 = scmp.lt.s32.totalorder %s416, 0
        %p419 = pnand %p418, %p417
        %p420 = pneg %p419
        %s421 = sadd.s32 %s416, 2
        %s422 = scalar_select %p420, %s421, %s416
        %p423 = scmp.eq.s32.totalorder %s422, 0
        // Predicated region
        $region45: #{ffdnet_forward.1} parent=31 // pred_check
          %p424 = pneg %p423
        $region46: #{ffdnet_forward.1} parent=31 // pred_check_branch
          %426 = sbr.rel (%p424) target = $region48
        $region47: #{ffdnet_forward.1} parent=31 // pred_region
          %v427 = vld [vmem:[#allocation2 + $0x4] sm:$0x8]
          %v428 = vld [vmem:[#allocation2 + $0x8] sm:$0xf]
          %v429 = vld [vmem:[#allocation2 + $0xc] sm:$0xf]
          %v430 = vld [vmem:[#allocation2 + $0x10] sm:$0xf]
          %v431 = vld [vmem:[#allocation2 + $0x14] sm:$0xf]
          %v432 = vld [vmem:[#allocation2 + $0x18] sm:$0xf]
          %v433 = vld [vmem:[#allocation2 + $0x1c] sm:$0xf]
          %v434 = vld [vmem:[#allocation2 + $0x20] sm:$0xf]
          %v435 = vld [vmem:[#allocation2 + $0x24] sm:$0xf]
          %v436 = vld [vmem:[#allocation2 + $0x28] sm:$0xf]
          %v437 = vld [vmem:[#allocation2 + $0x2c] sm:$0xf]
          %v438 = vld [vmem:[#allocation2 + $0x30] sm:$0xf]
          %v439 = vld [vmem:[#allocation2 + $0x34] sm:$0xf]
          %v440 = vld [vmem:[#allocation2 + $0x38] sm:$0xf]
          %v441 = vld [vmem:[#allocation2 + $0x3c] sm:$0xf]
          %v442 = vld [vmem:[#allocation2 + $0x40] sm:$0xf]
          %v443 = vld [vmem:[#allocation2 + $0x44] sm:$0xf]
          %v444 = vld [vmem:[#allocation2 + $0x48] sm:$0xf]
          %v445 = vld [vmem:[#allocation2 + $0x4c] sm:$0xf]
          %v446 = vld [vmem:[#allocation2 + $0x50] sm:$0xf]
          %v447 = vld [vmem:[#allocation2 + $0x54] sm:$0xf]
          %v448 = vld [vmem:[#allocation2 + $0x58] sm:$0xf]
          %v449 = vld [vmem:[#allocation2 + $0x5c] sm:$0xf]
          %v450 = vld [vmem:[#allocation2 + $0x60] sm:$0xf]
          %v451 = vld [vmem:[#allocation2 + $0x64] sm:$0xf]
          %v452 = vld [vmem:[#allocation2 + $0x68] sm:$0xf]
          %v453 = vld [vmem:[#allocation2 + $0x6c] sm:$0xf]
          %v454 = vld [vmem:[#allocation2 + $0x70] sm:$0xf]
          %v455 = vld [vmem:[#allocation2 + $0x74] sm:$0xf]
          %v456 = vld [vmem:[#allocation2 + $0x78] sm:$0xf]
          %v457 = vld [vmem:[#allocation2 + $0x7c] sm:$0xf]
          %v458 = vld [vmem:[#allocation2 + $0x80] sm:$0xf]
          %v459 = vld [vmem:[#allocation2 + $0x84] sm:$0xf]
          %v460 = vld [vmem:[%s208] sm:$0xf]
          %v461 = vld [vmem:[%s208 + $0x4] sm:$0xf]
          %v462 = vld [vmem:[%s208 + $0x8] sm:$0xf]
          %v463 = vld [vmem:[%s208 + $0xc] sm:$0xf]
          %v464 = vld [vmem:[%s208 + $0x10] sm:$0xf]
          %v465 = vld [vmem:[%s208 + $0x14] sm:$0xf]
          %v466 = vld [vmem:[%s208 + $0x18] sm:$0xf]
          %v467 = vld [vmem:[%s208 + $0x1c] sm:$0xf]
          %s468 = scalar_lea.vmem %s208, 32 [#allocation4]
          %v469 = vld [vmem:[%s468] sm:$0xf]
          %v470 = vld [vmem:[%s468 + $0x4] sm:$0xf]
          %v471 = vld [vmem:[%s468 + $0x8] sm:$0xf]
          %v472 = vld [vmem:[%s468 + $0xc] sm:$0xf]
          %v473 = vld [vmem:[%s468 + $0x10] sm:$0xf]
          %v474 = vld [vmem:[%s468 + $0x14] sm:$0xf]
          %v475 = vld [vmem:[%s468 + $0x18] sm:$0xf]
          %v476 = vld [vmem:[%s468 + $0x1c] sm:$0xf]
          %v509 = vunpack.c.l.b16 %v428
          %v510 = vunpack.c.l.b16 %v429
          %v511 = vunpack.c.l.b16 %v430
          %v512 = vunpack.c.l.b16 %v431
          %v513 = vunpack.c.l.b16 %v432
          %v514 = vunpack.c.l.b16 %v433
          %v515 = vunpack.c.l.b16 %v434
          %v516 = vunpack.c.l.b16 %v435
          %v517 = vunpack.c.l.b16 %v436
          %v518 = vunpack.c.l.b16 %v437
          %v519 = vunpack.c.l.b16 %v438
          %v520 = vunpack.c.l.b16 %v439
          %v521 = vunpack.c.l.b16 %v440
          %v522 = vunpack.c.l.b16 %v441
          %v523 = vunpack.c.l.b16 %v442
          %v524 = vunpack.c.l.b16 %v443
          %v525 = vunpack.c.l.b16 %v444
          %v526 = vunpack.c.l.b16 %v445
          %v527 = vunpack.c.l.b16 %v446
          %v528 = vunpack.c.l.b16 %v447
          %v529 = vunpack.c.l.b16 %v448
          %v530 = vunpack.c.l.b16 %v449
          %v531 = vunpack.c.l.b16 %v450
          %v532 = vunpack.c.l.b16 %v451
          %v533 = vunpack.c.l.b16 %v452
          %v534 = vunpack.c.l.b16 %v453
          %v535 = vunpack.c.l.b16 %v454
          %v536 = vunpack.c.l.b16 %v455
          %v537 = vunpack.c.l.b16 %v456
          %v538 = vunpack.c.l.b16 %v457
          %v539 = vunpack.c.l.b16 %v458
          %v540 = vunpack.c.l.b16 %v459
          %v541 = vpack.c.b16 %v510, %v509
          %v542 = vpack.c.b16 %v512, %v511
          %v543 = vpack.c.b16 %v514, %v513
          %v544 = vpack.c.b16 %v516, %v515
          %v545 = vpack.c.b16 %v518, %v517
          %v546 = vpack.c.b16 %v520, %v519
          %v547 = vpack.c.b16 %v522, %v521
          %v548 = vpack.c.b16 %v524, %v523
          %v549 = vpack.c.b16 %v526, %v525
          %v550 = vpack.c.b16 %v528, %v527
          %v551 = vpack.c.b16 %v530, %v529
          %v552 = vpack.c.b16 %v532, %v531
          %v553 = vpack.c.b16 %v534, %v533
          %v554 = vpack.c.b16 %v536, %v535
          %v555 = vpack.c.b16 %v538, %v537
          %v556 = vpack.c.b16 %v540, %v539
          %v565 = vunpack.c.l.b16 %v469
          %v566 = vunpack.c.l.b16 %v470
          %v567 = vunpack.c.l.b16 %v471
          %v568 = vunpack.c.l.b16 %v472
          %v569 = vunpack.c.l.b16 %v473
          %v570 = vunpack.c.l.b16 %v474
          %v571 = vunpack.c.l.b16 %v475
          %v572 = vunpack.c.l.b16 %v476
          %v573 = vpack.c.b16 %v566, %v565
          %v574 = vpack.c.b16 %v568, %v567
          %v575 = vpack.c.b16 %v570, %v569
          %v576 = vpack.c.b16 %v572, %v571
          %vm581 = vcmask 523264
          %v583 = vsel %vm581, %v541, 0
          %v586 = vsel %vm581, %v542, 0
          %v589 = vsel %vm581, %v543, 0
          %v592 = vsel %vm581, %v544, 0
          %v595 = vsel %vm581, %v545, 0
          %v598 = vsel %vm581, %v546, 0
          %v601 = vsel %vm581, %v547, 0
          %v604 = vsel %vm581, %v548, 0
          %v607 = vsel %vm581, %v549, 0
          %v610 = vsel %vm581, %v550, 0
          %v613 = vsel %vm581, %v551, 0
          %v616 = vsel %vm581, %v552, 0
          %v619 = vsel %vm581, %v553, 0
          %v622 = vsel %vm581, %v554, 0
          %v625 = vsel %vm581, %v555, 0
          %v628 = vsel %vm581, %v556, 0
          %630 = vmatpush.bf16.msra.mxu0 0
          %631 = vmatpush.bf16.msra.mxu0 0
          %632 = vmatpush.bf16.msra.mxu0 0
          %633 = vmatpush.bf16.msra.mxu0 0
          %634 = vmatpush.bf16.msra.mxu0 %v576
          %635 = vmatpush.bf16.msra.mxu0 %v575
          %636 = vmatpush.bf16.msra.mxu0 %v574
          %637 = vmatpush.bf16.msra.mxu0 %v573
          %638 = vmatmul.bf16.gmra.mxu0 %v583
          %v639 = vpop.f32.mrf.mxu0
          %v640 = vadd.f32 0.0, %v639
          %v641 = vpop.f32.mrf.mxu0
          %v642 = vadd.f32 0.0, %v641
          %643 = vmatmul.bf16.gmra.mxu0 %v586
          %v644 = vpop.f32.mrf.mxu0
          %v645 = vadd.f32 0.0, %v644
          %v646 = vpop.f32.mrf.mxu0
          %v647 = vadd.f32 0.0, %v646
          %648 = vmatmul.bf16.gmra.mxu0 %v589
          %v649 = vpop.f32.mrf.mxu0
          %v650 = vadd.f32 0.0, %v649
          %v651 = vpop.f32.mrf.mxu0
          %v652 = vadd.f32 0.0, %v651
          %653 = vmatmul.bf16.gmra.mxu0 %v592
          %v654 = vpop.f32.mrf.mxu0
          %v655 = vadd.f32 0.0, %v654
          %v656 = vpop.f32.mrf.mxu0
          %v657 = vadd.f32 0.0, %v656
          %658 = vmatmul.bf16.gmra.mxu0 %v595
          %v659 = vpop.f32.mrf.mxu0
          %v660 = vadd.f32 0.0, %v659
          %v661 = vpop.f32.mrf.mxu0
          %v662 = vadd.f32 0.0, %v661
          %663 = vmatmul.bf16.gmra.mxu0 %v598
          %v664 = vpop.f32.mrf.mxu0
          %v665 = vadd.f32 0.0, %v664
          %v666 = vpop.f32.mrf.mxu0
          %v667 = vadd.f32 0.0, %v666
          %668 = vmatmul.bf16.gmra.mxu0 %v601
          %v669 = vpop.f32.mrf.mxu0
          %v670 = vadd.f32 0.0, %v669
          %v671 = vpop.f32.mrf.mxu0
          %v672 = vadd.f32 0.0, %v671
          %673 = vmatmul.bf16.gmra.mxu0 %v604
          %v674 = vpop.f32.mrf.mxu0
          %v675 = vadd.f32 0.0, %v674
          %v676 = vpop.f32.mrf.mxu0
          %v677 = vadd.f32 0.0, %v676
          %678 = vmatmul.bf16.gmra.mxu0 %v607
          %v679 = vpop.f32.mrf.mxu0
          %v680 = vadd.f32 0.0, %v679
          %v681 = vpop.f32.mrf.mxu0
          %v682 = vadd.f32 0.0, %v681
          %683 = vmatmul.bf16.gmra.mxu0 %v610
          %v684 = vpop.f32.mrf.mxu0
          %v685 = vadd.f32 0.0, %v684
          %v686 = vpop.f32.mrf.mxu0
          %v687 = vadd.f32 0.0, %v686
          %688 = vmatmul.bf16.gmra.mxu0 %v613
          %v689 = vpop.f32.mrf.mxu0
          %v690 = vadd.f32 0.0, %v689
          %v691 = vpop.f32.mrf.mxu0
          %v692 = vadd.f32 0.0, %v691
          %693 = vmatmul.bf16.gmra.mxu0 %v616
          %v694 = vpop.f32.mrf.mxu0
          %v695 = vadd.f32 0.0, %v694
          %v696 = vpop.f32.mrf.mxu0
          %v697 = vadd.f32 0.0, %v696
          %698 = vmatmul.bf16.gmra.mxu0 %v619
          %v699 = vpop.f32.mrf.mxu0
          %v700 = vadd.f32 0.0, %v699
          %v701 = vpop.f32.mrf.mxu0
          %v702 = vadd.f32 0.0, %v701
          %703 = vmatmul.bf16.gmra.mxu0 %v622
          %v704 = vpop.f32.mrf.mxu0
          %v705 = vadd.f32 0.0, %v704
          %v706 = vpop.f32.mrf.mxu0
          %v707 = vadd.f32 0.0, %v706
          %708 = vmatmul.bf16.gmra.mxu0 %v625
          %v709 = vpop.f32.mrf.mxu0
          %v710 = vadd.f32 0.0, %v709
          %v711 = vpop.f32.mrf.mxu0
          %v712 = vadd.f32 0.0, %v711
          %713 = vmatmul.bf16.gmra.mxu0 %v628
          %v714 = vpop.f32.mrf.mxu0
          %v715 = vadd.f32 0.0, %v714
          %v716 = vpop.f32.mrf.mxu0
          %v717 = vadd.f32 0.0, %v716
          %718 = vdwg.mxu0
          %v720 = vunpack.c.l.b16 %v427
          %v721 = vpack.c.b16 %v509, %v720
          %v722 = vpack.c.b16 %v511, %v510
          %v723 = vpack.c.b16 %v513, %v512
          %v724 = vpack.c.b16 %v515, %v514
          %v725 = vpack.c.b16 %v517, %v516
          %v726 = vpack.c.b16 %v519, %v518
          %v727 = vpack.c.b16 %v521, %v520
          %v728 = vpack.c.b16 %v523, %v522
          %v729 = vpack.c.b16 %v525, %v524
          %v730 = vpack.c.b16 %v527, %v526
          %v731 = vpack.c.b16 %v529, %v528
          %v732 = vpack.c.b16 %v531, %v530
          %v733 = vpack.c.b16 %v533, %v532
          %v734 = vpack.c.b16 %v535, %v534
          %v735 = vpack.c.b16 %v537, %v536
          %v736 = vpack.c.b16 %v539, %v538
          %v737 = vpack.c.b16 %v540, %v540
          %vm738 = vsmask.f32 4352
          %v740 = vshrl.u32 %v721, 16
          %v742 = vrot.slane %v740, 3
          %v743 = vshll.u32 %v721, 16
          %v745 = vrot.slane %v743, 4
          %v746 = vor.u32 %v742, %v745
          %v748 = vshrl.u32 %v722, 16
          %v750 = vrot.slane %v748, 3
          %v751 = vshll.u32 %v722, 16
          %v753 = vrot.slane %v751, 4
          %v754 = vor.u32 %v750, %v753
          %v755 = vsel %vm738, %v746, %v754
          %v757 = vshrl.u32 %v723, 16
          %v759 = vrot.slane %v757, 3
          %v760 = vshll.u32 %v723, 16
          %v762 = vrot.slane %v760, 4
          %v763 = vor.u32 %v759, %v762
          %v764 = vsel %vm738, %v754, %v763
          %v766 = vshrl.u32 %v724, 16
          %v768 = vrot.slane %v766, 3
          %v769 = vshll.u32 %v724, 16
          %v771 = vrot.slane %v769, 4
          %v772 = vor.u32 %v768, %v771
          %v773 = vsel %vm738, %v763, %v772
          %v775 = vshrl.u32 %v725, 16
          %v777 = vrot.slane %v775, 3
          %v778 = vshll.u32 %v725, 16
          %v780 = vrot.slane %v778, 4
          %v781 = vor.u32 %v777, %v780
          %v782 = vsel %vm738, %v772, %v781
          %v784 = vshrl.u32 %v726, 16
          %v786 = vrot.slane %v784, 3
          %v787 = vshll.u32 %v726, 16
          %v789 = vrot.slane %v787, 4
          %v790 = vor.u32 %v786, %v789
          %v791 = vsel %vm738, %v781, %v790
          %v793 = vshrl.u32 %v727, 16
          %v795 = vrot.slane %v793, 3
          %v796 = vshll.u32 %v727, 16
          %v798 = vrot.slane %v796, 4
          %v799 = vor.u32 %v795, %v798
          %v800 = vsel %vm738, %v790, %v799
          %v802 = vshrl.u32 %v728, 16
          %v804 = vrot.slane %v802, 3
          %v805 = vshll.u32 %v728, 16
          %v807 = vrot.slane %v805, 4
          %v808 = vor.u32 %v804, %v807
          %v809 = vsel %vm738, %v799, %v808
          %v811 = vshrl.u32 %v729, 16
          %v813 = vrot.slane %v811, 3
          %v814 = vshll.u32 %v729, 16
          %v816 = vrot.slane %v814, 4
          %v817 = vor.u32 %v813, %v816
          %v818 = vsel %vm738, %v808, %v817
          %v820 = vshrl.u32 %v730, 16
          %v822 = vrot.slane %v820, 3
          %v823 = vshll.u32 %v730, 16
          %v825 = vrot.slane %v823, 4
          %v826 = vor.u32 %v822, %v825
          %v827 = vsel %vm738, %v817, %v826
          %v829 = vshrl.u32 %v731, 16
          %v831 = vrot.slane %v829, 3
          %v832 = vshll.u32 %v731, 16
          %v834 = vrot.slane %v832, 4
          %v835 = vor.u32 %v831, %v834
          %v836 = vsel %vm738, %v826, %v835
          %v838 = vshrl.u32 %v732, 16
          %v840 = vrot.slane %v838, 3
          %v841 = vshll.u32 %v732, 16
          %v843 = vrot.slane %v841, 4
          %v844 = vor.u32 %v840, %v843
          %v845 = vsel %vm738, %v835, %v844
          %v847 = vshrl.u32 %v733, 16
          %v849 = vrot.slane %v847, 3
          %v850 = vshll.u32 %v733, 16
          %v852 = vrot.slane %v850, 4
          %v853 = vor.u32 %v849, %v852
          %v854 = vsel %vm738, %v844, %v853
          %v856 = vshrl.u32 %v734, 16
          %v858 = vrot.slane %v856, 3
          %v859 = vshll.u32 %v734, 16
          %v861 = vrot.slane %v859, 4
          %v862 = vor.u32 %v858, %v861
          %v863 = vsel %vm738, %v853, %v862
          %v865 = vshrl.u32 %v735, 16
          %v867 = vrot.slane %v865, 3
          %v868 = vshll.u32 %v735, 16
          %v870 = vrot.slane %v868, 4
          %v871 = vor.u32 %v867, %v870
          %v872 = vsel %vm738, %v862, %v871
          %v874 = vshrl.u32 %v736, 16
          %v876 = vrot.slane %v874, 3
          %v877 = vshll.u32 %v736, 16
          %v879 = vrot.slane %v877, 4
          %v880 = vor.u32 %v876, %v879
          %v881 = vsel %vm738, %v871, %v880
          %v883 = vshrl.u32 %v737, 16
          %v885 = vrot.slane %v883, 3
          %v886 = vshll.u32 %v737, 16
          %v888 = vrot.slane %v886, 4
          %v889 = vor.u32 %v885, %v888
          %v890 = vsel %vm738, %v880, %v889
          %v899 = vunpack.c.l.b16 %v460
          %v900 = vunpack.c.l.b16 %v461
          %v901 = vunpack.c.l.b16 %v462
          %v902 = vunpack.c.l.b16 %v463
          %v903 = vunpack.c.l.b16 %v464
          %v904 = vunpack.c.l.b16 %v465
          %v905 = vunpack.c.l.b16 %v466
          %v906 = vunpack.c.l.b16 %v467
          %v907 = vpack.c.b16 %v900, %v899
          %v908 = vpack.c.b16 %v902, %v901
          %v909 = vpack.c.b16 %v904, %v903
          %v910 = vpack.c.b16 %v906, %v905
          %v916 = vsel %vm581, %v755, 0
          %v919 = vsel %vm581, %v764, 0
          %v922 = vsel %vm581, %v773, 0
          %v925 = vsel %vm581, %v782, 0
          %v928 = vsel %vm581, %v791, 0
          %v931 = vsel %vm581, %v800, 0
          %v934 = vsel %vm581, %v809, 0
          %v937 = vsel %vm581, %v818, 0
          %v940 = vsel %vm581, %v827, 0
          %v943 = vsel %vm581, %v836, 0
          %v946 = vsel %vm581, %v845, 0
          %v949 = vsel %vm581, %v854, 0
          %v952 = vsel %vm581, %v863, 0
          %v955 = vsel %vm581, %v872, 0
          %v958 = vsel %vm581, %v881, 0
          %v961 = vsel %vm581, %v890, 0
          %963 = vmatpush.bf16.msra.mxu0 0
          %964 = vmatpush.bf16.msra.mxu0 0
          %965 = vmatpush.bf16.msra.mxu0 0
          %966 = vmatpush.bf16.msra.mxu0 0
          %967 = vmatpush.bf16.msra.mxu0 %v910
          %968 = vmatpush.bf16.msra.mxu0 %v909
          %969 = vmatpush.bf16.msra.mxu0 %v908
          %970 = vmatpush.bf16.msra.mxu0 %v907
          %971 = vmatmul.bf16.gmra.mxu0 %v916
          %v972 = vpop.f32.mrf.mxu0
          %v973 = vadd.f32 %v640, %v972
          %v974 = vpop.f32.mrf.mxu0
          %v975 = vadd.f32 %v642, %v974
          %976 = vmatmul.bf16.gmra.mxu0 %v919
          %v977 = vpop.f32.mrf.mxu0
          %v978 = vadd.f32 %v645, %v977
          %v979 = vpop.f32.mrf.mxu0
          %v980 = vadd.f32 %v647, %v979
          %981 = vmatmul.bf16.gmra.mxu0 %v922
          %v982 = vpop.f32.mrf.mxu0
          %v983 = vadd.f32 %v650, %v982
          %v984 = vpop.f32.mrf.mxu0
          %v985 = vadd.f32 %v652, %v984
          %986 = vmatmul.bf16.gmra.mxu0 %v925
          %v987 = vpop.f32.mrf.mxu0
          %v988 = vadd.f32 %v655, %v987
          %v989 = vpop.f32.mrf.mxu0
          %v990 = vadd.f32 %v657, %v989
          %991 = vmatmul.bf16.gmra.mxu0 %v928
          %v992 = vpop.f32.mrf.mxu0
          %v993 = vadd.f32 %v660, %v992
          %v994 = vpop.f32.mrf.mxu0
          %v995 = vadd.f32 %v662, %v994
          %996 = vmatmul.bf16.gmra.mxu0 %v931
          %v997 = vpop.f32.mrf.mxu0
          %v998 = vadd.f32 %v665, %v997
          %v999 = vpop.f32.mrf.mxu0
          %v1000 = vadd.f32 %v667, %v999
          %1001 = vmatmul.bf16.gmra.mxu0 %v934
          %v1002 = vpop.f32.mrf.mxu0
          %v1003 = vadd.f32 %v670, %v1002
          %v1004 = vpop.f32.mrf.mxu0
          %v1005 = vadd.f32 %v672, %v1004
          %1006 = vmatmul.bf16.gmra.mxu0 %v937
          %v1007 = vpop.f32.mrf.mxu0
          %v1008 = vadd.f32 %v675, %v1007
          %v1009 = vpop.f32.mrf.mxu0
          %v1010 = vadd.f32 %v677, %v1009
          %1011 = vmatmul.bf16.gmra.mxu0 %v940
          %v1012 = vpop.f32.mrf.mxu0
          %v1013 = vadd.f32 %v680, %v1012
          %v1014 = vpop.f32.mrf.mxu0
          %v1015 = vadd.f32 %v682, %v1014
          %1016 = vmatmul.bf16.gmra.mxu0 %v943
          %v1017 = vpop.f32.mrf.mxu0
          %v1018 = vadd.f32 %v685, %v1017
          %v1019 = vpop.f32.mrf.mxu0
          %v1020 = vadd.f32 %v687, %v1019
          %1021 = vmatmul.bf16.gmra.mxu0 %v946
          %v1022 = vpop.f32.mrf.mxu0
          %v1023 = vadd.f32 %v690, %v1022
          %v1024 = vpop.f32.mrf.mxu0
          %v1025 = vadd.f32 %v692, %v1024
          %1026 = vmatmul.bf16.gmra.mxu0 %v949
          %v1027 = vpop.f32.mrf.mxu0
          %v1028 = vadd.f32 %v695, %v1027
          %v1029 = vpop.f32.mrf.mxu0
          %v1030 = vadd.f32 %v697, %v1029
          %1031 = vmatmul.bf16.gmra.mxu0 %v952
          %v1032 = vpop.f32.mrf.mxu0
          %v1033 = vadd.f32 %v700, %v1032
          %v1034 = vpop.f32.mrf.mxu0
          %v1035 = vadd.f32 %v702, %v1034
          %1036 = vmatmul.bf16.gmra.mxu0 %v955
          %v1037 = vpop.f32.mrf.mxu0
          %v1038 = vadd.f32 %v705, %v1037
          %v1039 = vpop.f32.mrf.mxu0
          %v1040 = vadd.f32 %v707, %v1039
          %1041 = vmatmul.bf16.gmra.mxu0 %v958
          %v1042 = vpop.f32.mrf.mxu0
          %v1043 = vadd.f32 %v710, %v1042
          %v1044 = vpop.f32.mrf.mxu0
          %v1045 = vadd.f32 %v712, %v1044
          %1046 = vmatmul.bf16.gmra.mxu0 %v961
          %v1047 = vpop.f32.mrf.mxu0
          %v1048 = vadd.f32 %v715, %v1047
          %v1049 = vpop.f32.mrf.mxu0
          %v1050 = vadd.f32 %v717, %v1049
          %1051 = vdwg.mxu0
          %v1052 = vld [vmem:[#allocation2 + $0x8] sm:$0xf]
          %v1053 = vld [vmem:[#allocation2 + $0xc] sm:$0xf]
          %v1054 = vld [vmem:[#allocation2 + $0x10] sm:$0xf]
          %v1055 = vld [vmem:[#allocation2 + $0x14] sm:$0xf]
          %v1056 = vld [vmem:[#allocation2 + $0x18] sm:$0xf]
          %v1057 = vld [vmem:[#allocation2 + $0x1c] sm:$0xf]
          %v1058 = vld [vmem:[#allocation2 + $0x20] sm:$0xf]
          %v1059 = vld [vmem:[#allocation2 + $0x24] sm:$0xf]
          %v1060 = vld [vmem:[#allocation2 + $0x28] sm:$0xf]
          %v1061 = vld [vmem:[#allocation2 + $0x2c] sm:$0xf]
          %v1062 = vld [vmem:[#allocation2 + $0x30] sm:$0xf]
          %v1063 = vld [vmem:[#allocation2 + $0x34] sm:$0xf]
          %v1064 = vld [vmem:[#allocation2 + $0x38] sm:$0xf]
          %v1065 = vld [vmem:[#allocation2 + $0x3c] sm:$0xf]
          %v1066 = vld [vmem:[#allocation2 + $0x40] sm:$0xf]
          %v1067 = vld [vmem:[#allocation2 + $0x44] sm:$0xf]
          %v1068 = vld [vmem:[#allocation2 + $0x48] sm:$0xf]
          %v1069 = vld [vmem:[#allocation2 + $0x4c] sm:$0xf]
          %v1070 = vld [vmem:[#allocation2 + $0x50] sm:$0xf]
          %v1071 = vld [vmem:[#allocation2 + $0x54] sm:$0xf]
          %v1072 = vld [vmem:[#allocation2 + $0x58] sm:$0xf]
          %v1073 = vld [vmem:[#allocation2 + $0x5c] sm:$0xf]
          %v1074 = vld [vmem:[#allocation2 + $0x60] sm:$0xf]
          %v1075 = vld [vmem:[#allocation2 + $0x64] sm:$0xf]
          %v1076 = vld [vmem:[#allocation2 + $0x68] sm:$0xf]
          %v1077 = vld [vmem:[#allocation2 + $0x6c] sm:$0xf]
          %v1078 = vld [vmem:[#allocation2 + $0x70] sm:$0xf]
          %v1079 = vld [vmem:[#allocation2 + $0x74] sm:$0xf]
          %v1080 = vld [vmem:[#allocation2 + $0x78] sm:$0xf]
          %v1081 = vld [vmem:[#allocation2 + $0x7c] sm:$0xf]
          %v1082 = vld [vmem:[#allocation2 + $0x80] sm:$0xf]
          %v1083 = vld [vmem:[#allocation2 + $0x84] sm:$0xf]
          %v1084 = vld [vmem:[#allocation2 + $0x88] sm:$0x1]
          %s1085 = scalar_lea.vmem %s208, 64 [#allocation4]
          %v1086 = vld [vmem:[%s1085] sm:$0xf]
          %v1087 = vld [vmem:[%s1085 + $0x4] sm:$0xf]
          %v1088 = vld [vmem:[%s1085 + $0x8] sm:$0xf]
          %v1089 = vld [vmem:[%s1085 + $0xc] sm:$0xf]
          %v1090 = vld [vmem:[%s1085 + $0x10] sm:$0xf]
          %v1091 = vld [vmem:[%s1085 + $0x14] sm:$0xf]
          %v1092 = vld [vmem:[%s1085 + $0x18] sm:$0xf]
          %v1093 = vld [vmem:[%s1085 + $0x1c] sm:$0xf]
          %v1127 = vunpack.c.l.b16 %v1052
          %v1128 = vunpack.c.l.b16 %v1053
          %v1129 = vunpack.c.l.b16 %v1054
          %v1130 = vunpack.c.l.b16 %v1055
          %v1131 = vunpack.c.l.b16 %v1056
          %v1132 = vunpack.c.l.b16 %v1057
          %v1133 = vunpack.c.l.b16 %v1058
          %v1134 = vunpack.c.l.b16 %v1059
          %v1135 = vunpack.c.l.b16 %v1060
          %v1136 = vunpack.c.l.b16 %v1061
          %v1137 = vunpack.c.l.b16 %v1062
          %v1138 = vunpack.c.l.b16 %v1063
          %v1139 = vunpack.c.l.b16 %v1064
          %v1140 = vunpack.c.l.b16 %v1065
          %v1141 = vunpack.c.l.b16 %v1066
          %v1142 = vunpack.c.l.b16 %v1067
          %v1143 = vunpack.c.l.b16 %v1068
          %v1144 = vunpack.c.l.b16 %v1069
          %v1145 = vunpack.c.l.b16 %v1070
          %v1146 = vunpack.c.l.b16 %v1071
          %v1147 = vunpack.c.l.b16 %v1072
          %v1148 = vunpack.c.l.b16 %v1073
          %v1149 = vunpack.c.l.b16 %v1074
          %v1150 = vunpack.c.l.b16 %v1075
          %v1151 = vunpack.c.l.b16 %v1076
          %v1152 = vunpack.c.l.b16 %v1077
          %v1153 = vunpack.c.l.b16 %v1078
          %v1154 = vunpack.c.l.b16 %v1079
          %v1155 = vunpack.c.l.b16 %v1080
          %v1156 = vunpack.c.l.b16 %v1081
          %v1157 = vunpack.c.l.b16 %v1082
          %v1158 = vunpack.c.l.b16 %v1083
          %v1159 = vunpack.c.l.b16 %v1084
          %v1160 = vpack.c.b16 %v1128, %v1127
          %v1161 = vpack.c.b16 %v1130, %v1129
          %v1162 = vpack.c.b16 %v1132, %v1131
          %v1163 = vpack.c.b16 %v1134, %v1133
          %v1164 = vpack.c.b16 %v1136, %v1135
          %v1165 = vpack.c.b16 %v1138, %v1137
          %v1166 = vpack.c.b16 %v1140, %v1139
          %v1167 = vpack.c.b16 %v1142, %v1141
          %v1168 = vpack.c.b16 %v1144, %v1143
          %v1169 = vpack.c.b16 %v1146, %v1145
          %v1170 = vpack.c.b16 %v1148, %v1147
          %v1171 = vpack.c.b16 %v1150, %v1149
          %v1172 = vpack.c.b16 %v1152, %v1151
          %v1173 = vpack.c.b16 %v1154, %v1153
          %v1174 = vpack.c.b16 %v1156, %v1155
          %v1175 = vpack.c.b16 %v1158, %v1157
          %v1176 = vpack.c.b16 %v1159, %v1159
          %vm1177 = vsmask.f32 7424
          %v1179 = vshrl.u32 %v1160, 16
          %v1181 = vshll.u32 %v1160, 16
          %v1183 = vrot.slane %v1181, 1
          %v1184 = vor.u32 %v1179, %v1183
          %v1186 = vshll.u32 %v1161, 16
          %v1188 = vrot.slane %v1186, 1
          %v1189 = vsel %vm1177, %v1184, %v1188
          %v1190 = vshrl.u32 %v1161, 16
          %v1192 = vor.u32 %v1190, %v1188
          %v1194 = vshll.u32 %v1162, 16
          %v1196 = vrot.slane %v1194, 1
          %v1197 = vsel %vm1177, %v1192, %v1196
          %v1198 = vshrl.u32 %v1162, 16
          %v1200 = vor.u32 %v1198, %v1196
          %v1202 = vshll.u32 %v1163, 16
          %v1204 = vrot.slane %v1202, 1
          %v1205 = vsel %vm1177, %v1200, %v1204
          %v1206 = vshrl.u32 %v1163, 16
          %v1208 = vor.u32 %v1206, %v1204
          %v1210 = vshll.u32 %v1164, 16
          %v1212 = vrot.slane %v1210, 1
          %v1213 = vsel %vm1177, %v1208, %v1212
          %v1214 = vshrl.u32 %v1164, 16
          %v1216 = vor.u32 %v1214, %v1212
          %v1218 = vshll.u32 %v1165, 16
          %v1220 = vrot.slane %v1218, 1
          %v1221 = vsel %vm1177, %v1216, %v1220
          %v1222 = vshrl.u32 %v1165, 16
          %v1224 = vor.u32 %v1222, %v1220
          %v1226 = vshll.u32 %v1166, 16
          %v1228 = vrot.slane %v1226, 1
          %v1229 = vsel %vm1177, %v1224, %v1228
          %v1230 = vshrl.u32 %v1166, 16
          %v1232 = vor.u32 %v1230, %v1228
          %v1234 = vshll.u32 %v1167, 16
          %v1236 = vrot.slane %v1234, 1
          %v1237 = vsel %vm1177, %v1232, %v1236
          %v1238 = vshrl.u32 %v1167, 16
          %v1240 = vor.u32 %v1238, %v1236
          %v1242 = vshll.u32 %v1168, 16
          %v1244 = vrot.slane %v1242, 1
          %v1245 = vsel %vm1177, %v1240, %v1244
          %v1246 = vshrl.u32 %v1168, 16
          %v1248 = vor.u32 %v1246, %v1244
          %v1250 = vshll.u32 %v1169, 16
          %v1252 = vrot.slane %v1250, 1
          %v1253 = vsel %vm1177, %v1248, %v1252
          %v1254 = vshrl.u32 %v1169, 16
          %v1256 = vor.u32 %v1254, %v1252
          %v1258 = vshll.u32 %v1170, 16
          %v1260 = vrot.slane %v1258, 1
          %v1261 = vsel %vm1177, %v1256, %v1260
          %v1262 = vshrl.u32 %v1170, 16
          %v1264 = vor.u32 %v1262, %v1260
          %v1266 = vshll.u32 %v1171, 16
          %v1268 = vrot.slane %v1266, 1
          %v1269 = vsel %vm1177, %v1264, %v1268
          %v1270 = vshrl.u32 %v1171, 16
          %v1272 = vor.u32 %v1270, %v1268
          %v1274 = vshll.u32 %v1172, 16
          %v1276 = vrot.slane %v1274, 1
          %v1277 = vsel %vm1177, %v1272, %v1276
          %v1278 = vshrl.u32 %v1172, 16
          %v1280 = vor.u32 %v1278, %v1276
          %v1282 = vshll.u32 %v1173, 16
          %v1284 = vrot.slane %v1282, 1
          %v1285 = vsel %vm1177, %v1280, %v1284
          %v1286 = vshrl.u32 %v1173, 16
          %v1288 = vor.u32 %v1286, %v1284
          %v1290 = vshll.u32 %v1174, 16
          %v1292 = vrot.slane %v1290, 1
          %v1293 = vsel %vm1177, %v1288, %v1292
          %v1294 = vshrl.u32 %v1174, 16
          %v1296 = vor.u32 %v1294, %v1292
          %v1298 = vshll.u32 %v1175, 16
          %v1300 = vrot.slane %v1298, 1
          %v1301 = vsel %vm1177, %v1296, %v1300
          %v1302 = vshrl.u32 %v1175, 16
          %v1304 = vor.u32 %v1302, %v1300
          %v1306 = vshll.u32 %v1176, 16
          %v1308 = vrot.slane %v1306, 1
          %v1309 = vsel %vm1177, %v1304, %v1308
          %v1318 = vunpack.c.l.b16 %v1086
          %v1319 = vunpack.c.l.b16 %v1087
          %v1320 = vunpack.c.l.b16 %v1088
          %v1321 = vunpack.c.l.b16 %v1089
          %v1322 = vunpack.c.l.b16 %v1090
          %v1323 = vunpack.c.l.b16 %v1091
          %v1324 = vunpack.c.l.b16 %v1092
          %v1325 = vunpack.c.l.b16 %v1093
          %v1326 = vpack.c.b16 %v1319, %v1318
          %v1327 = vpack.c.b16 %v1321, %v1320
          %v1328 = vpack.c.b16 %v1323, %v1322
          %v1329 = vpack.c.b16 %v1325, %v1324
          %v1335 = vsel %vm581, %v1189, 0
          %v1338 = vsel %vm581, %v1197, 0
          %v1341 = vsel %vm581, %v1205, 0
          %v1344 = vsel %vm581, %v1213, 0
          %v1347 = vsel %vm581, %v1221, 0
          %v1350 = vsel %vm581, %v1229, 0
          %v1353 = vsel %vm581, %v1237, 0
          %v1356 = vsel %vm581, %v1245, 0
          %v1359 = vsel %vm581, %v1253, 0
          %v1362 = vsel %vm581, %v1261, 0
          %v1365 = vsel %vm581, %v1269, 0
          %v1368 = vsel %vm581, %v1277, 0
          %v1371 = vsel %vm581, %v1285, 0
          %v1374 = vsel %vm581, %v1293, 0
          %v1377 = vsel %vm581, %v1301, 0
          %v1380 = vsel %vm581, %v1309, 0
          %1382 = vmatpush.bf16.msra.mxu0 0
          %1383 = vmatpush.bf16.msra.mxu0 0
          %1384 = vmatpush.bf16.msra.mxu0 0
          %1385 = vmatpush.bf16.msra.mxu0 0
          %1386 = vmatpush.bf16.msra.mxu0 %v1329
          %1387 = vmatpush.bf16.msra.mxu0 %v1328
          %1388 = vmatpush.bf16.msra.mxu0 %v1327
          %1389 = vmatpush.bf16.msra.mxu0 %v1326
          %1390 = vmatmul.bf16.gmra.mxu0 %v1335
          %v1391 = vpop.f32.mrf.mxu0
          %v1392 = vadd.f32 0.0, %v1391
          %v1393 = vpop.f32.mrf.mxu0
          %v1394 = vadd.f32 0.0, %v1393
          %1395 = vmatmul.bf16.gmra.mxu0 %v1338
          %v1396 = vpop.f32.mrf.mxu0
          %v1397 = vadd.f32 0.0, %v1396
          %v1398 = vpop.f32.mrf.mxu0
          %v1399 = vadd.f32 0.0, %v1398
          %1400 = vmatmul.bf16.gmra.mxu0 %v1341
          %v1401 = vpop.f32.mrf.mxu0
          %v1402 = vadd.f32 0.0, %v1401
          %v1403 = vpop.f32.mrf.mxu0
          %v1404 = vadd.f32 0.0, %v1403
          %1405 = vmatmul.bf16.gmra.mxu0 %v1344
          %v1406 = vpop.f32.mrf.mxu0
          %v1407 = vadd.f32 0.0, %v1406
          %v1408 = vpop.f32.mrf.mxu0
          %v1409 = vadd.f32 0.0, %v1408
          %1410 = vmatmul.bf16.gmra.mxu0 %v1347
          %v1411 = vpop.f32.mrf.mxu0
          %v1412 = vadd.f32 0.0, %v1411
          %v1413 = vpop.f32.mrf.mxu0
          %v1414 = vadd.f32 0.0, %v1413
          %1415 = vmatmul.bf16.gmra.mxu0 %v1350
          %v1416 = vpop.f32.mrf.mxu0
          %v1417 = vadd.f32 0.0, %v1416
          %v1418 = vpop.f32.mrf.mxu0
          %v1419 = vadd.f32 0.0, %v1418
          %1420 = vmatmul.bf16.gmra.mxu0 %v1353
          %v1421 = vpop.f32.mrf.mxu0
          %v1422 = vadd.f32 0.0, %v1421
          %v1423 = vpop.f32.mrf.mxu0
          %v1424 = vadd.f32 0.0, %v1423
          %1425 = vmatmul.bf16.gmra.mxu0 %v1356
          %v1426 = vpop.f32.mrf.mxu0
          %v1427 = vadd.f32 0.0, %v1426
          %v1428 = vpop.f32.mrf.mxu0
          %v1429 = vadd.f32 0.0, %v1428
          %1430 = vmatmul.bf16.gmra.mxu0 %v1359
          %v1431 = vpop.f32.mrf.mxu0
          %v1432 = vadd.f32 0.0, %v1431
          %v1433 = vpop.f32.mrf.mxu0
          %v1434 = vadd.f32 0.0, %v1433
          %1435 = vmatmul.bf16.gmra.mxu0 %v1362
          %v1436 = vpop.f32.mrf.mxu0
          %v1437 = vadd.f32 0.0, %v1436
          %v1438 = vpop.f32.mrf.mxu0
          %v1439 = vadd.f32 0.0, %v1438
          %1440 = vmatmul.bf16.gmra.mxu0 %v1365
          %v1441 = vpop.f32.mrf.mxu0
          %v1442 = vadd.f32 0.0, %v1441
          %v1443 = vpop.f32.mrf.mxu0
          %v1444 = vadd.f32 0.0, %v1443
          %1445 = vmatmul.bf16.gmra.mxu0 %v1368
          %v1446 = vpop.f32.mrf.mxu0
          %v1447 = vadd.f32 0.0, %v1446
          %v1448 = vpop.f32.mrf.mxu0
          %v1449 = vadd.f32 0.0, %v1448
          %1450 = vmatmul.bf16.gmra.mxu0 %v1371
          %v1451 = vpop.f32.mrf.mxu0
          %v1452 = vadd.f32 0.0, %v1451
          %v1453 = vpop.f32.mrf.mxu0
          %v1454 = vadd.f32 0.0, %v1453
          %1455 = vmatmul.bf16.gmra.mxu0 %v1374
          %v1456 = vpop.f32.mrf.mxu0
          %v1457 = vadd.f32 0.0, %v1456
          %v1458 = vpop.f32.mrf.mxu0
          %v1459 = vadd.f32 0.0, %v1458
          %1460 = vmatmul.bf16.gmra.mxu0 %v1377
          %v1461 = vpop.f32.mrf.mxu0
          %v1462 = vadd.f32 0.0, %v1461
          %v1463 = vpop.f32.mrf.mxu0
          %v1464 = vadd.f32 0.0, %v1463
          %1465 = vmatmul.bf16.gmra.mxu0 %v1380
          %v1466 = vpop.f32.mrf.mxu0
          %v1467 = vadd.f32 0.0, %v1466
          %v1468 = vpop.f32.mrf.mxu0
          %v1469 = vadd.f32 0.0, %v1468
          %1470 = vdwg.mxu0
          %v1471 = vadd.f32 %v973, %v1392
          %v1472 = vadd.f32 %v975, %v1394
          %v1473 = vadd.f32 %v978, %v1397
          %v1474 = vadd.f32 %v980, %v1399
          %v1475 = vadd.f32 %v983, %v1402
          %v1476 = vadd.f32 %v985, %v1404
          %v1477 = vadd.f32 %v988, %v1407
          %v1478 = vadd.f32 %v990, %v1409
          %v1479 = vadd.f32 %v993, %v1412
          %v1480 = vadd.f32 %v995, %v1414
          %v1481 = vadd.f32 %v998, %v1417
          %v1482 = vadd.f32 %v1000, %v1419
          %v1483 = vadd.f32 %v1003, %v1422
          %v1484 = vadd.f32 %v1005, %v1424
          %v1485 = vadd.f32 %v1008, %v1427
          %v1486 = vadd.f32 %v1010, %v1429
          %v1487 = vadd.f32 %v1013, %v1432
          %v1488 = vadd.f32 %v1015, %v1434
          %v1489 = vadd.f32 %v1018, %v1437
          %v1490 = vadd.f32 %v1020, %v1439
          %v1491 = vadd.f32 %v1023, %v1442
          %v1492 = vadd.f32 %v1025, %v1444
          %v1493 = vadd.f32 %v1028, %v1447
          %v1494 = vadd.f32 %v1030, %v1449
          %v1495 = vadd.f32 %v1033, %v1452
          %v1496 = vadd.f32 %v1035, %v1454
          %v1497 = vadd.f32 %v1038, %v1457
          %v1498 = vadd.f32 %v1040, %v1459
          %v1499 = vadd.f32 %v1043, %v1462
          %v1500 = vadd.f32 %v1045, %v1464
          %v1501 = vadd.f32 %v1048, %v1467
          %v1502 = vadd.f32 %v1050, %v1469
          %v1503 = vld [vmem:[#allocation2 + $0x14] sm:$0x8]
          %v1504 = vld [vmem:[#allocation2 + $0x18] sm:$0xf]
          %v1505 = vld [vmem:[#allocation2 + $0x1c] sm:$0xf]
          %v1506 = vld [vmem:[#allocation2 + $0x20] sm:$0xf]
          %v1507 = vld [vmem:[#allocation2 + $0x24] sm:$0xf]
          %v1508 = vld [vmem:[#allocation2 + $0x28] sm:$0xf]
          %v1509 = vld [vmem:[#allocation2 + $0x2c] sm:$0xf]
          %v1510 = vld [vmem:[#allocation2 + $0x30] sm:$0xf]
          %v1511 = vld [vmem:[#allocation2 + $0x34] sm:$0xf]
          %v1512 = vld [vmem:[#allocation2 + $0x38] sm:$0xf]
          %v1513 = vld [vmem:[#allocation2 + $0x3c] sm:$0xf]
          %v1514 = vld [vmem:[#allocation2 + $0x40] sm:$0xf]
          %v1515 = vld [vmem:[#allocation2 + $0x44] sm:$0xf]
          %v1516 = vld [vmem:[#allocation2 + $0x48] sm:$0xf]
          %v1517 = vld [vmem:[#allocation2 + $0x4c] sm:$0xf]
          %v1518 = vld [vmem:[#allocation2 + $0x50] sm:$0xf]
          %v1519 = vld [vmem:[#allocation2 + $0x54] sm:$0xf]
          %v1520 = vld [vmem:[#allocation2 + $0x58] sm:$0xf]
          %v1521 = vld [vmem:[#allocation2 + $0x5c] sm:$0xf]
          %v1522 = vld [vmem:[#allocation2 + $0x60] sm:$0xf]
          %v1523 = vld [vmem:[#allocation2 + $0x64] sm:$0xf]
          %v1524 = vld [vmem:[#allocation2 + $0x68] sm:$0xf]
          %v1525 = vld [vmem:[#allocation2 + $0x6c] sm:$0xf]
          %v1526 = vld [vmem:[#allocation2 + $0x70] sm:$0xf]
          %v1527 = vld [vmem:[#allocation2 + $0x74] sm:$0xf]
          %v1528 = vld [vmem:[#allocation2 + $0x78] sm:$0xf]
          %v1529 = vld [vmem:[#allocation2 + $0x7c] sm:$0xf]
          %v1530 = vld [vmem:[#allocation2 + $0x80] sm:$0xf]
          %v1531 = vld [vmem:[#allocation2 + $0x84] sm:$0xf]
          %v1532 = vld [vmem:[#allocation2 + $0x88] sm:$0xf]
          %v1533 = vld [vmem:[#allocation2 + $0x8c] sm:$0xf]
          %v1534 = vld [vmem:[#allocation2 + $0x90] sm:$0xf]
          %v1535 = vld [vmem:[#allocation2 + $0x94] sm:$0xf]
          %s1536 = scalar_lea.vmem %s208, 96 [#allocation4]
          %v1537 = vld [vmem:[%s1536] sm:$0xf]
          %v1538 = vld [vmem:[%s1536 + $0x4] sm:$0xf]
          %v1539 = vld [vmem:[%s1536 + $0x8] sm:$0xf]
          %v1540 = vld [vmem:[%s1536 + $0xc] sm:$0xf]
          %v1541 = vld [vmem:[%s1536 + $0x10] sm:$0xf]
          %v1542 = vld [vmem:[%s1536 + $0x14] sm:$0xf]
          %v1543 = vld [vmem:[%s1536 + $0x18] sm:$0xf]
          %v1544 = vld [vmem:[%s1536 + $0x1c] sm:$0xf]
          %v1578 = vunpack.c.l.b16 %v1503
          %v1579 = vunpack.c.l.b16 %v1504
          %v1580 = vunpack.c.l.b16 %v1505
          %v1581 = vunpack.c.l.b16 %v1506
          %v1582 = vunpack.c.l.b16 %v1507
          %v1583 = vunpack.c.l.b16 %v1508
          %v1584 = vunpack.c.l.b16 %v1509
          %v1585 = vunpack.c.l.b16 %v1510
          %v1586 = vunpack.c.l.b16 %v1511
          %v1587 = vunpack.c.l.b16 %v1512
          %v1588 = vunpack.c.l.b16 %v1513
          %v1589 = vunpack.c.l.b16 %v1514
          %v1590 = vunpack.c.l.b16 %v1515
          %v1591 = vunpack.c.l.b16 %v1516
          %v1592 = vunpack.c.l.b16 %v1517
          %v1593 = vunpack.c.l.b16 %v1518
          %v1594 = vunpack.c.l.b16 %v1519
          %v1595 = vunpack.c.l.b16 %v1520
          %v1596 = vunpack.c.l.b16 %v1521
          %v1597 = vunpack.c.l.b16 %v1522
          %v1598 = vunpack.c.l.b16 %v1523
          %v1599 = vunpack.c.l.b16 %v1524
          %v1600 = vunpack.c.l.b16 %v1525
          %v1601 = vunpack.c.l.b16 %v1526
          %v1602 = vunpack.c.l.b16 %v1527
          %v1603 = vunpack.c.l.b16 %v1528
          %v1604 = vunpack.c.l.b16 %v1529
          %v1605 = vunpack.c.l.b16 %v1530
          %v1606 = vunpack.c.l.b16 %v1531
          %v1607 = vunpack.c.l.b16 %v1532
          %v1608 = vunpack.c.l.b16 %v1533
          %v1609 = vunpack.c.l.b16 %v1534
          %v1610 = vunpack.c.l.b16 %v1535
          %v1611 = vpack.c.b16 %v1579, %v1578
          %v1612 = vpack.c.b16 %v1581, %v1580
          %v1613 = vpack.c.b16 %v1583, %v1582
          %v1614 = vpack.c.b16 %v1585, %v1584
          %v1615 = vpack.c.b16 %v1587, %v1586
          %v1616 = vpack.c.b16 %v1589, %v1588
          %v1617 = vpack.c.b16 %v1591, %v1590
          %v1618 = vpack.c.b16 %v1593, %v1592
          %v1619 = vpack.c.b16 %v1595, %v1594
          %v1620 = vpack.c.b16 %v1597, %v1596
          %v1621 = vpack.c.b16 %v1599, %v1598
          %v1622 = vpack.c.b16 %v1601, %v1600
          %v1623 = vpack.c.b16 %v1603, %v1602
          %v1624 = vpack.c.b16 %v1605, %v1604
          %v1625 = vpack.c.b16 %v1607, %v1606
          %v1626 = vpack.c.b16 %v1609, %v1608
          %v1627 = vpack.c.b16 %v1610, %v1610
          %v1629 = vshrl.u32 %v1611, 16
          %v1631 = vrot.slane %v1629, 3
          %v1632 = vshll.u32 %v1611, 16
          %v1634 = vrot.slane %v1632, 4
          %v1635 = vor.u32 %v1631, %v1634
          %v1637 = vshrl.u32 %v1612, 16
          %v1639 = vrot.slane %v1637, 3
          %v1640 = vshll.u32 %v1612, 16
          %v1642 = vrot.slane %v1640, 4
          %v1643 = vor.u32 %v1639, %v1642
          %v1644 = vsel %vm738, %v1635, %v1643
          %v1646 = vshrl.u32 %v1613, 16
          %v1648 = vrot.slane %v1646, 3
          %v1649 = vshll.u32 %v1613, 16
          %v1651 = vrot.slane %v1649, 4
          %v1652 = vor.u32 %v1648, %v1651
          %v1653 = vsel %vm738, %v1643, %v1652
          %v1655 = vshrl.u32 %v1614, 16
          %v1657 = vrot.slane %v1655, 3
          %v1658 = vshll.u32 %v1614, 16
          %v1660 = vrot.slane %v1658, 4
          %v1661 = vor.u32 %v1657, %v1660
          %v1662 = vsel %vm738, %v1652, %v1661
          %v1664 = vshrl.u32 %v1615, 16
          %v1666 = vrot.slane %v1664, 3
          %v1667 = vshll.u32 %v1615, 16
          %v1669 = vrot.slane %v1667, 4
          %v1670 = vor.u32 %v1666, %v1669
          %v1671 = vsel %vm738, %v1661, %v1670
          %v1673 = vshrl.u32 %v1616, 16
          %v1675 = vrot.slane %v1673, 3
          %v1676 = vshll.u32 %v1616, 16
          %v1678 = vrot.slane %v1676, 4
          %v1679 = vor.u32 %v1675, %v1678
          %v1680 = vsel %vm738, %v1670, %v1679
          %v1682 = vshrl.u32 %v1617, 16
          %v1684 = vrot.slane %v1682, 3
          %v1685 = vshll.u32 %v1617, 16
          %v1687 = vrot.slane %v1685, 4
          %v1688 = vor.u32 %v1684, %v1687
          %v1689 = vsel %vm738, %v1679, %v1688
          %v1691 = vshrl.u32 %v1618, 16
          %v1693 = vrot.slane %v1691, 3
          %v1694 = vshll.u32 %v1618, 16
          %v1696 = vrot.slane %v1694, 4
          %v1697 = vor.u32 %v1693, %v1696
          %v1698 = vsel %vm738, %v1688, %v1697
          %v1700 = vshrl.u32 %v1619, 16
          %v1702 = vrot.slane %v1700, 3
          %v1703 = vshll.u32 %v1619, 16
          %v1705 = vrot.slane %v1703, 4
          %v1706 = vor.u32 %v1702, %v1705
          %v1707 = vsel %vm738, %v1697, %v1706
          %v1709 = vshrl.u32 %v1620, 16
          %v1711 = vrot.slane %v1709, 3
          %v1712 = vshll.u32 %v1620, 16
          %v1714 = vrot.slane %v1712, 4
          %v1715 = vor.u32 %v1711, %v1714
          %v1716 = vsel %vm738, %v1706, %v1715
          %v1718 = vshrl.u32 %v1621, 16
          %v1720 = vrot.slane %v1718, 3
          %v1721 = vshll.u32 %v1621, 16
          %v1723 = vrot.slane %v1721, 4
          %v1724 = vor.u32 %v1720, %v1723
          %v1725 = vsel %vm738, %v1715, %v1724
          %v1727 = vshrl.u32 %v1622, 16
          %v1729 = vrot.slane %v1727, 3
          %v1730 = vshll.u32 %v1622, 16
          %v1732 = vrot.slane %v1730, 4
          %v1733 = vor.u32 %v1729, %v1732
          %v1734 = vsel %vm738, %v1724, %v1733
          %v1736 = vshrl.u32 %v1623, 16
          %v1738 = vrot.slane %v1736, 3
          %v1739 = vshll.u32 %v1623, 16
          %v1741 = vrot.slane %v1739, 4
          %v1742 = vor.u32 %v1738, %v1741
          %v1743 = vsel %vm738, %v1733, %v1742
          %v1745 = vshrl.u32 %v1624, 16
          %v1747 = vrot.slane %v1745, 3
          %v1748 = vshll.u32 %v1624, 16
          %v1750 = vrot.slane %v1748, 4
          %v1751 = vor.u32 %v1747, %v1750
          %v1752 = vsel %vm738, %v1742, %v1751
          %v1754 = vshrl.u32 %v1625, 16
          %v1756 = vrot.slane %v1754, 3
          %v1757 = vshll.u32 %v1625, 16
          %v1759 = vrot.slane %v1757, 4
          %v1760 = vor.u32 %v1756, %v1759
          %v1761 = vsel %vm738, %v1751, %v1760
          %v1763 = vshrl.u32 %v1626, 16
          %v1765 = vrot.slane %v1763, 3
          %v1766 = vshll.u32 %v1626, 16
          %v1768 = vrot.slane %v1766, 4
          %v1769 = vor.u32 %v1765, %v1768
          %v1770 = vsel %vm738, %v1760, %v1769
          %v1772 = vshrl.u32 %v1627, 16
          %v1774 = vrot.slane %v1772, 3
          %v1775 = vshll.u32 %v1627, 16
          %v1777 = vrot.slane %v1775, 4
          %v1778 = vor.u32 %v1774, %v1777
          %v1779 = vsel %vm738, %v1769, %v1778
          %v1788 = vunpack.c.l.b16 %v1537
          %v1789 = vunpack.c.l.b16 %v1538
          %v1790 = vunpack.c.l.b16 %v1539
          %v1791 = vunpack.c.l.b16 %v1540
          %v1792 = vunpack.c.l.b16 %v1541
          %v1793 = vunpack.c.l.b16 %v1542
          %v1794 = vunpack.c.l.b16 %v1543
          %v1795 = vunpack.c.l.b16 %v1544
          %v1796 = vpack.c.b16 %v1789, %v1788
          %v1797 = vpack.c.b16 %v1791, %v1790
          %v1798 = vpack.c.b16 %v1793, %v1792
          %v1799 = vpack.c.b16 %v1795, %v1794
          %v1805 = vsel %vm581, %v1644, 0
          %v1808 = vsel %vm581, %v1653, 0
          %v1811 = vsel %vm581, %v1662, 0
          %v1814 = vsel %vm581, %v1671, 0
          %v1817 = vsel %vm581, %v1680, 0
          %v1820 = vsel %vm581, %v1689, 0
          %v1823 = vsel %vm581, %v1698, 0
          %v1826 = vsel %vm581, %v1707, 0
          %v1829 = vsel %vm581, %v1716, 0
          %v1832 = vsel %vm581, %v1725, 0
          %v1835 = vsel %vm581, %v1734, 0
          %v1838 = vsel %vm581, %v1743, 0
          %v1841 = vsel %vm581, %v1752, 0
          %v1844 = vsel %vm581, %v1761, 0
          %v1847 = vsel %vm581, %v1770, 0
          %v1850 = vsel %vm581, %v1779, 0
          %1852 = vmatpush.bf16.msra.mxu0 0
          %1853 = vmatpush.bf16.msra.mxu0 0
          %1854 = vmatpush.bf16.msra.mxu0 0
          %1855 = vmatpush.bf16.msra.mxu0 0
          %1856 = vmatpush.bf16.msra.mxu0 %v1799
          %1857 = vmatpush.bf16.msra.mxu0 %v1798
          %1858 = vmatpush.bf16.msra.mxu0 %v1797
          %1859 = vmatpush.bf16.msra.mxu0 %v1796
          %1860 = vmatmul.bf16.gmra.mxu0 %v1805
          %v1861 = vpop.f32.mrf.mxu0
          %v1862 = vadd.f32 0.0, %v1861
          %v1863 = vpop.f32.mrf.mxu0
          %v1864 = vadd.f32 0.0, %v1863
          %1865 = vmatmul.bf16.gmra.mxu0 %v1808
          %v1866 = vpop.f32.mrf.mxu0
          %v1867 = vadd.f32 0.0, %v1866
          %v1868 = vpop.f32.mrf.mxu0
          %v1869 = vadd.f32 0.0, %v1868
          %1870 = vmatmul.bf16.gmra.mxu0 %v1811
          %v1871 = vpop.f32.mrf.mxu0
          %v1872 = vadd.f32 0.0, %v1871
          %v1873 = vpop.f32.mrf.mxu0
          %v1874 = vadd.f32 0.0, %v1873
          %1875 = vmatmul.bf16.gmra.mxu0 %v1814
          %v1876 = vpop.f32.mrf.mxu0
          %v1877 = vadd.f32 0.0, %v1876
          %v1878 = vpop.f32.mrf.mxu0
          %v1879 = vadd.f32 0.0, %v1878
          %1880 = vmatmul.bf16.gmra.mxu0 %v1817
          %v1881 = vpop.f32.mrf.mxu0
          %v1882 = vadd.f32 0.0, %v1881
          %v1883 = vpop.f32.mrf.mxu0
          %v1884 = vadd.f32 0.0, %v1883
          %1885 = vmatmul.bf16.gmra.mxu0 %v1820
          %v1886 = vpop.f32.mrf.mxu0
          %v1887 = vadd.f32 0.0, %v1886
          %v1888 = vpop.f32.mrf.mxu0
          %v1889 = vadd.f32 0.0, %v1888
          %1890 = vmatmul.bf16.gmra.mxu0 %v1823
          %v1891 = vpop.f32.mrf.mxu0
          %v1892 = vadd.f32 0.0, %v1891
          %v1893 = vpop.f32.mrf.mxu0
          %v1894 = vadd.f32 0.0, %v1893
          %1895 = vmatmul.bf16.gmra.mxu0 %v1826
          %v1896 = vpop.f32.mrf.mxu0
          %v1897 = vadd.f32 0.0, %v1896
          %v1898 = vpop.f32.mrf.mxu0
          %v1899 = vadd.f32 0.0, %v1898
          %1900 = vmatmul.bf16.gmra.mxu0 %v1829
          %v1901 = vpop.f32.mrf.mxu0
          %v1902 = vadd.f32 0.0, %v1901
          %v1903 = vpop.f32.mrf.mxu0
          %v1904 = vadd.f32 0.0, %v1903
          %1905 = vmatmul.bf16.gmra.mxu0 %v1832
          %v1906 = vpop.f32.mrf.mxu0
          %v1907 = vadd.f32 0.0, %v1906
          %v1908 = vpop.f32.mrf.mxu0
          %v1909 = vadd.f32 0.0, %v1908
          %1910 = vmatmul.bf16.gmra.mxu0 %v1835
          %v1911 = vpop.f32.mrf.mxu0
          %v1912 = vadd.f32 0.0, %v1911
          %v1913 = vpop.f32.mrf.mxu0
          %v1914 = vadd.f32 0.0, %v1913
          %1915 = vmatmul.bf16.gmra.mxu0 %v1838
          %v1916 = vpop.f32.mrf.mxu0
          %v1917 = vadd.f32 0.0, %v1916
          %v1918 = vpop.f32.mrf.mxu0
          %v1919 = vadd.f32 0.0, %v1918
          %1920 = vmatmul.bf16.gmra.mxu0 %v1841
          %v1921 = vpop.f32.mrf.mxu0
          %v1922 = vadd.f32 0.0, %v1921
          %v1923 = vpop.f32.mrf.mxu0
          %v1924 = vadd.f32 0.0, %v1923
          %1925 = vmatmul.bf16.gmra.mxu0 %v1844
          %v1926 = vpop.f32.mrf.mxu0
          %v1927 = vadd.f32 0.0, %v1926
          %v1928 = vpop.f32.mrf.mxu0
          %v1929 = vadd.f32 0.0, %v1928
          %1930 = vmatmul.bf16.gmra.mxu0 %v1847
          %v1931 = vpop.f32.mrf.mxu0
          %v1932 = vadd.f32 0.0, %v1931
          %v1933 = vpop.f32.mrf.mxu0
          %v1934 = vadd.f32 0.0, %v1933
          %1935 = vmatmul.bf16.gmra.mxu0 %v1850
          %v1936 = vpop.f32.mrf.mxu0
          %v1937 = vadd.f32 0.0, %v1936
          %v1938 = vpop.f32.mrf.mxu0
          %v1939 = vadd.f32 0.0, %v1938
          %1940 = vdwg.mxu0
          %v1941 = vadd.f32 %v1471, %v1862
          %v1942 = vadd.f32 %v1472, %v1864
          %v1943 = vadd.f32 %v1473, %v1867
          %v1944 = vadd.f32 %v1474, %v1869
          %v1945 = vadd.f32 %v1475, %v1872
          %v1946 = vadd.f32 %v1476, %v1874
          %v1947 = vadd.f32 %v1477, %v1877
          %v1948 = vadd.f32 %v1478, %v1879
          %v1949 = vadd.f32 %v1479, %v1882
          %v1950 = vadd.f32 %v1480, %v1884
          %v1951 = vadd.f32 %v1481, %v1887
          %v1952 = vadd.f32 %v1482, %v1889
          %v1953 = vadd.f32 %v1483, %v1892
          %v1954 = vadd.f32 %v1484, %v1894
          %v1955 = vadd.f32 %v1485, %v1897
          %v1956 = vadd.f32 %v1486, %v1899
          %v1957 = vadd.f32 %v1487, %v1902
          %v1958 = vadd.f32 %v1488, %v1904
          %v1959 = vadd.f32 %v1489, %v1907
          %v1960 = vadd.f32 %v1490, %v1909
          %v1961 = vadd.f32 %v1491, %v1912
          %v1962 = vadd.f32 %v1492, %v1914
          %v1963 = vadd.f32 %v1493, %v1917
          %v1964 = vadd.f32 %v1494, %v1919
          %v1965 = vadd.f32 %v1495, %v1922
          %v1966 = vadd.f32 %v1496, %v1924
          %v1967 = vadd.f32 %v1497, %v1927
          %v1968 = vadd.f32 %v1498, %v1929
          %v1969 = vadd.f32 %v1499, %v1932
          %v1970 = vadd.f32 %v1500, %v1934
          %v1971 = vadd.f32 %v1501, %v1937
          %v1972 = vadd.f32 %v1502, %v1939
          %s1973 = scalar_lea.vmem %s208, 128 [#allocation4]
          %v1974 = vld [vmem:[%s1973] sm:$0xf]
          %v1975 = vld [vmem:[%s1973 + $0x4] sm:$0xf]
          %v1976 = vld [vmem:[%s1973 + $0x8] sm:$0xf]
          %v1977 = vld [vmem:[%s1973 + $0xc] sm:$0xf]
          %v1978 = vld [vmem:[%s1973 + $0x10] sm:$0xf]
          %v1979 = vld [vmem:[%s1973 + $0x14] sm:$0xf]
          %v1980 = vld [vmem:[%s1973 + $0x18] sm:$0xf]
          %v1981 = vld [vmem:[%s1973 + $0x1c] sm:$0xf]
          %v1982 = vpack.c.b16 %v1580, %v1579
          %v1983 = vpack.c.b16 %v1582, %v1581
          %v1984 = vpack.c.b16 %v1584, %v1583
          %v1985 = vpack.c.b16 %v1586, %v1585
          %v1986 = vpack.c.b16 %v1588, %v1587
          %v1987 = vpack.c.b16 %v1590, %v1589
          %v1988 = vpack.c.b16 %v1592, %v1591
          %v1989 = vpack.c.b16 %v1594, %v1593
          %v1990 = vpack.c.b16 %v1596, %v1595
          %v1991 = vpack.c.b16 %v1598, %v1597
          %v1992 = vpack.c.b16 %v1600, %v1599
          %v1993 = vpack.c.b16 %v1602, %v1601
          %v1994 = vpack.c.b16 %v1604, %v1603
          %v1995 = vpack.c.b16 %v1606, %v1605
          %v1996 = vpack.c.b16 %v1608, %v1607
          %v1997 = vpack.c.b16 %v1610, %v1609
          %v2006 = vunpack.c.l.b16 %v1974
          %v2007 = vunpack.c.l.b16 %v1975
          %v2008 = vunpack.c.l.b16 %v1976
          %v2009 = vunpack.c.l.b16 %v1977
          %v2010 = vunpack.c.l.b16 %v1978
          %v2011 = vunpack.c.l.b16 %v1979
          %v2012 = vunpack.c.l.b16 %v1980
          %v2013 = vunpack.c.l.b16 %v1981
          %v2014 = vpack.c.b16 %v2007, %v2006
          %v2015 = vpack.c.b16 %v2009, %v2008
          %v2016 = vpack.c.b16 %v2011, %v2010
          %v2017 = vpack.c.b16 %v2013, %v2012
          %v2023 = vsel %vm581, %v1982, 0
          %v2026 = vsel %vm581, %v1983, 0
          %v2029 = vsel %vm581, %v1984, 0
          %v2032 = vsel %vm581, %v1985, 0
          %v2035 = vsel %vm581, %v1986, 0
          %v2038 = vsel %vm581, %v1987, 0
          %v2041 = vsel %vm581, %v1988, 0
          %v2044 = vsel %vm581, %v1989, 0
          %v2047 = vsel %vm581, %v1990, 0
          %v2050 = vsel %vm581, %v1991, 0
          %v2053 = vsel %vm581, %v1992, 0
          %v2056 = vsel %vm581, %v1993, 0
          %v2059 = vsel %vm581, %v1994, 0
          %v2062 = vsel %vm581, %v1995, 0
          %v2065 = vsel %vm581, %v1996, 0
          %v2068 = vsel %vm581, %v1997, 0
          %2070 = vmatpush.bf16.msra.mxu0 0
          %2071 = vmatpush.bf16.msra.mxu0 0
          %2072 = vmatpush.bf16.msra.mxu0 0
          %2073 = vmatpush.bf16.msra.mxu0 0
          %2074 = vmatpush.bf16.msra.mxu0 %v2017
          %2075 = vmatpush.bf16.msra.mxu0 %v2016
          %2076 = vmatpush.bf16.msra.mxu0 %v2015
          %2077 = vmatpush.bf16.msra.mxu0 %v2014
          %2078 = vmatmul.bf16.gmra.mxu0 %v2023
          %v2079 = vpop.f32.mrf.mxu0
          %v2080 = vadd.f32 0.0, %v2079
          %v2081 = vpop.f32.mrf.mxu0
          %v2082 = vadd.f32 0.0, %v2081
          %2083 = vmatmul.bf16.gmra.mxu0 %v2026
          %v2084 = vpop.f32.mrf.mxu0
          %v2085 = vadd.f32 0.0, %v2084
          %v2086 = vpop.f32.mrf.mxu0
          %v2087 = vadd.f32 0.0, %v2086
          %2088 = vmatmul.bf16.gmra.mxu0 %v2029
          %v2089 = vpop.f32.mrf.mxu0
          %v2090 = vadd.f32 0.0, %v2089
          %v2091 = vpop.f32.mrf.mxu0
          %v2092 = vadd.f32 0.0, %v2091
          %2093 = vmatmul.bf16.gmra.mxu0 %v2032
          %v2094 = vpop.f32.mrf.mxu0
          %v2095 = vadd.f32 0.0, %v2094
          %v2096 = vpop.f32.mrf.mxu0
          %v2097 = vadd.f32 0.0, %v2096
          %2098 = vmatmul.bf16.gmra.mxu0 %v2035
          %v2099 = vpop.f32.mrf.mxu0
          %v2100 = vadd.f32 0.0, %v2099
          %v2101 = vpop.f32.mrf.mxu0
          %v2102 = vadd.f32 0.0, %v2101
          %2103 = vmatmul.bf16.gmra.mxu0 %v2038
          %v2104 = vpop.f32.mrf.mxu0
          %v2105 = vadd.f32 0.0, %v2104
          %v2106 = vpop.f32.mrf.mxu0
          %v2107 = vadd.f32 0.0, %v2106
          %2108 = vmatmul.bf16.gmra.mxu0 %v2041
          %v2109 = vpop.f32.mrf.mxu0
          %v2110 = vadd.f32 0.0, %v2109
          %v2111 = vpop.f32.mrf.mxu0
          %v2112 = vadd.f32 0.0, %v2111
          %2113 = vmatmul.bf16.gmra.mxu0 %v2044
          %v2114 = vpop.f32.mrf.mxu0
          %v2115 = vadd.f32 0.0, %v2114
          %v2116 = vpop.f32.mrf.mxu0
          %v2117 = vadd.f32 0.0, %v2116
          %2118 = vmatmul.bf16.gmra.mxu0 %v2047
          %v2119 = vpop.f32.mrf.mxu0
          %v2120 = vadd.f32 0.0, %v2119
          %v2121 = vpop.f32.mrf.mxu0
          %v2122 = vadd.f32 0.0, %v2121
          %2123 = vmatmul.bf16.gmra.mxu0 %v2050
          %v2124 = vpop.f32.mrf.mxu0
          %v2125 = vadd.f32 0.0, %v2124
          %v2126 = vpop.f32.mrf.mxu0
          %v2127 = vadd.f32 0.0, %v2126
          %2128 = vmatmul.bf16.gmra.mxu0 %v2053
          %v2129 = vpop.f32.mrf.mxu0
          %v2130 = vadd.f32 0.0, %v2129
          %v2131 = vpop.f32.mrf.mxu0
          %v2132 = vadd.f32 0.0, %v2131
          %2133 = vmatmul.bf16.gmra.mxu0 %v2056
          %v2134 = vpop.f32.mrf.mxu0
          %v2135 = vadd.f32 0.0, %v2134
          %v2136 = vpop.f32.mrf.mxu0
          %v2137 = vadd.f32 0.0, %v2136
          %2138 = vmatmul.bf16.gmra.mxu0 %v2059
          %v2139 = vpop.f32.mrf.mxu0
          %v2140 = vadd.f32 0.0, %v2139
          %v2141 = vpop.f32.mrf.mxu0
          %v2142 = vadd.f32 0.0, %v2141
          %2143 = vmatmul.bf16.gmra.mxu0 %v2062
          %v2144 = vpop.f32.mrf.mxu0
          %v2145 = vadd.f32 0.0, %v2144
          %v2146 = vpop.f32.mrf.mxu0
          %v2147 = vadd.f32 0.0, %v2146
          %2148 = vmatmul.bf16.gmra.mxu0 %v2065
          %v2149 = vpop.f32.mrf.mxu0
          %v2150 = vadd.f32 0.0, %v2149
          %v2151 = vpop.f32.mrf.mxu0
          %v2152 = vadd.f32 0.0, %v2151
          %2153 = vmatmul.bf16.gmra.mxu0 %v2068
          %v2154 = vpop.f32.mrf.mxu0
          %v2155 = vadd.f32 0.0, %v2154
          %v2156 = vpop.f32.mrf.mxu0
          %v2157 = vadd.f32 0.0, %v2156
          %2158 = vdwg.mxu0
          %v2159 = vadd.f32 %v1941, %v2080
          %v2160 = vadd.f32 %v1942, %v2082
          %v2161 = vadd.f32 %v1943, %v2085
          %v2162 = vadd.f32 %v1944, %v2087
          %v2163 = vadd.f32 %v1945, %v2090
          %v2164 = vadd.f32 %v1946, %v2092
          %v2165 = vadd.f32 %v1947, %v2095
          %v2166 = vadd.f32 %v1948, %v2097
          %v2167 = vadd.f32 %v1949, %v2100
          %v2168 = vadd.f32 %v1950, %v2102
          %v2169 = vadd.f32 %v1951, %v2105
          %v2170 = vadd.f32 %v1952, %v2107
          %v2171 = vadd.f32 %v1953, %v2110
          %v2172 = vadd.f32 %v1954, %v2112
          %v2173 = vadd.f32 %v1955, %v2115
          %v2174 = vadd.f32 %v1956, %v2117
          %v2175 = vadd.f32 %v1957, %v2120
          %v2176 = vadd.f32 %v1958, %v2122
          %v2177 = vadd.f32 %v1959, %v2125
          %v2178 = vadd.f32 %v1960, %v2127
          %v2179 = vadd.f32 %v1961, %v2130
          %v2180 = vadd.f32 %v1962, %v2132
          %v2181 = vadd.f32 %v1963, %v2135
          %v2182 = vadd.f32 %v1964, %v2137
          %v2183 = vadd.f32 %v1965, %v2140
          %v2184 = vadd.f32 %v1966, %v2142
          %v2185 = vadd.f32 %v1967, %v2145
          %v2186 = vadd.f32 %v1968, %v2147
          %v2187 = vadd.f32 %v1969, %v2150
          %v2188 = vadd.f32 %v1970, %v2152
          %v2189 = vadd.f32 %v1971, %v2155
          %v2190 = vadd.f32 %v1972, %v2157
          %v2191 = vld [vmem:[#allocation2 + $0x18] sm:$0xf]
          %v2192 = vld [vmem:[#allocation2 + $0x1c] sm:$0xf]
          %v2193 = vld [vmem:[#allocation2 + $0x20] sm:$0xf]
          %v2194 = vld [vmem:[#allocation2 + $0x24] sm:$0xf]
          %v2195 = vld [vmem:[#allocation2 + $0x28] sm:$0xf]
          %v2196 = vld [vmem:[#allocation2 + $0x2c] sm:$0xf]
          %v2197 = vld [vmem:[#allocation2 + $0x30] sm:$0xf]
          %v2198 = vld [vmem:[#allocation2 + $0x34] sm:$0xf]
          %v2199 = vld [vmem:[#allocation2 + $0x38] sm:$0xf]
          %v2200 = vld [vmem:[#allocation2 + $0x3c] sm:$0xf]
          %v2201 = vld [vmem:[#allocation2 + $0x40] sm:$0xf]
          %v2202 = vld [vmem:[#allocation2 + $0x44] sm:$0xf]
          %v2203 = vld [vmem:[#allocation2 + $0x48] sm:$0xf]
          %v2204 = vld [vmem:[#allocation2 + $0x4c] sm:$0xf]
          %v2205 = vld [vmem:[#allocation2 + $0x50] sm:$0xf]
          %v2206 = vld [vmem:[#allocation2 + $0x54] sm:$0xf]
          %v2207 = vld [vmem:[#allocation2 + $0x58] sm:$0xf]
          %v2208 = vld [vmem:[#allocation2 + $0x5c] sm:$0xf]
          %v2209 = vld [vmem:[#allocation2 + $0x60] sm:$0xf]
          %v2210 = vld [vmem:[#allocation2 + $0x64] sm:$0xf]
          %v2211 = vld [vmem:[#allocation2 + $0x68] sm:$0xf]
          %v2212 = vld [vmem:[#allocation2 + $0x6c] sm:$0xf]
          %v2213 = vld [vmem:[#allocation2 + $0x70] sm:$0xf]
          %v2214 = vld [vmem:[#allocation2 + $0x74] sm:$0xf]
          %v2215 = vld [vmem:[#allocation2 + $0x78] sm:$0xf]
          %v2216 = vld [vmem:[#allocation2 + $0x7c] sm:$0xf]
          %v2217 = vld [vmem:[#allocation2 + $0x80] sm:$0xf]
          %v2218 = vld [vmem:[#allocation2 + $0x84] sm:$0xf]
          %v2219 = vld [vmem:[#allocation2 + $0x88] sm:$0xf]
          %v2220 = vld [vmem:[#allocation2 + $0x8c] sm:$0xf]
          %v2221 = vld [vmem:[#allocation2 + $0x90] sm:$0xf]
          %v2222 = vld [vmem:[#allocation2 + $0x94] sm:$0xf]
          %v2223 = vld [vmem:[#allocation2 + $0x98] sm:$0x1]
          %s2224 = scalar_lea.vmem %s208, 160 [#allocation4]
          %v2225 = vld [vmem:[%s2224] sm:$0xf]
          %v2226 = vld [vmem:[%s2224 + $0x4] sm:$0xf]
          %v2227 = vld [vmem:[%s2224 + $0x8] sm:$0xf]
          %v2228 = vld [vmem:[%s2224 + $0xc] sm:$0xf]
          %v2229 = vld [vmem:[%s2224 + $0x10] sm:$0xf]
          %v2230 = vld [vmem:[%s2224 + $0x14] sm:$0xf]
          %v2231 = vld [vmem:[%s2224 + $0x18] sm:$0xf]
          %v2232 = vld [vmem:[%s2224 + $0x1c] sm:$0xf]
          %v2266 = vunpack.c.l.b16 %v2191
          %v2267 = vunpack.c.l.b16 %v2192
          %v2268 = vunpack.c.l.b16 %v2193
          %v2269 = vunpack.c.l.b16 %v2194
          %v2270 = vunpack.c.l.b16 %v2195
          %v2271 = vunpack.c.l.b16 %v2196
          %v2272 = vunpack.c.l.b16 %v2197
          %v2273 = vunpack.c.l.b16 %v2198
          %v2274 = vunpack.c.l.b16 %v2199
          %v2275 = vunpack.c.l.b16 %v2200
          %v2276 = vunpack.c.l.b16 %v2201
          %v2277 = vunpack.c.l.b16 %v2202
          %v2278 = vunpack.c.l.b16 %v2203
          %v2279 = vunpack.c.l.b16 %v2204
          %v2280 = vunpack.c.l.b16 %v2205
          %v2281 = vunpack.c.l.b16 %v2206
          %v2282 = vunpack.c.l.b16 %v2207
          %v2283 = vunpack.c.l.b16 %v2208
          %v2284 = vunpack.c.l.b16 %v2209
          %v2285 = vunpack.c.l.b16 %v2210
          %v2286 = vunpack.c.l.b16 %v2211
          %v2287 = vunpack.c.l.b16 %v2212
          %v2288 = vunpack.c.l.b16 %v2213
          %v2289 = vunpack.c.l.b16 %v2214
          %v2290 = vunpack.c.l.b16 %v2215
          %v2291 = vunpack.c.l.b16 %v2216
          %v2292 = vunpack.c.l.b16 %v2217
          %v2293 = vunpack.c.l.b16 %v2218
          %v2294 = vunpack.c.l.b16 %v2219
          %v2295 = vunpack.c.l.b16 %v2220
          %v2296 = vunpack.c.l.b16 %v2221
          %v2297 = vunpack.c.l.b16 %v2222
          %v2298 = vunpack.c.l.b16 %v2223
          %v2299 = vpack.c.b16 %v2267, %v2266
          %v2300 = vpack.c.b16 %v2269, %v2268
          %v2301 = vpack.c.b16 %v2271, %v2270
          %v2302 = vpack.c.b16 %v2273, %v2272
          %v2303 = vpack.c.b16 %v2275, %v2274
          %v2304 = vpack.c.b16 %v2277, %v2276
          %v2305 = vpack.c.b16 %v2279, %v2278
          %v2306 = vpack.c.b16 %v2281, %v2280
          %v2307 = vpack.c.b16 %v2283, %v2282
          %v2308 = vpack.c.b16 %v2285, %v2284
          %v2309 = vpack.c.b16 %v2287, %v2286
          %v2310 = vpack.c.b16 %v2289, %v2288
          %v2311 = vpack.c.b16 %v2291, %v2290
          %v2312 = vpack.c.b16 %v2293, %v2292
          %v2313 = vpack.c.b16 %v2295, %v2294
          %v2314 = vpack.c.b16 %v2297, %v2296
          %v2315 = vpack.c.b16 %v2298, %v2298
          %v2317 = vshrl.u32 %v2299, 16
          %v2319 = vshll.u32 %v2299, 16
          %v2321 = vrot.slane %v2319, 1
          %v2322 = vor.u32 %v2317, %v2321
          %v2324 = vshll.u32 %v2300, 16
          %v2326 = vrot.slane %v2324, 1
          %v2327 = vsel %vm1177, %v2322, %v2326
          %v2328 = vshrl.u32 %v2300, 16
          %v2330 = vor.u32 %v2328, %v2326
          %v2332 = vshll.u32 %v2301, 16
          %v2334 = vrot.slane %v2332, 1
          %v2335 = vsel %vm1177, %v2330, %v2334
          %v2336 = vshrl.u32 %v2301, 16
          %v2338 = vor.u32 %v2336, %v2334
          %v2340 = vshll.u32 %v2302, 16
          %v2342 = vrot.slane %v2340, 1
          %v2343 = vsel %vm1177, %v2338, %v2342
          %v2344 = vshrl.u32 %v2302, 16
          %v2346 = vor.u32 %v2344, %v2342
          %v2348 = vshll.u32 %v2303, 16
          %v2350 = vrot.slane %v2348, 1
          %v2351 = vsel %vm1177, %v2346, %v2350
          %v2352 = vshrl.u32 %v2303, 16
          %v2354 = vor.u32 %v2352, %v2350
          %v2356 = vshll.u32 %v2304, 16
          %v2358 = vrot.slane %v2356, 1
          %v2359 = vsel %vm1177, %v2354, %v2358
          %v2360 = vshrl.u32 %v2304, 16
          %v2362 = vor.u32 %v2360, %v2358
          %v2364 = vshll.u32 %v2305, 16
          %v2366 = vrot.slane %v2364, 1
          %v2367 = vsel %vm1177, %v2362, %v2366
          %v2368 = vshrl.u32 %v2305, 16
          %v2370 = vor.u32 %v2368, %v2366
          %v2372 = vshll.u32 %v2306, 16
          %v2374 = vrot.slane %v2372, 1
          %v2375 = vsel %vm1177, %v2370, %v2374
          %v2376 = vshrl.u32 %v2306, 16
          %v2378 = vor.u32 %v2376, %v2374
          %v2380 = vshll.u32 %v2307, 16
          %v2382 = vrot.slane %v2380, 1
          %v2383 = vsel %vm1177, %v2378, %v2382
          %v2384 = vshrl.u32 %v2307, 16
          %v2386 = vor.u32 %v2384, %v2382
          %v2388 = vshll.u32 %v2308, 16
          %v2390 = vrot.slane %v2388, 1
          %v2391 = vsel %vm1177, %v2386, %v2390
          %v2392 = vshrl.u32 %v2308, 16
          %v2394 = vor.u32 %v2392, %v2390
          %v2396 = vshll.u32 %v2309, 16
          %v2398 = vrot.slane %v2396, 1
          %v2399 = vsel %vm1177, %v2394, %v2398
          %v2400 = vshrl.u32 %v2309, 16
          %v2402 = vor.u32 %v2400, %v2398
          %v2404 = vshll.u32 %v2310, 16
          %v2406 = vrot.slane %v2404, 1
          %v2407 = vsel %vm1177, %v2402, %v2406
          %v2408 = vshrl.u32 %v2310, 16
          %v2410 = vor.u32 %v2408, %v2406
          %v2412 = vshll.u32 %v2311, 16
          %v2414 = vrot.slane %v2412, 1
          %v2415 = vsel %vm1177, %v2410, %v2414
          %v2416 = vshrl.u32 %v2311, 16
          %v2418 = vor.u32 %v2416, %v2414
          %v2420 = vshll.u32 %v2312, 16
          %v2422 = vrot.slane %v2420, 1
          %v2423 = vsel %vm1177, %v2418, %v2422
          %v2424 = vshrl.u32 %v2312, 16
          %v2426 = vor.u32 %v2424, %v2422
          %v2428 = vshll.u32 %v2313, 16
          %v2430 = vrot.slane %v2428, 1
          %v2431 = vsel %vm1177, %v2426, %v2430
          %v2432 = vshrl.u32 %v2313, 16
          %v2434 = vor.u32 %v2432, %v2430
          %v2436 = vshll.u32 %v2314, 16
          %v2438 = vrot.slane %v2436, 1
          %v2439 = vsel %vm1177, %v2434, %v2438
          %v2440 = vshrl.u32 %v2314, 16
          %v2442 = vor.u32 %v2440, %v2438
          %v2444 = vshll.u32 %v2315, 16
          %v2446 = vrot.slane %v2444, 1
          %v2447 = vsel %vm1177, %v2442, %v2446
          %v2456 = vunpack.c.l.b16 %v2225
          %v2457 = vunpack.c.l.b16 %v2226
          %v2458 = vunpack.c.l.b16 %v2227
          %v2459 = vunpack.c.l.b16 %v2228
          %v2460 = vunpack.c.l.b16 %v2229
          %v2461 = vunpack.c.l.b16 %v2230
          %v2462 = vunpack.c.l.b16 %v2231
          %v2463 = vunpack.c.l.b16 %v2232
          %v2464 = vpack.c.b16 %v2457, %v2456
          %v2465 = vpack.c.b16 %v2459, %v2458
          %v2466 = vpack.c.b16 %v2461, %v2460
          %v2467 = vpack.c.b16 %v2463, %v2462
          %v2473 = vsel %vm581, %v2327, 0
          %v2476 = vsel %vm581, %v2335, 0
          %v2479 = vsel %vm581, %v2343, 0
          %v2482 = vsel %vm581, %v2351, 0
          %v2485 = vsel %vm581, %v2359, 0
          %v2488 = vsel %vm581, %v2367, 0
          %v2491 = vsel %vm581, %v2375, 0
          %v2494 = vsel %vm581, %v2383, 0
          %v2497 = vsel %vm581, %v2391, 0
          %v2500 = vsel %vm581, %v2399, 0
          %v2503 = vsel %vm581, %v2407, 0
          %v2506 = vsel %vm581, %v2415, 0
          %v2509 = vsel %vm581, %v2423, 0
          %v2512 = vsel %vm581, %v2431, 0
          %v2515 = vsel %vm581, %v2439, 0
          %v2518 = vsel %vm581, %v2447, 0
          %2520 = vmatpush.bf16.msra.mxu0 0
          %2521 = vmatpush.bf16.msra.mxu0 0
          %2522 = vmatpush.bf16.msra.mxu0 0
          %2523 = vmatpush.bf16.msra.mxu0 0
          %2524 = vmatpush.bf16.msra.mxu0 %v2467
          %2525 = vmatpush.bf16.msra.mxu0 %v2466
          %2526 = vmatpush.bf16.msra.mxu0 %v2465
          %2527 = vmatpush.bf16.msra.mxu0 %v2464
          %2528 = vmatmul.bf16.gmra.mxu0 %v2473
          %v2529 = vpop.f32.mrf.mxu0
          %v2530 = vadd.f32 0.0, %v2529
          %v2531 = vpop.f32.mrf.mxu0
          %v2532 = vadd.f32 0.0, %v2531
          %2533 = vmatmul.bf16.gmra.mxu0 %v2476
          %v2534 = vpop.f32.mrf.mxu0
          %v2535 = vadd.f32 0.0, %v2534
          %v2536 = vpop.f32.mrf.mxu0
          %v2537 = vadd.f32 0.0, %v2536
          %2538 = vmatmul.bf16.gmra.mxu0 %v2479
          %v2539 = vpop.f32.mrf.mxu0
          %v2540 = vadd.f32 0.0, %v2539
          %v2541 = vpop.f32.mrf.mxu0
          %v2542 = vadd.f32 0.0, %v2541
          %2543 = vmatmul.bf16.gmra.mxu0 %v2482
          %v2544 = vpop.f32.mrf.mxu0
          %v2545 = vadd.f32 0.0, %v2544
          %v2546 = vpop.f32.mrf.mxu0
          %v2547 = vadd.f32 0.0, %v2546
          %2548 = vmatmul.bf16.gmra.mxu0 %v2485
          %v2549 = vpop.f32.mrf.mxu0
          %v2550 = vadd.f32 0.0, %v2549
          %v2551 = vpop.f32.mrf.mxu0
          %v2552 = vadd.f32 0.0, %v2551
          %2553 = vmatmul.bf16.gmra.mxu0 %v2488
          %v2554 = vpop.f32.mrf.mxu0
          %v2555 = vadd.f32 0.0, %v2554
          %v2556 = vpop.f32.mrf.mxu0
          %v2557 = vadd.f32 0.0, %v2556
          %2558 = vmatmul.bf16.gmra.mxu0 %v2491
          %v2559 = vpop.f32.mrf.mxu0
          %v2560 = vadd.f32 0.0, %v2559
          %v2561 = vpop.f32.mrf.mxu0
          %v2562 = vadd.f32 0.0, %v2561
          %2563 = vmatmul.bf16.gmra.mxu0 %v2494
          %v2564 = vpop.f32.mrf.mxu0
          %v2565 = vadd.f32 0.0, %v2564
          %v2566 = vpop.f32.mrf.mxu0
          %v2567 = vadd.f32 0.0, %v2566
          %2568 = vmatmul.bf16.gmra.mxu0 %v2497
          %v2569 = vpop.f32.mrf.mxu0
          %v2570 = vadd.f32 0.0, %v2569
          %v2571 = vpop.f32.mrf.mxu0
          %v2572 = vadd.f32 0.0, %v2571
          %2573 = vmatmul.bf16.gmra.mxu0 %v2500
          %v2574 = vpop.f32.mrf.mxu0
          %v2575 = vadd.f32 0.0, %v2574
          %v2576 = vpop.f32.mrf.mxu0
          %v2577 = vadd.f32 0.0, %v2576
          %2578 = vmatmul.bf16.gmra.mxu0 %v2503
          %v2579 = vpop.f32.mrf.mxu0
          %v2580 = vadd.f32 0.0, %v2579
          %v2581 = vpop.f32.mrf.mxu0
          %v2582 = vadd.f32 0.0, %v2581
          %2583 = vmatmul.bf16.gmra.mxu0 %v2506
          %v2584 = vpop.f32.mrf.mxu0
          %v2585 = vadd.f32 0.0, %v2584
          %v2586 = vpop.f32.mrf.mxu0
          %v2587 = vadd.f32 0.0, %v2586
          %2588 = vmatmul.bf16.gmra.mxu0 %v2509
          %v2589 = vpop.f32.mrf.mxu0
          %v2590 = vadd.f32 0.0, %v2589
          %v2591 = vpop.f32.mrf.mxu0
          %v2592 = vadd.f32 0.0, %v2591
          %2593 = vmatmul.bf16.gmra.mxu0 %v2512
          %v2594 = vpop.f32.mrf.mxu0
          %v2595 = vadd.f32 0.0, %v2594
          %v2596 = vpop.f32.mrf.mxu0
          %v2597 = vadd.f32 0.0, %v2596
          %2598 = vmatmul.bf16.gmra.mxu0 %v2515
          %v2599 = vpop.f32.mrf.mxu0
          %v2600 = vadd.f32 0.0, %v2599
          %v2601 = vpop.f32.mrf.mxu0
          %v2602 = vadd.f32 0.0, %v2601
          %2603 = vmatmul.bf16.gmra.mxu0 %v2518
          %v2604 = vpop.f32.mrf.mxu0
          %v2605 = vadd.f32 0.0, %v2604
          %v2606 = vpop.f32.mrf.mxu0
          %v2607 = vadd.f32 0.0, %v2606
          %2608 = vdwg.mxu0
          %v2609 = vadd.f32 %v2159, %v2530
          %v2610 = vadd.f32 %v2160, %v2532
          %v2611 = vadd.f32 %v2161, %v2535
          %v2612 = vadd.f32 %v2162, %v2537
          %v2613 = vadd.f32 %v2163, %v2540
          %v2614 = vadd.f32 %v2164, %v2542
          %v2615 = vadd.f32 %v2165, %v2545
          %v2616 = vadd.f32 %v2166, %v2547
          %v2617 = vadd.f32 %v2167, %v2550
          %v2618 = vadd.f32 %v2168, %v2552
          %v2619 = vadd.f32 %v2169, %v2555
          %v2620 = vadd.f32 %v2170, %v2557
          %v2621 = vadd.f32 %v2171, %v2560
          %v2622 = vadd.f32 %v2172, %v2562
          %v2623 = vadd.f32 %v2173, %v2565
          %v2624 = vadd.f32 %v2174, %v2567
          %v2625 = vadd.f32 %v2175, %v2570
          %v2626 = vadd.f32 %v2176, %v2572
          %v2627 = vadd.f32 %v2177, %v2575
          %v2628 = vadd.f32 %v2178, %v2577
          %v2629 = vadd.f32 %v2179, %v2580
          %v2630 = vadd.f32 %v2180, %v2582
          %v2631 = vadd.f32 %v2181, %v2585
          %v2632 = vadd.f32 %v2182, %v2587
          %v2633 = vadd.f32 %v2183, %v2590
          %v2634 = vadd.f32 %v2184, %v2592
          %v2635 = vadd.f32 %v2185, %v2595
          %v2636 = vadd.f32 %v2186, %v2597
          %v2637 = vadd.f32 %v2187, %v2600
          %v2638 = vadd.f32 %v2188, %v2602
          %v2639 = vadd.f32 %v2189, %v2605
          %v2640 = vadd.f32 %v2190, %v2607
          %v2641 = vld [vmem:[#allocation2 + $0x24] sm:$0x8]
          %v2642 = vld [vmem:[#allocation2 + $0x28] sm:$0xf]
          %v2643 = vld [vmem:[#allocation2 + $0x2c] sm:$0xf]
          %v2644 = vld [vmem:[#allocation2 + $0x30] sm:$0xf]
          %v2645 = vld [vmem:[#allocation2 + $0x34] sm:$0xf]
          %v2646 = vld [vmem:[#allocation2 + $0x38] sm:$0xf]
          %v2647 = vld [vmem:[#allocation2 + $0x3c] sm:$0xf]
          %v2648 = vld [vmem:[#allocation2 + $0x40] sm:$0xf]
          %v2649 = vld [vmem:[#allocation2 + $0x44] sm:$0xf]
          %v2650 = vld [vmem:[#allocation2 + $0x48] sm:$0xf]
          %v2651 = vld [vmem:[#allocation2 + $0x4c] sm:$0xf]
          %v2652 = vld [vmem:[#allocation2 + $0x50] sm:$0xf]
          %v2653 = vld [vmem:[#allocation2 + $0x54] sm:$0xf]
          %v2654 = vld [vmem:[#allocation2 + $0x58] sm:$0xf]
          %v2655 = vld [vmem:[#allocation2 + $0x5c] sm:$0xf]
          %v2656 = vld [vmem:[#allocation2 + $0x60] sm:$0xf]
          %v2657 = vld [vmem:[#allocation2 + $0x64] sm:$0xf]
          %v2658 = vld [vmem:[#allocation2 + $0x68] sm:$0xf]
          %v2659 = vld [vmem:[#allocation2 + $0x6c] sm:$0xf]
          %v2660 = vld [vmem:[#allocation2 + $0x70] sm:$0xf]
          %v2661 = vld [vmem:[#allocation2 + $0x74] sm:$0xf]
          %v2662 = vld [vmem:[#allocation2 + $0x78] sm:$0xf]
          %v2663 = vld [vmem:[#allocation2 + $0x7c] sm:$0xf]
          %v2664 = vld [vmem:[#allocation2 + $0x80] sm:$0xf]
          %v2665 = vld [vmem:[#allocation2 + $0x84] sm:$0xf]
          %v2666 = vld [vmem:[#allocation2 + $0x88] sm:$0xf]
          %v2667 = vld [vmem:[#allocation2 + $0x8c] sm:$0xf]
          %v2668 = vld [vmem:[#allocation2 + $0x90] sm:$0xf]
          %v2669 = vld [vmem:[#allocation2 + $0x94] sm:$0xf]
          %v2670 = vld [vmem:[#allocation2 + $0x98] sm:$0xf]
          %v2671 = vld [vmem:[#allocation2 + $0x9c] sm:$0xf]
          %v2672 = vld [vmem:[#allocation2 + $0xa0] sm:$0xf]
          %v2673 = vld [vmem:[#allocation2 + $0xa4] sm:$0xf]
          %s2674 = scalar_lea.vmem %s208, 192 [#allocation4]
          %v2675 = vld [vmem:[%s2674] sm:$0xf]
          %v2676 = vld [vmem:[%s2674 + $0x4] sm:$0xf]
          %v2677 = vld [vmem:[%s2674 + $0x8] sm:$0xf]
          %v2678 = vld [vmem:[%s2674 + $0xc] sm:$0xf]
          %v2679 = vld [vmem:[%s2674 + $0x10] sm:$0xf]
          %v2680 = vld [vmem:[%s2674 + $0x14] sm:$0xf]
          %v2681 = vld [vmem:[%s2674 + $0x18] sm:$0xf]
          %v2682 = vld [vmem:[%s2674 + $0x1c] sm:$0xf]
          %v2716 = vunpack.c.l.b16 %v2641
          %v2717 = vunpack.c.l.b16 %v2642
          %v2718 = vunpack.c.l.b16 %v2643
          %v2719 = vunpack.c.l.b16 %v2644
          %v2720 = vunpack.c.l.b16 %v2645
          %v2721 = vunpack.c.l.b16 %v2646
          %v2722 = vunpack.c.l.b16 %v2647
          %v2723 = vunpack.c.l.b16 %v2648
          %v2724 = vunpack.c.l.b16 %v2649
          %v2725 = vunpack.c.l.b16 %v2650
          %v2726 = vunpack.c.l.b16 %v2651
          %v2727 = vunpack.c.l.b16 %v2652
          %v2728 = vunpack.c.l.b16 %v2653
          %v2729 = vunpack.c.l.b16 %v2654
          %v2730 = vunpack.c.l.b16 %v2655
          %v2731 = vunpack.c.l.b16 %v2656
          %v2732 = vunpack.c.l.b16 %v2657
          %v2733 = vunpack.c.l.b16 %v2658
          %v2734 = vunpack.c.l.b16 %v2659
          %v2735 = vunpack.c.l.b16 %v2660
          %v2736 = vunpack.c.l.b16 %v2661
          %v2737 = vunpack.c.l.b16 %v2662
          %v2738 = vunpack.c.l.b16 %v2663
          %v2739 = vunpack.c.l.b16 %v2664
          %v2740 = vunpack.c.l.b16 %v2665
          %v2741 = vunpack.c.l.b16 %v2666
          %v2742 = vunpack.c.l.b16 %v2667
          %v2743 = vunpack.c.l.b16 %v2668
          %v2744 = vunpack.c.l.b16 %v2669
          %v2745 = vunpack.c.l.b16 %v2670
          %v2746 = vunpack.c.l.b16 %v2671
          %v2747 = vunpack.c.l.b16 %v2672
          %v2748 = vunpack.c.l.b16 %v2673
          %v2749 = vpack.c.b16 %v2717, %v2716
          %v2750 = vpack.c.b16 %v2719, %v2718
          %v2751 = vpack.c.b16 %v2721, %v2720
          %v2752 = vpack.c.b16 %v2723, %v2722
          %v2753 = vpack.c.b16 %v2725, %v2724
          %v2754 = vpack.c.b16 %v2727, %v2726
          %v2755 = vpack.c.b16 %v2729, %v2728
          %v2756 = vpack.c.b16 %v2731, %v2730
          %v2757 = vpack.c.b16 %v2733, %v2732
          %v2758 = vpack.c.b16 %v2735, %v2734
          %v2759 = vpack.c.b16 %v2737, %v2736
          %v2760 = vpack.c.b16 %v2739, %v2738
          %v2761 = vpack.c.b16 %v2741, %v2740
          %v2762 = vpack.c.b16 %v2743, %v2742
          %v2763 = vpack.c.b16 %v2745, %v2744
          %v2764 = vpack.c.b16 %v2747, %v2746
          %v2765 = vpack.c.b16 %v2748, %v2748
          %v2767 = vshrl.u32 %v2749, 16
          %v2769 = vrot.slane %v2767, 3
          %v2770 = vshll.u32 %v2749, 16
          %v2772 = vrot.slane %v2770, 4
          %v2773 = vor.u32 %v2769, %v2772
          %v2775 = vshrl.u32 %v2750, 16
          %v2777 = vrot.slane %v2775, 3
          %v2778 = vshll.u32 %v2750, 16
          %v2780 = vrot.slane %v2778, 4
          %v2781 = vor.u32 %v2777, %v2780
          %v2782 = vsel %vm738, %v2773, %v2781
          %v2784 = vshrl.u32 %v2751, 16
          %v2786 = vrot.slane %v2784, 3
          %v2787 = vshll.u32 %v2751, 16
          %v2789 = vrot.slane %v2787, 4
          %v2790 = vor.u32 %v2786, %v2789
          %v2791 = vsel %vm738, %v2781, %v2790
          %v2793 = vshrl.u32 %v2752, 16
          %v2795 = vrot.slane %v2793, 3
          %v2796 = vshll.u32 %v2752, 16
          %v2798 = vrot.slane %v2796, 4
          %v2799 = vor.u32 %v2795, %v2798
          %v2800 = vsel %vm738, %v2790, %v2799
          %v2802 = vshrl.u32 %v2753, 16
          %v2804 = vrot.slane %v2802, 3
          %v2805 = vshll.u32 %v2753, 16
          %v2807 = vrot.slane %v2805, 4
          %v2808 = vor.u32 %v2804, %v2807
          %v2809 = vsel %vm738, %v2799, %v2808
          %v2811 = vshrl.u32 %v2754, 16
          %v2813 = vrot.slane %v2811, 3
          %v2814 = vshll.u32 %v2754, 16
          %v2816 = vrot.slane %v2814, 4
          %v2817 = vor.u32 %v2813, %v2816
          %v2818 = vsel %vm738, %v2808, %v2817
          %v2820 = vshrl.u32 %v2755, 16
          %v2822 = vrot.slane %v2820, 3
          %v2823 = vshll.u32 %v2755, 16
          %v2825 = vrot.slane %v2823, 4
          %v2826 = vor.u32 %v2822, %v2825
          %v2827 = vsel %vm738, %v2817, %v2826
          %v2829 = vshrl.u32 %v2756, 16
          %v2831 = vrot.slane %v2829, 3
          %v2832 = vshll.u32 %v2756, 16
          %v2834 = vrot.slane %v2832, 4
          %v2835 = vor.u32 %v2831, %v2834
          %v2836 = vsel %vm738, %v2826, %v2835
          %v2838 = vshrl.u32 %v2757, 16
          %v2840 = vrot.slane %v2838, 3
          %v2841 = vshll.u32 %v2757, 16
          %v2843 = vrot.slane %v2841, 4
          %v2844 = vor.u32 %v2840, %v2843
          %v2845 = vsel %vm738, %v2835, %v2844
          %v2847 = vshrl.u32 %v2758, 16
          %v2849 = vrot.slane %v2847, 3
          %v2850 = vshll.u32 %v2758, 16
          %v2852 = vrot.slane %v2850, 4
          %v2853 = vor.u32 %v2849, %v2852
          %v2854 = vsel %vm738, %v2844, %v2853
          %v2856 = vshrl.u32 %v2759, 16
          %v2858 = vrot.slane %v2856, 3
          %v2859 = vshll.u32 %v2759, 16
          %v2861 = vrot.slane %v2859, 4
          %v2862 = vor.u32 %v2858, %v2861
          %v2863 = vsel %vm738, %v2853, %v2862
          %v2865 = vshrl.u32 %v2760, 16
          %v2867 = vrot.slane %v2865, 3
          %v2868 = vshll.u32 %v2760, 16
          %v2870 = vrot.slane %v2868, 4
          %v2871 = vor.u32 %v2867, %v2870
          %v2872 = vsel %vm738, %v2862, %v2871
          %v2874 = vshrl.u32 %v2761, 16
          %v2876 = vrot.slane %v2874, 3
          %v2877 = vshll.u32 %v2761, 16
          %v2879 = vrot.slane %v2877, 4
          %v2880 = vor.u32 %v2876, %v2879
          %v2881 = vsel %vm738, %v2871, %v2880
          %v2883 = vshrl.u32 %v2762, 16
          %v2885 = vrot.slane %v2883, 3
          %v2886 = vshll.u32 %v2762, 16
          %v2888 = vrot.slane %v2886, 4
          %v2889 = vor.u32 %v2885, %v2888
          %v2890 = vsel %vm738, %v2880, %v2889
          %v2892 = vshrl.u32 %v2763, 16
          %v2894 = vrot.slane %v2892, 3
          %v2895 = vshll.u32 %v2763, 16
          %v2897 = vrot.slane %v2895, 4
          %v2898 = vor.u32 %v2894, %v2897
          %v2899 = vsel %vm738, %v2889, %v2898
          %v2901 = vshrl.u32 %v2764, 16
          %v2903 = vrot.slane %v2901, 3
          %v2904 = vshll.u32 %v2764, 16
          %v2906 = vrot.slane %v2904, 4
          %v2907 = vor.u32 %v2903, %v2906
          %v2908 = vsel %vm738, %v2898, %v2907
          %v2910 = vshrl.u32 %v2765, 16
          %v2912 = vrot.slane %v2910, 3
          %v2913 = vshll.u32 %v2765, 16
          %v2915 = vrot.slane %v2913, 4
          %v2916 = vor.u32 %v2912, %v2915
          %v2917 = vsel %vm738, %v2907, %v2916
          %v2926 = vunpack.c.l.b16 %v2675
          %v2927 = vunpack.c.l.b16 %v2676
          %v2928 = vunpack.c.l.b16 %v2677
          %v2929 = vunpack.c.l.b16 %v2678
          %v2930 = vunpack.c.l.b16 %v2679
          %v2931 = vunpack.c.l.b16 %v2680
          %v2932 = vunpack.c.l.b16 %v2681
          %v2933 = vunpack.c.l.b16 %v2682
          %v2934 = vpack.c.b16 %v2927, %v2926
          %v2935 = vpack.c.b16 %v2929, %v2928
          %v2936 = vpack.c.b16 %v2931, %v2930
          %v2937 = vpack.c.b16 %v2933, %v2932
          %v2943 = vsel %vm581, %v2782, 0
          %v2946 = vsel %vm581, %v2791, 0
          %v2949 = vsel %vm581, %v2800, 0
          %v2952 = vsel %vm581, %v2809, 0
          %v2955 = vsel %vm581, %v2818, 0
          %v2958 = vsel %vm581, %v2827, 0
          %v2961 = vsel %vm581, %v2836, 0
          %v2964 = vsel %vm581, %v2845, 0
          %v2967 = vsel %vm581, %v2854, 0
          %v2970 = vsel %vm581, %v2863, 0
          %v2973 = vsel %vm581, %v2872, 0
          %v2976 = vsel %vm581, %v2881, 0
          %v2979 = vsel %vm581, %v2890, 0
          %v2982 = vsel %vm581, %v2899, 0
          %v2985 = vsel %vm581, %v2908, 0
          %v2988 = vsel %vm581, %v2917, 0
          %2990 = vmatpush.bf16.msra.mxu0 0
          %2991 = vmatpush.bf16.msra.mxu0 0
          %2992 = vmatpush.bf16.msra.mxu0 0
          %2993 = vmatpush.bf16.msra.mxu0 0
          %2994 = vmatpush.bf16.msra.mxu0 %v2937
          %2995 = vmatpush.bf16.msra.mxu0 %v2936
          %2996 = vmatpush.bf16.msra.mxu0 %v2935
          %2997 = vmatpush.bf16.msra.mxu0 %v2934
          %2998 = vmatmul.bf16.gmra.mxu0 %v2943
          %v2999 = vpop.f32.mrf.mxu0
          %v3000 = vadd.f32 0.0, %v2999
          %v3001 = vpop.f32.mrf.mxu0
          %v3002 = vadd.f32 0.0, %v3001
          %3003 = vmatmul.bf16.gmra.mxu0 %v2946
          %v3004 = vpop.f32.mrf.mxu0
          %v3005 = vadd.f32 0.0, %v3004
          %v3006 = vpop.f32.mrf.mxu0
          %v3007 = vadd.f32 0.0, %v3006
          %3008 = vmatmul.bf16.gmra.mxu0 %v2949
          %v3009 = vpop.f32.mrf.mxu0
          %v3010 = vadd.f32 0.0, %v3009
          %v3011 = vpop.f32.mrf.mxu0
          %v3012 = vadd.f32 0.0, %v3011
          %3013 = vmatmul.bf16.gmra.mxu0 %v2952
          %v3014 = vpop.f32.mrf.mxu0
          %v3015 = vadd.f32 0.0, %v3014
          %v3016 = vpop.f32.mrf.mxu0
          %v3017 = vadd.f32 0.0, %v3016
          %3018 = vmatmul.bf16.gmra.mxu0 %v2955
          %v3019 = vpop.f32.mrf.mxu0
          %v3020 = vadd.f32 0.0, %v3019
          %v3021 = vpop.f32.mrf.mxu0
          %v3022 = vadd.f32 0.0, %v3021
          %3023 = vmatmul.bf16.gmra.mxu0 %v2958
          %v3024 = vpop.f32.mrf.mxu0
          %v3025 = vadd.f32 0.0, %v3024
          %v3026 = vpop.f32.mrf.mxu0
          %v3027 = vadd.f32 0.0, %v3026
          %3028 = vmatmul.bf16.gmra.mxu0 %v2961
          %v3029 = vpop.f32.mrf.mxu0
          %v3030 = vadd.f32 0.0, %v3029
          %v3031 = vpop.f32.mrf.mxu0
          %v3032 = vadd.f32 0.0, %v3031
          %3033 = vmatmul.bf16.gmra.mxu0 %v2964
          %v3034 = vpop.f32.mrf.mxu0
          %v3035 = vadd.f32 0.0, %v3034
          %v3036 = vpop.f32.mrf.mxu0
          %v3037 = vadd.f32 0.0, %v3036
          %3038 = vmatmul.bf16.gmra.mxu0 %v2967
          %v3039 = vpop.f32.mrf.mxu0
          %v3040 = vadd.f32 0.0, %v3039
          %v3041 = vpop.f32.mrf.mxu0
          %v3042 = vadd.f32 0.0, %v3041
          %3043 = vmatmul.bf16.gmra.mxu0 %v2970
          %v3044 = vpop.f32.mrf.mxu0
          %v3045 = vadd.f32 0.0, %v3044
          %v3046 = vpop.f32.mrf.mxu0
          %v3047 = vadd.f32 0.0, %v3046
          %3048 = vmatmul.bf16.gmra.mxu0 %v2973
          %v3049 = vpop.f32.mrf.mxu0
          %v3050 = vadd.f32 0.0, %v3049
          %v3051 = vpop.f32.mrf.mxu0
          %v3052 = vadd.f32 0.0, %v3051
          %3053 = vmatmul.bf16.gmra.mxu0 %v2976
          %v3054 = vpop.f32.mrf.mxu0
          %v3055 = vadd.f32 0.0, %v3054
          %v3056 = vpop.f32.mrf.mxu0
          %v3057 = vadd.f32 0.0, %v3056
          %3058 = vmatmul.bf16.gmra.mxu0 %v2979
          %v3059 = vpop.f32.mrf.mxu0
          %v3060 = vadd.f32 0.0, %v3059
          %v3061 = vpop.f32.mrf.mxu0
          %v3062 = vadd.f32 0.0, %v3061
          %3063 = vmatmul.bf16.gmra.mxu0 %v2982
          %v3064 = vpop.f32.mrf.mxu0
          %v3065 = vadd.f32 0.0, %v3064
          %v3066 = vpop.f32.mrf.mxu0
          %v3067 = vadd.f32 0.0, %v3066
          %3068 = vmatmul.bf16.gmra.mxu0 %v2985
          %v3069 = vpop.f32.mrf.mxu0
          %v3070 = vadd.f32 0.0, %v3069
          %v3071 = vpop.f32.mrf.mxu0
          %v3072 = vadd.f32 0.0, %v3071
          %3073 = vmatmul.bf16.gmra.mxu0 %v2988
          %v3074 = vpop.f32.mrf.mxu0
          %v3075 = vadd.f32 0.0, %v3074
          %v3076 = vpop.f32.mrf.mxu0
          %v3077 = vadd.f32 0.0, %v3076
          %3078 = vdwg.mxu0
          %v3079 = vadd.f32 %v2609, %v3000
          %v3080 = vadd.f32 %v2610, %v3002
          %v3081 = vadd.f32 %v2611, %v3005
          %v3082 = vadd.f32 %v2612, %v3007
          %v3083 = vadd.f32 %v2613, %v3010
          %v3084 = vadd.f32 %v2614, %v3012
          %v3085 = vadd.f32 %v2615, %v3015
          %v3086 = vadd.f32 %v2616, %v3017
          %v3087 = vadd.f32 %v2617, %v3020
          %v3088 = vadd.f32 %v2618, %v3022
          %v3089 = vadd.f32 %v2619, %v3025
          %v3090 = vadd.f32 %v2620, %v3027
          %v3091 = vadd.f32 %v2621, %v3030
          %v3092 = vadd.f32 %v2622, %v3032
          %v3093 = vadd.f32 %v2623, %v3035
          %v3094 = vadd.f32 %v2624, %v3037
          %v3095 = vadd.f32 %v2625, %v3040
          %v3096 = vadd.f32 %v2626, %v3042
          %v3097 = vadd.f32 %v2627, %v3045
          %v3098 = vadd.f32 %v2628, %v3047
          %v3099 = vadd.f32 %v2629, %v3050
          %v3100 = vadd.f32 %v2630, %v3052
          %v3101 = vadd.f32 %v2631, %v3055
          %v3102 = vadd.f32 %v2632, %v3057
          %v3103 = vadd.f32 %v2633, %v3060
          %v3104 = vadd.f32 %v2634, %v3062
          %v3105 = vadd.f32 %v2635, %v3065
          %v3106 = vadd.f32 %v2636, %v3067
          %v3107 = vadd.f32 %v2637, %v3070
          %v3108 = vadd.f32 %v2638, %v3072
          %v3109 = vadd.f32 %v2639, %v3075
          %v3110 = vadd.f32 %v2640, %v3077
          %s3111 = scalar_lea.vmem %s208, 224 [#allocation4]
          %v3112 = vld [vmem:[%s3111] sm:$0xf]
          %v3113 = vld [vmem:[%s3111 + $0x4] sm:$0xf]
          %v3114 = vld [vmem:[%s3111 + $0x8] sm:$0xf]
          %v3115 = vld [vmem:[%s3111 + $0xc] sm:$0xf]
          %v3116 = vld [vmem:[%s3111 + $0x10] sm:$0xf]
          %v3117 = vld [vmem:[%s3111 + $0x14] sm:$0xf]
          %v3118 = vld [vmem:[%s3111 + $0x18] sm:$0xf]
          %v3119 = vld [vmem:[%s3111 + $0x1c] sm:$0xf]
          %v3120 = vpack.c.b16 %v2718, %v2717
          %v3121 = vpack.c.b16 %v2720, %v2719
          %v3122 = vpack.c.b16 %v2722, %v2721
          %v3123 = vpack.c.b16 %v2724, %v2723
          %v3124 = vpack.c.b16 %v2726, %v2725
          %v3125 = vpack.c.b16 %v2728, %v2727
          %v3126 = vpack.c.b16 %v2730, %v2729
          %v3127 = vpack.c.b16 %v2732, %v2731
          %v3128 = vpack.c.b16 %v2734, %v2733
          %v3129 = vpack.c.b16 %v2736, %v2735
          %v3130 = vpack.c.b16 %v2738, %v2737
          %v3131 = vpack.c.b16 %v2740, %v2739
          %v3132 = vpack.c.b16 %v2742, %v2741
          %v3133 = vpack.c.b16 %v2744, %v2743
          %v3134 = vpack.c.b16 %v2746, %v2745
          %v3135 = vpack.c.b16 %v2748, %v2747
          %v3144 = vunpack.c.l.b16 %v3112
          %v3145 = vunpack.c.l.b16 %v3113
          %v3146 = vunpack.c.l.b16 %v3114
          %v3147 = vunpack.c.l.b16 %v3115
          %v3148 = vunpack.c.l.b16 %v3116
          %v3149 = vunpack.c.l.b16 %v3117
          %v3150 = vunpack.c.l.b16 %v3118
          %v3151 = vunpack.c.l.b16 %v3119
          %v3152 = vpack.c.b16 %v3145, %v3144
          %v3153 = vpack.c.b16 %v3147, %v3146
          %v3154 = vpack.c.b16 %v3149, %v3148
          %v3155 = vpack.c.b16 %v3151, %v3150
          %v3161 = vsel %vm581, %v3120, 0
          %v3164 = vsel %vm581, %v3121, 0
          %v3167 = vsel %vm581, %v3122, 0
          %v3170 = vsel %vm581, %v3123, 0
          %v3173 = vsel %vm581, %v3124, 0
          %v3176 = vsel %vm581, %v3125, 0
          %v3179 = vsel %vm581, %v3126, 0
          %v3182 = vsel %vm581, %v3127, 0
          %v3185 = vsel %vm581, %v3128, 0
          %v3188 = vsel %vm581, %v3129, 0
          %v3191 = vsel %vm581, %v3130, 0
          %v3194 = vsel %vm581, %v3131, 0
          %v3197 = vsel %vm581, %v3132, 0
          %v3200 = vsel %vm581, %v3133, 0
          %v3203 = vsel %vm581, %v3134, 0
          %v3206 = vsel %vm581, %v3135, 0
          %3208 = vmatpush.bf16.msra.mxu0 0
          %3209 = vmatpush.bf16.msra.mxu0 0
          %3210 = vmatpush.bf16.msra.mxu0 0
          %3211 = vmatpush.bf16.msra.mxu0 0
          %3212 = vmatpush.bf16.msra.mxu0 %v3155
          %3213 = vmatpush.bf16.msra.mxu0 %v3154
          %3214 = vmatpush.bf16.msra.mxu0 %v3153
          %3215 = vmatpush.bf16.msra.mxu0 %v3152
          %3216 = vmatmul.bf16.gmra.mxu0 %v3161
          %v3217 = vpop.f32.mrf.mxu0
          %v3218 = vadd.f32 0.0, %v3217
          %v3219 = vpop.f32.mrf.mxu0
          %v3220 = vadd.f32 0.0, %v3219
          %3221 = vmatmul.bf16.gmra.mxu0 %v3164
          %v3222 = vpop.f32.mrf.mxu0
          %v3223 = vadd.f32 0.0, %v3222
          %v3224 = vpop.f32.mrf.mxu0
          %v3225 = vadd.f32 0.0, %v3224
          %3226 = vmatmul.bf16.gmra.mxu0 %v3167
          %v3227 = vpop.f32.mrf.mxu0
          %v3228 = vadd.f32 0.0, %v3227
          %v3229 = vpop.f32.mrf.mxu0
          %v3230 = vadd.f32 0.0, %v3229
          %3231 = vmatmul.bf16.gmra.mxu0 %v3170
          %v3232 = vpop.f32.mrf.mxu0
          %v3233 = vadd.f32 0.0, %v3232
          %v3234 = vpop.f32.mrf.mxu0
          %v3235 = vadd.f32 0.0, %v3234
          %3236 = vmatmul.bf16.gmra.mxu0 %v3173
          %v3237 = vpop.f32.mrf.mxu0
          %v3238 = vadd.f32 0.0, %v3237
          %v3239 = vpop.f32.mrf.mxu0
          %v3240 = vadd.f32 0.0, %v3239
          %3241 = vmatmul.bf16.gmra.mxu0 %v3176
          %v3242 = vpop.f32.mrf.mxu0
          %v3243 = vadd.f32 0.0, %v3242
          %v3244 = vpop.f32.mrf.mxu0
          %v3245 = vadd.f32 0.0, %v3244
          %3246 = vmatmul.bf16.gmra.mxu0 %v3179
          %v3247 = vpop.f32.mrf.mxu0
          %v3248 = vadd.f32 0.0, %v3247
          %v3249 = vpop.f32.mrf.mxu0
          %v3250 = vadd.f32 0.0, %v3249
          %3251 = vmatmul.bf16.gmra.mxu0 %v3182
          %v3252 = vpop.f32.mrf.mxu0
          %v3253 = vadd.f32 0.0, %v3252
          %v3254 = vpop.f32.mrf.mxu0
          %v3255 = vadd.f32 0.0, %v3254
          %3256 = vmatmul.bf16.gmra.mxu0 %v3185
          %v3257 = vpop.f32.mrf.mxu0
          %v3258 = vadd.f32 0.0, %v3257
          %v3259 = vpop.f32.mrf.mxu0
          %v3260 = vadd.f32 0.0, %v3259
          %3261 = vmatmul.bf16.gmra.mxu0 %v3188
          %v3262 = vpop.f32.mrf.mxu0
          %v3263 = vadd.f32 0.0, %v3262
          %v3264 = vpop.f32.mrf.mxu0
          %v3265 = vadd.f32 0.0, %v3264
          %3266 = vmatmul.bf16.gmra.mxu0 %v3191
          %v3267 = vpop.f32.mrf.mxu0
          %v3268 = vadd.f32 0.0, %v3267
          %v3269 = vpop.f32.mrf.mxu0
          %v3270 = vadd.f32 0.0, %v3269
          %3271 = vmatmul.bf16.gmra.mxu0 %v3194
          %v3272 = vpop.f32.mrf.mxu0
          %v3273 = vadd.f32 0.0, %v3272
          %v3274 = vpop.f32.mrf.mxu0
          %v3275 = vadd.f32 0.0, %v3274
          %3276 = vmatmul.bf16.gmra.mxu0 %v3197
          %v3277 = vpop.f32.mrf.mxu0
          %v3278 = vadd.f32 0.0, %v3277
          %v3279 = vpop.f32.mrf.mxu0
          %v3280 = vadd.f32 0.0, %v3279
          %3281 = vmatmul.bf16.gmra.mxu0 %v3200
          %v3282 = vpop.f32.mrf.mxu0
          %v3283 = vadd.f32 0.0, %v3282
          %v3284 = vpop.f32.mrf.mxu0
          %v3285 = vadd.f32 0.0, %v3284
          %3286 = vmatmul.bf16.gmra.mxu0 %v3203
          %v3287 = vpop.f32.mrf.mxu0
          %v3288 = vadd.f32 0.0, %v3287
          %v3289 = vpop.f32.mrf.mxu0
          %v3290 = vadd.f32 0.0, %v3289
          %3291 = vmatmul.bf16.gmra.mxu0 %v3206
          %v3292 = vpop.f32.mrf.mxu0
          %v3293 = vadd.f32 0.0, %v3292
          %v3294 = vpop.f32.mrf.mxu0
          %v3295 = vadd.f32 0.0, %v3294
          %3296 = vdwg.mxu0
          %v3297 = vadd.f32 %v3079, %v3218
          %v3298 = vadd.f32 %v3080, %v3220
          %v3299 = vadd.f32 %v3081, %v3223
          %v3300 = vadd.f32 %v3082, %v3225
          %v3301 = vadd.f32 %v3083, %v3228
          %v3302 = vadd.f32 %v3084, %v3230
          %v3303 = vadd.f32 %v3085, %v3233
          %v3304 = vadd.f32 %v3086, %v3235
          %v3305 = vadd.f32 %v3087, %v3238
          %v3306 = vadd.f32 %v3088, %v3240
          %v3307 = vadd.f32 %v3089, %v3243
          %v3308 = vadd.f32 %v3090, %v3245
          %v3309 = vadd.f32 %v3091, %v3248
          %v3310 = vadd.f32 %v3092, %v3250
          %v3311 = vadd.f32 %v3093, %v3253
          %v3312 = vadd.f32 %v3094, %v3255
          %v3313 = vadd.f32 %v3095, %v3258
          %v3314 = vadd.f32 %v3096, %v3260
          %v3315 = vadd.f32 %v3097, %v3263
          %v3316 = vadd.f32 %v3098, %v3265
          %v3317 = vadd.f32 %v3099, %v3268
          %v3318 = vadd.f32 %v3100, %v3270
          %v3319 = vadd.f32 %v3101, %v3273
          %v3320 = vadd.f32 %v3102, %v3275
          %v3321 = vadd.f32 %v3103, %v3278
          %v3322 = vadd.f32 %v3104, %v3280
          %v3323 = vadd.f32 %v3105, %v3283
          %v3324 = vadd.f32 %v3106, %v3285
          %v3325 = vadd.f32 %v3107, %v3288
          %v3326 = vadd.f32 %v3108, %v3290
          %v3327 = vadd.f32 %v3109, %v3293
          %v3328 = vadd.f32 %v3110, %v3295
          %v3329 = vld [vmem:[#allocation2 + $0x28] sm:$0xf]
          %v3330 = vld [vmem:[#allocation2 + $0x2c] sm:$0xf]
          %v3331 = vld [vmem:[#allocation2 + $0x30] sm:$0xf]
          %v3332 = vld [vmem:[#allocation2 + $0x34] sm:$0xf]
          %v3333 = vld [vmem:[#allocation2 + $0x38] sm:$0xf]
          %v3334 = vld [vmem:[#allocation2 + $0x3c] sm:$0xf]
          %v3335 = vld [vmem:[#allocation2 + $0x40] sm:$0xf]
          %v3336 = vld [vmem:[#allocation2 + $0x44] sm:$0xf]
          %v3337 = vld [vmem:[#allocation2 + $0x48] sm:$0xf]
          %v3338 = vld [vmem:[#allocation2 + $0x4c] sm:$0xf]
          %v3339 = vld [vmem:[#allocation2 + $0x50] sm:$0xf]
          %v3340 = vld [vmem:[#allocation2 + $0x54] sm:$0xf]
          %v3341 = vld [vmem:[#allocation2 + $0x58] sm:$0xf]
          %v3342 = vld [vmem:[#allocation2 + $0x5c] sm:$0xf]
          %v3343 = vld [vmem:[#allocation2 + $0x60] sm:$0xf]
          %v3344 = vld [vmem:[#allocation2 + $0x64] sm:$0xf]
          %v3345 = vld [vmem:[#allocation2 + $0x68] sm:$0xf]
          %v3346 = vld [vmem:[#allocation2 + $0x6c] sm:$0xf]
          %v3347 = vld [vmem:[#allocation2 + $0x70] sm:$0xf]
          %v3348 = vld [vmem:[#allocation2 + $0x74] sm:$0xf]
          %v3349 = vld [vmem:[#allocation2 + $0x78] sm:$0xf]
          %v3350 = vld [vmem:[#allocation2 + $0x7c] sm:$0xf]
          %v3351 = vld [vmem:[#allocation2 + $0x80] sm:$0xf]
          %v3352 = vld [vmem:[#allocation2 + $0x84] sm:$0xf]
          %v3353 = vld [vmem:[#allocation2 + $0x88] sm:$0xf]
          %v3354 = vld [vmem:[#allocation2 + $0x8c] sm:$0xf]
          %v3355 = vld [vmem:[#allocation2 + $0x90] sm:$0xf]
          %v3356 = vld [vmem:[#allocation2 + $0x94] sm:$0xf]
          %v3357 = vld [vmem:[#allocation2 + $0x98] sm:$0xf]
          %v3358 = vld [vmem:[#allocation2 + $0x9c] sm:$0xf]
          %v3359 = vld [vmem:[#allocation2 + $0xa0] sm:$0xf]
          %v3360 = vld [vmem:[#allocation2 + $0xa4] sm:$0xf]
          %v3361 = vld [vmem:[#allocation2 + $0xa8] sm:$0x1]
          %s3362 = scalar_lea.vmem %s208, 256 [#allocation4]
          %v3363 = vld [vmem:[%s3362] sm:$0xf]
          %v3364 = vld [vmem:[%s3362 + $0x4] sm:$0xf]
          %v3365 = vld [vmem:[%s3362 + $0x8] sm:$0xf]
          %v3366 = vld [vmem:[%s3362 + $0xc] sm:$0xf]
          %v3367 = vld [vmem:[%s3362 + $0x10] sm:$0xf]
          %v3368 = vld [vmem:[%s3362 + $0x14] sm:$0xf]
          %v3369 = vld [vmem:[%s3362 + $0x18] sm:$0xf]
          %v3370 = vld [vmem:[%s3362 + $0x1c] sm:$0xf]
          %v3404 = vunpack.c.l.b16 %v3329
          %v3405 = vunpack.c.l.b16 %v3330
          %v3406 = vunpack.c.l.b16 %v3331
          %v3407 = vunpack.c.l.b16 %v3332
          %v3408 = vunpack.c.l.b16 %v3333
          %v3409 = vunpack.c.l.b16 %v3334
          %v3410 = vunpack.c.l.b16 %v3335
          %v3411 = vunpack.c.l.b16 %v3336
          %v3412 = vunpack.c.l.b16 %v3337
          %v3413 = vunpack.c.l.b16 %v3338
          %v3414 = vunpack.c.l.b16 %v3339
          %v3415 = vunpack.c.l.b16 %v3340
          %v3416 = vunpack.c.l.b16 %v3341
          %v3417 = vunpack.c.l.b16 %v3342
          %v3418 = vunpack.c.l.b16 %v3343
          %v3419 = vunpack.c.l.b16 %v3344
          %v3420 = vunpack.c.l.b16 %v3345
          %v3421 = vunpack.c.l.b16 %v3346
          %v3422 = vunpack.c.l.b16 %v3347
          %v3423 = vunpack.c.l.b16 %v3348
          %v3424 = vunpack.c.l.b16 %v3349
          %v3425 = vunpack.c.l.b16 %v3350
          %v3426 = vunpack.c.l.b16 %v3351
          %v3427 = vunpack.c.l.b16 %v3352
          %v3428 = vunpack.c.l.b16 %v3353
          %v3429 = vunpack.c.l.b16 %v3354
          %v3430 = vunpack.c.l.b16 %v3355
          %v3431 = vunpack.c.l.b16 %v3356
          %v3432 = vunpack.c.l.b16 %v3357
          %v3433 = vunpack.c.l.b16 %v3358
          %v3434 = vunpack.c.l.b16 %v3359
          %v3435 = vunpack.c.l.b16 %v3360
          %v3436 = vunpack.c.l.b16 %v3361
          %v3437 = vpack.c.b16 %v3405, %v3404
          %v3438 = vpack.c.b16 %v3407, %v3406
          %v3439 = vpack.c.b16 %v3409, %v3408
          %v3440 = vpack.c.b16 %v3411, %v3410
          %v3441 = vpack.c.b16 %v3413, %v3412
          %v3442 = vpack.c.b16 %v3415, %v3414
          %v3443 = vpack.c.b16 %v3417, %v3416
          %v3444 = vpack.c.b16 %v3419, %v3418
          %v3445 = vpack.c.b16 %v3421, %v3420
          %v3446 = vpack.c.b16 %v3423, %v3422
          %v3447 = vpack.c.b16 %v3425, %v3424
          %v3448 = vpack.c.b16 %v3427, %v3426
          %v3449 = vpack.c.b16 %v3429, %v3428
          %v3450 = vpack.c.b16 %v3431, %v3430
          %v3451 = vpack.c.b16 %v3433, %v3432
          %v3452 = vpack.c.b16 %v3435, %v3434
          %v3453 = vpack.c.b16 %v3436, %v3436
          %v3455 = vshrl.u32 %v3437, 16
          %v3457 = vshll.u32 %v3437, 16
          %v3459 = vrot.slane %v3457, 1
          %v3460 = vor.u32 %v3455, %v3459
          %v3462 = vshll.u32 %v3438, 16
          %v3464 = vrot.slane %v3462, 1
          %v3465 = vsel %vm1177, %v3460, %v3464
          %v3466 = vshrl.u32 %v3438, 16
          %v3468 = vor.u32 %v3466, %v3464
          %v3470 = vshll.u32 %v3439, 16
          %v3472 = vrot.slane %v3470, 1
          %v3473 = vsel %vm1177, %v3468, %v3472
          %v3474 = vshrl.u32 %v3439, 16
          %v3476 = vor.u32 %v3474, %v3472
          %v3478 = vshll.u32 %v3440, 16
          %v3480 = vrot.slane %v3478, 1
          %v3481 = vsel %vm1177, %v3476, %v3480
          %v3482 = vshrl.u32 %v3440, 16
          %v3484 = vor.u32 %v3482, %v3480
          %v3486 = vshll.u32 %v3441, 16
          %v3488 = vrot.slane %v3486, 1
          %v3489 = vsel %vm1177, %v3484, %v3488
          %v3490 = vshrl.u32 %v3441, 16
          %v3492 = vor.u32 %v3490, %v3488
          %v3494 = vshll.u32 %v3442, 16
          %v3496 = vrot.slane %v3494, 1
          %v3497 = vsel %vm1177, %v3492, %v3496
          %v3498 = vshrl.u32 %v3442, 16
          %v3500 = vor.u32 %v3498, %v3496
          %v3502 = vshll.u32 %v3443, 16
          %v3504 = vrot.slane %v3502, 1
          %v3505 = vsel %vm1177, %v3500, %v3504
          %v3506 = vshrl.u32 %v3443, 16
          %v3508 = vor.u32 %v3506, %v3504
          %v3510 = vshll.u32 %v3444, 16
          %v3512 = vrot.slane %v3510, 1
          %v3513 = vsel %vm1177, %v3508, %v3512
          %v3514 = vshrl.u32 %v3444, 16
          %v3516 = vor.u32 %v3514, %v3512
          %v3518 = vshll.u32 %v3445, 16
          %v3520 = vrot.slane %v3518, 1
          %v3521 = vsel %vm1177, %v3516, %v3520
          %v3522 = vshrl.u32 %v3445, 16
          %v3524 = vor.u32 %v3522, %v3520
          %v3526 = vshll.u32 %v3446, 16
          %v3528 = vrot.slane %v3526, 1
          %v3529 = vsel %vm1177, %v3524, %v3528
          %v3530 = vshrl.u32 %v3446, 16
          %v3532 = vor.u32 %v3530, %v3528
          %v3534 = vshll.u32 %v3447, 16
          %v3536 = vrot.slane %v3534, 1
          %v3537 = vsel %vm1177, %v3532, %v3536
          %v3538 = vshrl.u32 %v3447, 16
          %v3540 = vor.u32 %v3538, %v3536
          %v3542 = vshll.u32 %v3448, 16
          %v3544 = vrot.slane %v3542, 1
          %v3545 = vsel %vm1177, %v3540, %v3544
          %v3546 = vshrl.u32 %v3448, 16
          %v3548 = vor.u32 %v3546, %v3544
          %v3550 = vshll.u32 %v3449, 16
          %v3552 = vrot.slane %v3550, 1
          %v3553 = vsel %vm1177, %v3548, %v3552
          %v3554 = vshrl.u32 %v3449, 16
          %v3556 = vor.u32 %v3554, %v3552
          %v3558 = vshll.u32 %v3450, 16
          %v3560 = vrot.slane %v3558, 1
          %v3561 = vsel %vm1177, %v3556, %v3560
          %v3562 = vshrl.u32 %v3450, 16
          %v3564 = vor.u32 %v3562, %v3560
          %v3566 = vshll.u32 %v3451, 16
          %v3568 = vrot.slane %v3566, 1
          %v3569 = vsel %vm1177, %v3564, %v3568
          %v3570 = vshrl.u32 %v3451, 16
          %v3572 = vor.u32 %v3570, %v3568
          %v3574 = vshll.u32 %v3452, 16
          %v3576 = vrot.slane %v3574, 1
          %v3577 = vsel %vm1177, %v3572, %v3576
          %v3578 = vshrl.u32 %v3452, 16
          %v3580 = vor.u32 %v3578, %v3576
          %v3582 = vshll.u32 %v3453, 16
          %v3584 = vrot.slane %v3582, 1
          %v3585 = vsel %vm1177, %v3580, %v3584
          %v3594 = vunpack.c.l.b16 %v3363
          %v3595 = vunpack.c.l.b16 %v3364
          %v3596 = vunpack.c.l.b16 %v3365
          %v3597 = vunpack.c.l.b16 %v3366
          %v3598 = vunpack.c.l.b16 %v3367
          %v3599 = vunpack.c.l.b16 %v3368
          %v3600 = vunpack.c.l.b16 %v3369
          %v3601 = vunpack.c.l.b16 %v3370
          %v3602 = vpack.c.b16 %v3595, %v3594
          %v3603 = vpack.c.b16 %v3597, %v3596
          %v3604 = vpack.c.b16 %v3599, %v3598
          %v3605 = vpack.c.b16 %v3601, %v3600
          %v3611 = vsel %vm581, %v3465, 0
          %v3614 = vsel %vm581, %v3473, 0
          %v3617 = vsel %vm581, %v3481, 0
          %v3620 = vsel %vm581, %v3489, 0
          %v3623 = vsel %vm581, %v3497, 0
          %v3626 = vsel %vm581, %v3505, 0
          %v3629 = vsel %vm581, %v3513, 0
          %v3632 = vsel %vm581, %v3521, 0
          %v3635 = vsel %vm581, %v3529, 0
          %v3638 = vsel %vm581, %v3537, 0
          %v3641 = vsel %vm581, %v3545, 0
          %v3644 = vsel %vm581, %v3553, 0
          %v3647 = vsel %vm581, %v3561, 0
          %v3650 = vsel %vm581, %v3569, 0
          %v3653 = vsel %vm581, %v3577, 0
          %v3656 = vsel %vm581, %v3585, 0
          %3658 = vmatpush.bf16.msra.mxu0 0
          %3659 = vmatpush.bf16.msra.mxu0 0
          %3660 = vmatpush.bf16.msra.mxu0 0
          %3661 = vmatpush.bf16.msra.mxu0 0
          %3662 = vmatpush.bf16.msra.mxu0 %v3605
          %3663 = vmatpush.bf16.msra.mxu0 %v3604
          %3664 = vmatpush.bf16.msra.mxu0 %v3603
          %3665 = vmatpush.bf16.msra.mxu0 %v3602
          %3666 = vmatmul.bf16.gmra.mxu0 %v3611
          %v3667 = vpop.f32.mrf.mxu0
          %v3668 = vadd.f32 0.0, %v3667
          %v3669 = vpop.f32.mrf.mxu0
          %v3670 = vadd.f32 0.0, %v3669
          %3671 = vmatmul.bf16.gmra.mxu0 %v3614
          %v3672 = vpop.f32.mrf.mxu0
          %v3673 = vadd.f32 0.0, %v3672
          %v3674 = vpop.f32.mrf.mxu0
          %v3675 = vadd.f32 0.0, %v3674
          %3676 = vmatmul.bf16.gmra.mxu0 %v3617
          %v3677 = vpop.f32.mrf.mxu0
          %v3678 = vadd.f32 0.0, %v3677
          %v3679 = vpop.f32.mrf.mxu0
          %v3680 = vadd.f32 0.0, %v3679
          %3681 = vmatmul.bf16.gmra.mxu0 %v3620
          %v3682 = vpop.f32.mrf.mxu0
          %v3683 = vadd.f32 0.0, %v3682
          %v3684 = vpop.f32.mrf.mxu0
          %v3685 = vadd.f32 0.0, %v3684
          %3686 = vmatmul.bf16.gmra.mxu0 %v3623
          %v3687 = vpop.f32.mrf.mxu0
          %v3688 = vadd.f32 0.0, %v3687
          %v3689 = vpop.f32.mrf.mxu0
          %v3690 = vadd.f32 0.0, %v3689
          %3691 = vmatmul.bf16.gmra.mxu0 %v3626
          %v3692 = vpop.f32.mrf.mxu0
          %v3693 = vadd.f32 0.0, %v3692
          %v3694 = vpop.f32.mrf.mxu0
          %v3695 = vadd.f32 0.0, %v3694
          %3696 = vmatmul.bf16.gmra.mxu0 %v3629
          %v3697 = vpop.f32.mrf.mxu0
          %v3698 = vadd.f32 0.0, %v3697
          %v3699 = vpop.f32.mrf.mxu0
          %v3700 = vadd.f32 0.0, %v3699
          %3701 = vmatmul.bf16.gmra.mxu0 %v3632
          %v3702 = vpop.f32.mrf.mxu0
          %v3703 = vadd.f32 0.0, %v3702
          %v3704 = vpop.f32.mrf.mxu0
          %v3705 = vadd.f32 0.0, %v3704
          %3706 = vmatmul.bf16.gmra.mxu0 %v3635
          %v3707 = vpop.f32.mrf.mxu0
          %v3708 = vadd.f32 0.0, %v3707
          %v3709 = vpop.f32.mrf.mxu0
          %v3710 = vadd.f32 0.0, %v3709
          %3711 = vmatmul.bf16.gmra.mxu0 %v3638
          %v3712 = vpop.f32.mrf.mxu0
          %v3713 = vadd.f32 0.0, %v3712
          %v3714 = vpop.f32.mrf.mxu0
          %v3715 = vadd.f32 0.0, %v3714
          %3716 = vmatmul.bf16.gmra.mxu0 %v3641
          %v3717 = vpop.f32.mrf.mxu0
          %v3718 = vadd.f32 0.0, %v3717
          %v3719 = vpop.f32.mrf.mxu0
          %v3720 = vadd.f32 0.0, %v3719
          %3721 = vmatmul.bf16.gmra.mxu0 %v3644
          %v3722 = vpop.f32.mrf.mxu0
          %v3723 = vadd.f32 0.0, %v3722
          %v3724 = vpop.f32.mrf.mxu0
          %v3725 = vadd.f32 0.0, %v3724
          %3726 = vmatmul.bf16.gmra.mxu0 %v3647
          %v3727 = vpop.f32.mrf.mxu0
          %v3728 = vadd.f32 0.0, %v3727
          %v3729 = vpop.f32.mrf.mxu0
          %v3730 = vadd.f32 0.0, %v3729
          %3731 = vmatmul.bf16.gmra.mxu0 %v3650
          %v3732 = vpop.f32.mrf.mxu0
          %v3733 = vadd.f32 0.0, %v3732
          %v3734 = vpop.f32.mrf.mxu0
          %v3735 = vadd.f32 0.0, %v3734
          %3736 = vmatmul.bf16.gmra.mxu0 %v3653
          %v3737 = vpop.f32.mrf.mxu0
          %v3738 = vadd.f32 0.0, %v3737
          %v3739 = vpop.f32.mrf.mxu0
          %v3740 = vadd.f32 0.0, %v3739
          %3741 = vmatmul.bf16.gmra.mxu0 %v3656
          %v3742 = vpop.f32.mrf.mxu0
          %v3743 = vadd.f32 0.0, %v3742
          %v3744 = vpop.f32.mrf.mxu0
          %v3745 = vadd.f32 0.0, %v3744
          %3746 = vdwg.mxu0
          %v3747 = vadd.f32 %v3297, %v3668
          %v3748 = vadd.f32 %v3298, %v3670
          %v3749 = vadd.f32 %v3299, %v3673
          %v3750 = vadd.f32 %v3300, %v3675
          %v3751 = vadd.f32 %v3301, %v3678
          %v3752 = vadd.f32 %v3302, %v3680
          %v3753 = vadd.f32 %v3303, %v3683
          %v3754 = vadd.f32 %v3304, %v3685
          %v3755 = vadd.f32 %v3305, %v3688
          %v3756 = vadd.f32 %v3306, %v3690
          %v3757 = vadd.f32 %v3307, %v3693
          %v3758 = vadd.f32 %v3308, %v3695
          %v3759 = vadd.f32 %v3309, %v3698
          %v3760 = vadd.f32 %v3310, %v3700
          %v3761 = vadd.f32 %v3311, %v3703
          %v3762 = vadd.f32 %v3312, %v3705
          %v3763 = vadd.f32 %v3313, %v3708
          %v3764 = vadd.f32 %v3314, %v3710
          %v3765 = vadd.f32 %v3315, %v3713
          %v3766 = vadd.f32 %v3316, %v3715
          %v3767 = vadd.f32 %v3317, %v3718
          %v3768 = vadd.f32 %v3318, %v3720
          %v3769 = vadd.f32 %v3319, %v3723
          %v3770 = vadd.f32 %v3320, %v3725
          %v3771 = vadd.f32 %v3321, %v3728
          %v3772 = vadd.f32 %v3322, %v3730
          %v3773 = vadd.f32 %v3323, %v3733
          %v3774 = vadd.f32 %v3324, %v3735
          %v3775 = vadd.f32 %v3325, %v3738
          %v3776 = vadd.f32 %v3326, %v3740
          %v3777 = vadd.f32 %v3327, %v3743
          %v3778 = vadd.f32 %v3328, %v3745
          %v3779 = vld [vmem:[%s217] sm:$0x1]
          %v3781 = vperm.slane %v3779, 0
          %v3783 = vadd.f32 %v3747, %v3781
          %v3784 = vadd.f32 %v3748, %v3781
          %v3785 = vadd.f32 %v3749, %v3781
          %v3786 = vadd.f32 %v3750, %v3781
          %v3787 = vadd.f32 %v3751, %v3781
          %v3788 = vadd.f32 %v3752, %v3781
          %v3789 = vadd.f32 %v3753, %v3781
          %v3790 = vadd.f32 %v3754, %v3781
          %v3791 = vadd.f32 %v3755, %v3781
          %v3792 = vadd.f32 %v3756, %v3781
          %v3793 = vadd.f32 %v3757, %v3781
          %v3794 = vadd.f32 %v3758, %v3781
          %v3795 = vadd.f32 %v3759, %v3781
          %v3796 = vadd.f32 %v3760, %v3781
          %v3797 = vadd.f32 %v3761, %v3781
          %v3798 = vadd.f32 %v3762, %v3781
          %v3799 = vadd.f32 %v3763, %v3781
          %v3800 = vadd.f32 %v3764, %v3781
          %v3801 = vadd.f32 %v3765, %v3781
          %v3802 = vadd.f32 %v3766, %v3781
          %v3803 = vadd.f32 %v3767, %v3781
          %v3804 = vadd.f32 %v3768, %v3781
          %v3805 = vadd.f32 %v3769, %v3781
          %v3806 = vadd.f32 %v3770, %v3781
          %v3807 = vadd.f32 %v3771, %v3781
          %v3808 = vadd.f32 %v3772, %v3781
          %v3809 = vadd.f32 %v3773, %v3781
          %v3810 = vadd.f32 %v3774, %v3781
          %v3811 = vadd.f32 %v3775, %v3781
          %v3812 = vadd.f32 %v3776, %v3781
          %v3813 = vadd.f32 %v3777, %v3781
          %v3814 = vadd.f32 %v3778, %v3781
          %p3815 = scmp.lt.s32.totalorder %s25, 14
          // Predicated region
          $region49: #{ffdnet_forward.1} parent=47 // pred_check
            %p3816 = pneg %p3815
          $region50: #{ffdnet_forward.1} parent=47 // pred_check_branch
            %3818 = sbr.rel (%p3816) target = $region52
          $region51: #{ffdnet_forward.1} parent=47 // pred_region
            %v3819 = vlaneseq
            %v3820 = vshrl.u32 %v3819, 7
            %v3821 = vadd.s32 %v3820, 8
            %v3822 = vadd.s32 %v3820, 16
            %v3823 = vadd.s32 %v3820, 24
            %v3824 = vadd.s32 %v3820, 32
            %v3825 = vadd.s32 %v3820, 40
            %v3826 = vadd.s32 %v3820, 48
            %v3827 = vadd.s32 %v3820, 56
            %v3828 = vadd.s32 %v3820, 64
            %v3829 = vadd.s32 %v3820, 72
            %v3830 = vadd.s32 %v3820, 80
            %v3831 = vadd.s32 %v3820, 88
            %v3832 = vadd.s32 %v3820, 96
            %v3833 = vadd.s32 %v3820, 104
            %v3834 = vadd.s32 %v3820, 112
            %v3835 = vadd.s32 %v3820, 120
            %v3836 = vadd.s32 %v3820, 128
            %v3837 = vadd.s32 %v3820, 136
            %v3838 = vadd.s32 %v3820, 144
            %v3839 = vadd.s32 %v3820, 152
            %v3840 = vadd.s32 %v3820, 160
            %v3841 = vadd.s32 %v3820, 168
            %v3842 = vadd.s32 %v3820, 176
            %v3843 = vadd.s32 %v3820, 184
            %v3844 = vadd.s32 %v3820, 192
            %v3845 = vadd.s32 %v3820, 200
            %v3846 = vadd.s32 %v3820, 208
            %v3847 = vadd.s32 %v3820, 216
            %v3848 = vadd.s32 %v3820, 224
            %v3849 = vadd.s32 %v3820, 232
            %v3850 = vadd.s32 %v3820, 240
            %v3851 = vadd.s32 %v3820, 248
            %vm3852 = vcmp.lt.s32.totalorder %v3820, 0
            %v3853 = vsub.s32 0, %v3820
            %v3854 = vsel %vm3852, %v3853, %v3820
            %v3855 = vshrl.u32 %v3854, 5
            %v3856 = vand.u32 %v3854, 31
            %v3857 = vsub.s32 0, %v3856
            %v3858 = vsel %vm3852, %v3857, %v3856
            %vm3859 = vcmp.lt.s32.totalorder %v3821, 0
            %v3860 = vsub.s32 0, %v3821
            %v3861 = vsel %vm3859, %v3860, %v3821
            %v3862 = vshrl.u32 %v3861, 5
            %v3863 = vand.u32 %v3861, 31
            %v3864 = vsub.s32 0, %v3863
            %v3865 = vsel %vm3859, %v3864, %v3863
            %vm3866 = vcmp.lt.s32.totalorder %v3822, 0
            %v3867 = vsub.s32 0, %v3822
            %v3868 = vsel %vm3866, %v3867, %v3822
            %v3869 = vshrl.u32 %v3868, 5
            %v3870 = vand.u32 %v3868, 31
            %v3871 = vsub.s32 0, %v3870
            %v3872 = vsel %vm3866, %v3871, %v3870
            %vm3873 = vcmp.lt.s32.totalorder %v3823, 0
            %v3874 = vsub.s32 0, %v3823
            %v3875 = vsel %vm3873, %v3874, %v3823
            %v3876 = vshrl.u32 %v3875, 5
            %v3877 = vand.u32 %v3875, 31
            %v3878 = vsub.s32 0, %v3877
            %v3879 = vsel %vm3873, %v3878, %v3877
            %vm3880 = vcmp.lt.s32.totalorder %v3824, 0
            %v3881 = vsub.s32 0, %v3824
            %v3882 = vsel %vm3880, %v3881, %v3824
            %v3883 = vshrl.u32 %v3882, 5
            %v3884 = vand.u32 %v3882, 31
            %v3885 = vsub.s32 0, %v3884
            %v3886 = vsel %vm3880, %v3885, %v3884
            %vm3887 = vcmp.lt.s32.totalorder %v3825, 0
            %v3888 = vsub.s32 0, %v3825
            %v3889 = vsel %vm3887, %v3888, %v3825
            %v3890 = vshrl.u32 %v3889, 5
            %v3891 = vand.u32 %v3889, 31
            %v3892 = vsub.s32 0, %v3891
            %v3893 = vsel %vm3887, %v3892, %v3891
            %vm3894 = vcmp.lt.s32.totalorder %v3826, 0
            %v3895 = vsub.s32 0, %v3826
            %v3896 = vsel %vm3894, %v3895, %v3826
            %v3897 = vshrl.u32 %v3896, 5
            %v3898 = vand.u32 %v3896, 31
            %v3899 = vsub.s32 0, %v3898
            %v3900 = vsel %vm3894, %v3899, %v3898
            %vm3901 = vcmp.lt.s32.totalorder %v3827, 0
            %v3902 = vsub.s32 0, %v3827
            %v3903 = vsel %vm3901, %v3902, %v3827
            %v3904 = vshrl.u32 %v3903, 5
            %v3905 = vand.u32 %v3903, 31
            %v3906 = vsub.s32 0, %v3905
            %v3907 = vsel %vm3901, %v3906, %v3905
            %vm3908 = vcmp.lt.s32.totalorder %v3828, 0
            %v3909 = vsub.s32 0, %v3828
            %v3910 = vsel %vm3908, %v3909, %v3828
            %v3911 = vshrl.u32 %v3910, 5
            %v3912 = vand.u32 %v3910, 31
            %v3913 = vsub.s32 0, %v3912
            %v3914 = vsel %vm3908, %v3913, %v3912
            %vm3915 = vcmp.lt.s32.totalorder %v3829, 0
            %v3916 = vsub.s32 0, %v3829
            %v3917 = vsel %vm3915, %v3916, %v3829
            %v3918 = vshrl.u32 %v3917, 5
            %v3919 = vand.u32 %v3917, 31
            %v3920 = vsub.s32 0, %v3919
            %v3921 = vsel %vm3915, %v3920, %v3919
            %vm3922 = vcmp.lt.s32.totalorder %v3830, 0
            %v3923 = vsub.s32 0, %v3830
            %v3924 = vsel %vm3922, %v3923, %v3830
            %v3925 = vshrl.u32 %v3924, 5
            %v3926 = vand.u32 %v3924, 31
            %v3927 = vsub.s32 0, %v3926
            %v3928 = vsel %vm3922, %v3927, %v3926
            %vm3929 = vcmp.lt.s32.totalorder %v3831, 0
            %v3930 = vsub.s32 0, %v3831
            %v3931 = vsel %vm3929, %v3930, %v3831
            %v3932 = vshrl.u32 %v3931, 5
            %v3933 = vand.u32 %v3931, 31
            %v3934 = vsub.s32 0, %v3933
            %v3935 = vsel %vm3929, %v3934, %v3933
            %vm3936 = vcmp.lt.s32.totalorder %v3832, 0
            %v3937 = vsub.s32 0, %v3832
            %v3938 = vsel %vm3936, %v3937, %v3832
            %v3939 = vshrl.u32 %v3938, 5
            %v3940 = vand.u32 %v3938, 31
            %v3941 = vsub.s32 0, %v3940
            %v3942 = vsel %vm3936, %v3941, %v3940
            %vm3943 = vcmp.lt.s32.totalorder %v3833, 0
            %v3944 = vsub.s32 0, %v3833
            %v3945 = vsel %vm3943, %v3944, %v3833
            %v3946 = vshrl.u32 %v3945, 5
            %v3947 = vand.u32 %v3945, 31
            %v3948 = vsub.s32 0, %v3947
            %v3949 = vsel %vm3943, %v3948, %v3947
            %vm3950 = vcmp.lt.s32.totalorder %v3834, 0
            %v3951 = vsub.s32 0, %v3834
            %v3952 = vsel %vm3950, %v3951, %v3834
            %v3953 = vshrl.u32 %v3952, 5
            %v3954 = vand.u32 %v3952, 31
            %v3955 = vsub.s32 0, %v3954
            %v3956 = vsel %vm3950, %v3955, %v3954
            %vm3957 = vcmp.lt.s32.totalorder %v3835, 0
            %v3958 = vsub.s32 0, %v3835
            %v3959 = vsel %vm3957, %v3958, %v3835
            %v3960 = vshrl.u32 %v3959, 5
            %v3961 = vand.u32 %v3959, 31
            %v3962 = vsub.s32 0, %v3961
            %v3963 = vsel %vm3957, %v3962, %v3961
            %vm3964 = vcmp.lt.s32.totalorder %v3836, 0
            %v3965 = vsub.s32 0, %v3836
            %v3966 = vsel %vm3964, %v3965, %v3836
            %v3967 = vshrl.u32 %v3966, 5
            %v3968 = vand.u32 %v3966, 31
            %v3969 = vsub.s32 0, %v3968
            %v3970 = vsel %vm3964, %v3969, %v3968
            %vm3971 = vcmp.lt.s32.totalorder %v3837, 0
            %v3972 = vsub.s32 0, %v3837
            %v3973 = vsel %vm3971, %v3972, %v3837
            %v3974 = vshrl.u32 %v3973, 5
            %v3975 = vand.u32 %v3973, 31
            %v3976 = vsub.s32 0, %v3975
            %v3977 = vsel %vm3971, %v3976, %v3975
            %vm3978 = vcmp.lt.s32.totalorder %v3838, 0
            %v3979 = vsub.s32 0, %v3838
            %v3980 = vsel %vm3978, %v3979, %v3838
            %v3981 = vshrl.u32 %v3980, 5
            %v3982 = vand.u32 %v3980, 31
            %v3983 = vsub.s32 0, %v3982
            %v3984 = vsel %vm3978, %v3983, %v3982
            %vm3985 = vcmp.lt.s32.totalorder %v3839, 0
            %v3986 = vsub.s32 0, %v3839
            %v3987 = vsel %vm3985, %v3986, %v3839
            %v3988 = vshrl.u32 %v3987, 5
            %v3989 = vand.u32 %v3987, 31
            %v3990 = vsub.s32 0, %v3989
            %v3991 = vsel %vm3985, %v3990, %v3989
            %vm3992 = vcmp.lt.s32.totalorder %v3840, 0
            %v3993 = vsub.s32 0, %v3840
            %v3994 = vsel %vm3992, %v3993, %v3840
            %v3995 = vshrl.u32 %v3994, 5
            %v3996 = vand.u32 %v3994, 31
            %v3997 = vsub.s32 0, %v3996
            %v3998 = vsel %vm3992, %v3997, %v3996
            %vm3999 = vcmp.lt.s32.totalorder %v3841, 0
            %v4000 = vsub.s32 0, %v3841
            %v4001 = vsel %vm3999, %v4000, %v3841
            %v4002 = vshrl.u32 %v4001, 5
            %v4003 = vand.u32 %v4001, 31
            %v4004 = vsub.s32 0, %v4003
            %v4005 = vsel %vm3999, %v4004, %v4003
            %vm4006 = vcmp.lt.s32.totalorder %v3842, 0
            %v4007 = vsub.s32 0, %v3842
            %v4008 = vsel %vm4006, %v4007, %v3842
            %v4009 = vshrl.u32 %v4008, 5
            %v4010 = vand.u32 %v4008, 31
            %v4011 = vsub.s32 0, %v4010
            %v4012 = vsel %vm4006, %v4011, %v4010
            %vm4013 = vcmp.lt.s32.totalorder %v3843, 0
            %v4014 = vsub.s32 0, %v3843
            %v4015 = vsel %vm4013, %v4014, %v3843
            %v4016 = vshrl.u32 %v4015, 5
            %v4017 = vand.u32 %v4015, 31
            %v4018 = vsub.s32 0, %v4017
            %v4019 = vsel %vm4013, %v4018, %v4017
            %vm4020 = vcmp.lt.s32.totalorder %v3844, 0
            %v4021 = vsub.s32 0, %v3844
            %v4022 = vsel %vm4020, %v4021, %v3844
            %v4023 = vshrl.u32 %v4022, 5
            %v4024 = vand.u32 %v4022, 31
            %v4025 = vsub.s32 0, %v4024
            %v4026 = vsel %vm4020, %v4025, %v4024
            %vm4027 = vcmp.lt.s32.totalorder %v3845, 0
            %v4028 = vsub.s32 0, %v3845
            %v4029 = vsel %vm4027, %v4028, %v3845
            %v4030 = vshrl.u32 %v4029, 5
            %v4031 = vand.u32 %v4029, 31
            %v4032 = vsub.s32 0, %v4031
            %v4033 = vsel %vm4027, %v4032, %v4031
            %vm4034 = vcmp.lt.s32.totalorder %v3846, 0
            %v4035 = vsub.s32 0, %v3846
            %v4036 = vsel %vm4034, %v4035, %v3846
            %v4037 = vshrl.u32 %v4036, 5
            %v4038 = vand.u32 %v4036, 31
            %v4039 = vsub.s32 0, %v4038
            %v4040 = vsel %vm4034, %v4039, %v4038
            %vm4041 = vcmp.lt.s32.totalorder %v3847, 0
            %v4042 = vsub.s32 0, %v3847
            %v4043 = vsel %vm4041, %v4042, %v3847
            %v4044 = vshrl.u32 %v4043, 5
            %v4045 = vand.u32 %v4043, 31
            %v4046 = vsub.s32 0, %v4045
            %v4047 = vsel %vm4041, %v4046, %v4045
            %vm4048 = vcmp.lt.s32.totalorder %v3848, 0
            %v4049 = vsub.s32 0, %v3848
            %v4050 = vsel %vm4048, %v4049, %v3848
            %v4051 = vshrl.u32 %v4050, 5
            %v4052 = vand.u32 %v4050, 31
            %v4053 = vsub.s32 0, %v4052
            %v4054 = vsel %vm4048, %v4053, %v4052
            %vm4055 = vcmp.lt.s32.totalorder %v3849, 0
            %v4056 = vsub.s32 0, %v3849
            %v4057 = vsel %vm4055, %v4056, %v3849
            %v4058 = vshrl.u32 %v4057, 5
            %v4059 = vand.u32 %v4057, 31
            %v4060 = vsub.s32 0, %v4059
            %v4061 = vsel %vm4055, %v4060, %v4059
            %vm4062 = vcmp.lt.s32.totalorder %v3850, 0
            %v4063 = vsub.s32 0, %v3850
            %v4064 = vsel %vm4062, %v4063, %v3850
            %v4065 = vshrl.u32 %v4064, 5
            %v4066 = vand.u32 %v4064, 31
            %v4067 = vsub.s32 0, %v4066
            %v4068 = vsel %vm4062, %v4067, %v4066
            %vm4069 = vcmp.lt.s32.totalorder %v3851, 0
            %v4070 = vsub.s32 0, %v3851
            %v4071 = vsel %vm4069, %v4070, %v3851
            %v4072 = vshrl.u32 %v4071, 5
            %v4073 = vand.u32 %v4071, 31
            %v4074 = vsub.s32 0, %v4073
            %v4075 = vsel %vm4069, %v4074, %v4073
            %vm4076 = vcmp.ne.s32.totalorder %v3858, 0
            %vm4077 = vcmp.ne.s32.totalorder %v3865, 0
            %vm4078 = vcmp.ne.s32.totalorder %v3872, 0
            %vm4079 = vcmp.ne.s32.totalorder %v3879, 0
            %vm4080 = vcmp.ne.s32.totalorder %v3886, 0
            %vm4081 = vcmp.ne.s32.totalorder %v3893, 0
            %vm4082 = vcmp.ne.s32.totalorder %v3900, 0
            %vm4083 = vcmp.ne.s32.totalorder %v3907, 0
            %vm4084 = vcmp.ne.s32.totalorder %v3914, 0
            %vm4085 = vcmp.ne.s32.totalorder %v3921, 0
            %vm4086 = vcmp.ne.s32.totalorder %v3928, 0
            %vm4087 = vcmp.ne.s32.totalorder %v3935, 0
            %vm4088 = vcmp.ne.s32.totalorder %v3942, 0
            %vm4089 = vcmp.ne.s32.totalorder %v3949, 0
            %vm4090 = vcmp.ne.s32.totalorder %v3956, 0
            %vm4091 = vcmp.ne.s32.totalorder %v3963, 0
            %vm4092 = vcmp.ne.s32.totalorder %v3970, 0
            %vm4093 = vcmp.ne.s32.totalorder %v3977, 0
            %vm4094 = vcmp.ne.s32.totalorder %v3984, 0
            %vm4095 = vcmp.ne.s32.totalorder %v3991, 0
            %vm4096 = vcmp.ne.s32.totalorder %v3998, 0
            %vm4097 = vcmp.ne.s32.totalorder %v4005, 0
            %vm4098 = vcmp.ne.s32.totalorder %v4012, 0
            %vm4099 = vcmp.ne.s32.totalorder %v4019, 0
            %vm4100 = vcmp.ne.s32.totalorder %v4026, 0
            %vm4101 = vcmp.ne.s32.totalorder %v4033, 0
            %vm4102 = vcmp.ne.s32.totalorder %v4040, 0
            %vm4103 = vcmp.ne.s32.totalorder %v4047, 0
            %vm4104 = vcmp.ne.s32.totalorder %v4054, 0
            %vm4105 = vcmp.ne.s32.totalorder %v4061, 0
            %vm4106 = vcmp.ne.s32.totalorder %v4068, 0
            %vm4107 = vcmp.ne.s32.totalorder %v4075, 0
            %vm4108 = vcmp.lt.s32.totalorder %v3858, 0
            %vm4109 = vcmp.lt.s32.totalorder %v3865, 0
            %vm4110 = vcmp.lt.s32.totalorder %v3872, 0
            %vm4111 = vcmp.lt.s32.totalorder %v3879, 0
            %vm4112 = vcmp.lt.s32.totalorder %v3886, 0
            %vm4113 = vcmp.lt.s32.totalorder %v3893, 0
            %vm4114 = vcmp.lt.s32.totalorder %v3900, 0
            %vm4115 = vcmp.lt.s32.totalorder %v3907, 0
            %vm4116 = vcmp.lt.s32.totalorder %v3914, 0
            %vm4117 = vcmp.lt.s32.totalorder %v3921, 0
            %vm4118 = vcmp.lt.s32.totalorder %v3928, 0
            %vm4119 = vcmp.lt.s32.totalorder %v3935, 0
            %vm4120 = vcmp.lt.s32.totalorder %v3942, 0
            %vm4121 = vcmp.lt.s32.totalorder %v3949, 0
            %vm4122 = vcmp.lt.s32.totalorder %v3956, 0
            %vm4123 = vcmp.lt.s32.totalorder %v3963, 0
            %vm4124 = vcmp.lt.s32.totalorder %v3970, 0
            %vm4125 = vcmp.lt.s32.totalorder %v3977, 0
            %vm4126 = vcmp.lt.s32.totalorder %v3984, 0
            %vm4127 = vcmp.lt.s32.totalorder %v3991, 0
            %vm4128 = vcmp.lt.s32.totalorder %v3998, 0
            %vm4129 = vcmp.lt.s32.totalorder %v4005, 0
            %vm4130 = vcmp.lt.s32.totalorder %v4012, 0
            %vm4131 = vcmp.lt.s32.totalorder %v4019, 0
            %vm4132 = vcmp.lt.s32.totalorder %v4026, 0
            %vm4133 = vcmp.lt.s32.totalorder %v4033, 0
            %vm4134 = vcmp.lt.s32.totalorder %v4040, 0
            %vm4135 = vcmp.lt.s32.totalorder %v4047, 0
            %vm4136 = vcmp.lt.s32.totalorder %v4054, 0
            %vm4137 = vcmp.lt.s32.totalorder %v4061, 0
            %vm4138 = vcmp.lt.s32.totalorder %v4068, 0
            %vm4139 = vcmp.lt.s32.totalorder %v4075, 0
            %vm4140 = vmand %vm4108, %vm4076
            %vm4141 = vmand %vm4109, %vm4077
            %vm4142 = vmand %vm4110, %vm4078
            %vm4143 = vmand %vm4111, %vm4079
            %vm4144 = vmand %vm4112, %vm4080
            %vm4145 = vmand %vm4113, %vm4081
            %vm4146 = vmand %vm4114, %vm4082
            %vm4147 = vmand %vm4115, %vm4083
            %vm4148 = vmand %vm4116, %vm4084
            %vm4149 = vmand %vm4117, %vm4085
            %vm4150 = vmand %vm4118, %vm4086
            %vm4151 = vmand %vm4119, %vm4087
            %vm4152 = vmand %vm4120, %vm4088
            %vm4153 = vmand %vm4121, %vm4089
            %vm4154 = vmand %vm4122, %vm4090
            %vm4155 = vmand %vm4123, %vm4091
            %vm4156 = vmand %vm4124, %vm4092
            %vm4157 = vmand %vm4125, %vm4093
            %vm4158 = vmand %vm4126, %vm4094
            %vm4159 = vmand %vm4127, %vm4095
            %vm4160 = vmand %vm4128, %vm4096
            %vm4161 = vmand %vm4129, %vm4097
            %vm4162 = vmand %vm4130, %vm4098
            %vm4163 = vmand %vm4131, %vm4099
            %vm4164 = vmand %vm4132, %vm4100
            %vm4165 = vmand %vm4133, %vm4101
            %vm4166 = vmand %vm4134, %vm4102
            %vm4167 = vmand %vm4135, %vm4103
            %vm4168 = vmand %vm4136, %vm4104
            %vm4169 = vmand %vm4137, %vm4105
            %vm4170 = vmand %vm4138, %vm4106
            %vm4171 = vmand %vm4139, %vm4107
            %v4172 = vadd.s32 %v3858, 32
            %v4173 = vadd.s32 %v3865, 32
            %v4174 = vadd.s32 %v3872, 32
            %v4175 = vadd.s32 %v3879, 32
            %v4176 = vadd.s32 %v3886, 32
            %v4177 = vadd.s32 %v3893, 32
            %v4178 = vadd.s32 %v3900, 32
            %v4179 = vadd.s32 %v3907, 32
            %v4180 = vadd.s32 %v3914, 32
            %v4181 = vadd.s32 %v3921, 32
            %v4182 = vadd.s32 %v3928, 32
            %v4183 = vadd.s32 %v3935, 32
            %v4184 = vadd.s32 %v3942, 32
            %v4185 = vadd.s32 %v3949, 32
            %v4186 = vadd.s32 %v3956, 32
            %v4187 = vadd.s32 %v3963, 32
            %v4188 = vadd.s32 %v3970, 32
            %v4189 = vadd.s32 %v3977, 32
            %v4190 = vadd.s32 %v3984, 32
            %v4191 = vadd.s32 %v3991, 32
            %v4192 = vadd.s32 %v3998, 32
            %v4193 = vadd.s32 %v4005, 32
            %v4194 = vadd.s32 %v4012, 32
            %v4195 = vadd.s32 %v4019, 32
            %v4196 = vadd.s32 %v4026, 32
            %v4197 = vadd.s32 %v4033, 32
            %v4198 = vadd.s32 %v4040, 32
            %v4199 = vadd.s32 %v4047, 32
            %v4200 = vadd.s32 %v4054, 32
            %v4201 = vadd.s32 %v4061, 32
            %v4202 = vadd.s32 %v4068, 32
            %v4203 = vadd.s32 %v4075, 32
            %v4204 = vsel %vm4140, %v4172, %v3858
            %v4205 = vsel %vm4141, %v4173, %v3865
            %v4206 = vsel %vm4142, %v4174, %v3872
            %v4207 = vsel %vm4143, %v4175, %v3879
            %v4208 = vsel %vm4144, %v4176, %v3886
            %v4209 = vsel %vm4145, %v4177, %v3893
            %v4210 = vsel %vm4146, %v4178, %v3900
            %v4211 = vsel %vm4147, %v4179, %v3907
            %v4212 = vsel %vm4148, %v4180, %v3914
            %v4213 = vsel %vm4149, %v4181, %v3921
            %v4214 = vsel %vm4150, %v4182, %v3928
            %v4215 = vsel %vm4151, %v4183, %v3935
            %v4216 = vsel %vm4152, %v4184, %v3942
            %v4217 = vsel %vm4153, %v4185, %v3949
            %v4218 = vsel %vm4154, %v4186, %v3956
            %v4219 = vsel %vm4155, %v4187, %v3963
            %v4220 = vsel %vm4156, %v4188, %v3970
            %v4221 = vsel %vm4157, %v4189, %v3977
            %v4222 = vsel %vm4158, %v4190, %v3984
            %v4223 = vsel %vm4159, %v4191, %v3991
            %v4224 = vsel %vm4160, %v4192, %v3998
            %v4225 = vsel %vm4161, %v4193, %v4005
            %v4226 = vsel %vm4162, %v4194, %v4012
            %v4227 = vsel %vm4163, %v4195, %v4019
            %v4228 = vsel %vm4164, %v4196, %v4026
            %v4229 = vsel %vm4165, %v4197, %v4033
            %v4230 = vsel %vm4166, %v4198, %v4040
            %v4231 = vsel %vm4167, %v4199, %v4047
            %v4232 = vsel %vm4168, %v4200, %v4054
            %v4233 = vsel %vm4169, %v4201, %v4061
            %v4234 = vsel %vm4170, %v4202, %v4068
            %v4235 = vsel %vm4171, %v4203, %v4075
            %vm4236 = vcmp.lt.s32.totalorder %v4204, 8
            %vm4237 = vcmp.lt.s32.totalorder %v4205, 8
            %vm4238 = vcmp.lt.s32.totalorder %v4206, 8
            %vm4239 = vcmp.lt.s32.totalorder %v4207, 8
            %vm4240 = vcmp.lt.s32.totalorder %v4208, 8
            %vm4241 = vcmp.lt.s32.totalorder %v4209, 8
            %vm4242 = vcmp.lt.s32.totalorder %v4210, 8
            %vm4243 = vcmp.lt.s32.totalorder %v4211, 8
            %vm4244 = vcmp.lt.s32.totalorder %v4212, 8
            %vm4245 = vcmp.lt.s32.totalorder %v4213, 8
            %vm4246 = vcmp.lt.s32.totalorder %v4214, 8
            %vm4247 = vcmp.lt.s32.totalorder %v4215, 8
            %vm4248 = vcmp.lt.s32.totalorder %v4216, 8
            %vm4249 = vcmp.lt.s32.totalorder %v4217, 8
            %vm4250 = vcmp.lt.s32.totalorder %v4218, 8
            %vm4251 = vcmp.lt.s32.totalorder %v4219, 8
            %vm4252 = vcmp.lt.s32.totalorder %v4220, 8
            %vm4253 = vcmp.lt.s32.totalorder %v4221, 8
            %vm4254 = vcmp.lt.s32.totalorder %v4222, 8
            %vm4255 = vcmp.lt.s32.totalorder %v4223, 8
            %vm4256 = vcmp.lt.s32.totalorder %v4224, 8
            %vm4257 = vcmp.lt.s32.totalorder %v4225, 8
            %vm4258 = vcmp.lt.s32.totalorder %v4226, 8
            %vm4259 = vcmp.lt.s32.totalorder %v4227, 8
            %vm4260 = vcmp.lt.s32.totalorder %v4228, 8
            %vm4261 = vcmp.lt.s32.totalorder %v4229, 8
            %vm4262 = vcmp.lt.s32.totalorder %v4230, 8
            %vm4263 = vcmp.lt.s32.totalorder %v4231, 8
            %vm4264 = vcmp.lt.s32.totalorder %v4232, 8
            %vm4265 = vcmp.lt.s32.totalorder %v4233, 8
            %vm4266 = vcmp.lt.s32.totalorder %v4234, 8
            %vm4267 = vcmp.lt.s32.totalorder %v4235, 8
            %v4268 = vmax.f32 %v3783, 0.0
            %v4269 = vmax.f32 %v3784, 0.0
            %v4270 = vmax.f32 %v3785, 0.0
            %v4271 = vmax.f32 %v3786, 0.0
            %v4272 = vmax.f32 %v3787, 0.0
            %v4273 = vmax.f32 %v3788, 0.0
            %v4274 = vmax.f32 %v3789, 0.0
            %v4275 = vmax.f32 %v3790, 0.0
            %v4276 = vmax.f32 %v3791, 0.0
            %v4277 = vmax.f32 %v3792, 0.0
            %v4278 = vmax.f32 %v3793, 0.0
            %v4279 = vmax.f32 %v3794, 0.0
            %v4280 = vmax.f32 %v3795, 0.0
            %v4281 = vmax.f32 %v3796, 0.0
            %v4282 = vmax.f32 %v3797, 0.0
            %v4283 = vmax.f32 %v3798, 0.0
            %v4284 = vmax.f32 %v3799, 0.0
            %v4285 = vmax.f32 %v3800, 0.0
            %v4286 = vmax.f32 %v3801, 0.0
            %v4287 = vmax.f32 %v3802, 0.0
            %v4288 = vmax.f32 %v3803, 0.0
            %v4289 = vmax.f32 %v3804, 0.0
            %v4290 = vmax.f32 %v3805, 0.0
            %v4291 = vmax.f32 %v3806, 0.0
            %v4292 = vmax.f32 %v3807, 0.0
            %v4293 = vmax.f32 %v3808, 0.0
            %v4294 = vmax.f32 %v3809, 0.0
            %v4295 = vmax.f32 %v3810, 0.0
            %v4296 = vmax.f32 %v3811, 0.0
            %v4297 = vmax.f32 %v3812, 0.0
            %v4298 = vmax.f32 %v3813, 0.0
            %v4299 = vmax.f32 %v3814, 0.0
            %v4300 = vsel %vm4236, 1, 0
            %v4301 = vsel %vm4237, 1, 0
            %v4302 = vsel %vm4238, 1, 0
            %v4303 = vsel %vm4239, 1, 0
            %v4304 = vsel %vm4240, 1, 0
            %v4305 = vsel %vm4241, 1, 0
            %v4306 = vsel %vm4242, 1, 0
            %v4307 = vsel %vm4243, 1, 0
            %v4308 = vsel %vm4244, 1, 0
            %v4309 = vsel %vm4245, 1, 0
            %v4310 = vsel %vm4246, 1, 0
            %v4311 = vsel %vm4247, 1, 0
            %v4312 = vsel %vm4248, 1, 0
            %v4313 = vsel %vm4249, 1, 0
            %v4314 = vsel %vm4250, 1, 0
            %v4315 = vsel %vm4251, 1, 0
            %v4316 = vsel %vm4252, 1, 0
            %v4317 = vsel %vm4253, 1, 0
            %v4318 = vsel %vm4254, 1, 0
            %v4319 = vsel %vm4255, 1, 0
            %v4320 = vsel %vm4256, 1, 0
            %v4321 = vsel %vm4257, 1, 0
            %v4322 = vsel %vm4258, 1, 0
            %v4323 = vsel %vm4259, 1, 0
            %v4324 = vsel %vm4260, 1, 0
            %v4325 = vsel %vm4261, 1, 0
            %v4326 = vsel %vm4262, 1, 0
            %v4327 = vsel %vm4263, 1, 0
            %v4328 = vsel %vm4264, 1, 0
            %v4329 = vsel %vm4265, 1, 0
            %v4330 = vsel %vm4266, 1, 0
            %v4331 = vsel %vm4267, 1, 0
            %vm4332 = vcmp.eq.s32.totalorder %v4300, 1
            %vm4333 = vcmp.eq.s32.totalorder %v4301, 1
            %vm4334 = vcmp.eq.s32.totalorder %v4302, 1
            %vm4335 = vcmp.eq.s32.totalorder %v4303, 1
            %vm4336 = vcmp.eq.s32.totalorder %v4304, 1
            %vm4337 = vcmp.eq.s32.totalorder %v4305, 1
            %vm4338 = vcmp.eq.s32.totalorder %v4306, 1
            %vm4339 = vcmp.eq.s32.totalorder %v4307, 1
            %vm4340 = vcmp.eq.s32.totalorder %v4308, 1
            %vm4341 = vcmp.eq.s32.totalorder %v4309, 1
            %vm4342 = vcmp.eq.s32.totalorder %v4310, 1
            %vm4343 = vcmp.eq.s32.totalorder %v4311, 1
            %vm4344 = vcmp.eq.s32.totalorder %v4312, 1
            %vm4345 = vcmp.eq.s32.totalorder %v4313, 1
            %vm4346 = vcmp.eq.s32.totalorder %v4314, 1
            %vm4347 = vcmp.eq.s32.totalorder %v4315, 1
            %vm4348 = vcmp.eq.s32.totalorder %v4316, 1
            %vm4349 = vcmp.eq.s32.totalorder %v4317, 1
            %vm4350 = vcmp.eq.s32.totalorder %v4318, 1
            %vm4351 = vcmp.eq.s32.totalorder %v4319, 1
            %vm4352 = vcmp.eq.s32.totalorder %v4320, 1
            %vm4353 = vcmp.eq.s32.totalorder %v4321, 1
            %vm4354 = vcmp.eq.s32.totalorder %v4322, 1
            %vm4355 = vcmp.eq.s32.totalorder %v4323, 1
            %vm4356 = vcmp.eq.s32.totalorder %v4324, 1
            %vm4357 = vcmp.eq.s32.totalorder %v4325, 1
            %vm4358 = vcmp.eq.s32.totalorder %v4326, 1
            %vm4359 = vcmp.eq.s32.totalorder %v4327, 1
            %vm4360 = vcmp.eq.s32.totalorder %v4328, 1
            %vm4361 = vcmp.eq.s32.totalorder %v4329, 1
            %vm4362 = vcmp.eq.s32.totalorder %v4330, 1
            %vm4363 = vcmp.eq.s32.totalorder %v4331, 1
            %v4364 = vsel %vm4332, %v4268, 0.0
            %v4365 = vsel %vm4333, %v4269, 0.0
            %v4366 = vsel %vm4334, %v4270, 0.0
            %v4367 = vsel %vm4335, %v4271, 0.0
            %v4368 = vsel %vm4336, %v4272, 0.0
            %v4369 = vsel %vm4337, %v4273, 0.0
            %v4370 = vsel %vm4338, %v4274, 0.0
            %v4371 = vsel %vm4339, %v4275, 0.0
            %v4372 = vsel %vm4340, %v4276, 0.0
            %v4373 = vsel %vm4341, %v4277, 0.0
            %v4374 = vsel %vm4342, %v4278, 0.0
            %v4375 = vsel %vm4343, %v4279, 0.0
            %v4376 = vsel %vm4344, %v4280, 0.0
            %v4377 = vsel %vm4345, %v4281, 0.0
            %v4378 = vsel %vm4346, %v4282, 0.0
            %v4379 = vsel %vm4347, %v4283, 0.0
            %v4380 = vsel %vm4348, %v4284, 0.0
            %v4381 = vsel %vm4349, %v4285, 0.0
            %v4382 = vsel %vm4350, %v4286, 0.0
            %v4383 = vsel %vm4351, %v4287, 0.0
            %v4384 = vsel %vm4352, %v4288, 0.0
            %v4385 = vsel %vm4353, %v4289, 0.0
            %v4386 = vsel %vm4354, %v4290, 0.0
            %v4387 = vsel %vm4355, %v4291, 0.0
            %v4388 = vsel %vm4356, %v4292, 0.0
            %v4389 = vsel %vm4357, %v4293, 0.0
            %v4390 = vsel %vm4358, %v4294, 0.0
            %v4391 = vsel %vm4359, %v4295, 0.0
            %v4392 = vsel %vm4360, %v4296, 0.0
            %v4393 = vsel %vm4361, %v4297, 0.0
            %v4394 = vsel %vm4362, %v4298, 0.0
            %v4395 = vsel %vm4363, %v4299, 0.0
            %v4396 = vpack.c.bf16 %v4364, %v4364
            %v4397 = vpack.c.bf16 %v4365, %v4365
            %v4398 = vpack.c.bf16 %v4366, %v4366
            %v4399 = vpack.c.bf16 %v4367, %v4367
            %v4400 = vpack.c.bf16 %v4368, %v4368
            %v4401 = vpack.c.bf16 %v4369, %v4369
            %v4402 = vpack.c.bf16 %v4370, %v4370
            %v4403 = vpack.c.bf16 %v4371, %v4371
            %v4404 = vpack.c.bf16 %v4372, %v4372
            %v4405 = vpack.c.bf16 %v4373, %v4373
            %v4406 = vpack.c.bf16 %v4374, %v4374
            %v4407 = vpack.c.bf16 %v4375, %v4375
            %v4408 = vpack.c.bf16 %v4376, %v4376
            %v4409 = vpack.c.bf16 %v4377, %v4377
            %v4410 = vpack.c.bf16 %v4378, %v4378
            %v4411 = vpack.c.bf16 %v4379, %v4379
            %v4412 = vpack.c.bf16 %v4380, %v4380
            %v4413 = vpack.c.bf16 %v4381, %v4381
            %v4414 = vpack.c.bf16 %v4382, %v4382
            %v4415 = vpack.c.bf16 %v4383, %v4383
            %v4416 = vpack.c.bf16 %v4384, %v4384
            %v4417 = vpack.c.bf16 %v4385, %v4385
            %v4418 = vpack.c.bf16 %v4386, %v4386
            %v4419 = vpack.c.bf16 %v4387, %v4387
            %v4420 = vpack.c.bf16 %v4388, %v4388
            %v4421 = vpack.c.bf16 %v4389, %v4389
            %v4422 = vpack.c.bf16 %v4390, %v4390
            %v4423 = vpack.c.bf16 %v4391, %v4391
            %v4424 = vpack.c.bf16 %v4392, %v4392
            %v4425 = vpack.c.bf16 %v4393, %v4393
            %v4426 = vpack.c.bf16 %v4394, %v4394
            %v4427 = vpack.c.bf16 %v4395, %v4395
            %vm4428 = vcmask 519168
            %4429 = vst.msk [vmem:[#allocation3 + $0x18] sm:$0xf] %vm4428, %v4396
            %4430 = vst.msk [vmem:[#allocation3 + $0x1c] sm:$0xf] %vm4428, %v4397
            %4431 = vst.msk [vmem:[#allocation3 + $0x20] sm:$0xf] %vm4428, %v4398
            %4432 = vst.msk [vmem:[#allocation3 + $0x24] sm:$0xf] %vm4428, %v4399
            %4433 = vst.msk [vmem:[#allocation3 + $0x28] sm:$0xf] %vm4428, %v4400
            %4434 = vst.msk [vmem:[#allocation3 + $0x2c] sm:$0xf] %vm4428, %v4401
            %4435 = vst.msk [vmem:[#allocation3 + $0x30] sm:$0xf] %vm4428, %v4402
            %4436 = vst.msk [vmem:[#allocation3 + $0x34] sm:$0xf] %vm4428, %v4403
            %4437 = vst.msk [vmem:[#allocation3 + $0x38] sm:$0xf] %vm4428, %v4404
            %4438 = vst.msk [vmem:[#allocation3 + $0x3c] sm:$0xf] %vm4428, %v4405
            %4439 = vst.msk [vmem:[#allocation3 + $0x40] sm:$0xf] %vm4428, %v4406
            %4440 = vst.msk [vmem:[#allocation3 + $0x44] sm:$0xf] %vm4428, %v4407
            %4441 = vst.msk [vmem:[#allocation3 + $0x48] sm:$0xf] %vm4428, %v4408
            %4442 = vst.msk [vmem:[#allocation3 + $0x4c] sm:$0xf] %vm4428, %v4409
            %4443 = vst.msk [vmem:[#allocation3 + $0x50] sm:$0xf] %vm4428, %v4410
            %4444 = vst.msk [vmem:[#allocation3 + $0x54] sm:$0xf] %vm4428, %v4411
            %4445 = vst.msk [vmem:[#allocation3 + $0x58] sm:$0xf] %vm4428, %v4412
            %4446 = vst.msk [vmem:[#allocation3 + $0x5c] sm:$0xf] %vm4428, %v4413
            %4447 = vst.msk [vmem:[#allocation3 + $0x60] sm:$0xf] %vm4428, %v4414
            %4448 = vst.msk [vmem:[#allocation3 + $0x64] sm:$0xf] %vm4428, %v4415
            %4449 = vst.msk [vmem:[#allocation3 + $0x68] sm:$0xf] %vm4428, %v4416
            %4450 = vst.msk [vmem:[#allocation3 + $0x6c] sm:$0xf] %vm4428, %v4417
            %4451 = vst.msk [vmem:[#allocation3 + $0x70] sm:$0xf] %vm4428, %v4418
            %4452 = vst.msk [vmem:[#allocation3 + $0x74] sm:$0xf] %vm4428, %v4419
            %4453 = vst.msk [vmem:[#allocation3 + $0x78] sm:$0xf] %vm4428, %v4420
            %4454 = vst.msk [vmem:[#allocation3 + $0x7c] sm:$0xf] %vm4428, %v4421
            %4455 = vst.msk [vmem:[#allocation3 + $0x80] sm:$0xf] %vm4428, %v4422
            %4456 = vst.msk [vmem:[#allocation3 + $0x84] sm:$0xf] %vm4428, %v4423
            %4457 = vst.msk [vmem:[#allocation3 + $0x88] sm:$0xf] %vm4428, %v4424
            %4458 = vst.msk [vmem:[#allocation3 + $0x8c] sm:$0xf] %vm4428, %v4425
            %4459 = vst.msk [vmem:[#allocation3 + $0x90] sm:$0xf] %vm4428, %v4426
            %4460 = vst.msk [vmem:[#allocation3 + $0x94] sm:$0xf] %vm4428, %v4427
          $region52: #{ffdnet_forward.1} parent=47 // pred_fallthru
            _
          %p4461 = scmp.eq.s32.totalorder %s25, 14
          // Predicated region
          $region53: #{ffdnet_forward.1} parent=47 // pred_check
            %p4462 = pneg %p4461
          $region54: #{ffdnet_forward.1} parent=47 // pred_check_branch
            %4464 = sbr.rel (%p4462) target = $region56
          $region55: #{ffdnet_forward.1} parent=47 // pred_region
            %vm4465 = vcmask 31744
            %4466 = vst.msk [vmem:[%s259] sm:$0xff] %vm4465, %v3783
            %4467 = vst.msk [vmem:[%s259 + $0x8] sm:$0xff] %vm4465, %v3784
            %4468 = vst.msk [vmem:[%s259 + $0x10] sm:$0xff] %vm4465, %v3785
            %4469 = vst.msk [vmem:[%s259 + $0x18] sm:$0xff] %vm4465, %v3786
            %4470 = vst.msk [vmem:[%s259 + $0x20] sm:$0xff] %vm4465, %v3787
            %4471 = vst.msk [vmem:[%s259 + $0x28] sm:$0xff] %vm4465, %v3788
            %4472 = vst.msk [vmem:[%s259 + $0x30] sm:$0xff] %vm4465, %v3789
            %4473 = vst.msk [vmem:[%s259 + $0x38] sm:$0xff] %vm4465, %v3790
            %4474 = vst.msk [vmem:[%s259 + $0x40] sm:$0xff] %vm4465, %v3791
            %4475 = vst.msk [vmem:[%s259 + $0x48] sm:$0xff] %vm4465, %v3792
            %4476 = vst.msk [vmem:[%s259 + $0x50] sm:$0xff] %vm4465, %v3793
            %4477 = vst.msk [vmem:[%s259 + $0x58] sm:$0xff] %vm4465, %v3794
            %4478 = vst.msk [vmem:[%s259 + $0x60] sm:$0xff] %vm4465, %v3795
            %4479 = vst.msk [vmem:[%s259 + $0x68] sm:$0xff] %vm4465, %v3796
            %4480 = vst.msk [vmem:[%s259 + $0x70] sm:$0xff] %vm4465, %v3797
            %4481 = vst.msk [vmem:[%s259 + $0x78] sm:$0xff] %vm4465, %v3798
            %4482 = vst.msk [vmem:[%s259 + $0x80] sm:$0xff] %vm4465, %v3799
            %4483 = vst.msk [vmem:[%s259 + $0x88] sm:$0xff] %vm4465, %v3800
            %4484 = vst.msk [vmem:[%s259 + $0x90] sm:$0xff] %vm4465, %v3801
            %4485 = vst.msk [vmem:[%s259 + $0x98] sm:$0xff] %vm4465, %v3802
            %4486 = vst.msk [vmem:[%s259 + $0xa0] sm:$0xff] %vm4465, %v3803
            %4487 = vst.msk [vmem:[%s259 + $0xa8] sm:$0xff] %vm4465, %v3804
            %4488 = vst.msk [vmem:[%s259 + $0xb0] sm:$0xff] %vm4465, %v3805
            %4489 = vst.msk [vmem:[%s259 + $0xb8] sm:$0xff] %vm4465, %v3806
            %4490 = vst.msk [vmem:[%s259 + $0xc0] sm:$0xff] %vm4465, %v3807
            %4491 = vst.msk [vmem:[%s259 + $0xc8] sm:$0xff] %vm4465, %v3808
            %4492 = vst.msk [vmem:[%s259 + $0xd0] sm:$0xff] %vm4465, %v3809
            %4493 = vst.msk [vmem:[%s259 + $0xd8] sm:$0xff] %vm4465, %v3810
            %4494 = vst.msk [vmem:[%s259 + $0xe0] sm:$0xff] %vm4465, %v3811
            %4495 = vst.msk [vmem:[%s259 + $0xe8] sm:$0xff] %vm4465, %v3812
            %4496 = vst.msk [vmem:[%s259 + $0xf0] sm:$0xff] %vm4465, %v3813
            %4497 = vst.msk [vmem:[%s259 + $0xf8] sm:$0xff] %vm4465, %v3814
          $region56: #{ffdnet_forward.1} parent=47 // pred_fallthru
            _
        $region48: #{ffdnet_forward.1} parent=31 // pred_fallthru
          _
        %p4498 = scmp.eq.s32.totalorder %s422, 1
        // Predicated region
        $region57: #{ffdnet_forward.1} parent=31 // pred_check
          %p4499 = pneg %p4498
        $region58: #{ffdnet_forward.1} parent=31 // pred_check_branch
          %4501 = sbr.rel (%p4499) target = $region60
        $region59: #{ffdnet_forward.1} parent=31 // pred_region
          %v4502 = vld [vmem:[#allocation3 + $0x4] sm:$0x8]
          %v4503 = vld [vmem:[#allocation3 + $0x8] sm:$0xf]
          %v4504 = vld [vmem:[#allocation3 + $0xc] sm:$0xf]
          %v4505 = vld [vmem:[#allocation3 + $0x10] sm:$0xf]
          %v4506 = vld [vmem:[#allocation3 + $0x14] sm:$0xf]
          %v4507 = vld [vmem:[#allocation3 + $0x18] sm:$0xf]
          %v4508 = vld [vmem:[#allocation3 + $0x1c] sm:$0xf]
          %v4509 = vld [vmem:[#allocation3 + $0x20] sm:$0xf]
          %v4510 = vld [vmem:[#allocation3 + $0x24] sm:$0xf]
          %v4511 = vld [vmem:[#allocation3 + $0x28] sm:$0xf]
          %v4512 = vld [vmem:[#allocation3 + $0x2c] sm:$0xf]
          %v4513 = vld [vmem:[#allocation3 + $0x30] sm:$0xf]
          %v4514 = vld [vmem:[#allocation3 + $0x34] sm:$0xf]
          %v4515 = vld [vmem:[#allocation3 + $0x38] sm:$0xf]
          %v4516 = vld [vmem:[#allocation3 + $0x3c] sm:$0xf]
          %v4517 = vld [vmem:[#allocation3 + $0x40] sm:$0xf]
          %v4518 = vld [vmem:[#allocation3 + $0x44] sm:$0xf]
          %v4519 = vld [vmem:[#allocation3 + $0x48] sm:$0xf]
          %v4520 = vld [vmem:[#allocation3 + $0x4c] sm:$0xf]
          %v4521 = vld [vmem:[#allocation3 + $0x50] sm:$0xf]
          %v4522 = vld [vmem:[#allocation3 + $0x54] sm:$0xf]
          %v4523 = vld [vmem:[#allocation3 + $0x58] sm:$0xf]
          %v4524 = vld [vmem:[#allocation3 + $0x5c] sm:$0xf]
          %v4525 = vld [vmem:[#allocation3 + $0x60] sm:$0xf]
          %v4526 = vld [vmem:[#allocation3 + $0x64] sm:$0xf]
          %v4527 = vld [vmem:[#allocation3 + $0x68] sm:$0xf]
          %v4528 = vld [vmem:[#allocation3 + $0x6c] sm:$0xf]
          %v4529 = vld [vmem:[#allocation3 + $0x70] sm:$0xf]
          %v4530 = vld [vmem:[#allocation3 + $0x74] sm:$0xf]
          %v4531 = vld [vmem:[#allocation3 + $0x78] sm:$0xf]
          %v4532 = vld [vmem:[#allocation3 + $0x7c] sm:$0xf]
          %v4533 = vld [vmem:[#allocation3 + $0x80] sm:$0xf]
          %v4534 = vld [vmem:[#allocation3 + $0x84] sm:$0xf]
          %v4535 = vld [vmem:[%s208] sm:$0xf]
          %v4536 = vld [vmem:[%s208 + $0x4] sm:$0xf]
          %v4537 = vld [vmem:[%s208 + $0x8] sm:$0xf]
          %v4538 = vld [vmem:[%s208 + $0xc] sm:$0xf]
          %v4539 = vld [vmem:[%s208 + $0x10] sm:$0xf]
          %v4540 = vld [vmem:[%s208 + $0x14] sm:$0xf]
          %v4541 = vld [vmem:[%s208 + $0x18] sm:$0xf]
          %v4542 = vld [vmem:[%s208 + $0x1c] sm:$0xf]
          %s4543 = scalar_lea.vmem %s208, 32 [#allocation4]
          %v4544 = vld [vmem:[%s4543] sm:$0xf]
          %v4545 = vld [vmem:[%s4543 + $0x4] sm:$0xf]
          %v4546 = vld [vmem:[%s4543 + $0x8] sm:$0xf]
          %v4547 = vld [vmem:[%s4543 + $0xc] sm:$0xf]
          %v4548 = vld [vmem:[%s4543 + $0x10] sm:$0xf]
          %v4549 = vld [vmem:[%s4543 + $0x14] sm:$0xf]
          %v4550 = vld [vmem:[%s4543 + $0x18] sm:$0xf]
          %v4551 = vld [vmem:[%s4543 + $0x1c] sm:$0xf]
          %v4584 = vunpack.c.l.b16 %v4503
          %v4585 = vunpack.c.l.b16 %v4504
          %v4586 = vunpack.c.l.b16 %v4505
          %v4587 = vunpack.c.l.b16 %v4506
          %v4588 = vunpack.c.l.b16 %v4507
          %v4589 = vunpack.c.l.b16 %v4508
          %v4590 = vunpack.c.l.b16 %v4509
          %v4591 = vunpack.c.l.b16 %v4510
          %v4592 = vunpack.c.l.b16 %v4511
          %v4593 = vunpack.c.l.b16 %v4512
          %v4594 = vunpack.c.l.b16 %v4513
          %v4595 = vunpack.c.l.b16 %v4514
          %v4596 = vunpack.c.l.b16 %v4515
          %v4597 = vunpack.c.l.b16 %v4516
          %v4598 = vunpack.c.l.b16 %v4517
          %v4599 = vunpack.c.l.b16 %v4518
          %v4600 = vunpack.c.l.b16 %v4519
          %v4601 = vunpack.c.l.b16 %v4520
          %v4602 = vunpack.c.l.b16 %v4521
          %v4603 = vunpack.c.l.b16 %v4522
          %v4604 = vunpack.c.l.b16 %v4523
          %v4605 = vunpack.c.l.b16 %v4524
          %v4606 = vunpack.c.l.b16 %v4525
          %v4607 = vunpack.c.l.b16 %v4526
          %v4608 = vunpack.c.l.b16 %v4527
          %v4609 = vunpack.c.l.b16 %v4528
          %v4610 = vunpack.c.l.b16 %v4529
          %v4611 = vunpack.c.l.b16 %v4530
          %v4612 = vunpack.c.l.b16 %v4531
          %v4613 = vunpack.c.l.b16 %v4532
          %v4614 = vunpack.c.l.b16 %v4533
          %v4615 = vunpack.c.l.b16 %v4534
          %v4616 = vpack.c.b16 %v4585, %v4584
          %v4617 = vpack.c.b16 %v4587, %v4586
          %v4618 = vpack.c.b16 %v4589, %v4588
          %v4619 = vpack.c.b16 %v4591, %v4590
          %v4620 = vpack.c.b16 %v4593, %v4592
          %v4621 = vpack.c.b16 %v4595, %v4594
          %v4622 = vpack.c.b16 %v4597, %v4596
          %v4623 = vpack.c.b16 %v4599, %v4598
          %v4624 = vpack.c.b16 %v4601, %v4600
          %v4625 = vpack.c.b16 %v4603, %v4602
          %v4626 = vpack.c.b16 %v4605, %v4604
          %v4627 = vpack.c.b16 %v4607, %v4606
          %v4628 = vpack.c.b16 %v4609, %v4608
          %v4629 = vpack.c.b16 %v4611, %v4610
          %v4630 = vpack.c.b16 %v4613, %v4612
          %v4631 = vpack.c.b16 %v4615, %v4614
          %v4640 = vunpack.c.l.b16 %v4544
          %v4641 = vunpack.c.l.b16 %v4545
          %v4642 = vunpack.c.l.b16 %v4546
          %v4643 = vunpack.c.l.b16 %v4547
          %v4644 = vunpack.c.l.b16 %v4548
          %v4645 = vunpack.c.l.b16 %v4549
          %v4646 = vunpack.c.l.b16 %v4550
          %v4647 = vunpack.c.l.b16 %v4551
          %v4648 = vpack.c.b16 %v4641, %v4640
          %v4649 = vpack.c.b16 %v4643, %v4642
          %v4650 = vpack.c.b16 %v4645, %v4644
          %v4651 = vpack.c.b16 %v4647, %v4646
          %vm4656 = vcmask 523264
          %v4658 = vsel %vm4656, %v4616, 0
          %v4661 = vsel %vm4656, %v4617, 0
          %v4664 = vsel %vm4656, %v4618, 0
          %v4667 = vsel %vm4656, %v4619, 0
          %v4670 = vsel %vm4656, %v4620, 0
          %v4673 = vsel %vm4656, %v4621, 0
          %v4676 = vsel %vm4656, %v4622, 0
          %v4679 = vsel %vm4656, %v4623, 0
          %v4682 = vsel %vm4656, %v4624, 0
          %v4685 = vsel %vm4656, %v4625, 0
          %v4688 = vsel %vm4656, %v4626, 0
          %v4691 = vsel %vm4656, %v4627, 0
          %v4694 = vsel %vm4656, %v4628, 0
          %v4697 = vsel %vm4656, %v4629, 0
          %v4700 = vsel %vm4656, %v4630, 0
          %v4703 = vsel %vm4656, %v4631, 0
          %4705 = vmatpush.bf16.msra.mxu0 0
          %4706 = vmatpush.bf16.msra.mxu0 0
          %4707 = vmatpush.bf16.msra.mxu0 0
          %4708 = vmatpush.bf16.msra.mxu0 0
          %4709 = vmatpush.bf16.msra.mxu0 %v4651
          %4710 = vmatpush.bf16.msra.mxu0 %v4650
          %4711 = vmatpush.bf16.msra.mxu0 %v4649
          %4712 = vmatpush.bf16.msra.mxu0 %v4648
          %4713 = vmatmul.bf16.gmra.mxu0 %v4658
          %v4714 = vpop.f32.mrf.mxu0
          %v4715 = vadd.f32 0.0, %v4714
          %v4716 = vpop.f32.mrf.mxu0
          %v4717 = vadd.f32 0.0, %v4716
          %4718 = vmatmul.bf16.gmra.mxu0 %v4661
          %v4719 = vpop.f32.mrf.mxu0
          %v4720 = vadd.f32 0.0, %v4719
          %v4721 = vpop.f32.mrf.mxu0
          %v4722 = vadd.f32 0.0, %v4721
          %4723 = vmatmul.bf16.gmra.mxu0 %v4664
          %v4724 = vpop.f32.mrf.mxu0
          %v4725 = vadd.f32 0.0, %v4724
          %v4726 = vpop.f32.mrf.mxu0
          %v4727 = vadd.f32 0.0, %v4726
          %4728 = vmatmul.bf16.gmra.mxu0 %v4667
          %v4729 = vpop.f32.mrf.mxu0
          %v4730 = vadd.f32 0.0, %v4729
          %v4731 = vpop.f32.mrf.mxu0
          %v4732 = vadd.f32 0.0, %v4731
          %4733 = vmatmul.bf16.gmra.mxu0 %v4670
          %v4734 = vpop.f32.mrf.mxu0
          %v4735 = vadd.f32 0.0, %v4734
          %v4736 = vpop.f32.mrf.mxu0
          %v4737 = vadd.f32 0.0, %v4736
          %4738 = vmatmul.bf16.gmra.mxu0 %v4673
          %v4739 = vpop.f32.mrf.mxu0
          %v4740 = vadd.f32 0.0, %v4739
          %v4741 = vpop.f32.mrf.mxu0
          %v4742 = vadd.f32 0.0, %v4741
          %4743 = vmatmul.bf16.gmra.mxu0 %v4676
          %v4744 = vpop.f32.mrf.mxu0
          %v4745 = vadd.f32 0.0, %v4744
          %v4746 = vpop.f32.mrf.mxu0
          %v4747 = vadd.f32 0.0, %v4746
          %4748 = vmatmul.bf16.gmra.mxu0 %v4679
          %v4749 = vpop.f32.mrf.mxu0
          %v4750 = vadd.f32 0.0, %v4749
          %v4751 = vpop.f32.mrf.mxu0
          %v4752 = vadd.f32 0.0, %v4751
          %4753 = vmatmul.bf16.gmra.mxu0 %v4682
          %v4754 = vpop.f32.mrf.mxu0
          %v4755 = vadd.f32 0.0, %v4754
          %v4756 = vpop.f32.mrf.mxu0
          %v4757 = vadd.f32 0.0, %v4756
          %4758 = vmatmul.bf16.gmra.mxu0 %v4685
          %v4759 = vpop.f32.mrf.mxu0
          %v4760 = vadd.f32 0.0, %v4759
          %v4761 = vpop.f32.mrf.mxu0
          %v4762 = vadd.f32 0.0, %v4761
          %4763 = vmatmul.bf16.gmra.mxu0 %v4688
          %v4764 = vpop.f32.mrf.mxu0
          %v4765 = vadd.f32 0.0, %v4764
          %v4766 = vpop.f32.mrf.mxu0
          %v4767 = vadd.f32 0.0, %v4766
          %4768 = vmatmul.bf16.gmra.mxu0 %v4691
          %v4769 = vpop.f32.mrf.mxu0
          %v4770 = vadd.f32 0.0, %v4769
          %v4771 = vpop.f32.mrf.mxu0
          %v4772 = vadd.f32 0.0, %v4771
          %4773 = vmatmul.bf16.gmra.mxu0 %v4694
          %v4774 = vpop.f32.mrf.mxu0
          %v4775 = vadd.f32 0.0, %v4774
          %v4776 = vpop.f32.mrf.mxu0
          %v4777 = vadd.f32 0.0, %v4776
          %4778 = vmatmul.bf16.gmra.mxu0 %v4697
          %v4779 = vpop.f32.mrf.mxu0
          %v4780 = vadd.f32 0.0, %v4779
          %v4781 = vpop.f32.mrf.mxu0
          %v4782 = vadd.f32 0.0, %v4781
          %4783 = vmatmul.bf16.gmra.mxu0 %v4700
          %v4784 = vpop.f32.mrf.mxu0
          %v4785 = vadd.f32 0.0, %v4784
          %v4786 = vpop.f32.mrf.mxu0
          %v4787 = vadd.f32 0.0, %v4786
          %4788 = vmatmul.bf16.gmra.mxu0 %v4703
          %v4789 = vpop.f32.mrf.mxu0
          %v4790 = vadd.f32 0.0, %v4789
          %v4791 = vpop.f32.mrf.mxu0
          %v4792 = vadd.f32 0.0, %v4791
          %4793 = vdwg.mxu0
          %v4795 = vunpack.c.l.b16 %v4502
          %v4796 = vpack.c.b16 %v4584, %v4795
          %v4797 = vpack.c.b16 %v4586, %v4585
          %v4798 = vpack.c.b16 %v4588, %v4587
          %v4799 = vpack.c.b16 %v4590, %v4589
          %v4800 = vpack.c.b16 %v4592, %v4591
          %v4801 = vpack.c.b16 %v4594, %v4593
          %v4802 = vpack.c.b16 %v4596, %v4595
          %v4803 = vpack.c.b16 %v4598, %v4597
          %v4804 = vpack.c.b16 %v4600, %v4599
          %v4805 = vpack.c.b16 %v4602, %v4601
          %v4806 = vpack.c.b16 %v4604, %v4603
          %v4807 = vpack.c.b16 %v4606, %v4605
          %v4808 = vpack.c.b16 %v4608, %v4607
          %v4809 = vpack.c.b16 %v4610, %v4609
          %v4810 = vpack.c.b16 %v4612, %v4611
          %v4811 = vpack.c.b16 %v4614, %v4613
          %v4812 = vpack.c.b16 %v4615, %v4615
          %vm4813 = vsmask.f32 4352
          %v4815 = vshrl.u32 %v4796, 16
          %v4817 = vrot.slane %v4815, 3
          %v4818 = vshll.u32 %v4796, 16
          %v4820 = vrot.slane %v4818, 4
          %v4821 = vor.u32 %v4817, %v4820
          %v4823 = vshrl.u32 %v4797, 16
          %v4825 = vrot.slane %v4823, 3
          %v4826 = vshll.u32 %v4797, 16
          %v4828 = vrot.slane %v4826, 4
          %v4829 = vor.u32 %v4825, %v4828
          %v4830 = vsel %vm4813, %v4821, %v4829
          %v4832 = vshrl.u32 %v4798, 16
          %v4834 = vrot.slane %v4832, 3
          %v4835 = vshll.u32 %v4798, 16
          %v4837 = vrot.slane %v4835, 4
          %v4838 = vor.u32 %v4834, %v4837
          %v4839 = vsel %vm4813, %v4829, %v4838
          %v4841 = vshrl.u32 %v4799, 16
          %v4843 = vrot.slane %v4841, 3
          %v4844 = vshll.u32 %v4799, 16
          %v4846 = vrot.slane %v4844, 4
          %v4847 = vor.u32 %v4843, %v4846
          %v4848 = vsel %vm4813, %v4838, %v4847
          %v4850 = vshrl.u32 %v4800, 16
          %v4852 = vrot.slane %v4850, 3
          %v4853 = vshll.u32 %v4800, 16
          %v4855 = vrot.slane %v4853, 4
          %v4856 = vor.u32 %v4852, %v4855
          %v4857 = vsel %vm4813, %v4847, %v4856
          %v4859 = vshrl.u32 %v4801, 16
          %v4861 = vrot.slane %v4859, 3
          %v4862 = vshll.u32 %v4801, 16
          %v4864 = vrot.slane %v4862, 4
          %v4865 = vor.u32 %v4861, %v4864
          %v4866 = vsel %vm4813, %v4856, %v4865
          %v4868 = vshrl.u32 %v4802, 16
          %v4870 = vrot.slane %v4868, 3
          %v4871 = vshll.u32 %v4802, 16
          %v4873 = vrot.slane %v4871, 4
          %v4874 = vor.u32 %v4870, %v4873
          %v4875 = vsel %vm4813, %v4865, %v4874
          %v4877 = vshrl.u32 %v4803, 16
          %v4879 = vrot.slane %v4877, 3
          %v4880 = vshll.u32 %v4803, 16
          %v4882 = vrot.slane %v4880, 4
          %v4883 = vor.u32 %v4879, %v4882
          %v4884 = vsel %vm4813, %v4874, %v4883
          %v4886 = vshrl.u32 %v4804, 16
          %v4888 = vrot.slane %v4886, 3
          %v4889 = vshll.u32 %v4804, 16
          %v4891 = vrot.slane %v4889, 4
          %v4892 = vor.u32 %v4888, %v4891
          %v4893 = vsel %vm4813, %v4883, %v4892
          %v4895 = vshrl.u32 %v4805, 16
          %v4897 = vrot.slane %v4895, 3
          %v4898 = vshll.u32 %v4805, 16
          %v4900 = vrot.slane %v4898, 4
          %v4901 = vor.u32 %v4897, %v4900
          %v4902 = vsel %vm4813, %v4892, %v4901
          %v4904 = vshrl.u32 %v4806, 16
          %v4906 = vrot.slane %v4904, 3
          %v4907 = vshll.u32 %v4806, 16
          %v4909 = vrot.slane %v4907, 4
          %v4910 = vor.u32 %v4906, %v4909
          %v4911 = vsel %vm4813, %v4901, %v4910
          %v4913 = vshrl.u32 %v4807, 16
          %v4915 = vrot.slane %v4913, 3
          %v4916 = vshll.u32 %v4807, 16
          %v4918 = vrot.slane %v4916, 4
          %v4919 = vor.u32 %v4915, %v4918
          %v4920 = vsel %vm4813, %v4910, %v4919
          %v4922 = vshrl.u32 %v4808, 16
          %v4924 = vrot.slane %v4922, 3
          %v4925 = vshll.u32 %v4808, 16
          %v4927 = vrot.slane %v4925, 4
          %v4928 = vor.u32 %v4924, %v4927
          %v4929 = vsel %vm4813, %v4919, %v4928
          %v4931 = vshrl.u32 %v4809, 16
          %v4933 = vrot.slane %v4931, 3
          %v4934 = vshll.u32 %v4809, 16
          %v4936 = vrot.slane %v4934, 4
          %v4937 = vor.u32 %v4933, %v4936
          %v4938 = vsel %vm4813, %v4928, %v4937
          %v4940 = vshrl.u32 %v4810, 16
          %v4942 = vrot.slane %v4940, 3
          %v4943 = vshll.u32 %v4810, 16
          %v4945 = vrot.slane %v4943, 4
          %v4946 = vor.u32 %v4942, %v4945
          %v4947 = vsel %vm4813, %v4937, %v4946
          %v4949 = vshrl.u32 %v4811, 16
          %v4951 = vrot.slane %v4949, 3
          %v4952 = vshll.u32 %v4811, 16
          %v4954 = vrot.slane %v4952, 4
          %v4955 = vor.u32 %v4951, %v4954
          %v4956 = vsel %vm4813, %v4946, %v4955
          %v4958 = vshrl.u32 %v4812, 16
          %v4960 = vrot.slane %v4958, 3
          %v4961 = vshll.u32 %v4812, 16
          %v4963 = vrot.slane %v4961, 4
          %v4964 = vor.u32 %v4960, %v4963
          %v4965 = vsel %vm4813, %v4955, %v4964
          %v4974 = vunpack.c.l.b16 %v4535
          %v4975 = vunpack.c.l.b16 %v4536
          %v4976 = vunpack.c.l.b16 %v4537
          %v4977 = vunpack.c.l.b16 %v4538
          %v4978 = vunpack.c.l.b16 %v4539
          %v4979 = vunpack.c.l.b16 %v4540
          %v4980 = vunpack.c.l.b16 %v4541
          %v4981 = vunpack.c.l.b16 %v4542
          %v4982 = vpack.c.b16 %v4975, %v4974
          %v4983 = vpack.c.b16 %v4977, %v4976
          %v4984 = vpack.c.b16 %v4979, %v4978
          %v4985 = vpack.c.b16 %v4981, %v4980
          %v4991 = vsel %vm4656, %v4830, 0
          %v4994 = vsel %vm4656, %v4839, 0
          %v4997 = vsel %vm4656, %v4848, 0
          %v5000 = vsel %vm4656, %v4857, 0
          %v5003 = vsel %vm4656, %v4866, 0
          %v5006 = vsel %vm4656, %v4875, 0
          %v5009 = vsel %vm4656, %v4884, 0
          %v5012 = vsel %vm4656, %v4893, 0
          %v5015 = vsel %vm4656, %v4902, 0
          %v5018 = vsel %vm4656, %v4911, 0
          %v5021 = vsel %vm4656, %v4920, 0
          %v5024 = vsel %vm4656, %v4929, 0
          %v5027 = vsel %vm4656, %v4938, 0
          %v5030 = vsel %vm4656, %v4947, 0
          %v5033 = vsel %vm4656, %v4956, 0
          %v5036 = vsel %vm4656, %v4965, 0
          %5038 = vmatpush.bf16.msra.mxu0 0
          %5039 = vmatpush.bf16.msra.mxu0 0
          %5040 = vmatpush.bf16.msra.mxu0 0
          %5041 = vmatpush.bf16.msra.mxu0 0
          %5042 = vmatpush.bf16.msra.mxu0 %v4985
          %5043 = vmatpush.bf16.msra.mxu0 %v4984
          %5044 = vmatpush.bf16.msra.mxu0 %v4983
          %5045 = vmatpush.bf16.msra.mxu0 %v4982
          %5046 = vmatmul.bf16.gmra.mxu0 %v4991
          %v5047 = vpop.f32.mrf.mxu0
          %v5048 = vadd.f32 %v4715, %v5047
          %v5049 = vpop.f32.mrf.mxu0
          %v5050 = vadd.f32 %v4717, %v5049
          %5051 = vmatmul.bf16.gmra.mxu0 %v4994
          %v5052 = vpop.f32.mrf.mxu0
          %v5053 = vadd.f32 %v4720, %v5052
          %v5054 = vpop.f32.mrf.mxu0
          %v5055 = vadd.f32 %v4722, %v5054
          %5056 = vmatmul.bf16.gmra.mxu0 %v4997
          %v5057 = vpop.f32.mrf.mxu0
          %v5058 = vadd.f32 %v4725, %v5057
          %v5059 = vpop.f32.mrf.mxu0
          %v5060 = vadd.f32 %v4727, %v5059
          %5061 = vmatmul.bf16.gmra.mxu0 %v5000
          %v5062 = vpop.f32.mrf.mxu0
          %v5063 = vadd.f32 %v4730, %v5062
          %v5064 = vpop.f32.mrf.mxu0
          %v5065 = vadd.f32 %v4732, %v5064
          %5066 = vmatmul.bf16.gmra.mxu0 %v5003
          %v5067 = vpop.f32.mrf.mxu0
          %v5068 = vadd.f32 %v4735, %v5067
          %v5069 = vpop.f32.mrf.mxu0
          %v5070 = vadd.f32 %v4737, %v5069
          %5071 = vmatmul.bf16.gmra.mxu0 %v5006
          %v5072 = vpop.f32.mrf.mxu0
          %v5073 = vadd.f32 %v4740, %v5072
          %v5074 = vpop.f32.mrf.mxu0
          %v5075 = vadd.f32 %v4742, %v5074
          %5076 = vmatmul.bf16.gmra.mxu0 %v5009
          %v5077 = vpop.f32.mrf.mxu0
          %v5078 = vadd.f32 %v4745, %v5077
          %v5079 = vpop.f32.mrf.mxu0
          %v5080 = vadd.f32 %v4747, %v5079
          %5081 = vmatmul.bf16.gmra.mxu0 %v5012
          %v5082 = vpop.f32.mrf.mxu0
          %v5083 = vadd.f32 %v4750, %v5082
          %v5084 = vpop.f32.mrf.mxu0
          %v5085 = vadd.f32 %v4752, %v5084
          %5086 = vmatmul.bf16.gmra.mxu0 %v5015
          %v5087 = vpop.f32.mrf.mxu0
          %v5088 = vadd.f32 %v4755, %v5087
          %v5089 = vpop.f32.mrf.mxu0
          %v5090 = vadd.f32 %v4757, %v5089
          %5091 = vmatmul.bf16.gmra.mxu0 %v5018
          %v5092 = vpop.f32.mrf.mxu0
          %v5093 = vadd.f32 %v4760, %v5092
          %v5094 = vpop.f32.mrf.mxu0
          %v5095 = vadd.f32 %v4762, %v5094
          %5096 = vmatmul.bf16.gmra.mxu0 %v5021
          %v5097 = vpop.f32.mrf.mxu0
          %v5098 = vadd.f32 %v4765, %v5097
          %v5099 = vpop.f32.mrf.mxu0
          %v5100 = vadd.f32 %v4767, %v5099
          %5101 = vmatmul.bf16.gmra.mxu0 %v5024
          %v5102 = vpop.f32.mrf.mxu0
          %v5103 = vadd.f32 %v4770, %v5102
          %v5104 = vpop.f32.mrf.mxu0
          %v5105 = vadd.f32 %v4772, %v5104
          %5106 = vmatmul.bf16.gmra.mxu0 %v5027
          %v5107 = vpop.f32.mrf.mxu0
          %v5108 = vadd.f32 %v4775, %v5107
          %v5109 = vpop.f32.mrf.mxu0
          %v5110 = vadd.f32 %v4777, %v5109
          %5111 = vmatmul.bf16.gmra.mxu0 %v5030
          %v5112 = vpop.f32.mrf.mxu0
          %v5113 = vadd.f32 %v4780, %v5112
          %v5114 = vpop.f32.mrf.mxu0
          %v5115 = vadd.f32 %v4782, %v5114
          %5116 = vmatmul.bf16.gmra.mxu0 %v5033
          %v5117 = vpop.f32.mrf.mxu0
          %v5118 = vadd.f32 %v4785, %v5117
          %v5119 = vpop.f32.mrf.mxu0
          %v5120 = vadd.f32 %v4787, %v5119
          %5121 = vmatmul.bf16.gmra.mxu0 %v5036
          %v5122 = vpop.f32.mrf.mxu0
          %v5123 = vadd.f32 %v4790, %v5122
          %v5124 = vpop.f32.mrf.mxu0
          %v5125 = vadd.f32 %v4792, %v5124
          %5126 = vdwg.mxu0
          %v5127 = vld [vmem:[#allocation3 + $0x8] sm:$0xf]
          %v5128 = vld [vmem:[#allocation3 + $0xc] sm:$0xf]
          %v5129 = vld [vmem:[#allocation3 + $0x10] sm:$0xf]
          %v5130 = vld [vmem:[#allocation3 + $0x14] sm:$0xf]
          %v5131 = vld [vmem:[#allocation3 + $0x18] sm:$0xf]
          %v5132 = vld [vmem:[#allocation3 + $0x1c] sm:$0xf]
          %v5133 = vld [vmem:[#allocation3 + $0x20] sm:$0xf]
          %v5134 = vld [vmem:[#allocation3 + $0x24] sm:$0xf]
          %v5135 = vld [vmem:[#allocation3 + $0x28] sm:$0xf]
          %v5136 = vld [vmem:[#allocation3 + $0x2c] sm:$0xf]
          %v5137 = vld [vmem:[#allocation3 + $0x30] sm:$0xf]
          %v5138 = vld [vmem:[#allocation3 + $0x34] sm:$0xf]
          %v5139 = vld [vmem:[#allocation3 + $0x38] sm:$0xf]
          %v5140 = vld [vmem:[#allocation3 + $0x3c] sm:$0xf]
          %v5141 = vld [vmem:[#allocation3 + $0x40] sm:$0xf]
          %v5142 = vld [vmem:[#allocation3 + $0x44] sm:$0xf]
          %v5143 = vld [vmem:[#allocation3 + $0x48] sm:$0xf]
          %v5144 = vld [vmem:[#allocation3 + $0x4c] sm:$0xf]
          %v5145 = vld [vmem:[#allocation3 + $0x50] sm:$0xf]
          %v5146 = vld [vmem:[#allocation3 + $0x54] sm:$0xf]
          %v5147 = vld [vmem:[#allocation3 + $0x58] sm:$0xf]
          %v5148 = vld [vmem:[#allocation3 + $0x5c] sm:$0xf]
          %v5149 = vld [vmem:[#allocation3 + $0x60] sm:$0xf]
          %v5150 = vld [vmem:[#allocation3 + $0x64] sm:$0xf]
          %v5151 = vld [vmem:[#allocation3 + $0x68] sm:$0xf]
          %v5152 = vld [vmem:[#allocation3 + $0x6c] sm:$0xf]
          %v5153 = vld [vmem:[#allocation3 + $0x70] sm:$0xf]
          %v5154 = vld [vmem:[#allocation3 + $0x74] sm:$0xf]
          %v5155 = vld [vmem:[#allocation3 + $0x78] sm:$0xf]
          %v5156 = vld [vmem:[#allocation3 + $0x7c] sm:$0xf]
          %v5157 = vld [vmem:[#allocation3 + $0x80] sm:$0xf]
          %v5158 = vld [vmem:[#allocation3 + $0x84] sm:$0xf]
          %v5159 = vld [vmem:[#allocation3 + $0x88] sm:$0x1]
          %s5160 = scalar_lea.vmem %s208, 64 [#allocation4]
          %v5161 = vld [vmem:[%s5160] sm:$0xf]
          %v5162 = vld [vmem:[%s5160 + $0x4] sm:$0xf]
          %v5163 = vld [vmem:[%s5160 + $0x8] sm:$0xf]
          %v5164 = vld [vmem:[%s5160 + $0xc] sm:$0xf]
          %v5165 = vld [vmem:[%s5160 + $0x10] sm:$0xf]
          %v5166 = vld [vmem:[%s5160 + $0x14] sm:$0xf]
          %v5167 = vld [vmem:[%s5160 + $0x18] sm:$0xf]
          %v5168 = vld [vmem:[%s5160 + $0x1c] sm:$0xf]
          %v5202 = vunpack.c.l.b16 %v5127
          %v5203 = vunpack.c.l.b16 %v5128
          %v5204 = vunpack.c.l.b16 %v5129
          %v5205 = vunpack.c.l.b16 %v5130
          %v5206 = vunpack.c.l.b16 %v5131
          %v5207 = vunpack.c.l.b16 %v5132
          %v5208 = vunpack.c.l.b16 %v5133
          %v5209 = vunpack.c.l.b16 %v5134
          %v5210 = vunpack.c.l.b16 %v5135
          %v5211 = vunpack.c.l.b16 %v5136
          %v5212 = vunpack.c.l.b16 %v5137
          %v5213 = vunpack.c.l.b16 %v5138
          %v5214 = vunpack.c.l.b16 %v5139
          %v5215 = vunpack.c.l.b16 %v5140
          %v5216 = vunpack.c.l.b16 %v5141
          %v5217 = vunpack.c.l.b16 %v5142
          %v5218 = vunpack.c.l.b16 %v5143
          %v5219 = vunpack.c.l.b16 %v5144
          %v5220 = vunpack.c.l.b16 %v5145
          %v5221 = vunpack.c.l.b16 %v5146
          %v5222 = vunpack.c.l.b16 %v5147
          %v5223 = vunpack.c.l.b16 %v5148
          %v5224 = vunpack.c.l.b16 %v5149
          %v5225 = vunpack.c.l.b16 %v5150
          %v5226 = vunpack.c.l.b16 %v5151
          %v5227 = vunpack.c.l.b16 %v5152
          %v5228 = vunpack.c.l.b16 %v5153
          %v5229 = vunpack.c.l.b16 %v5154
          %v5230 = vunpack.c.l.b16 %v5155
          %v5231 = vunpack.c.l.b16 %v5156
          %v5232 = vunpack.c.l.b16 %v5157
          %v5233 = vunpack.c.l.b16 %v5158
          %v5234 = vunpack.c.l.b16 %v5159
          %v5235 = vpack.c.b16 %v5203, %v5202
          %v5236 = vpack.c.b16 %v5205, %v5204
          %v5237 = vpack.c.b16 %v5207, %v5206
          %v5238 = vpack.c.b16 %v5209, %v5208
          %v5239 = vpack.c.b16 %v5211, %v5210
          %v5240 = vpack.c.b16 %v5213, %v5212
          %v5241 = vpack.c.b16 %v5215, %v5214
          %v5242 = vpack.c.b16 %v5217, %v5216
          %v5243 = vpack.c.b16 %v5219, %v5218
          %v5244 = vpack.c.b16 %v5221, %v5220
          %v5245 = vpack.c.b16 %v5223, %v5222
          %v5246 = vpack.c.b16 %v5225, %v5224
          %v5247 = vpack.c.b16 %v5227, %v5226
          %v5248 = vpack.c.b16 %v5229, %v5228
          %v5249 = vpack.c.b16 %v5231, %v5230
          %v5250 = vpack.c.b16 %v5233, %v5232
          %v5251 = vpack.c.b16 %v5234, %v5234
          %vm5252 = vsmask.f32 7424
          %v5254 = vshrl.u32 %v5235, 16
          %v5256 = vshll.u32 %v5235, 16
          %v5258 = vrot.slane %v5256, 1
          %v5259 = vor.u32 %v5254, %v5258
          %v5261 = vshll.u32 %v5236, 16
          %v5263 = vrot.slane %v5261, 1
          %v5264 = vsel %vm5252, %v5259, %v5263
          %v5265 = vshrl.u32 %v5236, 16
          %v5267 = vor.u32 %v5265, %v5263
          %v5269 = vshll.u32 %v5237, 16
          %v5271 = vrot.slane %v5269, 1
          %v5272 = vsel %vm5252, %v5267, %v5271
          %v5273 = vshrl.u32 %v5237, 16
          %v5275 = vor.u32 %v5273, %v5271
          %v5277 = vshll.u32 %v5238, 16
          %v5279 = vrot.slane %v5277, 1
          %v5280 = vsel %vm5252, %v5275, %v5279
          %v5281 = vshrl.u32 %v5238, 16
          %v5283 = vor.u32 %v5281, %v5279
          %v5285 = vshll.u32 %v5239, 16
          %v5287 = vrot.slane %v5285, 1
          %v5288 = vsel %vm5252, %v5283, %v5287
          %v5289 = vshrl.u32 %v5239, 16
          %v5291 = vor.u32 %v5289, %v5287
          %v5293 = vshll.u32 %v5240, 16
          %v5295 = vrot.slane %v5293, 1
          %v5296 = vsel %vm5252, %v5291, %v5295
          %v5297 = vshrl.u32 %v5240, 16
          %v5299 = vor.u32 %v5297, %v5295
          %v5301 = vshll.u32 %v5241, 16
          %v5303 = vrot.slane %v5301, 1
          %v5304 = vsel %vm5252, %v5299, %v5303
          %v5305 = vshrl.u32 %v5241, 16
          %v5307 = vor.u32 %v5305, %v5303
          %v5309 = vshll.u32 %v5242, 16
          %v5311 = vrot.slane %v5309, 1
          %v5312 = vsel %vm5252, %v5307, %v5311
          %v5313 = vshrl.u32 %v5242, 16
          %v5315 = vor.u32 %v5313, %v5311
          %v5317 = vshll.u32 %v5243, 16
          %v5319 = vrot.slane %v5317, 1
          %v5320 = vsel %vm5252, %v5315, %v5319
          %v5321 = vshrl.u32 %v5243, 16
          %v5323 = vor.u32 %v5321, %v5319
          %v5325 = vshll.u32 %v5244, 16
          %v5327 = vrot.slane %v5325, 1
          %v5328 = vsel %vm5252, %v5323, %v5327
          %v5329 = vshrl.u32 %v5244, 16
          %v5331 = vor.u32 %v5329, %v5327
          %v5333 = vshll.u32 %v5245, 16
          %v5335 = vrot.slane %v5333, 1
          %v5336 = vsel %vm5252, %v5331, %v5335
          %v5337 = vshrl.u32 %v5245, 16
          %v5339 = vor.u32 %v5337, %v5335
          %v5341 = vshll.u32 %v5246, 16
          %v5343 = vrot.slane %v5341, 1
          %v5344 = vsel %vm5252, %v5339, %v5343
          %v5345 = vshrl.u32 %v5246, 16
          %v5347 = vor.u32 %v5345, %v5343
          %v5349 = vshll.u32 %v5247, 16
          %v5351 = vrot.slane %v5349, 1
          %v5352 = vsel %vm5252, %v5347, %v5351
          %v5353 = vshrl.u32 %v5247, 16
          %v5355 = vor.u32 %v5353, %v5351
          %v5357 = vshll.u32 %v5248, 16
          %v5359 = vrot.slane %v5357, 1
          %v5360 = vsel %vm5252, %v5355, %v5359
          %v5361 = vshrl.u32 %v5248, 16
          %v5363 = vor.u32 %v5361, %v5359
          %v5365 = vshll.u32 %v5249, 16
          %v5367 = vrot.slane %v5365, 1
          %v5368 = vsel %vm5252, %v5363, %v5367
          %v5369 = vshrl.u32 %v5249, 16
          %v5371 = vor.u32 %v5369, %v5367
          %v5373 = vshll.u32 %v5250, 16
          %v5375 = vrot.slane %v5373, 1
          %v5376 = vsel %vm5252, %v5371, %v5375
          %v5377 = vshrl.u32 %v5250, 16
          %v5379 = vor.u32 %v5377, %v5375
          %v5381 = vshll.u32 %v5251, 16
          %v5383 = vrot.slane %v5381, 1
          %v5384 = vsel %vm5252, %v5379, %v5383
          %v5393 = vunpack.c.l.b16 %v5161
          %v5394 = vunpack.c.l.b16 %v5162
          %v5395 = vunpack.c.l.b16 %v5163
          %v5396 = vunpack.c.l.b16 %v5164
          %v5397 = vunpack.c.l.b16 %v5165
          %v5398 = vunpack.c.l.b16 %v5166
          %v5399 = vunpack.c.l.b16 %v5167
          %v5400 = vunpack.c.l.b16 %v5168
          %v5401 = vpack.c.b16 %v5394, %v5393
          %v5402 = vpack.c.b16 %v5396, %v5395
          %v5403 = vpack.c.b16 %v5398, %v5397
          %v5404 = vpack.c.b16 %v5400, %v5399
          %v5410 = vsel %vm4656, %v5264, 0
          %v5413 = vsel %vm4656, %v5272, 0
          %v5416 = vsel %vm4656, %v5280, 0
          %v5419 = vsel %vm4656, %v5288, 0
          %v5422 = vsel %vm4656, %v5296, 0
          %v5425 = vsel %vm4656, %v5304, 0
          %v5428 = vsel %vm4656, %v5312, 0
          %v5431 = vsel %vm4656, %v5320, 0
          %v5434 = vsel %vm4656, %v5328, 0
          %v5437 = vsel %vm4656, %v5336, 0
          %v5440 = vsel %vm4656, %v5344, 0
          %v5443 = vsel %vm4656, %v5352, 0
          %v5446 = vsel %vm4656, %v5360, 0
          %v5449 = vsel %vm4656, %v5368, 0
          %v5452 = vsel %vm4656, %v5376, 0
          %v5455 = vsel %vm4656, %v5384, 0
          %5457 = vmatpush.bf16.msra.mxu0 0
          %5458 = vmatpush.bf16.msra.mxu0 0
          %5459 = vmatpush.bf16.msra.mxu0 0
          %5460 = vmatpush.bf16.msra.mxu0 0
          %5461 = vmatpush.bf16.msra.mxu0 %v5404
          %5462 = vmatpush.bf16.msra.mxu0 %v5403
          %5463 = vmatpush.bf16.msra.mxu0 %v5402
          %5464 = vmatpush.bf16.msra.mxu0 %v5401
          %5465 = vmatmul.bf16.gmra.mxu0 %v5410
          %v5466 = vpop.f32.mrf.mxu0
          %v5467 = vadd.f32 0.0, %v5466
          %v5468 = vpop.f32.mrf.mxu0
          %v5469 = vadd.f32 0.0, %v5468
          %5470 = vmatmul.bf16.gmra.mxu0 %v5413
          %v5471 = vpop.f32.mrf.mxu0
          %v5472 = vadd.f32 0.0, %v5471
          %v5473 = vpop.f32.mrf.mxu0
          %v5474 = vadd.f32 0.0, %v5473
          %5475 = vmatmul.bf16.gmra.mxu0 %v5416
          %v5476 = vpop.f32.mrf.mxu0
          %v5477 = vadd.f32 0.0, %v5476
          %v5478 = vpop.f32.mrf.mxu0
          %v5479 = vadd.f32 0.0, %v5478
          %5480 = vmatmul.bf16.gmra.mxu0 %v5419
          %v5481 = vpop.f32.mrf.mxu0
          %v5482 = vadd.f32 0.0, %v5481
          %v5483 = vpop.f32.mrf.mxu0
          %v5484 = vadd.f32 0.0, %v5483
          %5485 = vmatmul.bf16.gmra.mxu0 %v5422
          %v5486 = vpop.f32.mrf.mxu0
          %v5487 = vadd.f32 0.0, %v5486
          %v5488 = vpop.f32.mrf.mxu0
          %v5489 = vadd.f32 0.0, %v5488
          %5490 = vmatmul.bf16.gmra.mxu0 %v5425
          %v5491 = vpop.f32.mrf.mxu0
          %v5492 = vadd.f32 0.0, %v5491
          %v5493 = vpop.f32.mrf.mxu0
          %v5494 = vadd.f32 0.0, %v5493
          %5495 = vmatmul.bf16.gmra.mxu0 %v5428
          %v5496 = vpop.f32.mrf.mxu0
          %v5497 = vadd.f32 0.0, %v5496
          %v5498 = vpop.f32.mrf.mxu0
          %v5499 = vadd.f32 0.0, %v5498
          %5500 = vmatmul.bf16.gmra.mxu0 %v5431
          %v5501 = vpop.f32.mrf.mxu0
          %v5502 = vadd.f32 0.0, %v5501
          %v5503 = vpop.f32.mrf.mxu0
          %v5504 = vadd.f32 0.0, %v5503
          %5505 = vmatmul.bf16.gmra.mxu0 %v5434
          %v5506 = vpop.f32.mrf.mxu0
          %v5507 = vadd.f32 0.0, %v5506
          %v5508 = vpop.f32.mrf.mxu0
          %v5509 = vadd.f32 0.0, %v5508
          %5510 = vmatmul.bf16.gmra.mxu0 %v5437
          %v5511 = vpop.f32.mrf.mxu0
          %v5512 = vadd.f32 0.0, %v5511
          %v5513 = vpop.f32.mrf.mxu0
          %v5514 = vadd.f32 0.0, %v5513
          %5515 = vmatmul.bf16.gmra.mxu0 %v5440
          %v5516 = vpop.f32.mrf.mxu0
          %v5517 = vadd.f32 0.0, %v5516
          %v5518 = vpop.f32.mrf.mxu0
          %v5519 = vadd.f32 0.0, %v5518
          %5520 = vmatmul.bf16.gmra.mxu0 %v5443
          %v5521 = vpop.f32.mrf.mxu0
          %v5522 = vadd.f32 0.0, %v5521
          %v5523 = vpop.f32.mrf.mxu0
          %v5524 = vadd.f32 0.0, %v5523
          %5525 = vmatmul.bf16.gmra.mxu0 %v5446
          %v5526 = vpop.f32.mrf.mxu0
          %v5527 = vadd.f32 0.0, %v5526
          %v5528 = vpop.f32.mrf.mxu0
          %v5529 = vadd.f32 0.0, %v5528
          %5530 = vmatmul.bf16.gmra.mxu0 %v5449
          %v5531 = vpop.f32.mrf.mxu0
          %v5532 = vadd.f32 0.0, %v5531
          %v5533 = vpop.f32.mrf.mxu0
          %v5534 = vadd.f32 0.0, %v5533
          %5535 = vmatmul.bf16.gmra.mxu0 %v5452
          %v5536 = vpop.f32.mrf.mxu0
          %v5537 = vadd.f32 0.0, %v5536
          %v5538 = vpop.f32.mrf.mxu0
          %v5539 = vadd.f32 0.0, %v5538
          %5540 = vmatmul.bf16.gmra.mxu0 %v5455
          %v5541 = vpop.f32.mrf.mxu0
          %v5542 = vadd.f32 0.0, %v5541
          %v5543 = vpop.f32.mrf.mxu0
          %v5544 = vadd.f32 0.0, %v5543
          %5545 = vdwg.mxu0
          %v5546 = vadd.f32 %v5048, %v5467
          %v5547 = vadd.f32 %v5050, %v5469
          %v5548 = vadd.f32 %v5053, %v5472
          %v5549 = vadd.f32 %v5055, %v5474
          %v5550 = vadd.f32 %v5058, %v5477
          %v5551 = vadd.f32 %v5060, %v5479
          %v5552 = vadd.f32 %v5063, %v5482
          %v5553 = vadd.f32 %v5065, %v5484
          %v5554 = vadd.f32 %v5068, %v5487
          %v5555 = vadd.f32 %v5070, %v5489
          %v5556 = vadd.f32 %v5073, %v5492
          %v5557 = vadd.f32 %v5075, %v5494
          %v5558 = vadd.f32 %v5078, %v5497
          %v5559 = vadd.f32 %v5080, %v5499
          %v5560 = vadd.f32 %v5083, %v5502
          %v5561 = vadd.f32 %v5085, %v5504
          %v5562 = vadd.f32 %v5088, %v5507
          %v5563 = vadd.f32 %v5090, %v5509
          %v5564 = vadd.f32 %v5093, %v5512
          %v5565 = vadd.f32 %v5095, %v5514
          %v5566 = vadd.f32 %v5098, %v5517
          %v5567 = vadd.f32 %v5100, %v5519
          %v5568 = vadd.f32 %v5103, %v5522
          %v5569 = vadd.f32 %v5105, %v5524
          %v5570 = vadd.f32 %v5108, %v5527
          %v5571 = vadd.f32 %v5110, %v5529
          %v5572 = vadd.f32 %v5113, %v5532
          %v5573 = vadd.f32 %v5115, %v5534
          %v5574 = vadd.f32 %v5118, %v5537
          %v5575 = vadd.f32 %v5120, %v5539
          %v5576 = vadd.f32 %v5123, %v5542
          %v5577 = vadd.f32 %v5125, %v5544
          %v5578 = vld [vmem:[#allocation3 + $0x14] sm:$0x8]
          %v5579 = vld [vmem:[#allocation3 + $0x18] sm:$0xf]
          %v5580 = vld [vmem:[#allocation3 + $0x1c] sm:$0xf]
          %v5581 = vld [vmem:[#allocation3 + $0x20] sm:$0xf]
          %v5582 = vld [vmem:[#allocation3 + $0x24] sm:$0xf]
          %v5583 = vld [vmem:[#allocation3 + $0x28] sm:$0xf]
          %v5584 = vld [vmem:[#allocation3 + $0x2c] sm:$0xf]
          %v5585 = vld [vmem:[#allocation3 + $0x30] sm:$0xf]
          %v5586 = vld [vmem:[#allocation3 + $0x34] sm:$0xf]
          %v5587 = vld [vmem:[#allocation3 + $0x38] sm:$0xf]
          %v5588 = vld [vmem:[#allocation3 + $0x3c] sm:$0xf]
          %v5589 = vld [vmem:[#allocation3 + $0x40] sm:$0xf]
          %v5590 = vld [vmem:[#allocation3 + $0x44] sm:$0xf]
          %v5591 = vld [vmem:[#allocation3 + $0x48] sm:$0xf]
          %v5592 = vld [vmem:[#allocation3 + $0x4c] sm:$0xf]
          %v5593 = vld [vmem:[#allocation3 + $0x50] sm:$0xf]
          %v5594 = vld [vmem:[#allocation3 + $0x54] sm:$0xf]
          %v5595 = vld [vmem:[#allocation3 + $0x58] sm:$0xf]
          %v5596 = vld [vmem:[#allocation3 + $0x5c] sm:$0xf]
          %v5597 = vld [vmem:[#allocation3 + $0x60] sm:$0xf]
          %v5598 = vld [vmem:[#allocation3 + $0x64] sm:$0xf]
          %v5599 = vld [vmem:[#allocation3 + $0x68] sm:$0xf]
          %v5600 = vld [vmem:[#allocation3 + $0x6c] sm:$0xf]
          %v5601 = vld [vmem:[#allocation3 + $0x70] sm:$0xf]
          %v5602 = vld [vmem:[#allocation3 + $0x74] sm:$0xf]
          %v5603 = vld [vmem:[#allocation3 + $0x78] sm:$0xf]
          %v5604 = vld [vmem:[#allocation3 + $0x7c] sm:$0xf]
          %v5605 = vld [vmem:[#allocation3 + $0x80] sm:$0xf]
          %v5606 = vld [vmem:[#allocation3 + $0x84] sm:$0xf]
          %v5607 = vld [vmem:[#allocation3 + $0x88] sm:$0xf]
          %v5608 = vld [vmem:[#allocation3 + $0x8c] sm:$0xf]
          %v5609 = vld [vmem:[#allocation3 + $0x90] sm:$0xf]
          %v5610 = vld [vmem:[#allocation3 + $0x94] sm:$0xf]
          %s5611 = scalar_lea.vmem %s208, 96 [#allocation4]
          %v5612 = vld [vmem:[%s5611] sm:$0xf]
          %v5613 = vld [vmem:[%s5611 + $0x4] sm:$0xf]
          %v5614 = vld [vmem:[%s5611 + $0x8] sm:$0xf]
          %v5615 = vld [vmem:[%s5611 + $0xc] sm:$0xf]
          %v5616 = vld [vmem:[%s5611 + $0x10] sm:$0xf]
          %v5617 = vld [vmem:[%s5611 + $0x14] sm:$0xf]
          %v5618 = vld [vmem:[%s5611 + $0x18] sm:$0xf]
          %v5619 = vld [vmem:[%s5611 + $0x1c] sm:$0xf]
          %v5653 = vunpack.c.l.b16 %v5578
          %v5654 = vunpack.c.l.b16 %v5579
          %v5655 = vunpack.c.l.b16 %v5580
          %v5656 = vunpack.c.l.b16 %v5581
          %v5657 = vunpack.c.l.b16 %v5582
          %v5658 = vunpack.c.l.b16 %v5583
          %v5659 = vunpack.c.l.b16 %v5584
          %v5660 = vunpack.c.l.b16 %v5585
          %v5661 = vunpack.c.l.b16 %v5586
          %v5662 = vunpack.c.l.b16 %v5587
          %v5663 = vunpack.c.l.b16 %v5588
          %v5664 = vunpack.c.l.b16 %v5589
          %v5665 = vunpack.c.l.b16 %v5590
          %v5666 = vunpack.c.l.b16 %v5591
          %v5667 = vunpack.c.l.b16 %v5592
          %v5668 = vunpack.c.l.b16 %v5593
          %v5669 = vunpack.c.l.b16 %v5594
          %v5670 = vunpack.c.l.b16 %v5595
          %v5671 = vunpack.c.l.b16 %v5596
          %v5672 = vunpack.c.l.b16 %v5597
          %v5673 = vunpack.c.l.b16 %v5598
          %v5674 = vunpack.c.l.b16 %v5599
          %v5675 = vunpack.c.l.b16 %v5600
          %v5676 = vunpack.c.l.b16 %v5601
          %v5677 = vunpack.c.l.b16 %v5602
          %v5678 = vunpack.c.l.b16 %v5603
          %v5679 = vunpack.c.l.b16 %v5604
          %v5680 = vunpack.c.l.b16 %v5605
          %v5681 = vunpack.c.l.b16 %v5606
          %v5682 = vunpack.c.l.b16 %v5607
          %v5683 = vunpack.c.l.b16 %v5608
          %v5684 = vunpack.c.l.b16 %v5609
          %v5685 = vunpack.c.l.b16 %v5610
          %v5686 = vpack.c.b16 %v5654, %v5653
          %v5687 = vpack.c.b16 %v5656, %v5655
          %v5688 = vpack.c.b16 %v5658, %v5657
          %v5689 = vpack.c.b16 %v5660, %v5659
          %v5690 = vpack.c.b16 %v5662, %v5661
          %v5691 = vpack.c.b16 %v5664, %v5663
          %v5692 = vpack.c.b16 %v5666, %v5665
          %v5693 = vpack.c.b16 %v5668, %v5667
          %v5694 = vpack.c.b16 %v5670, %v5669
          %v5695 = vpack.c.b16 %v5672, %v5671
          %v5696 = vpack.c.b16 %v5674, %v5673
          %v5697 = vpack.c.b16 %v5676, %v5675
          %v5698 = vpack.c.b16 %v5678, %v5677
          %v5699 = vpack.c.b16 %v5680, %v5679
          %v5700 = vpack.c.b16 %v5682, %v5681
          %v5701 = vpack.c.b16 %v5684, %v5683
          %v5702 = vpack.c.b16 %v5685, %v5685
          %v5704 = vshrl.u32 %v5686, 16
          %v5706 = vrot.slane %v5704, 3
          %v5707 = vshll.u32 %v5686, 16
          %v5709 = vrot.slane %v5707, 4
          %v5710 = vor.u32 %v5706, %v5709
          %v5712 = vshrl.u32 %v5687, 16
          %v5714 = vrot.slane %v5712, 3
          %v5715 = vshll.u32 %v5687, 16
          %v5717 = vrot.slane %v5715, 4
          %v5718 = vor.u32 %v5714, %v5717
          %v5719 = vsel %vm4813, %v5710, %v5718
          %v5721 = vshrl.u32 %v5688, 16
          %v5723 = vrot.slane %v5721, 3
          %v5724 = vshll.u32 %v5688, 16
          %v5726 = vrot.slane %v5724, 4
          %v5727 = vor.u32 %v5723, %v5726
          %v5728 = vsel %vm4813, %v5718, %v5727
          %v5730 = vshrl.u32 %v5689, 16
          %v5732 = vrot.slane %v5730, 3
          %v5733 = vshll.u32 %v5689, 16
          %v5735 = vrot.slane %v5733, 4
          %v5736 = vor.u32 %v5732, %v5735
          %v5737 = vsel %vm4813, %v5727, %v5736
          %v5739 = vshrl.u32 %v5690, 16
          %v5741 = vrot.slane %v5739, 3
          %v5742 = vshll.u32 %v5690, 16
          %v5744 = vrot.slane %v5742, 4
          %v5745 = vor.u32 %v5741, %v5744
          %v5746 = vsel %vm4813, %v5736, %v5745
          %v5748 = vshrl.u32 %v5691, 16
          %v5750 = vrot.slane %v5748, 3
          %v5751 = vshll.u32 %v5691, 16
          %v5753 = vrot.slane %v5751, 4
          %v5754 = vor.u32 %v5750, %v5753
          %v5755 = vsel %vm4813, %v5745, %v5754
          %v5757 = vshrl.u32 %v5692, 16
          %v5759 = vrot.slane %v5757, 3
          %v5760 = vshll.u32 %v5692, 16
          %v5762 = vrot.slane %v5760, 4
          %v5763 = vor.u32 %v5759, %v5762
          %v5764 = vsel %vm4813, %v5754, %v5763
          %v5766 = vshrl.u32 %v5693, 16
          %v5768 = vrot.slane %v5766, 3
          %v5769 = vshll.u32 %v5693, 16
          %v5771 = vrot.slane %v5769, 4
          %v5772 = vor.u32 %v5768, %v5771
          %v5773 = vsel %vm4813, %v5763, %v5772
          %v5775 = vshrl.u32 %v5694, 16
          %v5777 = vrot.slane %v5775, 3
          %v5778 = vshll.u32 %v5694, 16
          %v5780 = vrot.slane %v5778, 4
          %v5781 = vor.u32 %v5777, %v5780
          %v5782 = vsel %vm4813, %v5772, %v5781
          %v5784 = vshrl.u32 %v5695, 16
          %v5786 = vrot.slane %v5784, 3
          %v5787 = vshll.u32 %v5695, 16
          %v5789 = vrot.slane %v5787, 4
          %v5790 = vor.u32 %v5786, %v5789
          %v5791 = vsel %vm4813, %v5781, %v5790
          %v5793 = vshrl.u32 %v5696, 16
          %v5795 = vrot.slane %v5793, 3
          %v5796 = vshll.u32 %v5696, 16
          %v5798 = vrot.slane %v5796, 4
          %v5799 = vor.u32 %v5795, %v5798
          %v5800 = vsel %vm4813, %v5790, %v5799
          %v5802 = vshrl.u32 %v5697, 16
          %v5804 = vrot.slane %v5802, 3
          %v5805 = vshll.u32 %v5697, 16
          %v5807 = vrot.slane %v5805, 4
          %v5808 = vor.u32 %v5804, %v5807
          %v5809 = vsel %vm4813, %v5799, %v5808
          %v5811 = vshrl.u32 %v5698, 16
          %v5813 = vrot.slane %v5811, 3
          %v5814 = vshll.u32 %v5698, 16
          %v5816 = vrot.slane %v5814, 4
          %v5817 = vor.u32 %v5813, %v5816
          %v5818 = vsel %vm4813, %v5808, %v5817
          %v5820 = vshrl.u32 %v5699, 16
          %v5822 = vrot.slane %v5820, 3
          %v5823 = vshll.u32 %v5699, 16
          %v5825 = vrot.slane %v5823, 4
          %v5826 = vor.u32 %v5822, %v5825
          %v5827 = vsel %vm4813, %v5817, %v5826
          %v5829 = vshrl.u32 %v5700, 16
          %v5831 = vrot.slane %v5829, 3
          %v5832 = vshll.u32 %v5700, 16
          %v5834 = vrot.slane %v5832, 4
          %v5835 = vor.u32 %v5831, %v5834
          %v5836 = vsel %vm4813, %v5826, %v5835
          %v5838 = vshrl.u32 %v5701, 16
          %v5840 = vrot.slane %v5838, 3
          %v5841 = vshll.u32 %v5701, 16
          %v5843 = vrot.slane %v5841, 4
          %v5844 = vor.u32 %v5840, %v5843
          %v5845 = vsel %vm4813, %v5835, %v5844
          %v5847 = vshrl.u32 %v5702, 16
          %v5849 = vrot.slane %v5847, 3
          %v5850 = vshll.u32 %v5702, 16
          %v5852 = vrot.slane %v5850, 4
          %v5853 = vor.u32 %v5849, %v5852
          %v5854 = vsel %vm4813, %v5844, %v5853
          %v5863 = vunpack.c.l.b16 %v5612
          %v5864 = vunpack.c.l.b16 %v5613
          %v5865 = vunpack.c.l.b16 %v5614
          %v5866 = vunpack.c.l.b16 %v5615
          %v5867 = vunpack.c.l.b16 %v5616
          %v5868 = vunpack.c.l.b16 %v5617
          %v5869 = vunpack.c.l.b16 %v5618
          %v5870 = vunpack.c.l.b16 %v5619
          %v5871 = vpack.c.b16 %v5864, %v5863
          %v5872 = vpack.c.b16 %v5866, %v5865
          %v5873 = vpack.c.b16 %v5868, %v5867
          %v5874 = vpack.c.b16 %v5870, %v5869
          %v5880 = vsel %vm4656, %v5719, 0
          %v5883 = vsel %vm4656, %v5728, 0
          %v5886 = vsel %vm4656, %v5737, 0
          %v5889 = vsel %vm4656, %v5746, 0
          %v5892 = vsel %vm4656, %v5755, 0
          %v5895 = vsel %vm4656, %v5764, 0
          %v5898 = vsel %vm4656, %v5773, 0
          %v5901 = vsel %vm4656, %v5782, 0
          %v5904 = vsel %vm4656, %v5791, 0
          %v5907 = vsel %vm4656, %v5800, 0
          %v5910 = vsel %vm4656, %v5809, 0
          %v5913 = vsel %vm4656, %v5818, 0
          %v5916 = vsel %vm4656, %v5827, 0
          %v5919 = vsel %vm4656, %v5836, 0
          %v5922 = vsel %vm4656, %v5845, 0
          %v5925 = vsel %vm4656, %v5854, 0
          %5927 = vmatpush.bf16.msra.mxu0 0
          %5928 = vmatpush.bf16.msra.mxu0 0
          %5929 = vmatpush.bf16.msra.mxu0 0
          %5930 = vmatpush.bf16.msra.mxu0 0
          %5931 = vmatpush.bf16.msra.mxu0 %v5874
          %5932 = vmatpush.bf16.msra.mxu0 %v5873
          %5933 = vmatpush.bf16.msra.mxu0 %v5872
          %5934 = vmatpush.bf16.msra.mxu0 %v5871
          %5935 = vmatmul.bf16.gmra.mxu0 %v5880
          %v5936 = vpop.f32.mrf.mxu0
          %v5937 = vadd.f32 0.0, %v5936
          %v5938 = vpop.f32.mrf.mxu0
          %v5939 = vadd.f32 0.0, %v5938
          %5940 = vmatmul.bf16.gmra.mxu0 %v5883
          %v5941 = vpop.f32.mrf.mxu0
          %v5942 = vadd.f32 0.0, %v5941
          %v5943 = vpop.f32.mrf.mxu0
          %v5944 = vadd.f32 0.0, %v5943
          %5945 = vmatmul.bf16.gmra.mxu0 %v5886
          %v5946 = vpop.f32.mrf.mxu0
          %v5947 = vadd.f32 0.0, %v5946
          %v5948 = vpop.f32.mrf.mxu0
          %v5949 = vadd.f32 0.0, %v5948
          %5950 = vmatmul.bf16.gmra.mxu0 %v5889
          %v5951 = vpop.f32.mrf.mxu0
          %v5952 = vadd.f32 0.0, %v5951
          %v5953 = vpop.f32.mrf.mxu0
          %v5954 = vadd.f32 0.0, %v5953
          %5955 = vmatmul.bf16.gmra.mxu0 %v5892
          %v5956 = vpop.f32.mrf.mxu0
          %v5957 = vadd.f32 0.0, %v5956
          %v5958 = vpop.f32.mrf.mxu0
          %v5959 = vadd.f32 0.0, %v5958
          %5960 = vmatmul.bf16.gmra.mxu0 %v5895
          %v5961 = vpop.f32.mrf.mxu0
          %v5962 = vadd.f32 0.0, %v5961
          %v5963 = vpop.f32.mrf.mxu0
          %v5964 = vadd.f32 0.0, %v5963
          %5965 = vmatmul.bf16.gmra.mxu0 %v5898
          %v5966 = vpop.f32.mrf.mxu0
          %v5967 = vadd.f32 0.0, %v5966
          %v5968 = vpop.f32.mrf.mxu0
          %v5969 = vadd.f32 0.0, %v5968
          %5970 = vmatmul.bf16.gmra.mxu0 %v5901
          %v5971 = vpop.f32.mrf.mxu0
          %v5972 = vadd.f32 0.0, %v5971
          %v5973 = vpop.f32.mrf.mxu0
          %v5974 = vadd.f32 0.0, %v5973
          %5975 = vmatmul.bf16.gmra.mxu0 %v5904
          %v5976 = vpop.f32.mrf.mxu0
          %v5977 = vadd.f32 0.0, %v5976
          %v5978 = vpop.f32.mrf.mxu0
          %v5979 = vadd.f32 0.0, %v5978
          %5980 = vmatmul.bf16.gmra.mxu0 %v5907
          %v5981 = vpop.f32.mrf.mxu0
          %v5982 = vadd.f32 0.0, %v5981
          %v5983 = vpop.f32.mrf.mxu0
          %v5984 = vadd.f32 0.0, %v5983
          %5985 = vmatmul.bf16.gmra.mxu0 %v5910
          %v5986 = vpop.f32.mrf.mxu0
          %v5987 = vadd.f32 0.0, %v5986
          %v5988 = vpop.f32.mrf.mxu0
          %v5989 = vadd.f32 0.0, %v5988
          %5990 = vmatmul.bf16.gmra.mxu0 %v5913
          %v5991 = vpop.f32.mrf.mxu0
          %v5992 = vadd.f32 0.0, %v5991
          %v5993 = vpop.f32.mrf.mxu0
          %v5994 = vadd.f32 0.0, %v5993
          %5995 = vmatmul.bf16.gmra.mxu0 %v5916
          %v5996 = vpop.f32.mrf.mxu0
          %v5997 = vadd.f32 0.0, %v5996
          %v5998 = vpop.f32.mrf.mxu0
          %v5999 = vadd.f32 0.0, %v5998
          %6000 = vmatmul.bf16.gmra.mxu0 %v5919
          %v6001 = vpop.f32.mrf.mxu0
          %v6002 = vadd.f32 0.0, %v6001
          %v6003 = vpop.f32.mrf.mxu0
          %v6004 = vadd.f32 0.0, %v6003
          %6005 = vmatmul.bf16.gmra.mxu0 %v5922
          %v6006 = vpop.f32.mrf.mxu0
          %v6007 = vadd.f32 0.0, %v6006
          %v6008 = vpop.f32.mrf.mxu0
          %v6009 = vadd.f32 0.0, %v6008
          %6010 = vmatmul.bf16.gmra.mxu0 %v5925
          %v6011 = vpop.f32.mrf.mxu0
          %v6012 = vadd.f32 0.0, %v6011
          %v6013 = vpop.f32.mrf.mxu0
          %v6014 = vadd.f32 0.0, %v6013
          %6015 = vdwg.mxu0
          %v6016 = vadd.f32 %v5546, %v5937
          %v6017 = vadd.f32 %v5547, %v5939
          %v6018 = vadd.f32 %v5548, %v5942
          %v6019 = vadd.f32 %v5549, %v5944
          %v6020 = vadd.f32 %v5550, %v5947
          %v6021 = vadd.f32 %v5551, %v5949
          %v6022 = vadd.f32 %v5552, %v5952
          %v6023 = vadd.f32 %v5553, %v5954
          %v6024 = vadd.f32 %v5554, %v5957
          %v6025 = vadd.f32 %v5555, %v5959
          %v6026 = vadd.f32 %v5556, %v5962
          %v6027 = vadd.f32 %v5557, %v5964
          %v6028 = vadd.f32 %v5558, %v5967
          %v6029 = vadd.f32 %v5559, %v5969
          %v6030 = vadd.f32 %v5560, %v5972
          %v6031 = vadd.f32 %v5561, %v5974
          %v6032 = vadd.f32 %v5562, %v5977
          %v6033 = vadd.f32 %v5563, %v5979
          %v6034 = vadd.f32 %v5564, %v5982
          %v6035 = vadd.f32 %v5565, %v5984
          %v6036 = vadd.f32 %v5566, %v5987
          %v6037 = vadd.f32 %v5567, %v5989
          %v6038 = vadd.f32 %v5568, %v5992
          %v6039 = vadd.f32 %v5569, %v5994
          %v6040 = vadd.f32 %v5570, %v5997
          %v6041 = vadd.f32 %v5571, %v5999
          %v6042 = vadd.f32 %v5572, %v6002
          %v6043 = vadd.f32 %v5573, %v6004
          %v6044 = vadd.f32 %v5574, %v6007
          %v6045 = vadd.f32 %v5575, %v6009
          %v6046 = vadd.f32 %v5576, %v6012
          %v6047 = vadd.f32 %v5577, %v6014
          %s6048 = scalar_lea.vmem %s208, 128 [#allocation4]
          %v6049 = vld [vmem:[%s6048] sm:$0xf]
          %v6050 = vld [vmem:[%s6048 + $0x4] sm:$0xf]
          %v6051 = vld [vmem:[%s6048 + $0x8] sm:$0xf]
          %v6052 = vld [vmem:[%s6048 + $0xc] sm:$0xf]
          %v6053 = vld [vmem:[%s6048 + $0x10] sm:$0xf]
          %v6054 = vld [vmem:[%s6048 + $0x14] sm:$0xf]
          %v6055 = vld [vmem:[%s6048 + $0x18] sm:$0xf]
          %v6056 = vld [vmem:[%s6048 + $0x1c] sm:$0xf]
          %v6057 = vpack.c.b16 %v5655, %v5654
          %v6058 = vpack.c.b16 %v5657, %v5656
          %v6059 = vpack.c.b16 %v5659, %v5658
          %v6060 = vpack.c.b16 %v5661, %v5660
          %v6061 = vpack.c.b16 %v5663, %v5662
          %v6062 = vpack.c.b16 %v5665, %v5664
          %v6063 = vpack.c.b16 %v5667, %v5666
          %v6064 = vpack.c.b16 %v5669, %v5668
          %v6065 = vpack.c.b16 %v5671, %v5670
          %v6066 = vpack.c.b16 %v5673, %v5672
          %v6067 = vpack.c.b16 %v5675, %v5674
          %v6068 = vpack.c.b16 %v5677, %v5676
          %v6069 = vpack.c.b16 %v5679, %v5678
          %v6070 = vpack.c.b16 %v5681, %v5680
          %v6071 = vpack.c.b16 %v5683, %v5682
          %v6072 = vpack.c.b16 %v5685, %v5684
          %v6081 = vunpack.c.l.b16 %v6049
          %v6082 = vunpack.c.l.b16 %v6050
          %v6083 = vunpack.c.l.b16 %v6051
          %v6084 = vunpack.c.l.b16 %v6052
          %v6085 = vunpack.c.l.b16 %v6053
          %v6086 = vunpack.c.l.b16 %v6054
          %v6087 = vunpack.c.l.b16 %v6055
          %v6088 = vunpack.c.l.b16 %v6056
          %v6089 = vpack.c.b16 %v6082, %v6081
          %v6090 = vpack.c.b16 %v6084, %v6083
          %v6091 = vpack.c.b16 %v6086, %v6085
          %v6092 = vpack.c.b16 %v6088, %v6087
          %v6098 = vsel %vm4656, %v6057, 0
          %v6101 = vsel %vm4656, %v6058, 0
          %v6104 = vsel %vm4656, %v6059, 0
          %v6107 = vsel %vm4656, %v6060, 0
          %v6110 = vsel %vm4656, %v6061, 0
          %v6113 = vsel %vm4656, %v6062, 0
          %v6116 = vsel %vm4656, %v6063, 0
          %v6119 = vsel %vm4656, %v6064, 0
          %v6122 = vsel %vm4656, %v6065, 0
          %v6125 = vsel %vm4656, %v6066, 0
          %v6128 = vsel %vm4656, %v6067, 0
          %v6131 = vsel %vm4656, %v6068, 0
          %v6134 = vsel %vm4656, %v6069, 0
          %v6137 = vsel %vm4656, %v6070, 0
          %v6140 = vsel %vm4656, %v6071, 0
          %v6143 = vsel %vm4656, %v6072, 0
          %6145 = vmatpush.bf16.msra.mxu0 0
          %6146 = vmatpush.bf16.msra.mxu0 0
          %6147 = vmatpush.bf16.msra.mxu0 0
          %6148 = vmatpush.bf16.msra.mxu0 0
          %6149 = vmatpush.bf16.msra.mxu0 %v6092
          %6150 = vmatpush.bf16.msra.mxu0 %v6091
          %6151 = vmatpush.bf16.msra.mxu0 %v6090
          %6152 = vmatpush.bf16.msra.mxu0 %v6089
          %6153 = vmatmul.bf16.gmra.mxu0 %v6098
          %v6154 = vpop.f32.mrf.mxu0
          %v6155 = vadd.f32 0.0, %v6154
          %v6156 = vpop.f32.mrf.mxu0
          %v6157 = vadd.f32 0.0, %v6156
          %6158 = vmatmul.bf16.gmra.mxu0 %v6101
          %v6159 = vpop.f32.mrf.mxu0
          %v6160 = vadd.f32 0.0, %v6159
          %v6161 = vpop.f32.mrf.mxu0
          %v6162 = vadd.f32 0.0, %v6161
          %6163 = vmatmul.bf16.gmra.mxu0 %v6104
          %v6164 = vpop.f32.mrf.mxu0
          %v6165 = vadd.f32 0.0, %v6164
          %v6166 = vpop.f32.mrf.mxu0
          %v6167 = vadd.f32 0.0, %v6166
          %6168 = vmatmul.bf16.gmra.mxu0 %v6107
          %v6169 = vpop.f32.mrf.mxu0
          %v6170 = vadd.f32 0.0, %v6169
          %v6171 = vpop.f32.mrf.mxu0
          %v6172 = vadd.f32 0.0, %v6171
          %6173 = vmatmul.bf16.gmra.mxu0 %v6110
          %v6174 = vpop.f32.mrf.mxu0
          %v6175 = vadd.f32 0.0, %v6174
          %v6176 = vpop.f32.mrf.mxu0
          %v6177 = vadd.f32 0.0, %v6176
          %6178 = vmatmul.bf16.gmra.mxu0 %v6113
          %v6179 = vpop.f32.mrf.mxu0
          %v6180 = vadd.f32 0.0, %v6179
          %v6181 = vpop.f32.mrf.mxu0
          %v6182 = vadd.f32 0.0, %v6181
          %6183 = vmatmul.bf16.gmra.mxu0 %v6116
          %v6184 = vpop.f32.mrf.mxu0
          %v6185 = vadd.f32 0.0, %v6184
          %v6186 = vpop.f32.mrf.mxu0
          %v6187 = vadd.f32 0.0, %v6186
          %6188 = vmatmul.bf16.gmra.mxu0 %v6119
          %v6189 = vpop.f32.mrf.mxu0
          %v6190 = vadd.f32 0.0, %v6189
          %v6191 = vpop.f32.mrf.mxu0
          %v6192 = vadd.f32 0.0, %v6191
          %6193 = vmatmul.bf16.gmra.mxu0 %v6122
          %v6194 = vpop.f32.mrf.mxu0
          %v6195 = vadd.f32 0.0, %v6194
          %v6196 = vpop.f32.mrf.mxu0
          %v6197 = vadd.f32 0.0, %v6196
          %6198 = vmatmul.bf16.gmra.mxu0 %v6125
          %v6199 = vpop.f32.mrf.mxu0
          %v6200 = vadd.f32 0.0, %v6199
          %v6201 = vpop.f32.mrf.mxu0
          %v6202 = vadd.f32 0.0, %v6201
          %6203 = vmatmul.bf16.gmra.mxu0 %v6128
          %v6204 = vpop.f32.mrf.mxu0
          %v6205 = vadd.f32 0.0, %v6204
          %v6206 = vpop.f32.mrf.mxu0
          %v6207 = vadd.f32 0.0, %v6206
          %6208 = vmatmul.bf16.gmra.mxu0 %v6131
          %v6209 = vpop.f32.mrf.mxu0
          %v6210 = vadd.f32 0.0, %v6209
          %v6211 = vpop.f32.mrf.mxu0
          %v6212 = vadd.f32 0.0, %v6211
          %6213 = vmatmul.bf16.gmra.mxu0 %v6134
          %v6214 = vpop.f32.mrf.mxu0
          %v6215 = vadd.f32 0.0, %v6214
          %v6216 = vpop.f32.mrf.mxu0
          %v6217 = vadd.f32 0.0, %v6216
          %6218 = vmatmul.bf16.gmra.mxu0 %v6137
          %v6219 = vpop.f32.mrf.mxu0
          %v6220 = vadd.f32 0.0, %v6219
          %v6221 = vpop.f32.mrf.mxu0
          %v6222 = vadd.f32 0.0, %v6221
          %6223 = vmatmul.bf16.gmra.mxu0 %v6140
          %v6224 = vpop.f32.mrf.mxu0
          %v6225 = vadd.f32 0.0, %v6224
          %v6226 = vpop.f32.mrf.mxu0
          %v6227 = vadd.f32 0.0, %v6226
          %6228 = vmatmul.bf16.gmra.mxu0 %v6143
          %v6229 = vpop.f32.mrf.mxu0
          %v6230 = vadd.f32 0.0, %v6229
          %v6231 = vpop.f32.mrf.mxu0
          %v6232 = vadd.f32 0.0, %v6231
          %6233 = vdwg.mxu0
          %v6234 = vadd.f32 %v6016, %v6155
          %v6235 = vadd.f32 %v6017, %v6157
          %v6236 = vadd.f32 %v6018, %v6160
          %v6237 = vadd.f32 %v6019, %v6162
          %v6238 = vadd.f32 %v6020, %v6165
          %v6239 = vadd.f32 %v6021, %v6167
          %v6240 = vadd.f32 %v6022, %v6170
          %v6241 = vadd.f32 %v6023, %v6172
          %v6242 = vadd.f32 %v6024, %v6175
          %v6243 = vadd.f32 %v6025, %v6177
          %v6244 = vadd.f32 %v6026, %v6180
          %v6245 = vadd.f32 %v6027, %v6182
          %v6246 = vadd.f32 %v6028, %v6185
          %v6247 = vadd.f32 %v6029, %v6187
          %v6248 = vadd.f32 %v6030, %v6190
          %v6249 = vadd.f32 %v6031, %v6192
          %v6250 = vadd.f32 %v6032, %v6195
          %v6251 = vadd.f32 %v6033, %v6197
          %v6252 = vadd.f32 %v6034, %v6200
          %v6253 = vadd.f32 %v6035, %v6202
          %v6254 = vadd.f32 %v6036, %v6205
          %v6255 = vadd.f32 %v6037, %v6207
          %v6256 = vadd.f32 %v6038, %v6210
          %v6257 = vadd.f32 %v6039, %v6212
          %v6258 = vadd.f32 %v6040, %v6215
          %v6259 = vadd.f32 %v6041, %v6217
          %v6260 = vadd.f32 %v6042, %v6220
          %v6261 = vadd.f32 %v6043, %v6222
          %v6262 = vadd.f32 %v6044, %v6225
          %v6263 = vadd.f32 %v6045, %v6227
          %v6264 = vadd.f32 %v6046, %v6230
          %v6265 = vadd.f32 %v6047, %v6232
          %v6266 = vld [vmem:[#allocation3 + $0x18] sm:$0xf]
          %v6267 = vld [vmem:[#allocation3 + $0x1c] sm:$0xf]
          %v6268 = vld [vmem:[#allocation3 + $0x20] sm:$0xf]
          %v6269 = vld [vmem:[#allocation3 + $0x24] sm:$0xf]
          %v6270 = vld [vmem:[#allocation3 + $0x28] sm:$0xf]
          %v6271 = vld [vmem:[#allocation3 + $0x2c] sm:$0xf]
          %v6272 = vld [vmem:[#allocation3 + $0x30] sm:$0xf]
          %v6273 = vld [vmem:[#allocation3 + $0x34] sm:$0xf]
          %v6274 = vld [vmem:[#allocation3 + $0x38] sm:$0xf]
          %v6275 = vld [vmem:[#allocation3 + $0x3c] sm:$0xf]
          %v6276 = vld [vmem:[#allocation3 + $0x40] sm:$0xf]
          %v6277 = vld [vmem:[#allocation3 + $0x44] sm:$0xf]
          %v6278 = vld [vmem:[#allocation3 + $0x48] sm:$0xf]
          %v6279 = vld [vmem:[#allocation3 + $0x4c] sm:$0xf]
          %v6280 = vld [vmem:[#allocation3 + $0x50] sm:$0xf]
          %v6281 = vld [vmem:[#allocation3 + $0x54] sm:$0xf]
          %v6282 = vld [vmem:[#allocation3 + $0x58] sm:$0xf]
          %v6283 = vld [vmem:[#allocation3 + $0x5c] sm:$0xf]
          %v6284 = vld [vmem:[#allocation3 + $0x60] sm:$0xf]
          %v6285 = vld [vmem:[#allocation3 + $0x64] sm:$0xf]
          %v6286 = vld [vmem:[#allocation3 + $0x68] sm:$0xf]
          %v6287 = vld [vmem:[#allocation3 + $0x6c] sm:$0xf]
          %v6288 = vld [vmem:[#allocation3 + $0x70] sm:$0xf]
          %v6289 = vld [vmem:[#allocation3 + $0x74] sm:$0xf]
          %v6290 = vld [vmem:[#allocation3 + $0x78] sm:$0xf]
          %v6291 = vld [vmem:[#allocation3 + $0x7c] sm:$0xf]
          %v6292 = vld [vmem:[#allocation3 + $0x80] sm:$0xf]
          %v6293 = vld [vmem:[#allocation3 + $0x84] sm:$0xf]
          %v6294 = vld [vmem:[#allocation3 + $0x88] sm:$0xf]
          %v6295 = vld [vmem:[#allocation3 + $0x8c] sm:$0xf]
          %v6296 = vld [vmem:[#allocation3 + $0x90] sm:$0xf]
          %v6297 = vld [vmem:[#allocation3 + $0x94] sm:$0xf]
          %v6298 = vld [vmem:[#allocation3 + $0x98] sm:$0x1]
          %s6299 = scalar_lea.vmem %s208, 160 [#allocation4]
          %v6300 = vld [vmem:[%s6299] sm:$0xf]
          %v6301 = vld [vmem:[%s6299 + $0x4] sm:$0xf]
          %v6302 = vld [vmem:[%s6299 + $0x8] sm:$0xf]
          %v6303 = vld [vmem:[%s6299 + $0xc] sm:$0xf]
          %v6304 = vld [vmem:[%s6299 + $0x10] sm:$0xf]
          %v6305 = vld [vmem:[%s6299 + $0x14] sm:$0xf]
          %v6306 = vld [vmem:[%s6299 + $0x18] sm:$0xf]
          %v6307 = vld [vmem:[%s6299 + $0x1c] sm:$0xf]
          %v6341 = vunpack.c.l.b16 %v6266
          %v6342 = vunpack.c.l.b16 %v6267
          %v6343 = vunpack.c.l.b16 %v6268
          %v6344 = vunpack.c.l.b16 %v6269
          %v6345 = vunpack.c.l.b16 %v6270
          %v6346 = vunpack.c.l.b16 %v6271
          %v6347 = vunpack.c.l.b16 %v6272
          %v6348 = vunpack.c.l.b16 %v6273
          %v6349 = vunpack.c.l.b16 %v6274
          %v6350 = vunpack.c.l.b16 %v6275
          %v6351 = vunpack.c.l.b16 %v6276
          %v6352 = vunpack.c.l.b16 %v6277
          %v6353 = vunpack.c.l.b16 %v6278
          %v6354 = vunpack.c.l.b16 %v6279
          %v6355 = vunpack.c.l.b16 %v6280
          %v6356 = vunpack.c.l.b16 %v6281
          %v6357 = vunpack.c.l.b16 %v6282
          %v6358 = vunpack.c.l.b16 %v6283
          %v6359 = vunpack.c.l.b16 %v6284
          %v6360 = vunpack.c.l.b16 %v6285
          %v6361 = vunpack.c.l.b16 %v6286
          %v6362 = vunpack.c.l.b16 %v6287
          %v6363 = vunpack.c.l.b16 %v6288
          %v6364 = vunpack.c.l.b16 %v6289
          %v6365 = vunpack.c.l.b16 %v6290
          %v6366 = vunpack.c.l.b16 %v6291
          %v6367 = vunpack.c.l.b16 %v6292
          %v6368 = vunpack.c.l.b16 %v6293
          %v6369 = vunpack.c.l.b16 %v6294
          %v6370 = vunpack.c.l.b16 %v6295
          %v6371 = vunpack.c.l.b16 %v6296
          %v6372 = vunpack.c.l.b16 %v6297
          %v6373 = vunpack.c.l.b16 %v6298
          %v6374 = vpack.c.b16 %v6342, %v6341
          %v6375 = vpack.c.b16 %v6344, %v6343
          %v6376 = vpack.c.b16 %v6346, %v6345
          %v6377 = vpack.c.b16 %v6348, %v6347
          %v6378 = vpack.c.b16 %v6350, %v6349
          %v6379 = vpack.c.b16 %v6352, %v6351
          %v6380 = vpack.c.b16 %v6354, %v6353
          %v6381 = vpack.c.b16 %v6356, %v6355
          %v6382 = vpack.c.b16 %v6358, %v6357
          %v6383 = vpack.c.b16 %v6360, %v6359
          %v6384 = vpack.c.b16 %v6362, %v6361
          %v6385 = vpack.c.b16 %v6364, %v6363
          %v6386 = vpack.c.b16 %v6366, %v6365
          %v6387 = vpack.c.b16 %v6368, %v6367
          %v6388 = vpack.c.b16 %v6370, %v6369
          %v6389 = vpack.c.b16 %v6372, %v6371
          %v6390 = vpack.c.b16 %v6373, %v6373
          %v6392 = vshrl.u32 %v6374, 16
          %v6394 = vshll.u32 %v6374, 16
          %v6396 = vrot.slane %v6394, 1
          %v6397 = vor.u32 %v6392, %v6396
          %v6399 = vshll.u32 %v6375, 16
          %v6401 = vrot.slane %v6399, 1
          %v6402 = vsel %vm5252, %v6397, %v6401
          %v6403 = vshrl.u32 %v6375, 16
          %v6405 = vor.u32 %v6403, %v6401
          %v6407 = vshll.u32 %v6376, 16
          %v6409 = vrot.slane %v6407, 1
          %v6410 = vsel %vm5252, %v6405, %v6409
          %v6411 = vshrl.u32 %v6376, 16
          %v6413 = vor.u32 %v6411, %v6409
          %v6415 = vshll.u32 %v6377, 16
          %v6417 = vrot.slane %v6415, 1
          %v6418 = vsel %vm5252, %v6413, %v6417
          %v6419 = vshrl.u32 %v6377, 16
          %v6421 = vor.u32 %v6419, %v6417
          %v6423 = vshll.u32 %v6378, 16
          %v6425 = vrot.slane %v6423, 1
          %v6426 = vsel %vm5252, %v6421, %v6425
          %v6427 = vshrl.u32 %v6378, 16
          %v6429 = vor.u32 %v6427, %v6425
          %v6431 = vshll.u32 %v6379, 16
          %v6433 = vrot.slane %v6431, 1
          %v6434 = vsel %vm5252, %v6429, %v6433
          %v6435 = vshrl.u32 %v6379, 16
          %v6437 = vor.u32 %v6435, %v6433
          %v6439 = vshll.u32 %v6380, 16
          %v6441 = vrot.slane %v6439, 1
          %v6442 = vsel %vm5252, %v6437, %v6441
          %v6443 = vshrl.u32 %v6380, 16
          %v6445 = vor.u32 %v6443, %v6441
          %v6447 = vshll.u32 %v6381, 16
          %v6449 = vrot.slane %v6447, 1
          %v6450 = vsel %vm5252, %v6445, %v6449
          %v6451 = vshrl.u32 %v6381, 16
          %v6453 = vor.u32 %v6451, %v6449
          %v6455 = vshll.u32 %v6382, 16
          %v6457 = vrot.slane %v6455, 1
          %v6458 = vsel %vm5252, %v6453, %v6457
          %v6459 = vshrl.u32 %v6382, 16
          %v6461 = vor.u32 %v6459, %v6457
          %v6463 = vshll.u32 %v6383, 16
          %v6465 = vrot.slane %v6463, 1
          %v6466 = vsel %vm5252, %v6461, %v6465
          %v6467 = vshrl.u32 %v6383, 16
          %v6469 = vor.u32 %v6467, %v6465
          %v6471 = vshll.u32 %v6384, 16
          %v6473 = vrot.slane %v6471, 1
          %v6474 = vsel %vm5252, %v6469, %v6473
          %v6475 = vshrl.u32 %v6384, 16
          %v6477 = vor.u32 %v6475, %v6473
          %v6479 = vshll.u32 %v6385, 16
          %v6481 = vrot.slane %v6479, 1
          %v6482 = vsel %vm5252, %v6477, %v6481
          %v6483 = vshrl.u32 %v6385, 16
          %v6485 = vor.u32 %v6483, %v6481
          %v6487 = vshll.u32 %v6386, 16
          %v6489 = vrot.slane %v6487, 1
          %v6490 = vsel %vm5252, %v6485, %v6489
          %v6491 = vshrl.u32 %v6386, 16
          %v6493 = vor.u32 %v6491, %v6489
          %v6495 = vshll.u32 %v6387, 16
          %v6497 = vrot.slane %v6495, 1
          %v6498 = vsel %vm5252, %v6493, %v6497
          %v6499 = vshrl.u32 %v6387, 16
          %v6501 = vor.u32 %v6499, %v6497
          %v6503 = vshll.u32 %v6388, 16
          %v6505 = vrot.slane %v6503, 1
          %v6506 = vsel %vm5252, %v6501, %v6505
          %v6507 = vshrl.u32 %v6388, 16
          %v6509 = vor.u32 %v6507, %v6505
          %v6511 = vshll.u32 %v6389, 16
          %v6513 = vrot.slane %v6511, 1
          %v6514 = vsel %vm5252, %v6509, %v6513
          %v6515 = vshrl.u32 %v6389, 16
          %v6517 = vor.u32 %v6515, %v6513
          %v6519 = vshll.u32 %v6390, 16
          %v6521 = vrot.slane %v6519, 1
          %v6522 = vsel %vm5252, %v6517, %v6521
          %v6531 = vunpack.c.l.b16 %v6300
          %v6532 = vunpack.c.l.b16 %v6301
          %v6533 = vunpack.c.l.b16 %v6302
          %v6534 = vunpack.c.l.b16 %v6303
          %v6535 = vunpack.c.l.b16 %v6304
          %v6536 = vunpack.c.l.b16 %v6305
          %v6537 = vunpack.c.l.b16 %v6306
          %v6538 = vunpack.c.l.b16 %v6307
          %v6539 = vpack.c.b16 %v6532, %v6531
          %v6540 = vpack.c.b16 %v6534, %v6533
          %v6541 = vpack.c.b16 %v6536, %v6535
          %v6542 = vpack.c.b16 %v6538, %v6537
          %v6548 = vsel %vm4656, %v6402, 0
          %v6551 = vsel %vm4656, %v6410, 0
          %v6554 = vsel %vm4656, %v6418, 0
          %v6557 = vsel %vm4656, %v6426, 0
          %v6560 = vsel %vm4656, %v6434, 0
          %v6563 = vsel %vm4656, %v6442, 0
          %v6566 = vsel %vm4656, %v6450, 0
          %v6569 = vsel %vm4656, %v6458, 0
          %v6572 = vsel %vm4656, %v6466, 0
          %v6575 = vsel %vm4656, %v6474, 0
          %v6578 = vsel %vm4656, %v6482, 0
          %v6581 = vsel %vm4656, %v6490, 0
          %v6584 = vsel %vm4656, %v6498, 0
          %v6587 = vsel %vm4656, %v6506, 0
          %v6590 = vsel %vm4656, %v6514, 0
          %v6593 = vsel %vm4656, %v6522, 0
          %6595 = vmatpush.bf16.msra.mxu0 0
          %6596 = vmatpush.bf16.msra.mxu0 0
          %6597 = vmatpush.bf16.msra.mxu0 0
          %6598 = vmatpush.bf16.msra.mxu0 0
          %6599 = vmatpush.bf16.msra.mxu0 %v6542
          %6600 = vmatpush.bf16.msra.mxu0 %v6541
          %6601 = vmatpush.bf16.msra.mxu0 %v6540
          %6602 = vmatpush.bf16.msra.mxu0 %v6539
          %6603 = vmatmul.bf16.gmra.mxu0 %v6548
          %v6604 = vpop.f32.mrf.mxu0
          %v6605 = vadd.f32 0.0, %v6604
          %v6606 = vpop.f32.mrf.mxu0
          %v6607 = vadd.f32 0.0, %v6606
          %6608 = vmatmul.bf16.gmra.mxu0 %v6551
          %v6609 = vpop.f32.mrf.mxu0
          %v6610 = vadd.f32 0.0, %v6609
          %v6611 = vpop.f32.mrf.mxu0
          %v6612 = vadd.f32 0.0, %v6611
          %6613 = vmatmul.bf16.gmra.mxu0 %v6554
          %v6614 = vpop.f32.mrf.mxu0
          %v6615 = vadd.f32 0.0, %v6614
          %v6616 = vpop.f32.mrf.mxu0
          %v6617 = vadd.f32 0.0, %v6616
          %6618 = vmatmul.bf16.gmra.mxu0 %v6557
          %v6619 = vpop.f32.mrf.mxu0
          %v6620 = vadd.f32 0.0, %v6619
          %v6621 = vpop.f32.mrf.mxu0
          %v6622 = vadd.f32 0.0, %v6621
          %6623 = vmatmul.bf16.gmra.mxu0 %v6560
          %v6624 = vpop.f32.mrf.mxu0
          %v6625 = vadd.f32 0.0, %v6624
          %v6626 = vpop.f32.mrf.mxu0
          %v6627 = vadd.f32 0.0, %v6626
          %6628 = vmatmul.bf16.gmra.mxu0 %v6563
          %v6629 = vpop.f32.mrf.mxu0
          %v6630 = vadd.f32 0.0, %v6629
          %v6631 = vpop.f32.mrf.mxu0
          %v6632 = vadd.f32 0.0, %v6631
          %6633 = vmatmul.bf16.gmra.mxu0 %v6566
          %v6634 = vpop.f32.mrf.mxu0
          %v6635 = vadd.f32 0.0, %v6634
          %v6636 = vpop.f32.mrf.mxu0
          %v6637 = vadd.f32 0.0, %v6636
          %6638 = vmatmul.bf16.gmra.mxu0 %v6569
          %v6639 = vpop.f32.mrf.mxu0
          %v6640 = vadd.f32 0.0, %v6639
          %v6641 = vpop.f32.mrf.mxu0
          %v6642 = vadd.f32 0.0, %v6641
          %6643 = vmatmul.bf16.gmra.mxu0 %v6572
          %v6644 = vpop.f32.mrf.mxu0
          %v6645 = vadd.f32 0.0, %v6644
          %v6646 = vpop.f32.mrf.mxu0
          %v6647 = vadd.f32 0.0, %v6646
          %6648 = vmatmul.bf16.gmra.mxu0 %v6575
          %v6649 = vpop.f32.mrf.mxu0
          %v6650 = vadd.f32 0.0, %v6649
          %v6651 = vpop.f32.mrf.mxu0
          %v6652 = vadd.f32 0.0, %v6651
          %6653 = vmatmul.bf16.gmra.mxu0 %v6578
          %v6654 = vpop.f32.mrf.mxu0
          %v6655 = vadd.f32 0.0, %v6654
          %v6656 = vpop.f32.mrf.mxu0
          %v6657 = vadd.f32 0.0, %v6656
          %6658 = vmatmul.bf16.gmra.mxu0 %v6581
          %v6659 = vpop.f32.mrf.mxu0
          %v6660 = vadd.f32 0.0, %v6659
          %v6661 = vpop.f32.mrf.mxu0
          %v6662 = vadd.f32 0.0, %v6661
          %6663 = vmatmul.bf16.gmra.mxu0 %v6584
          %v6664 = vpop.f32.mrf.mxu0
          %v6665 = vadd.f32 0.0, %v6664
          %v6666 = vpop.f32.mrf.mxu0
          %v6667 = vadd.f32 0.0, %v6666
          %6668 = vmatmul.bf16.gmra.mxu0 %v6587
          %v6669 = vpop.f32.mrf.mxu0
          %v6670 = vadd.f32 0.0, %v6669
          %v6671 = vpop.f32.mrf.mxu0
          %v6672 = vadd.f32 0.0, %v6671
          %6673 = vmatmul.bf16.gmra.mxu0 %v6590
          %v6674 = vpop.f32.mrf.mxu0
          %v6675 = vadd.f32 0.0, %v6674
          %v6676 = vpop.f32.mrf.mxu0
          %v6677 = vadd.f32 0.0, %v6676
          %6678 = vmatmul.bf16.gmra.mxu0 %v6593
          %v6679 = vpop.f32.mrf.mxu0
          %v6680 = vadd.f32 0.0, %v6679
          %v6681 = vpop.f32.mrf.mxu0
          %v6682 = vadd.f32 0.0, %v6681
          %6683 = vdwg.mxu0
          %v6684 = vadd.f32 %v6234, %v6605
          %v6685 = vadd.f32 %v6235, %v6607
          %v6686 = vadd.f32 %v6236, %v6610
          %v6687 = vadd.f32 %v6237, %v6612
          %v6688 = vadd.f32 %v6238, %v6615
          %v6689 = vadd.f32 %v6239, %v6617
          %v6690 = vadd.f32 %v6240, %v6620
          %v6691 = vadd.f32 %v6241, %v6622
          %v6692 = vadd.f32 %v6242, %v6625
          %v6693 = vadd.f32 %v6243, %v6627
          %v6694 = vadd.f32 %v6244, %v6630
          %v6695 = vadd.f32 %v6245, %v6632
          %v6696 = vadd.f32 %v6246, %v6635
          %v6697 = vadd.f32 %v6247, %v6637
          %v6698 = vadd.f32 %v6248, %v6640
          %v6699 = vadd.f32 %v6249, %v6642
          %v6700 = vadd.f32 %v6250, %v6645
          %v6701 = vadd.f32 %v6251, %v6647
          %v6702 = vadd.f32 %v6252, %v6650
          %v6703 = vadd.f32 %v6253, %v6652
          %v6704 = vadd.f32 %v6254, %v6655
          %v6705 = vadd.f32 %v6255, %v6657
          %v6706 = vadd.f32 %v6256, %v6660
          %v6707 = vadd.f32 %v6257, %v6662
          %v6708 = vadd.f32 %v6258, %v6665
          %v6709 = vadd.f32 %v6259, %v6667
          %v6710 = vadd.f32 %v6260, %v6670
          %v6711 = vadd.f32 %v6261, %v6672
          %v6712 = vadd.f32 %v6262, %v6675
          %v6713 = vadd.f32 %v6263, %v6677
          %v6714 = vadd.f32 %v6264, %v6680
          %v6715 = vadd.f32 %v6265, %v6682
          %v6716 = vld [vmem:[#allocation3 + $0x24] sm:$0x8]
          %v6717 = vld [vmem:[#allocation3 + $0x28] sm:$0xf]
          %v6718 = vld [vmem:[#allocation3 + $0x2c] sm:$0xf]
          %v6719 = vld [vmem:[#allocation3 + $0x30] sm:$0xf]
          %v6720 = vld [vmem:[#allocation3 + $0x34] sm:$0xf]
          %v6721 = vld [vmem:[#allocation3 + $0x38] sm:$0xf]
          %v6722 = vld [vmem:[#allocation3 + $0x3c] sm:$0xf]
          %v6723 = vld [vmem:[#allocation3 + $0x40] sm:$0xf]
          %v6724 = vld [vmem:[#allocation3 + $0x44] sm:$0xf]
          %v6725 = vld [vmem:[#allocation3 + $0x48] sm:$0xf]
          %v6726 = vld [vmem:[#allocation3 + $0x4c] sm:$0xf]
          %v6727 = vld [vmem:[#allocation3 + $0x50] sm:$0xf]
          %v6728 = vld [vmem:[#allocation3 + $0x54] sm:$0xf]
          %v6729 = vld [vmem:[#allocation3 + $0x58] sm:$0xf]
          %v6730 = vld [vmem:[#allocation3 + $0x5c] sm:$0xf]
          %v6731 = vld [vmem:[#allocation3 + $0x60] sm:$0xf]
          %v6732 = vld [vmem:[#allocation3 + $0x64] sm:$0xf]
          %v6733 = vld [vmem:[#allocation3 + $0x68] sm:$0xf]
          %v6734 = vld [vmem:[#allocation3 + $0x6c] sm:$0xf]
          %v6735 = vld [vmem:[#allocation3 + $0x70] sm:$0xf]
          %v6736 = vld [vmem:[#allocation3 + $0x74] sm:$0xf]
          %v6737 = vld [vmem:[#allocation3 + $0x78] sm:$0xf]
          %v6738 = vld [vmem:[#allocation3 + $0x7c] sm:$0xf]
          %v6739 = vld [vmem:[#allocation3 + $0x80] sm:$0xf]
          %v6740 = vld [vmem:[#allocation3 + $0x84] sm:$0xf]
          %v6741 = vld [vmem:[#allocation3 + $0x88] sm:$0xf]
          %v6742 = vld [vmem:[#allocation3 + $0x8c] sm:$0xf]
          %v6743 = vld [vmem:[#allocation3 + $0x90] sm:$0xf]
          %v6744 = vld [vmem:[#allocation3 + $0x94] sm:$0xf]
          %v6745 = vld [vmem:[#allocation3 + $0x98] sm:$0xf]
          %v6746 = vld [vmem:[#allocation3 + $0x9c] sm:$0xf]
          %v6747 = vld [vmem:[#allocation3 + $0xa0] sm:$0xf]
          %v6748 = vld [vmem:[#allocation3 + $0xa4] sm:$0xf]
          %s6749 = scalar_lea.vmem %s208, 192 [#allocation4]
          %v6750 = vld [vmem:[%s6749] sm:$0xf]
          %v6751 = vld [vmem:[%s6749 + $0x4] sm:$0xf]
          %v6752 = vld [vmem:[%s6749 + $0x8] sm:$0xf]
          %v6753 = vld [vmem:[%s6749 + $0xc] sm:$0xf]
          %v6754 = vld [vmem:[%s6749 + $0x10] sm:$0xf]
          %v6755 = vld [vmem:[%s6749 + $0x14] sm:$0xf]
          %v6756 = vld [vmem:[%s6749 + $0x18] sm:$0xf]
          %v6757 = vld [vmem:[%s6749 + $0x1c] sm:$0xf]
          %v6791 = vunpack.c.l.b16 %v6716
          %v6792 = vunpack.c.l.b16 %v6717
          %v6793 = vunpack.c.l.b16 %v6718
          %v6794 = vunpack.c.l.b16 %v6719
          %v6795 = vunpack.c.l.b16 %v6720
          %v6796 = vunpack.c.l.b16 %v6721
          %v6797 = vunpack.c.l.b16 %v6722
          %v6798 = vunpack.c.l.b16 %v6723
          %v6799 = vunpack.c.l.b16 %v6724
          %v6800 = vunpack.c.l.b16 %v6725
          %v6801 = vunpack.c.l.b16 %v6726
          %v6802 = vunpack.c.l.b16 %v6727
          %v6803 = vunpack.c.l.b16 %v6728
          %v6804 = vunpack.c.l.b16 %v6729
          %v6805 = vunpack.c.l.b16 %v6730
          %v6806 = vunpack.c.l.b16 %v6731
          %v6807 = vunpack.c.l.b16 %v6732
          %v6808 = vunpack.c.l.b16 %v6733
          %v6809 = vunpack.c.l.b16 %v6734
          %v6810 = vunpack.c.l.b16 %v6735
          %v6811 = vunpack.c.l.b16 %v6736
          %v6812 = vunpack.c.l.b16 %v6737
          %v6813 = vunpack.c.l.b16 %v6738
          %v6814 = vunpack.c.l.b16 %v6739
          %v6815 = vunpack.c.l.b16 %v6740
          %v6816 = vunpack.c.l.b16 %v6741
          %v6817 = vunpack.c.l.b16 %v6742
          %v6818 = vunpack.c.l.b16 %v6743
          %v6819 = vunpack.c.l.b16 %v6744
          %v6820 = vunpack.c.l.b16 %v6745
          %v6821 = vunpack.c.l.b16 %v6746
          %v6822 = vunpack.c.l.b16 %v6747
          %v6823 = vunpack.c.l.b16 %v6748
          %v6824 = vpack.c.b16 %v6792, %v6791
          %v6825 = vpack.c.b16 %v6794, %v6793
          %v6826 = vpack.c.b16 %v6796, %v6795
          %v6827 = vpack.c.b16 %v6798, %v6797
          %v6828 = vpack.c.b16 %v6800, %v6799
          %v6829 = vpack.c.b16 %v6802, %v6801
          %v6830 = vpack.c.b16 %v6804, %v6803
          %v6831 = vpack.c.b16 %v6806, %v6805
          %v6832 = vpack.c.b16 %v6808, %v6807
          %v6833 = vpack.c.b16 %v6810, %v6809
          %v6834 = vpack.c.b16 %v6812, %v6811
          %v6835 = vpack.c.b16 %v6814, %v6813
          %v6836 = vpack.c.b16 %v6816, %v6815
          %v6837 = vpack.c.b16 %v6818, %v6817
          %v6838 = vpack.c.b16 %v6820, %v6819
          %v6839 = vpack.c.b16 %v6822, %v6821
          %v6840 = vpack.c.b16 %v6823, %v6823
          %v6842 = vshrl.u32 %v6824, 16
          %v6844 = vrot.slane %v6842, 3
          %v6845 = vshll.u32 %v6824, 16
          %v6847 = vrot.slane %v6845, 4
          %v6848 = vor.u32 %v6844, %v6847
          %v6850 = vshrl.u32 %v6825, 16
          %v6852 = vrot.slane %v6850, 3
          %v6853 = vshll.u32 %v6825, 16
          %v6855 = vrot.slane %v6853, 4
          %v6856 = vor.u32 %v6852, %v6855
          %v6857 = vsel %vm4813, %v6848, %v6856
          %v6859 = vshrl.u32 %v6826, 16
          %v6861 = vrot.slane %v6859, 3
          %v6862 = vshll.u32 %v6826, 16
          %v6864 = vrot.slane %v6862, 4
          %v6865 = vor.u32 %v6861, %v6864
          %v6866 = vsel %vm4813, %v6856, %v6865
          %v6868 = vshrl.u32 %v6827, 16
          %v6870 = vrot.slane %v6868, 3
          %v6871 = vshll.u32 %v6827, 16
          %v6873 = vrot.slane %v6871, 4
          %v6874 = vor.u32 %v6870, %v6873
          %v6875 = vsel %vm4813, %v6865, %v6874
          %v6877 = vshrl.u32 %v6828, 16
          %v6879 = vrot.slane %v6877, 3
          %v6880 = vshll.u32 %v6828, 16
          %v6882 = vrot.slane %v6880, 4
          %v6883 = vor.u32 %v6879, %v6882
          %v6884 = vsel %vm4813, %v6874, %v6883
          %v6886 = vshrl.u32 %v6829, 16
          %v6888 = vrot.slane %v6886, 3
          %v6889 = vshll.u32 %v6829, 16
          %v6891 = vrot.slane %v6889, 4
          %v6892 = vor.u32 %v6888, %v6891
          %v6893 = vsel %vm4813, %v6883, %v6892
          %v6895 = vshrl.u32 %v6830, 16
          %v6897 = vrot.slane %v6895, 3
          %v6898 = vshll.u32 %v6830, 16
          %v6900 = vrot.slane %v6898, 4
          %v6901 = vor.u32 %v6897, %v6900
          %v6902 = vsel %vm4813, %v6892, %v6901
          %v6904 = vshrl.u32 %v6831, 16
          %v6906 = vrot.slane %v6904, 3
          %v6907 = vshll.u32 %v6831, 16
          %v6909 = vrot.slane %v6907, 4
          %v6910 = vor.u32 %v6906, %v6909
          %v6911 = vsel %vm4813, %v6901, %v6910
          %v6913 = vshrl.u32 %v6832, 16
          %v6915 = vrot.slane %v6913, 3
          %v6916 = vshll.u32 %v6832, 16
          %v6918 = vrot.slane %v6916, 4
          %v6919 = vor.u32 %v6915, %v6918
          %v6920 = vsel %vm4813, %v6910, %v6919
          %v6922 = vshrl.u32 %v6833, 16
          %v6924 = vrot.slane %v6922, 3
          %v6925 = vshll.u32 %v6833, 16
          %v6927 = vrot.slane %v6925, 4
          %v6928 = vor.u32 %v6924, %v6927
          %v6929 = vsel %vm4813, %v6919, %v6928
          %v6931 = vshrl.u32 %v6834, 16
          %v6933 = vrot.slane %v6931, 3
          %v6934 = vshll.u32 %v6834, 16
          %v6936 = vrot.slane %v6934, 4
          %v6937 = vor.u32 %v6933, %v6936
          %v6938 = vsel %vm4813, %v6928, %v6937
          %v6940 = vshrl.u32 %v6835, 16
          %v6942 = vrot.slane %v6940, 3
          %v6943 = vshll.u32 %v6835, 16
          %v6945 = vrot.slane %v6943, 4
          %v6946 = vor.u32 %v6942, %v6945
          %v6947 = vsel %vm4813, %v6937, %v6946
          %v6949 = vshrl.u32 %v6836, 16
          %v6951 = vrot.slane %v6949, 3
          %v6952 = vshll.u32 %v6836, 16
          %v6954 = vrot.slane %v6952, 4
          %v6955 = vor.u32 %v6951, %v6954
          %v6956 = vsel %vm4813, %v6946, %v6955
          %v6958 = vshrl.u32 %v6837, 16
          %v6960 = vrot.slane %v6958, 3
          %v6961 = vshll.u32 %v6837, 16
          %v6963 = vrot.slane %v6961, 4
          %v6964 = vor.u32 %v6960, %v6963
          %v6965 = vsel %vm4813, %v6955, %v6964
          %v6967 = vshrl.u32 %v6838, 16
          %v6969 = vrot.slane %v6967, 3
          %v6970 = vshll.u32 %v6838, 16
          %v6972 = vrot.slane %v6970, 4
          %v6973 = vor.u32 %v6969, %v6972
          %v6974 = vsel %vm4813, %v6964, %v6973
          %v6976 = vshrl.u32 %v6839, 16
          %v6978 = vrot.slane %v6976, 3
          %v6979 = vshll.u32 %v6839, 16
          %v6981 = vrot.slane %v6979, 4
          %v6982 = vor.u32 %v6978, %v6981
          %v6983 = vsel %vm4813, %v6973, %v6982
          %v6985 = vshrl.u32 %v6840, 16
          %v6987 = vrot.slane %v6985, 3
          %v6988 = vshll.u32 %v6840, 16
          %v6990 = vrot.slane %v6988, 4
          %v6991 = vor.u32 %v6987, %v6990
          %v6992 = vsel %vm4813, %v6982, %v6991
          %v7001 = vunpack.c.l.b16 %v6750
          %v7002 = vunpack.c.l.b16 %v6751
          %v7003 = vunpack.c.l.b16 %v6752
          %v7004 = vunpack.c.l.b16 %v6753
          %v7005 = vunpack.c.l.b16 %v6754
          %v7006 = vunpack.c.l.b16 %v6755
          %v7007 = vunpack.c.l.b16 %v6756
          %v7008 = vunpack.c.l.b16 %v6757
          %v7009 = vpack.c.b16 %v7002, %v7001
          %v7010 = vpack.c.b16 %v7004, %v7003
          %v7011 = vpack.c.b16 %v7006, %v7005
          %v7012 = vpack.c.b16 %v7008, %v7007
          %v7018 = vsel %vm4656, %v6857, 0
          %v7021 = vsel %vm4656, %v6866, 0
          %v7024 = vsel %vm4656, %v6875, 0
          %v7027 = vsel %vm4656, %v6884, 0
          %v7030 = vsel %vm4656, %v6893, 0
          %v7033 = vsel %vm4656, %v6902, 0
          %v7036 = vsel %vm4656, %v6911, 0
          %v7039 = vsel %vm4656, %v6920, 0
          %v7042 = vsel %vm4656, %v6929, 0
          %v7045 = vsel %vm4656, %v6938, 0
          %v7048 = vsel %vm4656, %v6947, 0
          %v7051 = vsel %vm4656, %v6956, 0
          %v7054 = vsel %vm4656, %v6965, 0
          %v7057 = vsel %vm4656, %v6974, 0
          %v7060 = vsel %vm4656, %v6983, 0
          %v7063 = vsel %vm4656, %v6992, 0
          %7065 = vmatpush.bf16.msra.mxu0 0
          %7066 = vmatpush.bf16.msra.mxu0 0
          %7067 = vmatpush.bf16.msra.mxu0 0
          %7068 = vmatpush.bf16.msra.mxu0 0
          %7069 = vmatpush.bf16.msra.mxu0 %v7012
          %7070 = vmatpush.bf16.msra.mxu0 %v7011
          %7071 = vmatpush.bf16.msra.mxu0 %v7010
          %7072 = vmatpush.bf16.msra.mxu0 %v7009
          %7073 = vmatmul.bf16.gmra.mxu0 %v7018
          %v7074 = vpop.f32.mrf.mxu0
          %v7075 = vadd.f32 0.0, %v7074
          %v7076 = vpop.f32.mrf.mxu0
          %v7077 = vadd.f32 0.0, %v7076
          %7078 = vmatmul.bf16.gmra.mxu0 %v7021
          %v7079 = vpop.f32.mrf.mxu0
          %v7080 = vadd.f32 0.0, %v7079
          %v7081 = vpop.f32.mrf.mxu0
          %v7082 = vadd.f32 0.0, %v7081
          %7083 = vmatmul.bf16.gmra.mxu0 %v7024
          %v7084 = vpop.f32.mrf.mxu0
          %v7085 = vadd.f32 0.0, %v7084
          %v7086 = vpop.f32.mrf.mxu0
          %v7087 = vadd.f32 0.0, %v7086
          %7088 = vmatmul.bf16.gmra.mxu0 %v7027
          %v7089 = vpop.f32.mrf.mxu0
          %v7090 = vadd.f32 0.0, %v7089
          %v7091 = vpop.f32.mrf.mxu0
          %v7092 = vadd.f32 0.0, %v7091
          %7093 = vmatmul.bf16.gmra.mxu0 %v7030
          %v7094 = vpop.f32.mrf.mxu0
          %v7095 = vadd.f32 0.0, %v7094
          %v7096 = vpop.f32.mrf.mxu0
          %v7097 = vadd.f32 0.0, %v7096
          %7098 = vmatmul.bf16.gmra.mxu0 %v7033
          %v7099 = vpop.f32.mrf.mxu0
          %v7100 = vadd.f32 0.0, %v7099
          %v7101 = vpop.f32.mrf.mxu0
          %v7102 = vadd.f32 0.0, %v7101
          %7103 = vmatmul.bf16.gmra.mxu0 %v7036
          %v7104 = vpop.f32.mrf.mxu0
          %v7105 = vadd.f32 0.0, %v7104
          %v7106 = vpop.f32.mrf.mxu0
          %v7107 = vadd.f32 0.0, %v7106
          %7108 = vmatmul.bf16.gmra.mxu0 %v7039
          %v7109 = vpop.f32.mrf.mxu0
          %v7110 = vadd.f32 0.0, %v7109
          %v7111 = vpop.f32.mrf.mxu0
          %v7112 = vadd.f32 0.0, %v7111
          %7113 = vmatmul.bf16.gmra.mxu0 %v7042
          %v7114 = vpop.f32.mrf.mxu0
          %v7115 = vadd.f32 0.0, %v7114
          %v7116 = vpop.f32.mrf.mxu0
          %v7117 = vadd.f32 0.0, %v7116
          %7118 = vmatmul.bf16.gmra.mxu0 %v7045
          %v7119 = vpop.f32.mrf.mxu0
          %v7120 = vadd.f32 0.0, %v7119
          %v7121 = vpop.f32.mrf.mxu0
          %v7122 = vadd.f32 0.0, %v7121
          %7123 = vmatmul.bf16.gmra.mxu0 %v7048
          %v7124 = vpop.f32.mrf.mxu0
          %v7125 = vadd.f32 0.0, %v7124
          %v7126 = vpop.f32.mrf.mxu0
          %v7127 = vadd.f32 0.0, %v7126
          %7128 = vmatmul.bf16.gmra.mxu0 %v7051
          %v7129 = vpop.f32.mrf.mxu0
          %v7130 = vadd.f32 0.0, %v7129
          %v7131 = vpop.f32.mrf.mxu0
          %v7132 = vadd.f32 0.0, %v7131
          %7133 = vmatmul.bf16.gmra.mxu0 %v7054
          %v7134 = vpop.f32.mrf.mxu0
          %v7135 = vadd.f32 0.0, %v7134
          %v7136 = vpop.f32.mrf.mxu0
          %v7137 = vadd.f32 0.0, %v7136
          %7138 = vmatmul.bf16.gmra.mxu0 %v7057
          %v7139 = vpop.f32.mrf.mxu0
          %v7140 = vadd.f32 0.0, %v7139
          %v7141 = vpop.f32.mrf.mxu0
          %v7142 = vadd.f32 0.0, %v7141
          %7143 = vmatmul.bf16.gmra.mxu0 %v7060
          %v7144 = vpop.f32.mrf.mxu0
          %v7145 = vadd.f32 0.0, %v7144
          %v7146 = vpop.f32.mrf.mxu0
          %v7147 = vadd.f32 0.0, %v7146
          %7148 = vmatmul.bf16.gmra.mxu0 %v7063
          %v7149 = vpop.f32.mrf.mxu0
          %v7150 = vadd.f32 0.0, %v7149
          %v7151 = vpop.f32.mrf.mxu0
          %v7152 = vadd.f32 0.0, %v7151
          %7153 = vdwg.mxu0
          %v7154 = vadd.f32 %v6684, %v7075
          %v7155 = vadd.f32 %v6685, %v7077
          %v7156 = vadd.f32 %v6686, %v7080
          %v7157 = vadd.f32 %v6687, %v7082
          %v7158 = vadd.f32 %v6688, %v7085
          %v7159 = vadd.f32 %v6689, %v7087
          %v7160 = vadd.f32 %v6690, %v7090
          %v7161 = vadd.f32 %v6691, %v7092
          %v7162 = vadd.f32 %v6692, %v7095
          %v7163 = vadd.f32 %v6693, %v7097
          %v7164 = vadd.f32 %v6694, %v7100
          %v7165 = vadd.f32 %v6695, %v7102
          %v7166 = vadd.f32 %v6696, %v7105
          %v7167 = vadd.f32 %v6697, %v7107
          %v7168 = vadd.f32 %v6698, %v7110
          %v7169 = vadd.f32 %v6699, %v7112
          %v7170 = vadd.f32 %v6700, %v7115
          %v7171 = vadd.f32 %v6701, %v7117
          %v7172 = vadd.f32 %v6702, %v7120
          %v7173 = vadd.f32 %v6703, %v7122
          %v7174 = vadd.f32 %v6704, %v7125
          %v7175 = vadd.f32 %v6705, %v7127
          %v7176 = vadd.f32 %v6706, %v7130
          %v7177 = vadd.f32 %v6707, %v7132
          %v7178 = vadd.f32 %v6708, %v7135
          %v7179 = vadd.f32 %v6709, %v7137
          %v7180 = vadd.f32 %v6710, %v7140
          %v7181 = vadd.f32 %v6711, %v7142
          %v7182 = vadd.f32 %v6712, %v7145
          %v7183 = vadd.f32 %v6713, %v7147
          %v7184 = vadd.f32 %v6714, %v7150
          %v7185 = vadd.f32 %v6715, %v7152
          %s7186 = scalar_lea.vmem %s208, 224 [#allocation4]
          %v7187 = vld [vmem:[%s7186] sm:$0xf]
          %v7188 = vld [vmem:[%s7186 + $0x4] sm:$0xf]
          %v7189 = vld [vmem:[%s7186 + $0x8] sm:$0xf]
          %v7190 = vld [vmem:[%s7186 + $0xc] sm:$0xf]
          %v7191 = vld [vmem:[%s7186 + $0x10] sm:$0xf]
          %v7192 = vld [vmem:[%s7186 + $0x14] sm:$0xf]
          %v7193 = vld [vmem:[%s7186 + $0x18] sm:$0xf]
          %v7194 = vld [vmem:[%s7186 + $0x1c] sm:$0xf]
          %v7195 = vpack.c.b16 %v6793, %v6792
          %v7196 = vpack.c.b16 %v6795, %v6794
          %v7197 = vpack.c.b16 %v6797, %v6796
          %v7198 = vpack.c.b16 %v6799, %v6798
          %v7199 = vpack.c.b16 %v6801, %v6800
          %v7200 = vpack.c.b16 %v6803, %v6802
          %v7201 = vpack.c.b16 %v6805, %v6804
          %v7202 = vpack.c.b16 %v6807, %v6806
          %v7203 = vpack.c.b16 %v6809, %v6808
          %v7204 = vpack.c.b16 %v6811, %v6810
          %v7205 = vpack.c.b16 %v6813, %v6812
          %v7206 = vpack.c.b16 %v6815, %v6814
          %v7207 = vpack.c.b16 %v6817, %v6816
          %v7208 = vpack.c.b16 %v6819, %v6818
          %v7209 = vpack.c.b16 %v6821, %v6820
          %v7210 = vpack.c.b16 %v6823, %v6822
          %v7219 = vunpack.c.l.b16 %v7187
          %v7220 = vunpack.c.l.b16 %v7188
          %v7221 = vunpack.c.l.b16 %v7189
          %v7222 = vunpack.c.l.b16 %v7190
          %v7223 = vunpack.c.l.b16 %v7191
          %v7224 = vunpack.c.l.b16 %v7192
          %v7225 = vunpack.c.l.b16 %v7193
          %v7226 = vunpack.c.l.b16 %v7194
          %v7227 = vpack.c.b16 %v7220, %v7219
          %v7228 = vpack.c.b16 %v7222, %v7221
          %v7229 = vpack.c.b16 %v7224, %v7223
          %v7230 = vpack.c.b16 %v7226, %v7225
          %v7236 = vsel %vm4656, %v7195, 0
          %v7239 = vsel %vm4656, %v7196, 0
          %v7242 = vsel %vm4656, %v7197, 0
          %v7245 = vsel %vm4656, %v7198, 0
          %v7248 = vsel %vm4656, %v7199, 0
          %v7251 = vsel %vm4656, %v7200, 0
          %v7254 = vsel %vm4656, %v7201, 0
          %v7257 = vsel %vm4656, %v7202, 0
          %v7260 = vsel %vm4656, %v7203, 0
          %v7263 = vsel %vm4656, %v7204, 0
          %v7266 = vsel %vm4656, %v7205, 0
          %v7269 = vsel %vm4656, %v7206, 0
          %v7272 = vsel %vm4656, %v7207, 0
          %v7275 = vsel %vm4656, %v7208, 0
          %v7278 = vsel %vm4656, %v7209, 0
          %v7281 = vsel %vm4656, %v7210, 0
          %7283 = vmatpush.bf16.msra.mxu0 0
          %7284 = vmatpush.bf16.msra.mxu0 0
          %7285 = vmatpush.bf16.msra.mxu0 0
          %7286 = vmatpush.bf16.msra.mxu0 0
          %7287 = vmatpush.bf16.msra.mxu0 %v7230
          %7288 = vmatpush.bf16.msra.mxu0 %v7229
          %7289 = vmatpush.bf16.msra.mxu0 %v7228
          %7290 = vmatpush.bf16.msra.mxu0 %v7227
          %7291 = vmatmul.bf16.gmra.mxu0 %v7236
          %v7292 = vpop.f32.mrf.mxu0
          %v7293 = vadd.f32 0.0, %v7292
          %v7294 = vpop.f32.mrf.mxu0
          %v7295 = vadd.f32 0.0, %v7294
          %7296 = vmatmul.bf16.gmra.mxu0 %v7239
          %v7297 = vpop.f32.mrf.mxu0
          %v7298 = vadd.f32 0.0, %v7297
          %v7299 = vpop.f32.mrf.mxu0
          %v7300 = vadd.f32 0.0, %v7299
          %7301 = vmatmul.bf16.gmra.mxu0 %v7242
          %v7302 = vpop.f32.mrf.mxu0
          %v7303 = vadd.f32 0.0, %v7302
          %v7304 = vpop.f32.mrf.mxu0
          %v7305 = vadd.f32 0.0, %v7304
          %7306 = vmatmul.bf16.gmra.mxu0 %v7245
          %v7307 = vpop.f32.mrf.mxu0
          %v7308 = vadd.f32 0.0, %v7307
          %v7309 = vpop.f32.mrf.mxu0
          %v7310 = vadd.f32 0.0, %v7309
          %7311 = vmatmul.bf16.gmra.mxu0 %v7248
          %v7312 = vpop.f32.mrf.mxu0
          %v7313 = vadd.f32 0.0, %v7312
          %v7314 = vpop.f32.mrf.mxu0
          %v7315 = vadd.f32 0.0, %v7314
          %7316 = vmatmul.bf16.gmra.mxu0 %v7251
          %v7317 = vpop.f32.mrf.mxu0
          %v7318 = vadd.f32 0.0, %v7317
          %v7319 = vpop.f32.mrf.mxu0
          %v7320 = vadd.f32 0.0, %v7319
          %7321 = vmatmul.bf16.gmra.mxu0 %v7254
          %v7322 = vpop.f32.mrf.mxu0
          %v7323 = vadd.f32 0.0, %v7322
          %v7324 = vpop.f32.mrf.mxu0
          %v7325 = vadd.f32 0.0, %v7324
          %7326 = vmatmul.bf16.gmra.mxu0 %v7257
          %v7327 = vpop.f32.mrf.mxu0
          %v7328 = vadd.f32 0.0, %v7327
          %v7329 = vpop.f32.mrf.mxu0
          %v7330 = vadd.f32 0.0, %v7329
          %7331 = vmatmul.bf16.gmra.mxu0 %v7260
          %v7332 = vpop.f32.mrf.mxu0
          %v7333 = vadd.f32 0.0, %v7332
          %v7334 = vpop.f32.mrf.mxu0
          %v7335 = vadd.f32 0.0, %v7334
          %7336 = vmatmul.bf16.gmra.mxu0 %v7263
          %v7337 = vpop.f32.mrf.mxu0
          %v7338 = vadd.f32 0.0, %v7337
          %v7339 = vpop.f32.mrf.mxu0
          %v7340 = vadd.f32 0.0, %v7339
          %7341 = vmatmul.bf16.gmra.mxu0 %v7266
          %v7342 = vpop.f32.mrf.mxu0
          %v7343 = vadd.f32 0.0, %v7342
          %v7344 = vpop.f32.mrf.mxu0
          %v7345 = vadd.f32 0.0, %v7344
          %7346 = vmatmul.bf16.gmra.mxu0 %v7269
          %v7347 = vpop.f32.mrf.mxu0
          %v7348 = vadd.f32 0.0, %v7347
          %v7349 = vpop.f32.mrf.mxu0
          %v7350 = vadd.f32 0.0, %v7349
          %7351 = vmatmul.bf16.gmra.mxu0 %v7272
          %v7352 = vpop.f32.mrf.mxu0
          %v7353 = vadd.f32 0.0, %v7352
          %v7354 = vpop.f32.mrf.mxu0
          %v7355 = vadd.f32 0.0, %v7354
          %7356 = vmatmul.bf16.gmra.mxu0 %v7275
          %v7357 = vpop.f32.mrf.mxu0
          %v7358 = vadd.f32 0.0, %v7357
          %v7359 = vpop.f32.mrf.mxu0
          %v7360 = vadd.f32 0.0, %v7359
          %7361 = vmatmul.bf16.gmra.mxu0 %v7278
          %v7362 = vpop.f32.mrf.mxu0
          %v7363 = vadd.f32 0.0, %v7362
          %v7364 = vpop.f32.mrf.mxu0
          %v7365 = vadd.f32 0.0, %v7364
          %7366 = vmatmul.bf16.gmra.mxu0 %v7281
          %v7367 = vpop.f32.mrf.mxu0
          %v7368 = vadd.f32 0.0, %v7367
          %v7369 = vpop.f32.mrf.mxu0
          %v7370 = vadd.f32 0.0, %v7369
          %7371 = vdwg.mxu0
          %v7372 = vadd.f32 %v7154, %v7293
          %v7373 = vadd.f32 %v7155, %v7295
          %v7374 = vadd.f32 %v7156, %v7298
          %v7375 = vadd.f32 %v7157, %v7300
          %v7376 = vadd.f32 %v7158, %v7303
          %v7377 = vadd.f32 %v7159, %v7305
          %v7378 = vadd.f32 %v7160, %v7308
          %v7379 = vadd.f32 %v7161, %v7310
          %v7380 = vadd.f32 %v7162, %v7313
          %v7381 = vadd.f32 %v7163, %v7315
          %v7382 = vadd.f32 %v7164, %v7318
          %v7383 = vadd.f32 %v7165, %v7320
          %v7384 = vadd.f32 %v7166, %v7323
          %v7385 = vadd.f32 %v7167, %v7325
          %v7386 = vadd.f32 %v7168, %v7328
          %v7387 = vadd.f32 %v7169, %v7330
          %v7388 = vadd.f32 %v7170, %v7333
          %v7389 = vadd.f32 %v7171, %v7335
          %v7390 = vadd.f32 %v7172, %v7338
          %v7391 = vadd.f32 %v7173, %v7340
          %v7392 = vadd.f32 %v7174, %v7343
          %v7393 = vadd.f32 %v7175, %v7345
          %v7394 = vadd.f32 %v7176, %v7348
          %v7395 = vadd.f32 %v7177, %v7350
          %v7396 = vadd.f32 %v7178, %v7353
          %v7397 = vadd.f32 %v7179, %v7355
          %v7398 = vadd.f32 %v7180, %v7358
          %v7399 = vadd.f32 %v7181, %v7360
          %v7400 = vadd.f32 %v7182, %v7363
          %v7401 = vadd.f32 %v7183, %v7365
          %v7402 = vadd.f32 %v7184, %v7368
          %v7403 = vadd.f32 %v7185, %v7370
          %v7404 = vld [vmem:[#allocation3 + $0x28] sm:$0xf]
          %v7405 = vld [vmem:[#allocation3 + $0x2c] sm:$0xf]
          %v7406 = vld [vmem:[#allocation3 + $0x30] sm:$0xf]
          %v7407 = vld [vmem:[#allocation3 + $0x34] sm:$0xf]
          %v7408 = vld [vmem:[#allocation3 + $0x38] sm:$0xf]
          %v7409 = vld [vmem:[#allocation3 + $0x3c] sm:$0xf]
          %v7410 = vld [vmem:[#allocation3 + $0x40] sm:$0xf]
          %v7411 = vld [vmem:[#allocation3 + $0x44] sm:$0xf]
          %v7412 = vld [vmem:[#allocation3 + $0x48] sm:$0xf]
          %v7413 = vld [vmem:[#allocation3 + $0x4c] sm:$0xf]
          %v7414 = vld [vmem:[#allocation3 + $0x50] sm:$0xf]
          %v7415 = vld [vmem:[#allocation3 + $0x54] sm:$0xf]
          %v7416 = vld [vmem:[#allocation3 + $0x58] sm:$0xf]
          %v7417 = vld [vmem:[#allocation3 + $0x5c] sm:$0xf]
          %v7418 = vld [vmem:[#allocation3 + $0x60] sm:$0xf]
          %v7419 = vld [vmem:[#allocation3 + $0x64] sm:$0xf]
          %v7420 = vld [vmem:[#allocation3 + $0x68] sm:$0xf]
          %v7421 = vld [vmem:[#allocation3 + $0x6c] sm:$0xf]
          %v7422 = vld [vmem:[#allocation3 + $0x70] sm:$0xf]
          %v7423 = vld [vmem:[#allocation3 + $0x74] sm:$0xf]
          %v7424 = vld [vmem:[#allocation3 + $0x78] sm:$0xf]
          %v7425 = vld [vmem:[#allocation3 + $0x7c] sm:$0xf]
          %v7426 = vld [vmem:[#allocation3 + $0x80] sm:$0xf]
          %v7427 = vld [vmem:[#allocation3 + $0x84] sm:$0xf]
          %v7428 = vld [vmem:[#allocation3 + $0x88] sm:$0xf]
          %v7429 = vld [vmem:[#allocation3 + $0x8c] sm:$0xf]
          %v7430 = vld [vmem:[#allocation3 + $0x90] sm:$0xf]
          %v7431 = vld [vmem:[#allocation3 + $0x94] sm:$0xf]
          %v7432 = vld [vmem:[#allocation3 + $0x98] sm:$0xf]
          %v7433 = vld [vmem:[#allocation3 + $0x9c] sm:$0xf]
          %v7434 = vld [vmem:[#allocation3 + $0xa0] sm:$0xf]
          %v7435 = vld [vmem:[#allocation3 + $0xa4] sm:$0xf]
          %v7436 = vld [vmem:[#allocation3 + $0xa8] sm:$0x1]
          %s7437 = scalar_lea.vmem %s208, 256 [#allocation4]
          %v7438 = vld [vmem:[%s7437] sm:$0xf]
          %v7439 = vld [vmem:[%s7437 + $0x4] sm:$0xf]
          %v7440 = vld [vmem:[%s7437 + $0x8] sm:$0xf]
          %v7441 = vld [vmem:[%s7437 + $0xc] sm:$0xf]
          %v7442 = vld [vmem:[%s7437 + $0x10] sm:$0xf]
          %v7443 = vld [vmem:[%s7437 + $0x14] sm:$0xf]
          %v7444 = vld [vmem:[%s7437 + $0x18] sm:$0xf]
          %v7445 = vld [vmem:[%s7437 + $0x1c] sm:$0xf]
          %v7479 = vunpack.c.l.b16 %v7404
          %v7480 = vunpack.c.l.b16 %v7405
          %v7481 = vunpack.c.l.b16 %v7406
          %v7482 = vunpack.c.l.b16 %v7407
          %v7483 = vunpack.c.l.b16 %v7408
          %v7484 = vunpack.c.l.b16 %v7409
          %v7485 = vunpack.c.l.b16 %v7410
          %v7486 = vunpack.c.l.b16 %v7411
          %v7487 = vunpack.c.l.b16 %v7412
          %v7488 = vunpack.c.l.b16 %v7413
          %v7489 = vunpack.c.l.b16 %v7414
          %v7490 = vunpack.c.l.b16 %v7415
          %v7491 = vunpack.c.l.b16 %v7416
          %v7492 = vunpack.c.l.b16 %v7417
          %v7493 = vunpack.c.l.b16 %v7418
          %v7494 = vunpack.c.l.b16 %v7419
          %v7495 = vunpack.c.l.b16 %v7420
          %v7496 = vunpack.c.l.b16 %v7421
          %v7497 = vunpack.c.l.b16 %v7422
          %v7498 = vunpack.c.l.b16 %v7423
          %v7499 = vunpack.c.l.b16 %v7424
          %v7500 = vunpack.c.l.b16 %v7425
          %v7501 = vunpack.c.l.b16 %v7426
          %v7502 = vunpack.c.l.b16 %v7427
          %v7503 = vunpack.c.l.b16 %v7428
          %v7504 = vunpack.c.l.b16 %v7429
          %v7505 = vunpack.c.l.b16 %v7430
          %v7506 = vunpack.c.l.b16 %v7431
          %v7507 = vunpack.c.l.b16 %v7432
          %v7508 = vunpack.c.l.b16 %v7433
          %v7509 = vunpack.c.l.b16 %v7434
          %v7510 = vunpack.c.l.b16 %v7435
          %v7511 = vunpack.c.l.b16 %v7436
          %v7512 = vpack.c.b16 %v7480, %v7479
          %v7513 = vpack.c.b16 %v7482, %v7481
          %v7514 = vpack.c.b16 %v7484, %v7483
          %v7515 = vpack.c.b16 %v7486, %v7485
          %v7516 = vpack.c.b16 %v7488, %v7487
          %v7517 = vpack.c.b16 %v7490, %v7489
          %v7518 = vpack.c.b16 %v7492, %v7491
          %v7519 = vpack.c.b16 %v7494, %v7493
          %v7520 = vpack.c.b16 %v7496, %v7495
          %v7521 = vpack.c.b16 %v7498, %v7497
          %v7522 = vpack.c.b16 %v7500, %v7499
          %v7523 = vpack.c.b16 %v7502, %v7501
          %v7524 = vpack.c.b16 %v7504, %v7503
          %v7525 = vpack.c.b16 %v7506, %v7505
          %v7526 = vpack.c.b16 %v7508, %v7507
          %v7527 = vpack.c.b16 %v7510, %v7509
          %v7528 = vpack.c.b16 %v7511, %v7511
          %v7530 = vshrl.u32 %v7512, 16
          %v7532 = vshll.u32 %v7512, 16
          %v7534 = vrot.slane %v7532, 1
          %v7535 = vor.u32 %v7530, %v7534
          %v7537 = vshll.u32 %v7513, 16
          %v7539 = vrot.slane %v7537, 1
          %v7540 = vsel %vm5252, %v7535, %v7539
          %v7541 = vshrl.u32 %v7513, 16
          %v7543 = vor.u32 %v7541, %v7539
          %v7545 = vshll.u32 %v7514, 16
          %v7547 = vrot.slane %v7545, 1
          %v7548 = vsel %vm5252, %v7543, %v7547
          %v7549 = vshrl.u32 %v7514, 16
          %v7551 = vor.u32 %v7549, %v7547
          %v7553 = vshll.u32 %v7515, 16
          %v7555 = vrot.slane %v7553, 1
          %v7556 = vsel %vm5252, %v7551, %v7555
          %v7557 = vshrl.u32 %v7515, 16
          %v7559 = vor.u32 %v7557, %v7555
          %v7561 = vshll.u32 %v7516, 16
          %v7563 = vrot.slane %v7561, 1
          %v7564 = vsel %vm5252, %v7559, %v7563
          %v7565 = vshrl.u32 %v7516, 16
          %v7567 = vor.u32 %v7565, %v7563
          %v7569 = vshll.u32 %v7517, 16
          %v7571 = vrot.slane %v7569, 1
          %v7572 = vsel %vm5252, %v7567, %v7571
          %v7573 = vshrl.u32 %v7517, 16
          %v7575 = vor.u32 %v7573, %v7571
          %v7577 = vshll.u32 %v7518, 16
          %v7579 = vrot.slane %v7577, 1
          %v7580 = vsel %vm5252, %v7575, %v7579
          %v7581 = vshrl.u32 %v7518, 16
          %v7583 = vor.u32 %v7581, %v7579
          %v7585 = vshll.u32 %v7519, 16
          %v7587 = vrot.slane %v7585, 1
          %v7588 = vsel %vm5252, %v7583, %v7587
          %v7589 = vshrl.u32 %v7519, 16
          %v7591 = vor.u32 %v7589, %v7587
          %v7593 = vshll.u32 %v7520, 16
          %v7595 = vrot.slane %v7593, 1
          %v7596 = vsel %vm5252, %v7591, %v7595
          %v7597 = vshrl.u32 %v7520, 16
          %v7599 = vor.u32 %v7597, %v7595
          %v7601 = vshll.u32 %v7521, 16
          %v7603 = vrot.slane %v7601, 1
          %v7604 = vsel %vm5252, %v7599, %v7603
          %v7605 = vshrl.u32 %v7521, 16
          %v7607 = vor.u32 %v7605, %v7603
          %v7609 = vshll.u32 %v7522, 16
          %v7611 = vrot.slane %v7609, 1
          %v7612 = vsel %vm5252, %v7607, %v7611
          %v7613 = vshrl.u32 %v7522, 16
          %v7615 = vor.u32 %v7613, %v7611
          %v7617 = vshll.u32 %v7523, 16
          %v7619 = vrot.slane %v7617, 1
          %v7620 = vsel %vm5252, %v7615, %v7619
          %v7621 = vshrl.u32 %v7523, 16
          %v7623 = vor.u32 %v7621, %v7619
          %v7625 = vshll.u32 %v7524, 16
          %v7627 = vrot.slane %v7625, 1
          %v7628 = vsel %vm5252, %v7623, %v7627
          %v7629 = vshrl.u32 %v7524, 16
          %v7631 = vor.u32 %v7629, %v7627
          %v7633 = vshll.u32 %v7525, 16
          %v7635 = vrot.slane %v7633, 1
          %v7636 = vsel %vm5252, %v7631, %v7635
          %v7637 = vshrl.u32 %v7525, 16
          %v7639 = vor.u32 %v7637, %v7635
          %v7641 = vshll.u32 %v7526, 16
          %v7643 = vrot.slane %v7641, 1
          %v7644 = vsel %vm5252, %v7639, %v7643
          %v7645 = vshrl.u32 %v7526, 16
          %v7647 = vor.u32 %v7645, %v7643
          %v7649 = vshll.u32 %v7527, 16
          %v7651 = vrot.slane %v7649, 1
          %v7652 = vsel %vm5252, %v7647, %v7651
          %v7653 = vshrl.u32 %v7527, 16
          %v7655 = vor.u32 %v7653, %v7651
          %v7657 = vshll.u32 %v7528, 16
          %v7659 = vrot.slane %v7657, 1
          %v7660 = vsel %vm5252, %v7655, %v7659
          %v7669 = vunpack.c.l.b16 %v7438
          %v7670 = vunpack.c.l.b16 %v7439
          %v7671 = vunpack.c.l.b16 %v7440
          %v7672 = vunpack.c.l.b16 %v7441
          %v7673 = vunpack.c.l.b16 %v7442
          %v7674 = vunpack.c.l.b16 %v7443
          %v7675 = vunpack.c.l.b16 %v7444
          %v7676 = vunpack.c.l.b16 %v7445
          %v7677 = vpack.c.b16 %v7670, %v7669
          %v7678 = vpack.c.b16 %v7672, %v7671
          %v7679 = vpack.c.b16 %v7674, %v7673
          %v7680 = vpack.c.b16 %v7676, %v7675
          %v7686 = vsel %vm4656, %v7540, 0
          %v7689 = vsel %vm4656, %v7548, 0
          %v7692 = vsel %vm4656, %v7556, 0
          %v7695 = vsel %vm4656, %v7564, 0
          %v7698 = vsel %vm4656, %v7572, 0
          %v7701 = vsel %vm4656, %v7580, 0
          %v7704 = vsel %vm4656, %v7588, 0
          %v7707 = vsel %vm4656, %v7596, 0
          %v7710 = vsel %vm4656, %v7604, 0
          %v7713 = vsel %vm4656, %v7612, 0
          %v7716 = vsel %vm4656, %v7620, 0
          %v7719 = vsel %vm4656, %v7628, 0
          %v7722 = vsel %vm4656, %v7636, 0
          %v7725 = vsel %vm4656, %v7644, 0
          %v7728 = vsel %vm4656, %v7652, 0
          %v7731 = vsel %vm4656, %v7660, 0
          %7733 = vmatpush.bf16.msra.mxu0 0
          %7734 = vmatpush.bf16.msra.mxu0 0
          %7735 = vmatpush.bf16.msra.mxu0 0
          %7736 = vmatpush.bf16.msra.mxu0 0
          %7737 = vmatpush.bf16.msra.mxu0 %v7680
          %7738 = vmatpush.bf16.msra.mxu0 %v7679
          %7739 = vmatpush.bf16.msra.mxu0 %v7678
          %7740 = vmatpush.bf16.msra.mxu0 %v7677
          %7741 = vmatmul.bf16.gmra.mxu0 %v7686
          %v7742 = vpop.f32.mrf.mxu0
          %v7743 = vadd.f32 0.0, %v7742
          %v7744 = vpop.f32.mrf.mxu0
          %v7745 = vadd.f32 0.0, %v7744
          %7746 = vmatmul.bf16.gmra.mxu0 %v7689
          %v7747 = vpop.f32.mrf.mxu0
          %v7748 = vadd.f32 0.0, %v7747
          %v7749 = vpop.f32.mrf.mxu0
          %v7750 = vadd.f32 0.0, %v7749
          %7751 = vmatmul.bf16.gmra.mxu0 %v7692
          %v7752 = vpop.f32.mrf.mxu0
          %v7753 = vadd.f32 0.0, %v7752
          %v7754 = vpop.f32.mrf.mxu0
          %v7755 = vadd.f32 0.0, %v7754
          %7756 = vmatmul.bf16.gmra.mxu0 %v7695
          %v7757 = vpop.f32.mrf.mxu0
          %v7758 = vadd.f32 0.0, %v7757
          %v7759 = vpop.f32.mrf.mxu0
          %v7760 = vadd.f32 0.0, %v7759
          %7761 = vmatmul.bf16.gmra.mxu0 %v7698
          %v7762 = vpop.f32.mrf.mxu0
          %v7763 = vadd.f32 0.0, %v7762
          %v7764 = vpop.f32.mrf.mxu0
          %v7765 = vadd.f32 0.0, %v7764
          %7766 = vmatmul.bf16.gmra.mxu0 %v7701
          %v7767 = vpop.f32.mrf.mxu0
          %v7768 = vadd.f32 0.0, %v7767
          %v7769 = vpop.f32.mrf.mxu0
          %v7770 = vadd.f32 0.0, %v7769
          %7771 = vmatmul.bf16.gmra.mxu0 %v7704
          %v7772 = vpop.f32.mrf.mxu0
          %v7773 = vadd.f32 0.0, %v7772
          %v7774 = vpop.f32.mrf.mxu0
          %v7775 = vadd.f32 0.0, %v7774
          %7776 = vmatmul.bf16.gmra.mxu0 %v7707
          %v7777 = vpop.f32.mrf.mxu0
          %v7778 = vadd.f32 0.0, %v7777
          %v7779 = vpop.f32.mrf.mxu0
          %v7780 = vadd.f32 0.0, %v7779
          %7781 = vmatmul.bf16.gmra.mxu0 %v7710
          %v7782 = vpop.f32.mrf.mxu0
          %v7783 = vadd.f32 0.0, %v7782
          %v7784 = vpop.f32.mrf.mxu0
          %v7785 = vadd.f32 0.0, %v7784
          %7786 = vmatmul.bf16.gmra.mxu0 %v7713
          %v7787 = vpop.f32.mrf.mxu0
          %v7788 = vadd.f32 0.0, %v7787
          %v7789 = vpop.f32.mrf.mxu0
          %v7790 = vadd.f32 0.0, %v7789
          %7791 = vmatmul.bf16.gmra.mxu0 %v7716
          %v7792 = vpop.f32.mrf.mxu0
          %v7793 = vadd.f32 0.0, %v7792
          %v7794 = vpop.f32.mrf.mxu0
          %v7795 = vadd.f32 0.0, %v7794
          %7796 = vmatmul.bf16.gmra.mxu0 %v7719
          %v7797 = vpop.f32.mrf.mxu0
          %v7798 = vadd.f32 0.0, %v7797
          %v7799 = vpop.f32.mrf.mxu0
          %v7800 = vadd.f32 0.0, %v7799
          %7801 = vmatmul.bf16.gmra.mxu0 %v7722
          %v7802 = vpop.f32.mrf.mxu0
          %v7803 = vadd.f32 0.0, %v7802
          %v7804 = vpop.f32.mrf.mxu0
          %v7805 = vadd.f32 0.0, %v7804
          %7806 = vmatmul.bf16.gmra.mxu0 %v7725
          %v7807 = vpop.f32.mrf.mxu0
          %v7808 = vadd.f32 0.0, %v7807
          %v7809 = vpop.f32.mrf.mxu0
          %v7810 = vadd.f32 0.0, %v7809
          %7811 = vmatmul.bf16.gmra.mxu0 %v7728
          %v7812 = vpop.f32.mrf.mxu0
          %v7813 = vadd.f32 0.0, %v7812
          %v7814 = vpop.f32.mrf.mxu0
          %v7815 = vadd.f32 0.0, %v7814
          %7816 = vmatmul.bf16.gmra.mxu0 %v7731
          %v7817 = vpop.f32.mrf.mxu0
          %v7818 = vadd.f32 0.0, %v7817
          %v7819 = vpop.f32.mrf.mxu0
          %v7820 = vadd.f32 0.0, %v7819
          %7821 = vdwg.mxu0
          %v7822 = vadd.f32 %v7372, %v7743
          %v7823 = vadd.f32 %v7373, %v7745
          %v7824 = vadd.f32 %v7374, %v7748
          %v7825 = vadd.f32 %v7375, %v7750
          %v7826 = vadd.f32 %v7376, %v7753
          %v7827 = vadd.f32 %v7377, %v7755
          %v7828 = vadd.f32 %v7378, %v7758
          %v7829 = vadd.f32 %v7379, %v7760
          %v7830 = vadd.f32 %v7380, %v7763
          %v7831 = vadd.f32 %v7381, %v7765
          %v7832 = vadd.f32 %v7382, %v7768
          %v7833 = vadd.f32 %v7383, %v7770
          %v7834 = vadd.f32 %v7384, %v7773
          %v7835 = vadd.f32 %v7385, %v7775
          %v7836 = vadd.f32 %v7386, %v7778
          %v7837 = vadd.f32 %v7387, %v7780
          %v7838 = vadd.f32 %v7388, %v7783
          %v7839 = vadd.f32 %v7389, %v7785
          %v7840 = vadd.f32 %v7390, %v7788
          %v7841 = vadd.f32 %v7391, %v7790
          %v7842 = vadd.f32 %v7392, %v7793
          %v7843 = vadd.f32 %v7393, %v7795
          %v7844 = vadd.f32 %v7394, %v7798
          %v7845 = vadd.f32 %v7395, %v7800
          %v7846 = vadd.f32 %v7396, %v7803
          %v7847 = vadd.f32 %v7397, %v7805
          %v7848 = vadd.f32 %v7398, %v7808
          %v7849 = vadd.f32 %v7399, %v7810
          %v7850 = vadd.f32 %v7400, %v7813
          %v7851 = vadd.f32 %v7401, %v7815
          %v7852 = vadd.f32 %v7402, %v7818
          %v7853 = vadd.f32 %v7403, %v7820
          %v7854 = vld [vmem:[%s217] sm:$0x1]
          %v7856 = vperm.slane %v7854, 0
          %v7858 = vadd.f32 %v7822, %v7856
          %v7859 = vadd.f32 %v7823, %v7856
          %v7860 = vadd.f32 %v7824, %v7856
          %v7861 = vadd.f32 %v7825, %v7856
          %v7862 = vadd.f32 %v7826, %v7856
          %v7863 = vadd.f32 %v7827, %v7856
          %v7864 = vadd.f32 %v7828, %v7856
          %v7865 = vadd.f32 %v7829, %v7856
          %v7866 = vadd.f32 %v7830, %v7856
          %v7867 = vadd.f32 %v7831, %v7856
          %v7868 = vadd.f32 %v7832, %v7856
          %v7869 = vadd.f32 %v7833, %v7856
          %v7870 = vadd.f32 %v7834, %v7856
          %v7871 = vadd.f32 %v7835, %v7856
          %v7872 = vadd.f32 %v7836, %v7856
          %v7873 = vadd.f32 %v7837, %v7856
          %v7874 = vadd.f32 %v7838, %v7856
          %v7875 = vadd.f32 %v7839, %v7856
          %v7876 = vadd.f32 %v7840, %v7856
          %v7877 = vadd.f32 %v7841, %v7856
          %v7878 = vadd.f32 %v7842, %v7856
          %v7879 = vadd.f32 %v7843, %v7856
          %v7880 = vadd.f32 %v7844, %v7856
          %v7881 = vadd.f32 %v7845, %v7856
          %v7882 = vadd.f32 %v7846, %v7856
          %v7883 = vadd.f32 %v7847, %v7856
          %v7884 = vadd.f32 %v7848, %v7856
          %v7885 = vadd.f32 %v7849, %v7856
          %v7886 = vadd.f32 %v7850, %v7856
          %v7887 = vadd.f32 %v7851, %v7856
          %v7888 = vadd.f32 %v7852, %v7856
          %v7889 = vadd.f32 %v7853, %v7856
          %p7890 = scmp.lt.s32.totalorder %s25, 14
          // Predicated region
          $region61: #{ffdnet_forward.1} parent=59 // pred_check
            %p7891 = pneg %p7890
          $region62: #{ffdnet_forward.1} parent=59 // pred_check_branch
            %7893 = sbr.rel (%p7891) target = $region64
          $region63: #{ffdnet_forward.1} parent=59 // pred_region
            %v7894 = vlaneseq
            %v7895 = vshrl.u32 %v7894, 7
            %v7896 = vadd.s32 %v7895, 8
            %v7897 = vadd.s32 %v7895, 16
            %v7898 = vadd.s32 %v7895, 24
            %v7899 = vadd.s32 %v7895, 32
            %v7900 = vadd.s32 %v7895, 40
            %v7901 = vadd.s32 %v7895, 48
            %v7902 = vadd.s32 %v7895, 56
            %v7903 = vadd.s32 %v7895, 64
            %v7904 = vadd.s32 %v7895, 72
            %v7905 = vadd.s32 %v7895, 80
            %v7906 = vadd.s32 %v7895, 88
            %v7907 = vadd.s32 %v7895, 96
            %v7908 = vadd.s32 %v7895, 104
            %v7909 = vadd.s32 %v7895, 112
            %v7910 = vadd.s32 %v7895, 120
            %v7911 = vadd.s32 %v7895, 128
            %v7912 = vadd.s32 %v7895, 136
            %v7913 = vadd.s32 %v7895, 144
            %v7914 = vadd.s32 %v7895, 152
            %v7915 = vadd.s32 %v7895, 160
            %v7916 = vadd.s32 %v7895, 168
            %v7917 = vadd.s32 %v7895, 176
            %v7918 = vadd.s32 %v7895, 184
            %v7919 = vadd.s32 %v7895, 192
            %v7920 = vadd.s32 %v7895, 200
            %v7921 = vadd.s32 %v7895, 208
            %v7922 = vadd.s32 %v7895, 216
            %v7923 = vadd.s32 %v7895, 224
            %v7924 = vadd.s32 %v7895, 232
            %v7925 = vadd.s32 %v7895, 240
            %v7926 = vadd.s32 %v7895, 248
            %vm7927 = vcmp.lt.s32.totalorder %v7895, 0
            %v7928 = vsub.s32 0, %v7895
            %v7929 = vsel %vm7927, %v7928, %v7895
            %v7930 = vshrl.u32 %v7929, 5
            %v7931 = vand.u32 %v7929, 31
            %v7932 = vsub.s32 0, %v7931
            %v7933 = vsel %vm7927, %v7932, %v7931
            %vm7934 = vcmp.lt.s32.totalorder %v7896, 0
            %v7935 = vsub.s32 0, %v7896
            %v7936 = vsel %vm7934, %v7935, %v7896
            %v7937 = vshrl.u32 %v7936, 5
            %v7938 = vand.u32 %v7936, 31
            %v7939 = vsub.s32 0, %v7938
            %v7940 = vsel %vm7934, %v7939, %v7938
            %vm7941 = vcmp.lt.s32.totalorder %v7897, 0
            %v7942 = vsub.s32 0, %v7897
            %v7943 = vsel %vm7941, %v7942, %v7897
            %v7944 = vshrl.u32 %v7943, 5
            %v7945 = vand.u32 %v7943, 31
            %v7946 = vsub.s32 0, %v7945
            %v7947 = vsel %vm7941, %v7946, %v7945
            %vm7948 = vcmp.lt.s32.totalorder %v7898, 0
            %v7949 = vsub.s32 0, %v7898
            %v7950 = vsel %vm7948, %v7949, %v7898
            %v7951 = vshrl.u32 %v7950, 5
            %v7952 = vand.u32 %v7950, 31
            %v7953 = vsub.s32 0, %v7952
            %v7954 = vsel %vm7948, %v7953, %v7952
            %vm7955 = vcmp.lt.s32.totalorder %v7899, 0
            %v7956 = vsub.s32 0, %v7899
            %v7957 = vsel %vm7955, %v7956, %v7899
            %v7958 = vshrl.u32 %v7957, 5
            %v7959 = vand.u32 %v7957, 31
            %v7960 = vsub.s32 0, %v7959
            %v7961 = vsel %vm7955, %v7960, %v7959
            %vm7962 = vcmp.lt.s32.totalorder %v7900, 0
            %v7963 = vsub.s32 0, %v7900
            %v7964 = vsel %vm7962, %v7963, %v7900
            %v7965 = vshrl.u32 %v7964, 5
            %v7966 = vand.u32 %v7964, 31
            %v7967 = vsub.s32 0, %v7966
            %v7968 = vsel %vm7962, %v7967, %v7966
            %vm7969 = vcmp.lt.s32.totalorder %v7901, 0
            %v7970 = vsub.s32 0, %v7901
            %v7971 = vsel %vm7969, %v7970, %v7901
            %v7972 = vshrl.u32 %v7971, 5
            %v7973 = vand.u32 %v7971, 31
            %v7974 = vsub.s32 0, %v7973
            %v7975 = vsel %vm7969, %v7974, %v7973
            %vm7976 = vcmp.lt.s32.totalorder %v7902, 0
            %v7977 = vsub.s32 0, %v7902
            %v7978 = vsel %vm7976, %v7977, %v7902
            %v7979 = vshrl.u32 %v7978, 5
            %v7980 = vand.u32 %v7978, 31
            %v7981 = vsub.s32 0, %v7980
            %v7982 = vsel %vm7976, %v7981, %v7980
            %vm7983 = vcmp.lt.s32.totalorder %v7903, 0
            %v7984 = vsub.s32 0, %v7903
            %v7985 = vsel %vm7983, %v7984, %v7903
            %v7986 = vshrl.u32 %v7985, 5
            %v7987 = vand.u32 %v7985, 31
            %v7988 = vsub.s32 0, %v7987
            %v7989 = vsel %vm7983, %v7988, %v7987
            %vm7990 = vcmp.lt.s32.totalorder %v7904, 0
            %v7991 = vsub.s32 0, %v7904
            %v7992 = vsel %vm7990, %v7991, %v7904
            %v7993 = vshrl.u32 %v7992, 5
            %v7994 = vand.u32 %v7992, 31
            %v7995 = vsub.s32 0, %v7994
            %v7996 = vsel %vm7990, %v7995, %v7994
            %vm7997 = vcmp.lt.s32.totalorder %v7905, 0
            %v7998 = vsub.s32 0, %v7905
            %v7999 = vsel %vm7997, %v7998, %v7905
            %v8000 = vshrl.u32 %v7999, 5
            %v8001 = vand.u32 %v7999, 31
            %v8002 = vsub.s32 0, %v8001
            %v8003 = vsel %vm7997, %v8002, %v8001
            %vm8004 = vcmp.lt.s32.totalorder %v7906, 0
            %v8005 = vsub.s32 0, %v7906
            %v8006 = vsel %vm8004, %v8005, %v7906
            %v8007 = vshrl.u32 %v8006, 5
            %v8008 = vand.u32 %v8006, 31
            %v8009 = vsub.s32 0, %v8008
            %v8010 = vsel %vm8004, %v8009, %v8008
            %vm8011 = vcmp.lt.s32.totalorder %v7907, 0
            %v8012 = vsub.s32 0, %v7907
            %v8013 = vsel %vm8011, %v8012, %v7907
            %v8014 = vshrl.u32 %v8013, 5
            %v8015 = vand.u32 %v8013, 31
            %v8016 = vsub.s32 0, %v8015
            %v8017 = vsel %vm8011, %v8016, %v8015
            %vm8018 = vcmp.lt.s32.totalorder %v7908, 0
            %v8019 = vsub.s32 0, %v7908
            %v8020 = vsel %vm8018, %v8019, %v7908
            %v8021 = vshrl.u32 %v8020, 5
            %v8022 = vand.u32 %v8020, 31
            %v8023 = vsub.s32 0, %v8022
            %v8024 = vsel %vm8018, %v8023, %v8022
            %vm8025 = vcmp.lt.s32.totalorder %v7909, 0
            %v8026 = vsub.s32 0, %v7909
            %v8027 = vsel %vm8025, %v8026, %v7909
            %v8028 = vshrl.u32 %v8027, 5
            %v8029 = vand.u32 %v8027, 31
            %v8030 = vsub.s32 0, %v8029
            %v8031 = vsel %vm8025, %v8030, %v8029
            %vm8032 = vcmp.lt.s32.totalorder %v7910, 0
            %v8033 = vsub.s32 0, %v7910
            %v8034 = vsel %vm8032, %v8033, %v7910
            %v8035 = vshrl.u32 %v8034, 5
            %v8036 = vand.u32 %v8034, 31
            %v8037 = vsub.s32 0, %v8036
            %v8038 = vsel %vm8032, %v8037, %v8036
            %vm8039 = vcmp.lt.s32.totalorder %v7911, 0
            %v8040 = vsub.s32 0, %v7911
            %v8041 = vsel %vm8039, %v8040, %v7911
            %v8042 = vshrl.u32 %v8041, 5
            %v8043 = vand.u32 %v8041, 31
            %v8044 = vsub.s32 0, %v8043
            %v8045 = vsel %vm8039, %v8044, %v8043
            %vm8046 = vcmp.lt.s32.totalorder %v7912, 0
            %v8047 = vsub.s32 0, %v7912
            %v8048 = vsel %vm8046, %v8047, %v7912
            %v8049 = vshrl.u32 %v8048, 5
            %v8050 = vand.u32 %v8048, 31
            %v8051 = vsub.s32 0, %v8050
            %v8052 = vsel %vm8046, %v8051, %v8050
            %vm8053 = vcmp.lt.s32.totalorder %v7913, 0
            %v8054 = vsub.s32 0, %v7913
            %v8055 = vsel %vm8053, %v8054, %v7913
            %v8056 = vshrl.u32 %v8055, 5
            %v8057 = vand.u32 %v8055, 31
            %v8058 = vsub.s32 0, %v8057
            %v8059 = vsel %vm8053, %v8058, %v8057
            %vm8060 = vcmp.lt.s32.totalorder %v7914, 0
            %v8061 = vsub.s32 0, %v7914
            %v8062 = vsel %vm8060, %v8061, %v7914
            %v8063 = vshrl.u32 %v8062, 5
            %v8064 = vand.u32 %v8062, 31
            %v8065 = vsub.s32 0, %v8064
            %v8066 = vsel %vm8060, %v8065, %v8064
            %vm8067 = vcmp.lt.s32.totalorder %v7915, 0
            %v8068 = vsub.s32 0, %v7915
            %v8069 = vsel %vm8067, %v8068, %v7915
            %v8070 = vshrl.u32 %v8069, 5
            %v8071 = vand.u32 %v8069, 31
            %v8072 = vsub.s32 0, %v8071
            %v8073 = vsel %vm8067, %v8072, %v8071
            %vm8074 = vcmp.lt.s32.totalorder %v7916, 0
            %v8075 = vsub.s32 0, %v7916
            %v8076 = vsel %vm8074, %v8075, %v7916
            %v8077 = vshrl.u32 %v8076, 5
            %v8078 = vand.u32 %v8076, 31
            %v8079 = vsub.s32 0, %v8078
            %v8080 = vsel %vm8074, %v8079, %v8078
            %vm8081 = vcmp.lt.s32.totalorder %v7917, 0
            %v8082 = vsub.s32 0, %v7917
            %v8083 = vsel %vm8081, %v8082, %v7917
            %v8084 = vshrl.u32 %v8083, 5
            %v8085 = vand.u32 %v8083, 31
            %v8086 = vsub.s32 0, %v8085
            %v8087 = vsel %vm8081, %v8086, %v8085
            %vm8088 = vcmp.lt.s32.totalorder %v7918, 0
            %v8089 = vsub.s32 0, %v7918
            %v8090 = vsel %vm8088, %v8089, %v7918
            %v8091 = vshrl.u32 %v8090, 5
            %v8092 = vand.u32 %v8090, 31
            %v8093 = vsub.s32 0, %v8092
            %v8094 = vsel %vm8088, %v8093, %v8092
            %vm8095 = vcmp.lt.s32.totalorder %v7919, 0
            %v8096 = vsub.s32 0, %v7919
            %v8097 = vsel %vm8095, %v8096, %v7919
            %v8098 = vshrl.u32 %v8097, 5
            %v8099 = vand.u32 %v8097, 31
            %v8100 = vsub.s32 0, %v8099
            %v8101 = vsel %vm8095, %v8100, %v8099
            %vm8102 = vcmp.lt.s32.totalorder %v7920, 0
            %v8103 = vsub.s32 0, %v7920
            %v8104 = vsel %vm8102, %v8103, %v7920
            %v8105 = vshrl.u32 %v8104, 5
            %v8106 = vand.u32 %v8104, 31
            %v8107 = vsub.s32 0, %v8106
            %v8108 = vsel %vm8102, %v8107, %v8106
            %vm8109 = vcmp.lt.s32.totalorder %v7921, 0
            %v8110 = vsub.s32 0, %v7921
            %v8111 = vsel %vm8109, %v8110, %v7921
            %v8112 = vshrl.u32 %v8111, 5
            %v8113 = vand.u32 %v8111, 31
            %v8114 = vsub.s32 0, %v8113
            %v8115 = vsel %vm8109, %v8114, %v8113
            %vm8116 = vcmp.lt.s32.totalorder %v7922, 0
            %v8117 = vsub.s32 0, %v7922
            %v8118 = vsel %vm8116, %v8117, %v7922
            %v8119 = vshrl.u32 %v8118, 5
            %v8120 = vand.u32 %v8118, 31
            %v8121 = vsub.s32 0, %v8120
            %v8122 = vsel %vm8116, %v8121, %v8120
            %vm8123 = vcmp.lt.s32.totalorder %v7923, 0
            %v8124 = vsub.s32 0, %v7923
            %v8125 = vsel %vm8123, %v8124, %v7923
            %v8126 = vshrl.u32 %v8125, 5
            %v8127 = vand.u32 %v8125, 31
            %v8128 = vsub.s32 0, %v8127
            %v8129 = vsel %vm8123, %v8128, %v8127
            %vm8130 = vcmp.lt.s32.totalorder %v7924, 0
            %v8131 = vsub.s32 0, %v7924
            %v8132 = vsel %vm8130, %v8131, %v7924
            %v8133 = vshrl.u32 %v8132, 5
            %v8134 = vand.u32 %v8132, 31
            %v8135 = vsub.s32 0, %v8134
            %v8136 = vsel %vm8130, %v8135, %v8134
            %vm8137 = vcmp.lt.s32.totalorder %v7925, 0
            %v8138 = vsub.s32 0, %v7925
            %v8139 = vsel %vm8137, %v8138, %v7925
            %v8140 = vshrl.u32 %v8139, 5
            %v8141 = vand.u32 %v8139, 31
            %v8142 = vsub.s32 0, %v8141
            %v8143 = vsel %vm8137, %v8142, %v8141
            %vm8144 = vcmp.lt.s32.totalorder %v7926, 0
            %v8145 = vsub.s32 0, %v7926
            %v8146 = vsel %vm8144, %v8145, %v7926
            %v8147 = vshrl.u32 %v8146, 5
            %v8148 = vand.u32 %v8146, 31
            %v8149 = vsub.s32 0, %v8148
            %v8150 = vsel %vm8144, %v8149, %v8148
            %vm8151 = vcmp.ne.s32.totalorder %v7933, 0
            %vm8152 = vcmp.ne.s32.totalorder %v7940, 0
            %vm8153 = vcmp.ne.s32.totalorder %v7947, 0
            %vm8154 = vcmp.ne.s32.totalorder %v7954, 0
            %vm8155 = vcmp.ne.s32.totalorder %v7961, 0
            %vm8156 = vcmp.ne.s32.totalorder %v7968, 0
            %vm8157 = vcmp.ne.s32.totalorder %v7975, 0
            %vm8158 = vcmp.ne.s32.totalorder %v7982, 0
            %vm8159 = vcmp.ne.s32.totalorder %v7989, 0
            %vm8160 = vcmp.ne.s32.totalorder %v7996, 0
            %vm8161 = vcmp.ne.s32.totalorder %v8003, 0
            %vm8162 = vcmp.ne.s32.totalorder %v8010, 0
            %vm8163 = vcmp.ne.s32.totalorder %v8017, 0
            %vm8164 = vcmp.ne.s32.totalorder %v8024, 0
            %vm8165 = vcmp.ne.s32.totalorder %v8031, 0
            %vm8166 = vcmp.ne.s32.totalorder %v8038, 0
            %vm8167 = vcmp.ne.s32.totalorder %v8045, 0
            %vm8168 = vcmp.ne.s32.totalorder %v8052, 0
            %vm8169 = vcmp.ne.s32.totalorder %v8059, 0
            %vm8170 = vcmp.ne.s32.totalorder %v8066, 0
            %vm8171 = vcmp.ne.s32.totalorder %v8073, 0
            %vm8172 = vcmp.ne.s32.totalorder %v8080, 0
            %vm8173 = vcmp.ne.s32.totalorder %v8087, 0
            %vm8174 = vcmp.ne.s32.totalorder %v8094, 0
            %vm8175 = vcmp.ne.s32.totalorder %v8101, 0
            %vm8176 = vcmp.ne.s32.totalorder %v8108, 0
            %vm8177 = vcmp.ne.s32.totalorder %v8115, 0
            %vm8178 = vcmp.ne.s32.totalorder %v8122, 0
            %vm8179 = vcmp.ne.s32.totalorder %v8129, 0
            %vm8180 = vcmp.ne.s32.totalorder %v8136, 0
            %vm8181 = vcmp.ne.s32.totalorder %v8143, 0
            %vm8182 = vcmp.ne.s32.totalorder %v8150, 0
            %vm8183 = vcmp.lt.s32.totalorder %v7933, 0
            %vm8184 = vcmp.lt.s32.totalorder %v7940, 0
            %vm8185 = vcmp.lt.s32.totalorder %v7947, 0
            %vm8186 = vcmp.lt.s32.totalorder %v7954, 0
            %vm8187 = vcmp.lt.s32.totalorder %v7961, 0
            %vm8188 = vcmp.lt.s32.totalorder %v7968, 0
            %vm8189 = vcmp.lt.s32.totalorder %v7975, 0
            %vm8190 = vcmp.lt.s32.totalorder %v7982, 0
            %vm8191 = vcmp.lt.s32.totalorder %v7989, 0
            %vm8192 = vcmp.lt.s32.totalorder %v7996, 0
            %vm8193 = vcmp.lt.s32.totalorder %v8003, 0
            %vm8194 = vcmp.lt.s32.totalorder %v8010, 0
            %vm8195 = vcmp.lt.s32.totalorder %v8017, 0
            %vm8196 = vcmp.lt.s32.totalorder %v8024, 0
            %vm8197 = vcmp.lt.s32.totalorder %v8031, 0
            %vm8198 = vcmp.lt.s32.totalorder %v8038, 0
            %vm8199 = vcmp.lt.s32.totalorder %v8045, 0
            %vm8200 = vcmp.lt.s32.totalorder %v8052, 0
            %vm8201 = vcmp.lt.s32.totalorder %v8059, 0
            %vm8202 = vcmp.lt.s32.totalorder %v8066, 0
            %vm8203 = vcmp.lt.s32.totalorder %v8073, 0
            %vm8204 = vcmp.lt.s32.totalorder %v8080, 0
            %vm8205 = vcmp.lt.s32.totalorder %v8087, 0
            %vm8206 = vcmp.lt.s32.totalorder %v8094, 0
            %vm8207 = vcmp.lt.s32.totalorder %v8101, 0
            %vm8208 = vcmp.lt.s32.totalorder %v8108, 0
            %vm8209 = vcmp.lt.s32.totalorder %v8115, 0
            %vm8210 = vcmp.lt.s32.totalorder %v8122, 0
            %vm8211 = vcmp.lt.s32.totalorder %v8129, 0
            %vm8212 = vcmp.lt.s32.totalorder %v8136, 0
            %vm8213 = vcmp.lt.s32.totalorder %v8143, 0
            %vm8214 = vcmp.lt.s32.totalorder %v8150, 0
            %vm8215 = vmand %vm8183, %vm8151
            %vm8216 = vmand %vm8184, %vm8152
            %vm8217 = vmand %vm8185, %vm8153
            %vm8218 = vmand %vm8186, %vm8154
            %vm8219 = vmand %vm8187, %vm8155
            %vm8220 = vmand %vm8188, %vm8156
            %vm8221 = vmand %vm8189, %vm8157
            %vm8222 = vmand %vm8190, %vm8158
            %vm8223 = vmand %vm8191, %vm8159
            %vm8224 = vmand %vm8192, %vm8160
            %vm8225 = vmand %vm8193, %vm8161
            %vm8226 = vmand %vm8194, %vm8162
            %vm8227 = vmand %vm8195, %vm8163
            %vm8228 = vmand %vm8196, %vm8164
            %vm8229 = vmand %vm8197, %vm8165
            %vm8230 = vmand %vm8198, %vm8166
            %vm8231 = vmand %vm8199, %vm8167
            %vm8232 = vmand %vm8200, %vm8168
            %vm8233 = vmand %vm8201, %vm8169
            %vm8234 = vmand %vm8202, %vm8170
            %vm8235 = vmand %vm8203, %vm8171
            %vm8236 = vmand %vm8204, %vm8172
            %vm8237 = vmand %vm8205, %vm8173
            %vm8238 = vmand %vm8206, %vm8174
            %vm8239 = vmand %vm8207, %vm8175
            %vm8240 = vmand %vm8208, %vm8176
            %vm8241 = vmand %vm8209, %vm8177
            %vm8242 = vmand %vm8210, %vm8178
            %vm8243 = vmand %vm8211, %vm8179
            %vm8244 = vmand %vm8212, %vm8180
            %vm8245 = vmand %vm8213, %vm8181
            %vm8246 = vmand %vm8214, %vm8182
            %v8247 = vadd.s32 %v7933, 32
            %v8248 = vadd.s32 %v7940, 32
            %v8249 = vadd.s32 %v7947, 32
            %v8250 = vadd.s32 %v7954, 32
            %v8251 = vadd.s32 %v7961, 32
            %v8252 = vadd.s32 %v7968, 32
            %v8253 = vadd.s32 %v7975, 32
            %v8254 = vadd.s32 %v7982, 32
            %v8255 = vadd.s32 %v7989, 32
            %v8256 = vadd.s32 %v7996, 32
            %v8257 = vadd.s32 %v8003, 32
            %v8258 = vadd.s32 %v8010, 32
            %v8259 = vadd.s32 %v8017, 32
            %v8260 = vadd.s32 %v8024, 32
            %v8261 = vadd.s32 %v8031, 32
            %v8262 = vadd.s32 %v8038, 32
            %v8263 = vadd.s32 %v8045, 32
            %v8264 = vadd.s32 %v8052, 32
            %v8265 = vadd.s32 %v8059, 32
            %v8266 = vadd.s32 %v8066, 32
            %v8267 = vadd.s32 %v8073, 32
            %v8268 = vadd.s32 %v8080, 32
            %v8269 = vadd.s32 %v8087, 32
            %v8270 = vadd.s32 %v8094, 32
            %v8271 = vadd.s32 %v8101, 32
            %v8272 = vadd.s32 %v8108, 32
            %v8273 = vadd.s32 %v8115, 32
            %v8274 = vadd.s32 %v8122, 32
            %v8275 = vadd.s32 %v8129, 32
            %v8276 = vadd.s32 %v8136, 32
            %v8277 = vadd.s32 %v8143, 32
            %v8278 = vadd.s32 %v8150, 32
            %v8279 = vsel %vm8215, %v8247, %v7933
            %v8280 = vsel %vm8216, %v8248, %v7940
            %v8281 = vsel %vm8217, %v8249, %v7947
            %v8282 = vsel %vm8218, %v8250, %v7954
            %v8283 = vsel %vm8219, %v8251, %v7961
            %v8284 = vsel %vm8220, %v8252, %v7968
            %v8285 = vsel %vm8221, %v8253, %v7975
            %v8286 = vsel %vm8222, %v8254, %v7982
            %v8287 = vsel %vm8223, %v8255, %v7989
            %v8288 = vsel %vm8224, %v8256, %v7996
            %v8289 = vsel %vm8225, %v8257, %v8003
            %v8290 = vsel %vm8226, %v8258, %v8010
            %v8291 = vsel %vm8227, %v8259, %v8017
            %v8292 = vsel %vm8228, %v8260, %v8024
            %v8293 = vsel %vm8229, %v8261, %v8031
            %v8294 = vsel %vm8230, %v8262, %v8038
            %v8295 = vsel %vm8231, %v8263, %v8045
            %v8296 = vsel %vm8232, %v8264, %v8052
            %v8297 = vsel %vm8233, %v8265, %v8059
            %v8298 = vsel %vm8234, %v8266, %v8066
            %v8299 = vsel %vm8235, %v8267, %v8073
            %v8300 = vsel %vm8236, %v8268, %v8080
            %v8301 = vsel %vm8237, %v8269, %v8087
            %v8302 = vsel %vm8238, %v8270, %v8094
            %v8303 = vsel %vm8239, %v8271, %v8101
            %v8304 = vsel %vm8240, %v8272, %v8108
            %v8305 = vsel %vm8241, %v8273, %v8115
            %v8306 = vsel %vm8242, %v8274, %v8122
            %v8307 = vsel %vm8243, %v8275, %v8129
            %v8308 = vsel %vm8244, %v8276, %v8136
            %v8309 = vsel %vm8245, %v8277, %v8143
            %v8310 = vsel %vm8246, %v8278, %v8150
            %vm8311 = vcmp.lt.s32.totalorder %v8279, 8
            %vm8312 = vcmp.lt.s32.totalorder %v8280, 8
            %vm8313 = vcmp.lt.s32.totalorder %v8281, 8
            %vm8314 = vcmp.lt.s32.totalorder %v8282, 8
            %vm8315 = vcmp.lt.s32.totalorder %v8283, 8
            %vm8316 = vcmp.lt.s32.totalorder %v8284, 8
            %vm8317 = vcmp.lt.s32.totalorder %v8285, 8
            %vm8318 = vcmp.lt.s32.totalorder %v8286, 8
            %vm8319 = vcmp.lt.s32.totalorder %v8287, 8
            %vm8320 = vcmp.lt.s32.totalorder %v8288, 8
            %vm8321 = vcmp.lt.s32.totalorder %v8289, 8
            %vm8322 = vcmp.lt.s32.totalorder %v8290, 8
            %vm8323 = vcmp.lt.s32.totalorder %v8291, 8
            %vm8324 = vcmp.lt.s32.totalorder %v8292, 8
            %vm8325 = vcmp.lt.s32.totalorder %v8293, 8
            %vm8326 = vcmp.lt.s32.totalorder %v8294, 8
            %vm8327 = vcmp.lt.s32.totalorder %v8295, 8
            %vm8328 = vcmp.lt.s32.totalorder %v8296, 8
            %vm8329 = vcmp.lt.s32.totalorder %v8297, 8
            %vm8330 = vcmp.lt.s32.totalorder %v8298, 8
            %vm8331 = vcmp.lt.s32.totalorder %v8299, 8
            %vm8332 = vcmp.lt.s32.totalorder %v8300, 8
            %vm8333 = vcmp.lt.s32.totalorder %v8301, 8
            %vm8334 = vcmp.lt.s32.totalorder %v8302, 8
            %vm8335 = vcmp.lt.s32.totalorder %v8303, 8
            %vm8336 = vcmp.lt.s32.totalorder %v8304, 8
            %vm8337 = vcmp.lt.s32.totalorder %v8305, 8
            %vm8338 = vcmp.lt.s32.totalorder %v8306, 8
            %vm8339 = vcmp.lt.s32.totalorder %v8307, 8
            %vm8340 = vcmp.lt.s32.totalorder %v8308, 8
            %vm8341 = vcmp.lt.s32.totalorder %v8309, 8
            %vm8342 = vcmp.lt.s32.totalorder %v8310, 8
            %v8343 = vmax.f32 %v7858, 0.0
            %v8344 = vmax.f32 %v7859, 0.0
            %v8345 = vmax.f32 %v7860, 0.0
            %v8346 = vmax.f32 %v7861, 0.0
            %v8347 = vmax.f32 %v7862, 0.0
            %v8348 = vmax.f32 %v7863, 0.0
            %v8349 = vmax.f32 %v7864, 0.0
            %v8350 = vmax.f32 %v7865, 0.0
            %v8351 = vmax.f32 %v7866, 0.0
            %v8352 = vmax.f32 %v7867, 0.0
            %v8353 = vmax.f32 %v7868, 0.0
            %v8354 = vmax.f32 %v7869, 0.0
            %v8355 = vmax.f32 %v7870, 0.0
            %v8356 = vmax.f32 %v7871, 0.0
            %v8357 = vmax.f32 %v7872, 0.0
            %v8358 = vmax.f32 %v7873, 0.0
            %v8359 = vmax.f32 %v7874, 0.0
            %v8360 = vmax.f32 %v7875, 0.0
            %v8361 = vmax.f32 %v7876, 0.0
            %v8362 = vmax.f32 %v7877, 0.0
            %v8363 = vmax.f32 %v7878, 0.0
            %v8364 = vmax.f32 %v7879, 0.0
            %v8365 = vmax.f32 %v7880, 0.0
            %v8366 = vmax.f32 %v7881, 0.0
            %v8367 = vmax.f32 %v7882, 0.0
            %v8368 = vmax.f32 %v7883, 0.0
            %v8369 = vmax.f32 %v7884, 0.0
            %v8370 = vmax.f32 %v7885, 0.0
            %v8371 = vmax.f32 %v7886, 0.0
            %v8372 = vmax.f32 %v7887, 0.0
            %v8373 = vmax.f32 %v7888, 0.0
            %v8374 = vmax.f32 %v7889, 0.0
            %v8375 = vsel %vm8311, 1, 0
            %v8376 = vsel %vm8312, 1, 0
            %v8377 = vsel %vm8313, 1, 0
            %v8378 = vsel %vm8314, 1, 0
            %v8379 = vsel %vm8315, 1, 0
            %v8380 = vsel %vm8316, 1, 0
            %v8381 = vsel %vm8317, 1, 0
            %v8382 = vsel %vm8318, 1, 0
            %v8383 = vsel %vm8319, 1, 0
            %v8384 = vsel %vm8320, 1, 0
            %v8385 = vsel %vm8321, 1, 0
            %v8386 = vsel %vm8322, 1, 0
            %v8387 = vsel %vm8323, 1, 0
            %v8388 = vsel %vm8324, 1, 0
            %v8389 = vsel %vm8325, 1, 0
            %v8390 = vsel %vm8326, 1, 0
            %v8391 = vsel %vm8327, 1, 0
            %v8392 = vsel %vm8328, 1, 0
            %v8393 = vsel %vm8329, 1, 0
            %v8394 = vsel %vm8330, 1, 0
            %v8395 = vsel %vm8331, 1, 0
            %v8396 = vsel %vm8332, 1, 0
            %v8397 = vsel %vm8333, 1, 0
            %v8398 = vsel %vm8334, 1, 0
            %v8399 = vsel %vm8335, 1, 0
            %v8400 = vsel %vm8336, 1, 0
            %v8401 = vsel %vm8337, 1, 0
            %v8402 = vsel %vm8338, 1, 0
            %v8403 = vsel %vm8339, 1, 0
            %v8404 = vsel %vm8340, 1, 0
            %v8405 = vsel %vm8341, 1, 0
            %v8406 = vsel %vm8342, 1, 0
            %vm8407 = vcmp.eq.s32.totalorder %v8375, 1
            %vm8408 = vcmp.eq.s32.totalorder %v8376, 1
            %vm8409 = vcmp.eq.s32.totalorder %v8377, 1
            %vm8410 = vcmp.eq.s32.totalorder %v8378, 1
            %vm8411 = vcmp.eq.s32.totalorder %v8379, 1
            %vm8412 = vcmp.eq.s32.totalorder %v8380, 1
            %vm8413 = vcmp.eq.s32.totalorder %v8381, 1
            %vm8414 = vcmp.eq.s32.totalorder %v8382, 1
            %vm8415 = vcmp.eq.s32.totalorder %v8383, 1
            %vm8416 = vcmp.eq.s32.totalorder %v8384, 1
            %vm8417 = vcmp.eq.s32.totalorder %v8385, 1
            %vm8418 = vcmp.eq.s32.totalorder %v8386, 1
            %vm8419 = vcmp.eq.s32.totalorder %v8387, 1
            %vm8420 = vcmp.eq.s32.totalorder %v8388, 1
            %vm8421 = vcmp.eq.s32.totalorder %v8389, 1
            %vm8422 = vcmp.eq.s32.totalorder %v8390, 1
            %vm8423 = vcmp.eq.s32.totalorder %v8391, 1
            %vm8424 = vcmp.eq.s32.totalorder %v8392, 1
            %vm8425 = vcmp.eq.s32.totalorder %v8393, 1
            %vm8426 = vcmp.eq.s32.totalorder %v8394, 1
            %vm8427 = vcmp.eq.s32.totalorder %v8395, 1
            %vm8428 = vcmp.eq.s32.totalorder %v8396, 1
            %vm8429 = vcmp.eq.s32.totalorder %v8397, 1
            %vm8430 = vcmp.eq.s32.totalorder %v8398, 1
            %vm8431 = vcmp.eq.s32.totalorder %v8399, 1
            %vm8432 = vcmp.eq.s32.totalorder %v8400, 1
            %vm8433 = vcmp.eq.s32.totalorder %v8401, 1
            %vm8434 = vcmp.eq.s32.totalorder %v8402, 1
            %vm8435 = vcmp.eq.s32.totalorder %v8403, 1
            %vm8436 = vcmp.eq.s32.totalorder %v8404, 1
            %vm8437 = vcmp.eq.s32.totalorder %v8405, 1
            %vm8438 = vcmp.eq.s32.totalorder %v8406, 1
            %v8439 = vsel %vm8407, %v8343, 0.0
            %v8440 = vsel %vm8408, %v8344, 0.0
            %v8441 = vsel %vm8409, %v8345, 0.0
            %v8442 = vsel %vm8410, %v8346, 0.0
            %v8443 = vsel %vm8411, %v8347, 0.0
            %v8444 = vsel %vm8412, %v8348, 0.0
            %v8445 = vsel %vm8413, %v8349, 0.0
            %v8446 = vsel %vm8414, %v8350, 0.0
            %v8447 = vsel %vm8415, %v8351, 0.0
            %v8448 = vsel %vm8416, %v8352, 0.0
            %v8449 = vsel %vm8417, %v8353, 0.0
            %v8450 = vsel %vm8418, %v8354, 0.0
            %v8451 = vsel %vm8419, %v8355, 0.0
            %v8452 = vsel %vm8420, %v8356, 0.0
            %v8453 = vsel %vm8421, %v8357, 0.0
            %v8454 = vsel %vm8422, %v8358, 0.0
            %v8455 = vsel %vm8423, %v8359, 0.0
            %v8456 = vsel %vm8424, %v8360, 0.0
            %v8457 = vsel %vm8425, %v8361, 0.0
            %v8458 = vsel %vm8426, %v8362, 0.0
            %v8459 = vsel %vm8427, %v8363, 0.0
            %v8460 = vsel %vm8428, %v8364, 0.0
            %v8461 = vsel %vm8429, %v8365, 0.0
            %v8462 = vsel %vm8430, %v8366, 0.0
            %v8463 = vsel %vm8431, %v8367, 0.0
            %v8464 = vsel %vm8432, %v8368, 0.0
            %v8465 = vsel %vm8433, %v8369, 0.0
            %v8466 = vsel %vm8434, %v8370, 0.0
            %v8467 = vsel %vm8435, %v8371, 0.0
            %v8468 = vsel %vm8436, %v8372, 0.0
            %v8469 = vsel %vm8437, %v8373, 0.0
            %v8470 = vsel %vm8438, %v8374, 0.0
            %v8471 = vpack.c.bf16 %v8439, %v8439
            %v8472 = vpack.c.bf16 %v8440, %v8440
            %v8473 = vpack.c.bf16 %v8441, %v8441
            %v8474 = vpack.c.bf16 %v8442, %v8442
            %v8475 = vpack.c.bf16 %v8443, %v8443
            %v8476 = vpack.c.bf16 %v8444, %v8444
            %v8477 = vpack.c.bf16 %v8445, %v8445
            %v8478 = vpack.c.bf16 %v8446, %v8446
            %v8479 = vpack.c.bf16 %v8447, %v8447
            %v8480 = vpack.c.bf16 %v8448, %v8448
            %v8481 = vpack.c.bf16 %v8449, %v8449
            %v8482 = vpack.c.bf16 %v8450, %v8450
            %v8483 = vpack.c.bf16 %v8451, %v8451
            %v8484 = vpack.c.bf16 %v8452, %v8452
            %v8485 = vpack.c.bf16 %v8453, %v8453
            %v8486 = vpack.c.bf16 %v8454, %v8454
            %v8487 = vpack.c.bf16 %v8455, %v8455
            %v8488 = vpack.c.bf16 %v8456, %v8456
            %v8489 = vpack.c.bf16 %v8457, %v8457
            %v8490 = vpack.c.bf16 %v8458, %v8458
            %v8491 = vpack.c.bf16 %v8459, %v8459
            %v8492 = vpack.c.bf16 %v8460, %v8460
            %v8493 = vpack.c.bf16 %v8461, %v8461
            %v8494 = vpack.c.bf16 %v8462, %v8462
            %v8495 = vpack.c.bf16 %v8463, %v8463
            %v8496 = vpack.c.bf16 %v8464, %v8464
            %v8497 = vpack.c.bf16 %v8465, %v8465
            %v8498 = vpack.c.bf16 %v8466, %v8466
            %v8499 = vpack.c.bf16 %v8467, %v8467
            %v8500 = vpack.c.bf16 %v8468, %v8468
            %v8501 = vpack.c.bf16 %v8469, %v8469
            %v8502 = vpack.c.bf16 %v8470, %v8470
            %vm8503 = vcmask 519168
            %8504 = vst.msk [vmem:[#allocation2 + $0x18] sm:$0xf] %vm8503, %v8471
            %8505 = vst.msk [vmem:[#allocation2 + $0x1c] sm:$0xf] %vm8503, %v8472
            %8506 = vst.msk [vmem:[#allocation2 + $0x20] sm:$0xf] %vm8503, %v8473
            %8507 = vst.msk [vmem:[#allocation2 + $0x24] sm:$0xf] %vm8503, %v8474
            %8508 = vst.msk [vmem:[#allocation2 + $0x28] sm:$0xf] %vm8503, %v8475
            %8509 = vst.msk [vmem:[#allocation2 + $0x2c] sm:$0xf] %vm8503, %v8476
            %8510 = vst.msk [vmem:[#allocation2 + $0x30] sm:$0xf] %vm8503, %v8477
            %8511 = vst.msk [vmem:[#allocation2 + $0x34] sm:$0xf] %vm8503, %v8478
            %8512 = vst.msk [vmem:[#allocation2 + $0x38] sm:$0xf] %vm8503, %v8479
            %8513 = vst.msk [vmem:[#allocation2 + $0x3c] sm:$0xf] %vm8503, %v8480
            %8514 = vst.msk [vmem:[#allocation2 + $0x40] sm:$0xf] %vm8503, %v8481
            %8515 = vst.msk [vmem:[#allocation2 + $0x44] sm:$0xf] %vm8503, %v8482
            %8516 = vst.msk [vmem:[#allocation2 + $0x48] sm:$0xf] %vm8503, %v8483
            %8517 = vst.msk [vmem:[#allocation2 + $0x4c] sm:$0xf] %vm8503, %v8484
            %8518 = vst.msk [vmem:[#allocation2 + $0x50] sm:$0xf] %vm8503, %v8485
            %8519 = vst.msk [vmem:[#allocation2 + $0x54] sm:$0xf] %vm8503, %v8486
            %8520 = vst.msk [vmem:[#allocation2 + $0x58] sm:$0xf] %vm8503, %v8487
            %8521 = vst.msk [vmem:[#allocation2 + $0x5c] sm:$0xf] %vm8503, %v8488
            %8522 = vst.msk [vmem:[#allocation2 + $0x60] sm:$0xf] %vm8503, %v8489
            %8523 = vst.msk [vmem:[#allocation2 + $0x64] sm:$0xf] %vm8503, %v8490
            %8524 = vst.msk [vmem:[#allocation2 + $0x68] sm:$0xf] %vm8503, %v8491
            %8525 = vst.msk [vmem:[#allocation2 + $0x6c] sm:$0xf] %vm8503, %v8492
            %8526 = vst.msk [vmem:[#allocation2 + $0x70] sm:$0xf] %vm8503, %v8493
            %8527 = vst.msk [vmem:[#allocation2 + $0x74] sm:$0xf] %vm8503, %v8494
            %8528 = vst.msk [vmem:[#allocation2 + $0x78] sm:$0xf] %vm8503, %v8495
            %8529 = vst.msk [vmem:[#allocation2 + $0x7c] sm:$0xf] %vm8503, %v8496
            %8530 = vst.msk [vmem:[#allocation2 + $0x80] sm:$0xf] %vm8503, %v8497
            %8531 = vst.msk [vmem:[#allocation2 + $0x84] sm:$0xf] %vm8503, %v8498
            %8532 = vst.msk [vmem:[#allocation2 + $0x88] sm:$0xf] %vm8503, %v8499
            %8533 = vst.msk [vmem:[#allocation2 + $0x8c] sm:$0xf] %vm8503, %v8500
            %8534 = vst.msk [vmem:[#allocation2 + $0x90] sm:$0xf] %vm8503, %v8501
            %8535 = vst.msk [vmem:[#allocation2 + $0x94] sm:$0xf] %vm8503, %v8502
          $region64: #{ffdnet_forward.1} parent=59 // pred_fallthru
            _
          %p8536 = scmp.eq.s32.totalorder %s25, 14
          // Predicated region
          $region65: #{ffdnet_forward.1} parent=59 // pred_check
            %p8537 = pneg %p8536
          $region66: #{ffdnet_forward.1} parent=59 // pred_check_branch
            %8539 = sbr.rel (%p8537) target = $region68
          $region67: #{ffdnet_forward.1} parent=59 // pred_region
            %vm8540 = vcmask 31744
            %8541 = vst.msk [vmem:[%s259] sm:$0xff] %vm8540, %v7858
            %8542 = vst.msk [vmem:[%s259 + $0x8] sm:$0xff] %vm8540, %v7859
            %8543 = vst.msk [vmem:[%s259 + $0x10] sm:$0xff] %vm8540, %v7860
            %8544 = vst.msk [vmem:[%s259 + $0x18] sm:$0xff] %vm8540, %v7861
            %8545 = vst.msk [vmem:[%s259 + $0x20] sm:$0xff] %vm8540, %v7862
            %8546 = vst.msk [vmem:[%s259 + $0x28] sm:$0xff] %vm8540, %v7863
            %8547 = vst.msk [vmem:[%s259 + $0x30] sm:$0xff] %vm8540, %v7864
            %8548 = vst.msk [vmem:[%s259 + $0x38] sm:$0xff] %vm8540, %v7865
            %8549 = vst.msk [vmem:[%s259 + $0x40] sm:$0xff] %vm8540, %v7866
            %8550 = vst.msk [vmem:[%s259 + $0x48] sm:$0xff] %vm8540, %v7867
            %8551 = vst.msk [vmem:[%s259 + $0x50] sm:$0xff] %vm8540, %v7868
            %8552 = vst.msk [vmem:[%s259 + $0x58] sm:$0xff] %vm8540, %v7869
            %8553 = vst.msk [vmem:[%s259 + $0x60] sm:$0xff] %vm8540, %v7870
            %8554 = vst.msk [vmem:[%s259 + $0x68] sm:$0xff] %vm8540, %v7871
            %8555 = vst.msk [vmem:[%s259 + $0x70] sm:$0xff] %vm8540, %v7872
            %8556 = vst.msk [vmem:[%s259 + $0x78] sm:$0xff] %vm8540, %v7873
            %8557 = vst.msk [vmem:[%s259 + $0x80] sm:$0xff] %vm8540, %v7874
            %8558 = vst.msk [vmem:[%s259 + $0x88] sm:$0xff] %vm8540, %v7875
            %8559 = vst.msk [vmem:[%s259 + $0x90] sm:$0xff] %vm8540, %v7876
            %8560 = vst.msk [vmem:[%s259 + $0x98] sm:$0xff] %vm8540, %v7877
            %8561 = vst.msk [vmem:[%s259 + $0xa0] sm:$0xff] %vm8540, %v7878
            %8562 = vst.msk [vmem:[%s259 + $0xa8] sm:$0xff] %vm8540, %v7879
            %8563 = vst.msk [vmem:[%s259 + $0xb0] sm:$0xff] %vm8540, %v7880
            %8564 = vst.msk [vmem:[%s259 + $0xb8] sm:$0xff] %vm8540, %v7881
            %8565 = vst.msk [vmem:[%s259 + $0xc0] sm:$0xff] %vm8540, %v7882
            %8566 = vst.msk [vmem:[%s259 + $0xc8] sm:$0xff] %vm8540, %v7883
            %8567 = vst.msk [vmem:[%s259 + $0xd0] sm:$0xff] %vm8540, %v7884
            %8568 = vst.msk [vmem:[%s259 + $0xd8] sm:$0xff] %vm8540, %v7885
            %8569 = vst.msk [vmem:[%s259 + $0xe0] sm:$0xff] %vm8540, %v7886
            %8570 = vst.msk [vmem:[%s259 + $0xe8] sm:$0xff] %vm8540, %v7887
            %8571 = vst.msk [vmem:[%s259 + $0xf0] sm:$0xff] %vm8540, %v7888
            %8572 = vst.msk [vmem:[%s259 + $0xf8] sm:$0xff] %vm8540, %v7889
          $region68: #{ffdnet_forward.1} parent=59 // pred_fallthru
            _
        $region60: #{ffdnet_forward.1} parent=31 // pred_fallthru
          _
        %p8573 = scmp.lt.s32.totalorder %s24, 1
        %s8574 = scalar_select %p8573, %s24, 1
        %s8575 = smul.addr %s8574, 32
        %s8576 = smul.addr %s8575, 8
        %s8577 = scalar_lea.vmem %s3, %s8576
        // Predicated region
        $region69: #{ffdnet_forward.1} parent=31 // pred_check
          %p8578 = pneg %p128
        $region70: #{ffdnet_forward.1} parent=31 // pred_check_branch
          %8580 = sbr.rel (%p8578) target = $region72
        $region71: #{ffdnet_forward.1} parent=31 // pred_region
          _
        $region72: #{ffdnet_forward.1} parent=31 // pred_fallthru
          _
      $region32: #{ffdnet_forward.1} parent=5 // pred_fallthru
        _
      %p8581 = scmp.le.s32.totalorder 2, %s15
      // Predicated region
      $region73: #{ffdnet_forward.1} parent=5 // pred_check
        %p8582 = pneg %p8581
      $region74: #{ffdnet_forward.1} parent=5 // pred_check_branch
        %8584 = sbr.rel (%p8582) target = $region76
      $region75: #{ffdnet_forward.1} parent=5 // pred_region
        %s8585 = ssub.s32 %s15, 2
        // Predicated region
        $region77: #{ffdnet_forward.1} parent=75 // pred_check
          %p8586 = pneg %p134
        $region78: #{ffdnet_forward.1} parent=75 // pred_check_branch
          %8588 = sbr.rel (%p8586) target = $region80
        $region79: #{ffdnet_forward.1} parent=75 // pred_region
          %p8589 = scmp.lt.s32.totalorder %s26, 1
          %s8590 = scalar_select %p8589, %s26, 1
          %s8591 = smul.addr %s8590, 32
          %s8592 = smul.addr %s8591, 8
          %s8593 = scalar_lea.vmem %s3, %s8592
        $region80: #{ffdnet_forward.1} parent=75 // pred_fallthru
          _
      $region76: #{ffdnet_forward.1} parent=5 // pred_fallthru
        _
    $region6: #{ffdnet_forward.1} parent=1 // loop_footer
      %s19 = sadd.s32 1, %s15
    $region7: #{ffdnet_forward.1} parent=1 // loop_footer_branch
      %14 = sbr.rel target = $region3
    $region8: #{ffdnet_forward.1} parent=1 // loop_exit
      _
    %8594 = vsyncpa [#allocation5], 1
    %s8595 = scalar_lea.sflag [#allocation5], 1
    %8596 = vsyncpa %s8595, 1
    %8597 = vsyncpa [#allocation7], 1
    %s8598 = scalar_lea.sflag [#allocation7], 1
    %8599 = vsyncpa %s8598, 1

</llo_original>
